<compile_context>
chip_gen: v7x
topology: tpu7x:2x2x1
jax: 0.10.0
libtpu: 0.0.40
codegen_flags: <defaults>
</compile_context>

<pallas_src>
import jax
import jax.numpy as jnp
from jax.experimental import pallas as pl
from jax.experimental.pallas import tpu as pltpu

C_SE, C_MID, C_OUT = 76, 1824, 304
H = W = 7
EPS = 1e-3  # BatchNorm2d eps


def se_conv_bn_kernel(x_se_ref, x_ref, w1_ref, b1_ref, w2_ref,
                      gamma_ref, beta_ref, out_ref):
    # ---- conv2d157: 1x1 conv (76 -> 1824) on a 1x1 spatial input, channel-major:
    #      s = W1[C_MID, C_SE] @ x_se[C_SE, 1]  (bf16 x bf16, f32 accumulate)
    s = jnp.dot(w1_ref[...], x_se_ref[...],
                preferred_element_type=jnp.float32) + b1_ref[...]       # [C_MID, 1]
    # ---- sigmoid26 (exp + reciprocal live on the EUP slot)
    gate = jax.nn.sigmoid(s)                                            # [C_MID, 1]
    # ---- operator.mul: broadcast the per-channel gate across the HW lane axis
    y = (x_ref[...] * gate).astype(jnp.bfloat16)                        # [C_MID, HW]
    # ---- conv2d158: 1x1 conv (1824 -> 304), no bias:
    #      z = W2[C_OUT, C_MID] @ y[C_MID, HW]  (f32 accumulation on MXU)
    z = jnp.dot(w2_ref[...], y, preferred_element_type=jnp.float32)     # [C_OUT, HW]
    # ---- batchnorm2d104 (training mode): per-channel (row) stats over the
    #      N*H*W lane axis, biased variance, fused affine epilogue.
    mean = jnp.mean(z, axis=-1, keepdims=True)                          # [C_OUT, 1]
    var = jnp.mean((z - mean) ** 2, axis=-1, keepdims=True)             # [C_OUT, 1]
    scale = gamma_ref[...] * jax.lax.rsqrt(var + EPS)                   # [C_OUT, 1]
    shift = beta_ref[...] - mean * scale                                # [C_OUT, 1]
    out_ref[...] = z * scale + shift


def se_conv_bn(x503, x500, w1, b1, w2, gamma, beta):
    """x503: [1,76,1,1], x500: [1,1824,7,7] (NCHW, PyTorch convention)."""
    n, c_mid, h, w = x500.shape
    assert n == 1, "channel-major reshape assumes batch == 1 (as in the module)"
    hw = n * h * w

    # Glue: pure reshapes + dtype casts only — no transposes, no .T weight copies.
    x_chw = x500.reshape(c_mid, hw)                           # [1824, 49] f32
    x_se = x503.reshape(C_SE, 1).astype(jnp.bfloat16)         # [76, 1]
    w1_k = w1.reshape(C_MID, C_SE).astype(jnp.bfloat16)       # [1824, 76]
    w2_k = w2.reshape(C_OUT, C_MID).astype(jnp.bfloat16)      # [304, 1824]
    b1_k = b1.reshape(C_MID, 1)                               # f32
    gamma_k = gamma.reshape(C_OUT, 1)                         # f32
    beta_k = beta.reshape(C_OUT, 1)                           # f32

    # Cost hint so XLA can schedule this tiny, latency-bound call sensibly.
    flops = 2 * (C_MID * C_SE + C_OUT * C_MID * hw)
    bytes_accessed = (x_chw.size * 4 + x_se.size * 2 + w1_k.size * 2 +
                      w2_k.size * 2 + b1_k.size * 4 + gamma_k.size * 4 +
                      beta_k.size * 4 + C_OUT * hw * 4)
    cost = pl.CostEstimate(flops=flops, transcendentals=C_MID,
                           bytes_accessed=bytes_accessed)

    # Everything fits comfortably in VMEM (~2 MB total) -> single invocation,
    # whole arrays as one block each, no grid (kernel is HBM/launch bound).
    # TODO(synk): optional v7x-only variant: grid=(2,) over C_OUT halves with
    # dimension_semantics=("parallel",) to shard w2 traffic across the 2 TCs.
    vmem = pl.BlockSpec(memory_space=pltpu.MemorySpace.VMEM)
    out_cmaj = pl.pallas_call(
        se_conv_bn_kernel,
        out_shape=jax.ShapeDtypeStruct((C_OUT, hw), jnp.float32),
        in_specs=[vmem] * 7,
        out_specs=vmem,
        cost_estimate=cost,
    )(x_se, x_chw, w1_k, b1_k, w2_k, gamma_k, beta_k)

    # [304, 49] is already channel-major -> plain reshape back to NCHW.
    return out_cmaj.reshape(n, C_OUT, h, w)


if __name__ == "__main__":
    key = jax.random.PRNGKey(0)
    k = jax.random.split(key, 7)

    # inputs (shapes implied by the module's forward)
    x500 = jax.random.normal(k[0], (1, C_MID, H, W), jnp.float32)
    x503 = jax.random.normal(k[1], (1, C_SE, 1, 1), jnp.float32)

    # deterministic parameters (shapes from the module __init__)
    w1 = jax.random.normal(k[2], (C_MID, C_SE, 1, 1), jnp.float32) * 0.05   # conv2d157.weight
    b1 = jax.random.normal(k[3], (C_MID,), jnp.float32) * 0.05              # conv2d157.bias
    w2 = jax.random.normal(k[4], (C_OUT, C_MID, 1, 1), jnp.float32) * 0.02  # conv2d158.weight
    gamma = 1.0 + 0.1 * jax.random.normal(k[5], (C_OUT,), jnp.float32)      # bn.weight
    beta = 0.1 * jax.random.normal(k[6], (C_OUT,), jnp.float32)             # bn.bias

    out = se_conv_bn(x503, x500, w1, b1, w2, gamma, beta)
    jax.block_until_ready(out)
    assert out.shape == (1, C_OUT, H, W) and out.dtype == jnp.float32
    print("KERNEL_OK")
</pallas_src>

<mosaic_0001>
module attributes {stable_mosaic.version = 11 : i64} {
  func.func @se_conv_bn_kernel(%arg0: memref<76x1xbf16, #tpu.memory_space<vmem>>, %arg1: memref<1824x49xf32, #tpu.memory_space<vmem>>, %arg2: memref<1824x76xbf16, #tpu.memory_space<vmem>>, %arg3: memref<1824x1xf32, #tpu.memory_space<vmem>>, %arg4: memref<304x1824xbf16, #tpu.memory_space<vmem>>, %arg5: memref<304x1xf32, #tpu.memory_space<vmem>>, %arg6: memref<304x1xf32, #tpu.memory_space<vmem>>, %arg7: memref<304x49xf32, #tpu.memory_space<vmem>>) attributes {dimension_semantics = [], scalar_prefetch = 0 : i64, scratch_operands = 0 : i64, tpu.core_type = #tpu.core_type<tc>} {
    %c0 = arith.constant 0 : index
    %c0_0 = arith.constant 0 : index
    %0 = vector.load %arg2[%c0, %c0_0] : memref<1824x76xbf16, #tpu.memory_space<vmem>>, vector<1824x76xbf16>
    %c0_1 = arith.constant 0 : index
    %c0_2 = arith.constant 0 : index
    %1 = vector.load %arg0[%c0_1, %c0_2] : memref<76x1xbf16, #tpu.memory_space<vmem>>, vector<76x1xbf16>
    %cst = arith.constant dense<0.000000e+00> : vector<1824x1xf32>
    %2 = tpu.matmul %0, %1, %cst {dimension_numbers = #tpu.dot_dimension_numbers<[1], [0], [0], [1], [0, 0, 1, 1], [], []>} : vector<1824x76xbf16>, vector<76x1xbf16>, vector<1824x1xf32> -> vector<1824x1xf32>
    %c0_3 = arith.constant 0 : index
    %c0_4 = arith.constant 0 : index
    %3 = vector.load %arg3[%c0_3, %c0_4] : memref<1824x1xf32, #tpu.memory_space<vmem>>, vector<1824x1xf32>
    %4 = arith.addf %2, %3 : vector<1824x1xf32>
    %5 = arith.negf %4 : vector<1824x1xf32>
    %6 = math.exp %5 : vector<1824x1xf32>
    %cst_5 = arith.constant 1.000000e+00 : f32
    %7 = vector.broadcast %cst_5 : f32 to vector<1824x1xf32>
    %8 = arith.addf %7, %6 : vector<1824x1xf32>
    %9 = arith.divf %7, %8 : vector<1824x1xf32>
    %c0_6 = arith.constant 0 : index
    %c0_7 = arith.constant 0 : index
    %10 = vector.load %arg1[%c0_6, %c0_7] : memref<1824x49xf32, #tpu.memory_space<vmem>>, vector<1824x49xf32>
    %11 = vector.broadcast %9 : vector<1824x1xf32> to vector<1824x49xf32>
    %12 = arith.mulf %10, %11 : vector<1824x49xf32>
    %13 = arith.truncf %12 : vector<1824x49xf32> to vector<1824x49xbf16>
    %c0_8 = arith.constant 0 : index
    %c0_9 = arith.constant 0 : index
    %14 = vector.load %arg4[%c0_8, %c0_9] : memref<304x1824xbf16, #tpu.memory_space<vmem>>, vector<304x1824xbf16>
    %cst_10 = arith.constant dense<0.000000e+00> : vector<304x49xf32>
    %15 = tpu.matmul %14, %13, %cst_10 {dimension_numbers = #tpu.dot_dimension_numbers<[1], [0], [0], [1], [0, 0, 1, 1], [], []>} : vector<304x1824xbf16>, vector<1824x49xbf16>, vector<304x49xf32> -> vector<304x49xf32>
    %cst_11 = arith.constant dense<0.000000e+00> : vector<304xf32>
    %16 = vector.multi_reduction <add>, %15, %cst_11 [1] : vector<304x49xf32> to vector<304xf32>
    %17 = vector.shape_cast %16 : vector<304xf32> to vector<304x1xf32>
    %cst_12 = arith.constant 4.900000e+01 : f32
    %18 = vector.broadcast %cst_12 : f32 to vector<304x1xf32>
    %19 = arith.divf %17, %18 : vector<304x1xf32>
    %20 = vector.broadcast %19 : vector<304x1xf32> to vector<304x49xf32>
    %21 = arith.subf %15, %20 : vector<304x49xf32>
    %22 = arith.mulf %21, %21 : vector<304x49xf32>
    %cst_13 = arith.constant dense<0.000000e+00> : vector<304xf32>
    %23 = vector.multi_reduction <add>, %22, %cst_13 [1] : vector<304x49xf32> to vector<304xf32>
    %24 = vector.shape_cast %23 : vector<304xf32> to vector<304x1xf32>
    %cst_14 = arith.constant 4.900000e+01 : f32
    %25 = vector.broadcast %cst_14 : f32 to vector<304x1xf32>
    %26 = arith.divf %24, %25 : vector<304x1xf32>
    %c0_15 = arith.constant 0 : index
    %c0_16 = arith.constant 0 : index
    %27 = vector.load %arg5[%c0_15, %c0_16] : memref<304x1xf32, #tpu.memory_space<vmem>>, vector<304x1xf32>
    %cst_17 = arith.constant 1.000000e-03 : f32
    %28 = vector.broadcast %cst_17 : f32 to vector<304x1xf32>
    %29 = arith.addf %26, %28 : vector<304x1xf32>
    %30 = math.rsqrt %29 : vector<304x1xf32>
    %31 = arith.mulf %27, %30 : vector<304x1xf32>
    %c0_18 = arith.constant 0 : index
    %c0_19 = arith.constant 0 : index
    %32 = vector.load %arg6[%c0_18, %c0_19] : memref<304x1xf32, #tpu.memory_space<vmem>>, vector<304x1xf32>
    %33 = arith.mulf %19, %31 : vector<304x1xf32>
    %34 = arith.subf %32, %33 : vector<304x1xf32>
    %35 = vector.broadcast %31 : vector<304x1xf32> to vector<304x49xf32>
    %36 = arith.mulf %15, %35 : vector<304x49xf32>
    %37 = vector.broadcast %34 : vector<304x1xf32> to vector<304x49xf32>
    %38 = arith.addf %36, %37 : vector<304x49xf32>
    %c0_20 = arith.constant 0 : index
    %c0_21 = arith.constant 0 : index
    %39 = vector.load %arg7[%c0_20, %c0_21] : memref<304x49xf32, #tpu.memory_space<vmem>>, vector<304x49xf32>
    tpu.vector_store %arg7[%c0_20, %c0_21], %38 {strides = array<i32>} : memref<304x49xf32, #tpu.memory_space<vmem>>, vector<304x49xf32>,
    return
  }
}

</mosaic_0001>

<llo_original>
// kernel: tpu_custom_call.1
$region0: #{tpu_custom_call.1}
  #allocation0 [shape = 'u32[]', space=smem, size = 0x4, offset = 0x4, fixed_abs, tag = 'smem constant byte address 0x4 - core index']
  #allocation1 [shape = 'u32[144,128]{1,0:T(1,128)}', space=vmem, size = 0x12000, scoped, tag = 'internal scratch']
  %s0 = inlined_call_operand.vmem [shape: bf16[76,1], index: 0, kind: input, shape index: {}]
  %s1 = inlined_call_operand.vmem [shape: f32[1824,49], index: 1, kind: input, shape index: {}]
  %s2 = inlined_call_operand.vmem [shape: bf16[1824,76], index: 2, kind: input, shape index: {}]
  %s3 = inlined_call_operand.vmem [shape: f32[1824,1], index: 3, kind: input, shape index: {}]
  %s4 = inlined_call_operand.vmem [shape: bf16[304,1824], index: 4, kind: input, shape index: {}]
  %s5 = inlined_call_operand.vmem [shape: f32[304,1], index: 5, kind: input, shape index: {}]
  %s6 = inlined_call_operand.vmem [shape: f32[304,1], index: 6, kind: input, shape index: {}]
  %s7 = inlined_call_operand.vmem [shape: f32[304,49], index: 7, kind: output, shape index: {}]
  %s8 = sld [smem:[#allocation0]]
  $region38: #{tpu_custom_call.1} parent=0
    _
  %s10 = ssub.s32 1, %s8
  %s11 = scalar_select 0, %s10, %s8
  // Predicated region
  $region2: #{tpu_custom_call.1} parent=0 // pred_check
    _
  $region3: #{tpu_custom_call.1} parent=0 // pred_check_branch
    %13 = sbr.rel (0) target = $region5
  $region4: #{tpu_custom_call.1} parent=0 // pred_region
    _
  $region5: #{tpu_custom_call.1} parent=0 // pred_fallthru
    _
  // Predicated region
  $region6: #{tpu_custom_call.1} parent=0 // pred_check
    _
  $region7: #{tpu_custom_call.1} parent=0 // pred_check_branch
    %15 = sbr.rel (0) target = $region9
  $region8: #{tpu_custom_call.1} parent=0 // pred_region
    _
  $region9: #{tpu_custom_call.1} parent=0 // pred_fallthru
    _
  // Predicated region
  $region10: #{tpu_custom_call.1} parent=0 // pred_check
    _
  $region11: #{tpu_custom_call.1} parent=0 // pred_check_branch
    %17 = sbr.rel (0) target = $region13
  $region12: #{tpu_custom_call.1} parent=0 // pred_region
    _
  $region13: #{tpu_custom_call.1} parent=0 // pred_fallthru
    _
  // Predicated region
  $region14: #{tpu_custom_call.1} parent=0 // pred_check
    _
  $region15: #{tpu_custom_call.1} parent=0 // pred_check_branch
    %19 = sbr.rel (0) target = $region17
  $region16: #{tpu_custom_call.1} parent=0 // pred_region
    _
  $region17: #{tpu_custom_call.1} parent=0 // pred_fallthru
    _
  // Predicated region
  $region18: #{tpu_custom_call.1} parent=0 // pred_check
    _
  $region19: #{tpu_custom_call.1} parent=0 // pred_check_branch
    %21 = sbr.rel (0) target = $region21
  $region20: #{tpu_custom_call.1} parent=0 // pred_region
    _
  $region21: #{tpu_custom_call.1} parent=0 // pred_fallthru
    _
  // Predicated region
  $region22: #{tpu_custom_call.1} parent=0 // pred_check
    _
  $region23: #{tpu_custom_call.1} parent=0 // pred_check_branch
    %23 = sbr.rel (0) target = $region25
  $region24: #{tpu_custom_call.1} parent=0 // pred_region
    _
  $region25: #{tpu_custom_call.1} parent=0 // pred_fallthru
    _
  // Predicated region
  $region26: #{tpu_custom_call.1} parent=0 // pred_check
    _
  $region27: #{tpu_custom_call.1} parent=0 // pred_check_branch
    %25 = sbr.rel (0) target = $region29
  $region28: #{tpu_custom_call.1} parent=0 // pred_region
    _
  $region29: #{tpu_custom_call.1} parent=0 // pred_fallthru
    _
  %v27 = vld [vmem:[%s2] sm:$0xf]
  %v28 = vld [vmem:[%s2 + $0x4] sm:$0xf]
  %v29 = vld [vmem:[%s2 + $0x8] sm:$0xf]
  %v30 = vld [vmem:[%s2 + $0xc] sm:$0xf]
  %v31 = vld [vmem:[%s2 + $0x10] sm:$0xf]
  %v32 = vld [vmem:[%s2 + $0x14] sm:$0xf]
  %v33 = vld [vmem:[%s2 + $0x18] sm:$0xf]
  %v34 = vld [vmem:[%s2 + $0x1c] sm:$0xf]
  %v35 = vld [vmem:[%s2 + $0x20] sm:$0xf]
  %v36 = vld [vmem:[%s2 + $0x24] sm:$0xf]
  %v37 = vld [vmem:[%s2 + $0x28] sm:$0xf]
  %v38 = vld [vmem:[%s2 + $0x2c] sm:$0xf]
  %v39 = vld [vmem:[%s2 + $0x30] sm:$0xf]
  %v40 = vld [vmem:[%s2 + $0x34] sm:$0xf]
  %v41 = vld [vmem:[%s2 + $0x38] sm:$0xf]
  %v42 = vld [vmem:[%s2 + $0x3c] sm:$0xf]
  %v43 = vld [vmem:[%s2 + $0x40] sm:$0xf]
  %v44 = vld [vmem:[%s2 + $0x44] sm:$0xf]
  %v45 = vld [vmem:[%s2 + $0x48] sm:$0xf]
  %v46 = vld [vmem:[%s2 + $0x4c] sm:$0xf]
  %v47 = vld [vmem:[%s2 + $0x50] sm:$0xf]
  %v48 = vld [vmem:[%s2 + $0x54] sm:$0xf]
  %v49 = vld [vmem:[%s2 + $0x58] sm:$0xf]
  %v50 = vld [vmem:[%s2 + $0x5c] sm:$0xf]
  %v51 = vld [vmem:[%s2 + $0x60] sm:$0xf]
  %v52 = vld [vmem:[%s2 + $0x64] sm:$0xf]
  %v53 = vld [vmem:[%s2 + $0x68] sm:$0xf]
  %v54 = vld [vmem:[%s2 + $0x6c] sm:$0xf]
  %v55 = vld [vmem:[%s2 + $0x70] sm:$0xf]
  %v56 = vld [vmem:[%s2 + $0x74] sm:$0xf]
  %v57 = vld [vmem:[%s2 + $0x78] sm:$0xf]
  %v58 = vld [vmem:[%s2 + $0x7c] sm:$0xf]
  %v59 = vld [vmem:[%s2 + $0x80] sm:$0xf]
  %v60 = vld [vmem:[%s2 + $0x84] sm:$0xf]
  %v61 = vld [vmem:[%s2 + $0x88] sm:$0xf]
  %v62 = vld [vmem:[%s2 + $0x8c] sm:$0xf]
  %v63 = vld [vmem:[%s2 + $0x90] sm:$0xf]
  %v64 = vld [vmem:[%s2 + $0x94] sm:$0xf]
  %v65 = vld [vmem:[%s2 + $0x98] sm:$0xf]
  %v66 = vld [vmem:[%s2 + $0x9c] sm:$0xf]
  %v67 = vld [vmem:[%s2 + $0xa0] sm:$0xf]
  %v68 = vld [vmem:[%s2 + $0xa4] sm:$0xf]
  %v69 = vld [vmem:[%s2 + $0xa8] sm:$0xf]
  %v70 = vld [vmem:[%s2 + $0xac] sm:$0xf]
  %v71 = vld [vmem:[%s2 + $0xb0] sm:$0xf]
  %v72 = vld [vmem:[%s2 + $0xb4] sm:$0xf]
  %v73 = vld [vmem:[%s2 + $0xb8] sm:$0xf]
  %v74 = vld [vmem:[%s2 + $0xbc] sm:$0xf]
  %v75 = vld [vmem:[%s2 + $0xc0] sm:$0xf]
  %v76 = vld [vmem:[%s2 + $0xc4] sm:$0xf]
  %v77 = vld [vmem:[%s2 + $0xc8] sm:$0xf]
  %v78 = vld [vmem:[%s2 + $0xcc] sm:$0xf]
  %v79 = vld [vmem:[%s2 + $0xd0] sm:$0xf]
  %v80 = vld [vmem:[%s2 + $0xd4] sm:$0xf]
  %v81 = vld [vmem:[%s2 + $0xd8] sm:$0xf]
  %v82 = vld [vmem:[%s2 + $0xdc] sm:$0xf]
  %v83 = vld [vmem:[%s2 + $0xe0] sm:$0xf]
  %v84 = vld [vmem:[%s2 + $0xe4] sm:$0xf]
  %v85 = vld [vmem:[%s2 + $0xe8] sm:$0xf]
  %v86 = vld [vmem:[%s2 + $0xec] sm:$0xf]
  %v87 = vld [vmem:[%s2 + $0xf0] sm:$0xf]
  %v88 = vld [vmem:[%s2 + $0xf4] sm:$0xf]
  %v89 = vld [vmem:[%s2 + $0xf8] sm:$0xf]
  %v90 = vld [vmem:[%s2 + $0xfc] sm:$0xf]
  %v91 = vld [vmem:[%s2 + $0x100] sm:$0xf]
  %v92 = vld [vmem:[%s2 + $0x104] sm:$0xf]
  %v93 = vld [vmem:[%s2 + $0x108] sm:$0xf]
  %v94 = vld [vmem:[%s2 + $0x10c] sm:$0xf]
  %v95 = vld [vmem:[%s2 + $0x110] sm:$0xf]
  %v96 = vld [vmem:[%s2 + $0x114] sm:$0xf]
  %v97 = vld [vmem:[%s2 + $0x118] sm:$0xf]
  %v98 = vld [vmem:[%s2 + $0x11c] sm:$0xf]
  %v99 = vld [vmem:[%s2 + $0x120] sm:$0xf]
  %v100 = vld [vmem:[%s2 + $0x124] sm:$0xf]
  %v101 = vld [vmem:[%s2 + $0x128] sm:$0xf]
  %v102 = vld [vmem:[%s2 + $0x12c] sm:$0xf]
  %v103 = vld [vmem:[%s2 + $0x130] sm:$0xf]
  %v104 = vld [vmem:[%s2 + $0x134] sm:$0xf]
  %v105 = vld [vmem:[%s2 + $0x138] sm:$0xf]
  %v106 = vld [vmem:[%s2 + $0x13c] sm:$0xf]
  %v107 = vld [vmem:[%s2 + $0x140] sm:$0xf]
  %v108 = vld [vmem:[%s2 + $0x144] sm:$0xf]
  %v109 = vld [vmem:[%s2 + $0x148] sm:$0xf]
  %v110 = vld [vmem:[%s2 + $0x14c] sm:$0xf]
  %v111 = vld [vmem:[%s2 + $0x150] sm:$0xf]
  %v112 = vld [vmem:[%s2 + $0x154] sm:$0xf]
  %v113 = vld [vmem:[%s2 + $0x158] sm:$0xf]
  %v114 = vld [vmem:[%s2 + $0x15c] sm:$0xf]
  %v115 = vld [vmem:[%s2 + $0x160] sm:$0xf]
  %v116 = vld [vmem:[%s2 + $0x164] sm:$0xf]
  %v117 = vld [vmem:[%s2 + $0x168] sm:$0xf]
  %v118 = vld [vmem:[%s2 + $0x16c] sm:$0xf]
  %v119 = vld [vmem:[%s2 + $0x170] sm:$0xf]
  %v120 = vld [vmem:[%s2 + $0x174] sm:$0xf]
  %v121 = vld [vmem:[%s2 + $0x178] sm:$0xf]
  %v122 = vld [vmem:[%s2 + $0x17c] sm:$0xf]
  %v123 = vld [vmem:[%s2 + $0x180] sm:$0xf]
  %v124 = vld [vmem:[%s2 + $0x184] sm:$0xf]
  %v125 = vld [vmem:[%s2 + $0x188] sm:$0xf]
  %v126 = vld [vmem:[%s2 + $0x18c] sm:$0xf]
  %v127 = vld [vmem:[%s2 + $0x190] sm:$0xf]
  %v128 = vld [vmem:[%s2 + $0x194] sm:$0xf]
  %v129 = vld [vmem:[%s2 + $0x198] sm:$0xf]
  %v130 = vld [vmem:[%s2 + $0x19c] sm:$0xf]
  %v131 = vld [vmem:[%s2 + $0x1a0] sm:$0xf]
  %v132 = vld [vmem:[%s2 + $0x1a4] sm:$0xf]
  %v133 = vld [vmem:[%s2 + $0x1a8] sm:$0xf]
  %v134 = vld [vmem:[%s2 + $0x1ac] sm:$0xf]
  %v135 = vld [vmem:[%s2 + $0x1b0] sm:$0xf]
  %v136 = vld [vmem:[%s2 + $0x1b4] sm:$0xf]
  %v137 = vld [vmem:[%s2 + $0x1b8] sm:$0xf]
  %v138 = vld [vmem:[%s2 + $0x1bc] sm:$0xf]
  %v139 = vld [vmem:[%s2 + $0x1c0] sm:$0xf]
  %v140 = vld [vmem:[%s2 + $0x1c4] sm:$0xf]
  %v141 = vld [vmem:[%s2 + $0x1c8] sm:$0xf]
  %v142 = vld [vmem:[%s2 + $0x1cc] sm:$0xf]
  %v143 = vld [vmem:[%s2 + $0x1d0] sm:$0xf]
  %v144 = vld [vmem:[%s2 + $0x1d4] sm:$0xf]
  %v145 = vld [vmem:[%s2 + $0x1d8] sm:$0xf]
  %v146 = vld [vmem:[%s2 + $0x1dc] sm:$0xf]
  %v147 = vld [vmem:[%s2 + $0x1e0] sm:$0xf]
  %v148 = vld [vmem:[%s2 + $0x1e4] sm:$0xf]
  %v149 = vld [vmem:[%s2 + $0x1e8] sm:$0xf]
  %v150 = vld [vmem:[%s2 + $0x1ec] sm:$0xf]
  %v151 = vld [vmem:[%s2 + $0x1f0] sm:$0xf]
  %v152 = vld [vmem:[%s2 + $0x1f4] sm:$0xf]
  %v153 = vld [vmem:[%s2 + $0x1f8] sm:$0xf]
  %v154 = vld [vmem:[%s2 + $0x1fc] sm:$0xf]
  %v155 = vld [vmem:[%s2 + $0x200] sm:$0xf]
  %v156 = vld [vmem:[%s2 + $0x204] sm:$0xf]
  %v157 = vld [vmem:[%s2 + $0x208] sm:$0xf]
  %v158 = vld [vmem:[%s2 + $0x20c] sm:$0xf]
  %v159 = vld [vmem:[%s2 + $0x210] sm:$0xf]
  %v160 = vld [vmem:[%s2 + $0x214] sm:$0xf]
  %v161 = vld [vmem:[%s2 + $0x218] sm:$0xf]
  %v162 = vld [vmem:[%s2 + $0x21c] sm:$0xf]
  %v163 = vld [vmem:[%s2 + $0x220] sm:$0xf]
  %v164 = vld [vmem:[%s2 + $0x224] sm:$0xf]
  %v165 = vld [vmem:[%s2 + $0x228] sm:$0xf]
  %v166 = vld [vmem:[%s2 + $0x22c] sm:$0xf]
  %v167 = vld [vmem:[%s2 + $0x230] sm:$0xf]
  %v168 = vld [vmem:[%s2 + $0x234] sm:$0xf]
  %v169 = vld [vmem:[%s2 + $0x238] sm:$0xf]
  %v170 = vld [vmem:[%s2 + $0x23c] sm:$0xf]
  %v171 = vld [vmem:[%s2 + $0x240] sm:$0xf]
  %v172 = vld [vmem:[%s2 + $0x244] sm:$0xf]
  %v173 = vld [vmem:[%s2 + $0x248] sm:$0xf]
  %v174 = vld [vmem:[%s2 + $0x24c] sm:$0xf]
  %v175 = vld [vmem:[%s2 + $0x250] sm:$0xf]
  %v176 = vld [vmem:[%s2 + $0x254] sm:$0xf]
  %v177 = vld [vmem:[%s2 + $0x258] sm:$0xf]
  %v178 = vld [vmem:[%s2 + $0x25c] sm:$0xf]
  %v179 = vld [vmem:[%s2 + $0x260] sm:$0xf]
  %v180 = vld [vmem:[%s2 + $0x264] sm:$0xf]
  %v181 = vld [vmem:[%s2 + $0x268] sm:$0xf]
  %v182 = vld [vmem:[%s2 + $0x26c] sm:$0xf]
  %v183 = vld [vmem:[%s2 + $0x270] sm:$0xf]
  %v184 = vld [vmem:[%s2 + $0x274] sm:$0xf]
  %v185 = vld [vmem:[%s2 + $0x278] sm:$0xf]
  %v186 = vld [vmem:[%s2 + $0x27c] sm:$0xf]
  %v187 = vld [vmem:[%s2 + $0x280] sm:$0xf]
  %v188 = vld [vmem:[%s2 + $0x284] sm:$0xf]
  %v189 = vld [vmem:[%s2 + $0x288] sm:$0xf]
  %v190 = vld [vmem:[%s2 + $0x28c] sm:$0xf]
  %v191 = vld [vmem:[%s2 + $0x290] sm:$0xf]
  %v192 = vld [vmem:[%s2 + $0x294] sm:$0xf]
  %v193 = vld [vmem:[%s2 + $0x298] sm:$0xf]
  %v194 = vld [vmem:[%s2 + $0x29c] sm:$0xf]
  %v195 = vld [vmem:[%s2 + $0x2a0] sm:$0xf]
  %v196 = vld [vmem:[%s2 + $0x2a4] sm:$0xf]
  %v197 = vld [vmem:[%s2 + $0x2a8] sm:$0xf]
  %v198 = vld [vmem:[%s2 + $0x2ac] sm:$0xf]
  %v199 = vld [vmem:[%s2 + $0x2b0] sm:$0xf]
  %v200 = vld [vmem:[%s2 + $0x2b4] sm:$0xf]
  %v201 = vld [vmem:[%s2 + $0x2b8] sm:$0xf]
  %v202 = vld [vmem:[%s2 + $0x2bc] sm:$0xf]
  %v203 = vld [vmem:[%s2 + $0x2c0] sm:$0xf]
  %v204 = vld [vmem:[%s2 + $0x2c4] sm:$0xf]
  %v205 = vld [vmem:[%s2 + $0x2c8] sm:$0xf]
  %v206 = vld [vmem:[%s2 + $0x2cc] sm:$0xf]
  %v207 = vld [vmem:[%s2 + $0x2d0] sm:$0xf]
  %v208 = vld [vmem:[%s2 + $0x2d4] sm:$0xf]
  %v209 = vld [vmem:[%s2 + $0x2d8] sm:$0xf]
  %v210 = vld [vmem:[%s2 + $0x2dc] sm:$0xf]
  %v211 = vld [vmem:[%s2 + $0x2e0] sm:$0xf]
  %v212 = vld [vmem:[%s2 + $0x2e4] sm:$0xf]
  %v213 = vld [vmem:[%s2 + $0x2e8] sm:$0xf]
  %v214 = vld [vmem:[%s2 + $0x2ec] sm:$0xf]
  %v215 = vld [vmem:[%s2 + $0x2f0] sm:$0xf]
  %v216 = vld [vmem:[%s2 + $0x2f4] sm:$0xf]
  %v217 = vld [vmem:[%s2 + $0x2f8] sm:$0xf]
  %v218 = vld [vmem:[%s2 + $0x2fc] sm:$0xf]
  %v219 = vld [vmem:[%s2 + $0x300] sm:$0xf]
  %v220 = vld [vmem:[%s2 + $0x304] sm:$0xf]
  %v221 = vld [vmem:[%s2 + $0x308] sm:$0xf]
  %v222 = vld [vmem:[%s2 + $0x30c] sm:$0xf]
  %v223 = vld [vmem:[%s2 + $0x310] sm:$0xf]
  %v224 = vld [vmem:[%s2 + $0x314] sm:$0xf]
  %v225 = vld [vmem:[%s2 + $0x318] sm:$0xf]
  %v226 = vld [vmem:[%s2 + $0x31c] sm:$0xf]
  %v227 = vld [vmem:[%s2 + $0x320] sm:$0xf]
  %v228 = vld [vmem:[%s2 + $0x324] sm:$0xf]
  %v229 = vld [vmem:[%s2 + $0x328] sm:$0xf]
  %v230 = vld [vmem:[%s2 + $0x32c] sm:$0xf]
  %v231 = vld [vmem:[%s2 + $0x330] sm:$0xf]
  %v232 = vld [vmem:[%s2 + $0x334] sm:$0xf]
  %v233 = vld [vmem:[%s2 + $0x338] sm:$0xf]
  %v234 = vld [vmem:[%s2 + $0x33c] sm:$0xf]
  %v235 = vld [vmem:[%s2 + $0x340] sm:$0xf]
  %v236 = vld [vmem:[%s2 + $0x344] sm:$0xf]
  %v237 = vld [vmem:[%s2 + $0x348] sm:$0xf]
  %v238 = vld [vmem:[%s2 + $0x34c] sm:$0xf]
  %v239 = vld [vmem:[%s2 + $0x350] sm:$0xf]
  %v240 = vld [vmem:[%s2 + $0x354] sm:$0xf]
  %v241 = vld [vmem:[%s2 + $0x358] sm:$0xf]
  %v242 = vld [vmem:[%s2 + $0x35c] sm:$0xf]
  %v243 = vld [vmem:[%s2 + $0x360] sm:$0xf]
  %v244 = vld [vmem:[%s2 + $0x364] sm:$0xf]
  %v245 = vld [vmem:[%s2 + $0x368] sm:$0xf]
  %v246 = vld [vmem:[%s2 + $0x36c] sm:$0xf]
  %v247 = vld [vmem:[%s2 + $0x370] sm:$0xf]
  %v248 = vld [vmem:[%s2 + $0x374] sm:$0xf]
  %v249 = vld [vmem:[%s2 + $0x378] sm:$0xf]
  %v250 = vld [vmem:[%s2 + $0x37c] sm:$0xf]
  %v251 = vld [vmem:[%s2 + $0x380] sm:$0xf]
  %v252 = vld [vmem:[%s2 + $0x384] sm:$0xf]
  %v253 = vld [vmem:[%s2 + $0x388] sm:$0xf]
  %v254 = vld [vmem:[%s2 + $0x38c] sm:$0xf]
  %v255 = vld [vmem:[%s0] sm:$0xf]
  %v256 = vld [vmem:[%s0 + $0x4] sm:$0xf]
  %v257 = vld [vmem:[%s0 + $0x8] sm:$0xf]
  %v258 = vld [vmem:[%s0 + $0xc] sm:$0xf]
  %v259 = vld [vmem:[%s0 + $0x10] sm:$0xf]
  %v260 = vld [vmem:[%s0 + $0x14] sm:$0xf]
  %v261 = vld [vmem:[%s0 + $0x18] sm:$0xf]
  %v262 = vld [vmem:[%s0 + $0x1c] sm:$0xf]
  %v263 = vld [vmem:[%s0 + $0x20] sm:$0xf]
  %v264 = vld [vmem:[%s0 + $0x24] sm:$0x3]
  %v265 = vld [vmem:[%s3] sm:$0xff]
  %v266 = vld [vmem:[%s3 + $0x8] sm:$0xff]
  %v267 = vld [vmem:[%s3 + $0x10] sm:$0xff]
  %v268 = vld [vmem:[%s3 + $0x18] sm:$0xff]
  %v269 = vld [vmem:[%s3 + $0x20] sm:$0xff]
  %v270 = vld [vmem:[%s3 + $0x28] sm:$0xff]
  %v271 = vld [vmem:[%s3 + $0x30] sm:$0xff]
  %v272 = vld [vmem:[%s3 + $0x38] sm:$0xff]
  %v273 = vld [vmem:[%s3 + $0x40] sm:$0xff]
  %v274 = vld [vmem:[%s3 + $0x48] sm:$0xff]
  %v275 = vld [vmem:[%s3 + $0x50] sm:$0xff]
  %v276 = vld [vmem:[%s3 + $0x58] sm:$0xff]
  %v277 = vld [vmem:[%s3 + $0x60] sm:$0xff]
  %v278 = vld [vmem:[%s3 + $0x68] sm:$0xff]
  %v279 = vld [vmem:[%s3 + $0x70] sm:$0xff]
  %v280 = vld [vmem:[%s3 + $0x78] sm:$0xff]
  %v281 = vld [vmem:[%s3 + $0x80] sm:$0xff]
  %v282 = vld [vmem:[%s3 + $0x88] sm:$0xff]
  %v283 = vld [vmem:[%s3 + $0x90] sm:$0xff]
  %v284 = vld [vmem:[%s3 + $0x98] sm:$0xff]
  %v285 = vld [vmem:[%s3 + $0xa0] sm:$0xff]
  %v286 = vld [vmem:[%s3 + $0xa8] sm:$0xff]
  %v287 = vld [vmem:[%s3 + $0xb0] sm:$0xff]
  %v288 = vld [vmem:[%s3 + $0xb8] sm:$0xff]
  %v289 = vld [vmem:[%s3 + $0xc0] sm:$0xff]
  %v290 = vld [vmem:[%s3 + $0xc8] sm:$0xff]
  %v291 = vld [vmem:[%s3 + $0xd0] sm:$0xff]
  %v292 = vld [vmem:[%s3 + $0xd8] sm:$0xff]
  %v293 = vld [vmem:[%s3 + $0xe0] sm:$0xff]
  %v294 = vld [vmem:[%s3 + $0xe8] sm:$0xff]
  %v295 = vld [vmem:[%s3 + $0xf0] sm:$0xff]
  %v296 = vld [vmem:[%s3 + $0xf8] sm:$0xff]
  %v297 = vld [vmem:[%s3 + $0x100] sm:$0xff]
  %v298 = vld [vmem:[%s3 + $0x108] sm:$0xff]
  %v299 = vld [vmem:[%s3 + $0x110] sm:$0xff]
  %v300 = vld [vmem:[%s3 + $0x118] sm:$0xff]
  %v301 = vld [vmem:[%s3 + $0x120] sm:$0xff]
  %v302 = vld [vmem:[%s3 + $0x128] sm:$0xff]
  %v303 = vld [vmem:[%s3 + $0x130] sm:$0xff]
  %v304 = vld [vmem:[%s3 + $0x138] sm:$0xff]
  %v305 = vld [vmem:[%s3 + $0x140] sm:$0xff]
  %v306 = vld [vmem:[%s3 + $0x148] sm:$0xff]
  %v307 = vld [vmem:[%s3 + $0x150] sm:$0xff]
  %v308 = vld [vmem:[%s3 + $0x158] sm:$0xff]
  %v309 = vld [vmem:[%s3 + $0x160] sm:$0xff]
  %v310 = vld [vmem:[%s3 + $0x168] sm:$0xff]
  %v311 = vld [vmem:[%s3 + $0x170] sm:$0xff]
  %v312 = vld [vmem:[%s3 + $0x178] sm:$0xff]
  %v313 = vld [vmem:[%s3 + $0x180] sm:$0xff]
  %v314 = vld [vmem:[%s3 + $0x188] sm:$0xff]
  %v315 = vld [vmem:[%s3 + $0x190] sm:$0xff]
  %v316 = vld [vmem:[%s3 + $0x198] sm:$0xff]
  %v317 = vld [vmem:[%s3 + $0x1a0] sm:$0xff]
  %v318 = vld [vmem:[%s3 + $0x1a8] sm:$0xff]
  %v319 = vld [vmem:[%s3 + $0x1b0] sm:$0xff]
  %v320 = vld [vmem:[%s3 + $0x1b8] sm:$0xff]
  %v321 = vld [vmem:[%s3 + $0x1c0] sm:$0xff]
  %v322 = vld [vmem:[%s3 + $0x1c8] sm:$0xff]
  %v323 = vld [vmem:[%s3 + $0x1d0] sm:$0xff]
  %v324 = vld [vmem:[%s3 + $0x1d8] sm:$0xff]
  %v325 = vld [vmem:[%s3 + $0x1e0] sm:$0xff]
  %v326 = vld [vmem:[%s3 + $0x1e8] sm:$0xff]
  %v327 = vld [vmem:[%s3 + $0x1f0] sm:$0xff]
  %v328 = vld [vmem:[%s3 + $0x1f8] sm:$0xff]
  %v329 = vld [vmem:[%s3 + $0x200] sm:$0xff]
  %v330 = vld [vmem:[%s3 + $0x208] sm:$0xff]
  %v331 = vld [vmem:[%s3 + $0x210] sm:$0xff]
  %v332 = vld [vmem:[%s3 + $0x218] sm:$0xff]
  %v333 = vld [vmem:[%s3 + $0x220] sm:$0xff]
  %v334 = vld [vmem:[%s3 + $0x228] sm:$0xff]
  %v335 = vld [vmem:[%s3 + $0x230] sm:$0xff]
  %v336 = vld [vmem:[%s3 + $0x238] sm:$0xff]
  %v337 = vld [vmem:[%s3 + $0x240] sm:$0xff]
  %v338 = vld [vmem:[%s3 + $0x248] sm:$0xff]
  %v339 = vld [vmem:[%s3 + $0x250] sm:$0xff]
  %v340 = vld [vmem:[%s3 + $0x258] sm:$0xff]
  %v341 = vld [vmem:[%s3 + $0x260] sm:$0xff]
  %v342 = vld [vmem:[%s3 + $0x268] sm:$0xff]
  %v343 = vld [vmem:[%s3 + $0x270] sm:$0xff]
  %v344 = vld [vmem:[%s3 + $0x278] sm:$0xff]
  %v345 = vld [vmem:[%s3 + $0x280] sm:$0xff]
  %v346 = vld [vmem:[%s3 + $0x288] sm:$0xff]
  %v347 = vld [vmem:[%s3 + $0x290] sm:$0xff]
  %v348 = vld [vmem:[%s3 + $0x298] sm:$0xff]
  %v349 = vld [vmem:[%s3 + $0x2a0] sm:$0xff]
  %v350 = vld [vmem:[%s3 + $0x2a8] sm:$0xff]
  %v351 = vld [vmem:[%s3 + $0x2b0] sm:$0xff]
  %v352 = vld [vmem:[%s3 + $0x2b8] sm:$0xff]
  %v353 = vld [vmem:[%s3 + $0x2c0] sm:$0xff]
  %v354 = vld [vmem:[%s3 + $0x2c8] sm:$0xff]
  %v355 = vld [vmem:[%s3 + $0x2d0] sm:$0xff]
  %v356 = vld [vmem:[%s3 + $0x2d8] sm:$0xff]
  %v357 = vld [vmem:[%s3 + $0x2e0] sm:$0xff]
  %v358 = vld [vmem:[%s3 + $0x2e8] sm:$0xff]
  %v359 = vld [vmem:[%s3 + $0x2f0] sm:$0xff]
  %v360 = vld [vmem:[%s3 + $0x2f8] sm:$0xff]
  %v361 = vld [vmem:[%s3 + $0x300] sm:$0xff]
  %v362 = vld [vmem:[%s3 + $0x308] sm:$0xff]
  %v363 = vld [vmem:[%s3 + $0x310] sm:$0xff]
  %v364 = vld [vmem:[%s3 + $0x318] sm:$0xff]
  %v365 = vld [vmem:[%s3 + $0x320] sm:$0xff]
  %v366 = vld [vmem:[%s3 + $0x328] sm:$0xff]
  %v367 = vld [vmem:[%s3 + $0x330] sm:$0xff]
  %v368 = vld [vmem:[%s3 + $0x338] sm:$0xff]
  %v369 = vld [vmem:[%s3 + $0x340] sm:$0xff]
  %v370 = vld [vmem:[%s3 + $0x348] sm:$0xff]
  %v371 = vld [vmem:[%s3 + $0x350] sm:$0xff]
  %v372 = vld [vmem:[%s3 + $0x358] sm:$0xff]
  %v373 = vld [vmem:[%s3 + $0x360] sm:$0xff]
  %v374 = vld [vmem:[%s3 + $0x368] sm:$0xff]
  %v375 = vld [vmem:[%s3 + $0x370] sm:$0xff]
  %v376 = vld [vmem:[%s3 + $0x378] sm:$0xff]
  %v377 = vld [vmem:[%s3 + $0x380] sm:$0xff]
  %v378 = vld [vmem:[%s3 + $0x388] sm:$0xff]
  %v379 = vld [vmem:[%s3 + $0x390] sm:$0xff]
  %v380 = vld [vmem:[%s3 + $0x398] sm:$0xff]
  %v381 = vld [vmem:[%s3 + $0x3a0] sm:$0xff]
  %v382 = vld [vmem:[%s3 + $0x3a8] sm:$0xff]
  %v383 = vld [vmem:[%s3 + $0x3b0] sm:$0xff]
  %v384 = vld [vmem:[%s3 + $0x3b8] sm:$0xff]
  %v385 = vld [vmem:[%s3 + $0x3c0] sm:$0xff]
  %v386 = vld [vmem:[%s3 + $0x3c8] sm:$0xff]
  %v387 = vld [vmem:[%s3 + $0x3d0] sm:$0xff]
  %v388 = vld [vmem:[%s3 + $0x3d8] sm:$0xff]
  %v389 = vld [vmem:[%s3 + $0x3e0] sm:$0xff]
  %v390 = vld [vmem:[%s3 + $0x3e8] sm:$0xff]
  %v391 = vld [vmem:[%s3 + $0x3f0] sm:$0xff]
  %v392 = vld [vmem:[%s3 + $0x3f8] sm:$0xff]
  %v393 = vld [vmem:[%s3 + $0x400] sm:$0xff]
  %v394 = vld [vmem:[%s3 + $0x408] sm:$0xff]
  %v395 = vld [vmem:[%s3 + $0x410] sm:$0xff]
  %v396 = vld [vmem:[%s3 + $0x418] sm:$0xff]
  %v397 = vld [vmem:[%s3 + $0x420] sm:$0xff]
  %v398 = vld [vmem:[%s3 + $0x428] sm:$0xff]
  %v399 = vld [vmem:[%s3 + $0x430] sm:$0xff]
  %v400 = vld [vmem:[%s3 + $0x438] sm:$0xff]
  %v401 = vld [vmem:[%s3 + $0x440] sm:$0xff]
  %v402 = vld [vmem:[%s3 + $0x448] sm:$0xff]
  %v403 = vld [vmem:[%s3 + $0x450] sm:$0xff]
  %v404 = vld [vmem:[%s3 + $0x458] sm:$0xff]
  %v405 = vld [vmem:[%s3 + $0x460] sm:$0xff]
  %v406 = vld [vmem:[%s3 + $0x468] sm:$0xff]
  %v407 = vld [vmem:[%s3 + $0x470] sm:$0xff]
  %v408 = vld [vmem:[%s3 + $0x478] sm:$0xff]
  %v409 = vld [vmem:[%s3 + $0x480] sm:$0xff]
  %v410 = vld [vmem:[%s3 + $0x488] sm:$0xff]
  %v411 = vld [vmem:[%s3 + $0x490] sm:$0xff]
  %v412 = vld [vmem:[%s3 + $0x498] sm:$0xff]
  %v413 = vld [vmem:[%s3 + $0x4a0] sm:$0xff]
  %v414 = vld [vmem:[%s3 + $0x4a8] sm:$0xff]
  %v415 = vld [vmem:[%s3 + $0x4b0] sm:$0xff]
  %v416 = vld [vmem:[%s3 + $0x4b8] sm:$0xff]
  %v417 = vld [vmem:[%s3 + $0x4c0] sm:$0xff]
  %v418 = vld [vmem:[%s3 + $0x4c8] sm:$0xff]
  %v419 = vld [vmem:[%s3 + $0x4d0] sm:$0xff]
  %v420 = vld [vmem:[%s3 + $0x4d8] sm:$0xff]
  %v421 = vld [vmem:[%s3 + $0x4e0] sm:$0xff]
  %v422 = vld [vmem:[%s3 + $0x4e8] sm:$0xff]
  %v423 = vld [vmem:[%s3 + $0x4f0] sm:$0xff]
  %v424 = vld [vmem:[%s3 + $0x4f8] sm:$0xff]
  %v425 = vld [vmem:[%s3 + $0x500] sm:$0xff]
  %v426 = vld [vmem:[%s3 + $0x508] sm:$0xff]
  %v427 = vld [vmem:[%s3 + $0x510] sm:$0xff]
  %v428 = vld [vmem:[%s3 + $0x518] sm:$0xff]
  %v429 = vld [vmem:[%s3 + $0x520] sm:$0xff]
  %v430 = vld [vmem:[%s3 + $0x528] sm:$0xff]
  %v431 = vld [vmem:[%s3 + $0x530] sm:$0xff]
  %v432 = vld [vmem:[%s3 + $0x538] sm:$0xff]
  %v433 = vld [vmem:[%s3 + $0x540] sm:$0xff]
  %v434 = vld [vmem:[%s3 + $0x548] sm:$0xff]
  %v435 = vld [vmem:[%s3 + $0x550] sm:$0xff]
  %v436 = vld [vmem:[%s3 + $0x558] sm:$0xff]
  %v437 = vld [vmem:[%s3 + $0x560] sm:$0xff]
  %v438 = vld [vmem:[%s3 + $0x568] sm:$0xff]
  %v439 = vld [vmem:[%s3 + $0x570] sm:$0xff]
  %v440 = vld [vmem:[%s3 + $0x578] sm:$0xff]
  %v441 = vld [vmem:[%s3 + $0x580] sm:$0xff]
  %v442 = vld [vmem:[%s3 + $0x588] sm:$0xff]
  %v443 = vld [vmem:[%s3 + $0x590] sm:$0xff]
  %v444 = vld [vmem:[%s3 + $0x598] sm:$0xff]
  %v445 = vld [vmem:[%s3 + $0x5a0] sm:$0xff]
  %v446 = vld [vmem:[%s3 + $0x5a8] sm:$0xff]
  %v447 = vld [vmem:[%s3 + $0x5b0] sm:$0xff]
  %v448 = vld [vmem:[%s3 + $0x5b8] sm:$0xff]
  %v449 = vld [vmem:[%s3 + $0x5c0] sm:$0xff]
  %v450 = vld [vmem:[%s3 + $0x5c8] sm:$0xff]
  %v451 = vld [vmem:[%s3 + $0x5d0] sm:$0xff]
  %v452 = vld [vmem:[%s3 + $0x5d8] sm:$0xff]
  %v453 = vld [vmem:[%s3 + $0x5e0] sm:$0xff]
  %v454 = vld [vmem:[%s3 + $0x5e8] sm:$0xff]
  %v455 = vld [vmem:[%s3 + $0x5f0] sm:$0xff]
  %v456 = vld [vmem:[%s3 + $0x5f8] sm:$0xff]
  %v457 = vld [vmem:[%s3 + $0x600] sm:$0xff]
  %v458 = vld [vmem:[%s3 + $0x608] sm:$0xff]
  %v459 = vld [vmem:[%s3 + $0x610] sm:$0xff]
  %v460 = vld [vmem:[%s3 + $0x618] sm:$0xff]
  %v461 = vld [vmem:[%s3 + $0x620] sm:$0xff]
  %v462 = vld [vmem:[%s3 + $0x628] sm:$0xff]
  %v463 = vld [vmem:[%s3 + $0x630] sm:$0xff]
  %v464 = vld [vmem:[%s3 + $0x638] sm:$0xff]
  %v465 = vld [vmem:[%s3 + $0x640] sm:$0xff]
  %v466 = vld [vmem:[%s3 + $0x648] sm:$0xff]
  %v467 = vld [vmem:[%s3 + $0x650] sm:$0xff]
  %v468 = vld [vmem:[%s3 + $0x658] sm:$0xff]
  %v469 = vld [vmem:[%s3 + $0x660] sm:$0xff]
  %v470 = vld [vmem:[%s3 + $0x668] sm:$0xff]
  %v471 = vld [vmem:[%s3 + $0x670] sm:$0xff]
  %v472 = vld [vmem:[%s3 + $0x678] sm:$0xff]
  %v473 = vld [vmem:[%s3 + $0x680] sm:$0xff]
  %v474 = vld [vmem:[%s3 + $0x688] sm:$0xff]
  %v475 = vld [vmem:[%s3 + $0x690] sm:$0xff]
  %v476 = vld [vmem:[%s3 + $0x698] sm:$0xff]
  %v477 = vld [vmem:[%s3 + $0x6a0] sm:$0xff]
  %v478 = vld [vmem:[%s3 + $0x6a8] sm:$0xff]
  %v479 = vld [vmem:[%s3 + $0x6b0] sm:$0xff]
  %v480 = vld [vmem:[%s3 + $0x6b8] sm:$0xff]
  %v481 = vld [vmem:[%s3 + $0x6c0] sm:$0xff]
  %v482 = vld [vmem:[%s3 + $0x6c8] sm:$0xff]
  %v483 = vld [vmem:[%s3 + $0x6d0] sm:$0xff]
  %v484 = vld [vmem:[%s3 + $0x6d8] sm:$0xff]
  %v485 = vld [vmem:[%s3 + $0x6e0] sm:$0xff]
  %v486 = vld [vmem:[%s3 + $0x6e8] sm:$0xff]
  %v487 = vld [vmem:[%s3 + $0x6f0] sm:$0xff]
  %v488 = vld [vmem:[%s3 + $0x6f8] sm:$0xff]
  %v489 = vld [vmem:[%s3 + $0x700] sm:$0xff]
  %v490 = vld [vmem:[%s3 + $0x708] sm:$0xff]
  %v491 = vld [vmem:[%s3 + $0x710] sm:$0xff]
  %v492 = vld [vmem:[%s3 + $0x718] sm:$0xff]
  %v721 = vunpack.c.l.b16 %v27
  %v722 = vunpack.c.l.b16 %v28
  %v723 = vunpack.c.l.b16 %v29
  %v724 = vunpack.c.l.b16 %v30
  %v725 = vunpack.c.l.b16 %v31
  %v726 = vunpack.c.l.b16 %v32
  %v727 = vunpack.c.l.b16 %v33
  %v728 = vunpack.c.l.b16 %v34
  %v729 = vunpack.c.l.b16 %v35
  %v730 = vunpack.c.l.b16 %v36
  %v731 = vunpack.c.l.b16 %v37
  %v732 = vunpack.c.l.b16 %v38
  %v733 = vunpack.c.l.b16 %v39
  %v734 = vunpack.c.l.b16 %v40
  %v735 = vunpack.c.l.b16 %v41
  %v736 = vunpack.c.l.b16 %v42
  %v737 = vunpack.c.l.b16 %v43
  %v738 = vunpack.c.l.b16 %v44
  %v739 = vunpack.c.l.b16 %v45
  %v740 = vunpack.c.l.b16 %v46
  %v741 = vunpack.c.l.b16 %v47
  %v742 = vunpack.c.l.b16 %v48
  %v743 = vunpack.c.l.b16 %v49
  %v744 = vunpack.c.l.b16 %v50
  %v745 = vunpack.c.l.b16 %v51
  %v746 = vunpack.c.l.b16 %v52
  %v747 = vunpack.c.l.b16 %v53
  %v748 = vunpack.c.l.b16 %v54
  %v749 = vunpack.c.l.b16 %v55
  %v750 = vunpack.c.l.b16 %v56
  %v751 = vunpack.c.l.b16 %v57
  %v752 = vunpack.c.l.b16 %v58
  %v753 = vunpack.c.l.b16 %v59
  %v754 = vunpack.c.l.b16 %v60
  %v755 = vunpack.c.l.b16 %v61
  %v756 = vunpack.c.l.b16 %v62
  %v757 = vunpack.c.l.b16 %v63
  %v758 = vunpack.c.l.b16 %v64
  %v759 = vunpack.c.l.b16 %v65
  %v760 = vunpack.c.l.b16 %v66
  %v761 = vunpack.c.l.b16 %v67
  %v762 = vunpack.c.l.b16 %v68
  %v763 = vunpack.c.l.b16 %v69
  %v764 = vunpack.c.l.b16 %v70
  %v765 = vunpack.c.l.b16 %v71
  %v766 = vunpack.c.l.b16 %v72
  %v767 = vunpack.c.l.b16 %v73
  %v768 = vunpack.c.l.b16 %v74
  %v769 = vunpack.c.l.b16 %v75
  %v770 = vunpack.c.l.b16 %v76
  %v771 = vunpack.c.l.b16 %v77
  %v772 = vunpack.c.l.b16 %v78
  %v773 = vunpack.c.l.b16 %v79
  %v774 = vunpack.c.l.b16 %v80
  %v775 = vunpack.c.l.b16 %v81
  %v776 = vunpack.c.l.b16 %v82
  %v777 = vunpack.c.l.b16 %v83
  %v778 = vunpack.c.l.b16 %v84
  %v779 = vunpack.c.l.b16 %v85
  %v780 = vunpack.c.l.b16 %v86
  %v781 = vunpack.c.l.b16 %v87
  %v782 = vunpack.c.l.b16 %v88
  %v783 = vunpack.c.l.b16 %v89
  %v784 = vunpack.c.l.b16 %v90
  %v785 = vunpack.c.l.b16 %v91
  %v786 = vunpack.c.l.b16 %v92
  %v787 = vunpack.c.l.b16 %v93
  %v788 = vunpack.c.l.b16 %v94
  %v789 = vunpack.c.l.b16 %v95
  %v790 = vunpack.c.l.b16 %v96
  %v791 = vunpack.c.l.b16 %v97
  %v792 = vunpack.c.l.b16 %v98
  %v793 = vunpack.c.l.b16 %v99
  %v794 = vunpack.c.l.b16 %v100
  %v795 = vunpack.c.l.b16 %v101
  %v796 = vunpack.c.l.b16 %v102
  %v797 = vunpack.c.l.b16 %v103
  %v798 = vunpack.c.l.b16 %v104
  %v799 = vunpack.c.l.b16 %v105
  %v800 = vunpack.c.l.b16 %v106
  %v801 = vunpack.c.l.b16 %v107
  %v802 = vunpack.c.l.b16 %v108
  %v803 = vunpack.c.l.b16 %v109
  %v804 = vunpack.c.l.b16 %v110
  %v805 = vunpack.c.l.b16 %v111
  %v806 = vunpack.c.l.b16 %v112
  %v807 = vunpack.c.l.b16 %v113
  %v808 = vunpack.c.l.b16 %v114
  %v809 = vunpack.c.l.b16 %v115
  %v810 = vunpack.c.l.b16 %v116
  %v811 = vunpack.c.l.b16 %v117
  %v812 = vunpack.c.l.b16 %v118
  %v813 = vunpack.c.l.b16 %v119
  %v814 = vunpack.c.l.b16 %v120
  %v815 = vunpack.c.l.b16 %v121
  %v816 = vunpack.c.l.b16 %v122
  %v817 = vunpack.c.l.b16 %v123
  %v818 = vunpack.c.l.b16 %v124
  %v819 = vunpack.c.l.b16 %v125
  %v820 = vunpack.c.l.b16 %v126
  %v821 = vunpack.c.l.b16 %v127
  %v822 = vunpack.c.l.b16 %v128
  %v823 = vunpack.c.l.b16 %v129
  %v824 = vunpack.c.l.b16 %v130
  %v825 = vunpack.c.l.b16 %v131
  %v826 = vunpack.c.l.b16 %v132
  %v827 = vunpack.c.l.b16 %v133
  %v828 = vunpack.c.l.b16 %v134
  %v829 = vunpack.c.l.b16 %v135
  %v830 = vunpack.c.l.b16 %v136
  %v831 = vunpack.c.l.b16 %v137
  %v832 = vunpack.c.l.b16 %v138
  %v833 = vunpack.c.l.b16 %v139
  %v834 = vunpack.c.l.b16 %v140
  %v835 = vunpack.c.l.b16 %v141
  %v836 = vunpack.c.l.b16 %v142
  %v837 = vunpack.c.l.b16 %v143
  %v838 = vunpack.c.l.b16 %v144
  %v839 = vunpack.c.l.b16 %v145
  %v840 = vunpack.c.l.b16 %v146
  %v841 = vunpack.c.l.b16 %v147
  %v842 = vunpack.c.l.b16 %v148
  %v843 = vunpack.c.l.b16 %v149
  %v844 = vunpack.c.l.b16 %v150
  %v845 = vunpack.c.l.b16 %v151
  %v846 = vunpack.c.l.b16 %v152
  %v847 = vunpack.c.l.b16 %v153
  %v848 = vunpack.c.l.b16 %v154
  %v849 = vunpack.c.l.b16 %v155
  %v850 = vunpack.c.l.b16 %v156
  %v851 = vunpack.c.l.b16 %v157
  %v852 = vunpack.c.l.b16 %v158
  %v853 = vunpack.c.l.b16 %v159
  %v854 = vunpack.c.l.b16 %v160
  %v855 = vunpack.c.l.b16 %v161
  %v856 = vunpack.c.l.b16 %v162
  %v857 = vunpack.c.l.b16 %v163
  %v858 = vunpack.c.l.b16 %v164
  %v859 = vunpack.c.l.b16 %v165
  %v860 = vunpack.c.l.b16 %v166
  %v861 = vunpack.c.l.b16 %v167
  %v862 = vunpack.c.l.b16 %v168
  %v863 = vunpack.c.l.b16 %v169
  %v864 = vunpack.c.l.b16 %v170
  %v865 = vunpack.c.l.b16 %v171
  %v866 = vunpack.c.l.b16 %v172
  %v867 = vunpack.c.l.b16 %v173
  %v868 = vunpack.c.l.b16 %v174
  %v869 = vunpack.c.l.b16 %v175
  %v870 = vunpack.c.l.b16 %v176
  %v871 = vunpack.c.l.b16 %v177
  %v872 = vunpack.c.l.b16 %v178
  %v873 = vunpack.c.l.b16 %v179
  %v874 = vunpack.c.l.b16 %v180
  %v875 = vunpack.c.l.b16 %v181
  %v876 = vunpack.c.l.b16 %v182
  %v877 = vunpack.c.l.b16 %v183
  %v878 = vunpack.c.l.b16 %v184
  %v879 = vunpack.c.l.b16 %v185
  %v880 = vunpack.c.l.b16 %v186
  %v881 = vunpack.c.l.b16 %v187
  %v882 = vunpack.c.l.b16 %v188
  %v883 = vunpack.c.l.b16 %v189
  %v884 = vunpack.c.l.b16 %v190
  %v885 = vunpack.c.l.b16 %v191
  %v886 = vunpack.c.l.b16 %v192
  %v887 = vunpack.c.l.b16 %v193
  %v888 = vunpack.c.l.b16 %v194
  %v889 = vunpack.c.l.b16 %v195
  %v890 = vunpack.c.l.b16 %v196
  %v891 = vunpack.c.l.b16 %v197
  %v892 = vunpack.c.l.b16 %v198
  %v893 = vunpack.c.l.b16 %v199
  %v894 = vunpack.c.l.b16 %v200
  %v895 = vunpack.c.l.b16 %v201
  %v896 = vunpack.c.l.b16 %v202
  %v897 = vunpack.c.l.b16 %v203
  %v898 = vunpack.c.l.b16 %v204
  %v899 = vunpack.c.l.b16 %v205
  %v900 = vunpack.c.l.b16 %v206
  %v901 = vunpack.c.l.b16 %v207
  %v902 = vunpack.c.l.b16 %v208
  %v903 = vunpack.c.l.b16 %v209
  %v904 = vunpack.c.l.b16 %v210
  %v905 = vunpack.c.l.b16 %v211
  %v906 = vunpack.c.l.b16 %v212
  %v907 = vunpack.c.l.b16 %v213
  %v908 = vunpack.c.l.b16 %v214
  %v909 = vunpack.c.l.b16 %v215
  %v910 = vunpack.c.l.b16 %v216
  %v911 = vunpack.c.l.b16 %v217
  %v912 = vunpack.c.l.b16 %v218
  %v913 = vunpack.c.l.b16 %v219
  %v914 = vunpack.c.l.b16 %v220
  %v915 = vunpack.c.l.b16 %v221
  %v916 = vunpack.c.l.b16 %v222
  %v917 = vunpack.c.l.b16 %v223
  %v918 = vunpack.c.l.b16 %v224
  %v919 = vunpack.c.l.b16 %v225
  %v920 = vunpack.c.l.b16 %v226
  %v921 = vunpack.c.l.b16 %v227
  %v922 = vunpack.c.l.b16 %v228
  %v923 = vunpack.c.l.b16 %v229
  %v924 = vunpack.c.l.b16 %v230
  %v925 = vunpack.c.l.b16 %v231
  %v926 = vunpack.c.l.b16 %v232
  %v927 = vunpack.c.l.b16 %v233
  %v928 = vunpack.c.l.b16 %v234
  %v929 = vunpack.c.l.b16 %v235
  %v930 = vunpack.c.l.b16 %v236
  %v931 = vunpack.c.l.b16 %v237
  %v932 = vunpack.c.l.b16 %v238
  %v933 = vunpack.c.l.b16 %v239
  %v934 = vunpack.c.l.b16 %v240
  %v935 = vunpack.c.l.b16 %v241
  %v936 = vunpack.c.l.b16 %v242
  %v937 = vunpack.c.l.b16 %v243
  %v938 = vunpack.c.l.b16 %v244
  %v939 = vunpack.c.l.b16 %v245
  %v940 = vunpack.c.l.b16 %v246
  %v941 = vunpack.c.l.b16 %v247
  %v942 = vunpack.c.l.b16 %v248
  %v943 = vunpack.c.l.b16 %v249
  %v944 = vunpack.c.l.b16 %v250
  %v945 = vunpack.c.l.b16 %v251
  %v946 = vunpack.c.l.b16 %v252
  %v947 = vunpack.c.l.b16 %v253
  %v948 = vunpack.c.l.b16 %v254
  %v949 = vpack.c.b16 %v722, %v721
  %v950 = vpack.c.b16 %v724, %v723
  %v951 = vpack.c.b16 %v726, %v725
  %v952 = vpack.c.b16 %v728, %v727
  %v953 = vpack.c.b16 %v730, %v729
  %v954 = vpack.c.b16 %v732, %v731
  %v955 = vpack.c.b16 %v734, %v733
  %v956 = vpack.c.b16 %v736, %v735
  %v957 = vpack.c.b16 %v738, %v737
  %v958 = vpack.c.b16 %v740, %v739
  %v959 = vpack.c.b16 %v742, %v741
  %v960 = vpack.c.b16 %v744, %v743
  %v961 = vpack.c.b16 %v746, %v745
  %v962 = vpack.c.b16 %v748, %v747
  %v963 = vpack.c.b16 %v750, %v749
  %v964 = vpack.c.b16 %v752, %v751
  %v965 = vpack.c.b16 %v754, %v753
  %v966 = vpack.c.b16 %v756, %v755
  %v967 = vpack.c.b16 %v758, %v757
  %v968 = vpack.c.b16 %v760, %v759
  %v969 = vpack.c.b16 %v762, %v761
  %v970 = vpack.c.b16 %v764, %v763
  %v971 = vpack.c.b16 %v766, %v765
  %v972 = vpack.c.b16 %v768, %v767
  %v973 = vpack.c.b16 %v770, %v769
  %v974 = vpack.c.b16 %v772, %v771
  %v975 = vpack.c.b16 %v774, %v773
  %v976 = vpack.c.b16 %v776, %v775
  %v977 = vpack.c.b16 %v778, %v777
  %v978 = vpack.c.b16 %v780, %v779
  %v979 = vpack.c.b16 %v782, %v781
  %v980 = vpack.c.b16 %v784, %v783
  %v981 = vpack.c.b16 %v786, %v785
  %v982 = vpack.c.b16 %v788, %v787
  %v983 = vpack.c.b16 %v790, %v789
  %v984 = vpack.c.b16 %v792, %v791
  %v985 = vpack.c.b16 %v794, %v793
  %v986 = vpack.c.b16 %v796, %v795
  %v987 = vpack.c.b16 %v798, %v797
  %v988 = vpack.c.b16 %v800, %v799
  %v989 = vpack.c.b16 %v802, %v801
  %v990 = vpack.c.b16 %v804, %v803
  %v991 = vpack.c.b16 %v806, %v805
  %v992 = vpack.c.b16 %v808, %v807
  %v993 = vpack.c.b16 %v810, %v809
  %v994 = vpack.c.b16 %v812, %v811
  %v995 = vpack.c.b16 %v814, %v813
  %v996 = vpack.c.b16 %v816, %v815
  %v997 = vpack.c.b16 %v818, %v817
  %v998 = vpack.c.b16 %v820, %v819
  %v999 = vpack.c.b16 %v822, %v821
  %v1000 = vpack.c.b16 %v824, %v823
  %v1001 = vpack.c.b16 %v826, %v825
  %v1002 = vpack.c.b16 %v828, %v827
  %v1003 = vpack.c.b16 %v830, %v829
  %v1004 = vpack.c.b16 %v832, %v831
  %v1005 = vpack.c.b16 %v834, %v833
  %v1006 = vpack.c.b16 %v836, %v835
  %v1007 = vpack.c.b16 %v838, %v837
  %v1008 = vpack.c.b16 %v840, %v839
  %v1009 = vpack.c.b16 %v842, %v841
  %v1010 = vpack.c.b16 %v844, %v843
  %v1011 = vpack.c.b16 %v846, %v845
  %v1012 = vpack.c.b16 %v848, %v847
  %v1013 = vpack.c.b16 %v850, %v849
  %v1014 = vpack.c.b16 %v852, %v851
  %v1015 = vpack.c.b16 %v854, %v853
  %v1016 = vpack.c.b16 %v856, %v855
  %v1017 = vpack.c.b16 %v858, %v857
  %v1018 = vpack.c.b16 %v860, %v859
  %v1019 = vpack.c.b16 %v862, %v861
  %v1020 = vpack.c.b16 %v864, %v863
  %v1021 = vpack.c.b16 %v866, %v865
  %v1022 = vpack.c.b16 %v868, %v867
  %v1023 = vpack.c.b16 %v870, %v869
  %v1024 = vpack.c.b16 %v872, %v871
  %v1025 = vpack.c.b16 %v874, %v873
  %v1026 = vpack.c.b16 %v876, %v875
  %v1027 = vpack.c.b16 %v878, %v877
  %v1028 = vpack.c.b16 %v880, %v879
  %v1029 = vpack.c.b16 %v882, %v881
  %v1030 = vpack.c.b16 %v884, %v883
  %v1031 = vpack.c.b16 %v886, %v885
  %v1032 = vpack.c.b16 %v888, %v887
  %v1033 = vpack.c.b16 %v890, %v889
  %v1034 = vpack.c.b16 %v892, %v891
  %v1035 = vpack.c.b16 %v894, %v893
  %v1036 = vpack.c.b16 %v896, %v895
  %v1037 = vpack.c.b16 %v898, %v897
  %v1038 = vpack.c.b16 %v900, %v899
  %v1039 = vpack.c.b16 %v902, %v901
  %v1040 = vpack.c.b16 %v904, %v903
  %v1041 = vpack.c.b16 %v906, %v905
  %v1042 = vpack.c.b16 %v908, %v907
  %v1043 = vpack.c.b16 %v910, %v909
  %v1044 = vpack.c.b16 %v912, %v911
  %v1045 = vpack.c.b16 %v914, %v913
  %v1046 = vpack.c.b16 %v916, %v915
  %v1047 = vpack.c.b16 %v918, %v917
  %v1048 = vpack.c.b16 %v920, %v919
  %v1049 = vpack.c.b16 %v922, %v921
  %v1050 = vpack.c.b16 %v924, %v923
  %v1051 = vpack.c.b16 %v926, %v925
  %v1052 = vpack.c.b16 %v928, %v927
  %v1053 = vpack.c.b16 %v930, %v929
  %v1054 = vpack.c.b16 %v932, %v931
  %v1055 = vpack.c.b16 %v934, %v933
  %v1056 = vpack.c.b16 %v936, %v935
  %v1057 = vpack.c.b16 %v938, %v937
  %v1058 = vpack.c.b16 %v940, %v939
  %v1059 = vpack.c.b16 %v942, %v941
  %v1060 = vpack.c.b16 %v944, %v943
  %v1061 = vpack.c.b16 %v946, %v945
  %v1062 = vpack.c.b16 %v948, %v947
  %v1073 = vunpack.c.l.b16 %v255
  %v1074 = vunpack.c.l.b16 %v256
  %v1075 = vunpack.c.l.b16 %v257
  %v1076 = vunpack.c.l.b16 %v258
  %v1077 = vunpack.c.l.b16 %v259
  %v1078 = vunpack.c.l.b16 %v260
  %v1079 = vunpack.c.l.b16 %v261
  %v1080 = vunpack.c.l.b16 %v262
  %v1081 = vunpack.c.l.b16 %v263
  %v1082 = vunpack.c.l.b16 %v264
  %v1083 = vpack.c.b16 %v1074, %v1073
  %v1084 = vpack.c.b16 %v1076, %v1075
  %v1085 = vpack.c.b16 %v1078, %v1077
  %v1086 = vpack.c.b16 %v1080, %v1079
  %v1087 = vpack.c.b16 %v1082, %v1081
  %vm1092 = vcmask 621568
  %v1094 = vsel %vm1092, %v949, 0
  %v1097 = vsel %vm1092, %v950, 0
  %v1100 = vsel %vm1092, %v951, 0
  %v1103 = vsel %vm1092, %v952, 0
  %v1106 = vsel %vm1092, %v953, 0
  %v1109 = vsel %vm1092, %v954, 0
  %v1112 = vsel %vm1092, %v955, 0
  %v1115 = vsel %vm1092, %v956, 0
  %v1118 = vsel %vm1092, %v957, 0
  %v1121 = vsel %vm1092, %v958, 0
  %v1124 = vsel %vm1092, %v959, 0
  %v1127 = vsel %vm1092, %v960, 0
  %v1130 = vsel %vm1092, %v961, 0
  %v1133 = vsel %vm1092, %v962, 0
  %v1136 = vsel %vm1092, %v963, 0
  %v1139 = vsel %vm1092, %v964, 0
  %v1142 = vsel %vm1092, %v965, 0
  %v1145 = vsel %vm1092, %v966, 0
  %v1148 = vsel %vm1092, %v967, 0
  %v1151 = vsel %vm1092, %v968, 0
  %v1154 = vsel %vm1092, %v969, 0
  %v1157 = vsel %vm1092, %v970, 0
  %v1160 = vsel %vm1092, %v971, 0
  %v1163 = vsel %vm1092, %v972, 0
  %v1166 = vsel %vm1092, %v973, 0
  %v1169 = vsel %vm1092, %v974, 0
  %v1172 = vsel %vm1092, %v975, 0
  %v1175 = vsel %vm1092, %v976, 0
  %v1178 = vsel %vm1092, %v977, 0
  %v1181 = vsel %vm1092, %v978, 0
  %v1184 = vsel %vm1092, %v979, 0
  %v1187 = vsel %vm1092, %v980, 0
  %v1190 = vsel %vm1092, %v981, 0
  %v1193 = vsel %vm1092, %v982, 0
  %v1196 = vsel %vm1092, %v983, 0
  %v1199 = vsel %vm1092, %v984, 0
  %v1202 = vsel %vm1092, %v985, 0
  %v1205 = vsel %vm1092, %v986, 0
  %v1208 = vsel %vm1092, %v987, 0
  %v1211 = vsel %vm1092, %v988, 0
  %v1214 = vsel %vm1092, %v989, 0
  %v1217 = vsel %vm1092, %v990, 0
  %v1220 = vsel %vm1092, %v991, 0
  %v1223 = vsel %vm1092, %v992, 0
  %v1226 = vsel %vm1092, %v993, 0
  %v1229 = vsel %vm1092, %v994, 0
  %v1232 = vsel %vm1092, %v995, 0
  %v1235 = vsel %vm1092, %v996, 0
  %v1238 = vsel %vm1092, %v997, 0
  %v1241 = vsel %vm1092, %v998, 0
  %v1244 = vsel %vm1092, %v999, 0
  %v1247 = vsel %vm1092, %v1000, 0
  %v1250 = vsel %vm1092, %v1001, 0
  %v1253 = vsel %vm1092, %v1002, 0
  %v1256 = vsel %vm1092, %v1003, 0
  %v1259 = vsel %vm1092, %v1004, 0
  %v1262 = vsel %vm1092, %v1005, 0
  %v1265 = vsel %vm1092, %v1006, 0
  %v1268 = vsel %vm1092, %v1007, 0
  %v1271 = vsel %vm1092, %v1008, 0
  %v1274 = vsel %vm1092, %v1009, 0
  %v1277 = vsel %vm1092, %v1010, 0
  %v1280 = vsel %vm1092, %v1011, 0
  %v1283 = vsel %vm1092, %v1012, 0
  %v1286 = vsel %vm1092, %v1013, 0
  %v1289 = vsel %vm1092, %v1014, 0
  %v1292 = vsel %vm1092, %v1015, 0
  %v1295 = vsel %vm1092, %v1016, 0
  %v1298 = vsel %vm1092, %v1017, 0
  %v1301 = vsel %vm1092, %v1018, 0
  %v1304 = vsel %vm1092, %v1019, 0
  %v1307 = vsel %vm1092, %v1020, 0
  %v1310 = vsel %vm1092, %v1021, 0
  %v1313 = vsel %vm1092, %v1022, 0
  %v1316 = vsel %vm1092, %v1023, 0
  %v1319 = vsel %vm1092, %v1024, 0
  %v1322 = vsel %vm1092, %v1025, 0
  %v1325 = vsel %vm1092, %v1026, 0
  %v1328 = vsel %vm1092, %v1027, 0
  %v1331 = vsel %vm1092, %v1028, 0
  %v1334 = vsel %vm1092, %v1029, 0
  %v1337 = vsel %vm1092, %v1030, 0
  %v1340 = vsel %vm1092, %v1031, 0
  %v1343 = vsel %vm1092, %v1032, 0
  %v1346 = vsel %vm1092, %v1033, 0
  %v1349 = vsel %vm1092, %v1034, 0
  %v1352 = vsel %vm1092, %v1035, 0
  %v1355 = vsel %vm1092, %v1036, 0
  %v1358 = vsel %vm1092, %v1037, 0
  %v1361 = vsel %vm1092, %v1038, 0
  %v1364 = vsel %vm1092, %v1039, 0
  %v1367 = vsel %vm1092, %v1040, 0
  %v1370 = vsel %vm1092, %v1041, 0
  %v1373 = vsel %vm1092, %v1042, 0
  %v1376 = vsel %vm1092, %v1043, 0
  %v1379 = vsel %vm1092, %v1044, 0
  %v1382 = vsel %vm1092, %v1045, 0
  %v1385 = vsel %vm1092, %v1046, 0
  %v1388 = vsel %vm1092, %v1047, 0
  %v1391 = vsel %vm1092, %v1048, 0
  %v1394 = vsel %vm1092, %v1049, 0
  %v1397 = vsel %vm1092, %v1050, 0
  %v1400 = vsel %vm1092, %v1051, 0
  %v1403 = vsel %vm1092, %v1052, 0
  %v1406 = vsel %vm1092, %v1053, 0
  %v1409 = vsel %vm1092, %v1054, 0
  %v1412 = vsel %vm1092, %v1055, 0
  %v1415 = vsel %vm1092, %v1056, 0
  %v1418 = vsel %vm1092, %v1057, 0
  %v1421 = vsel %vm1092, %v1058, 0
  %v1424 = vsel %vm1092, %v1059, 0
  %v1427 = vsel %vm1092, %v1060, 0
  %v1430 = vsel %vm1092, %v1061, 0
  %v1433 = vsel %vm1092, %v1062, 0
  %vm1435 = vcmask 1045504
  %v1437 = vsel %vm1435, %v1087, 0
  %1439 = vmatprep.subr.bf16.mxu0 0
  %1440 = vmatpush1.bf16.msra.mxu0 %v1083
  %1441 = vmatprep.subr.bf16.mxu0 0
  %1442 = vmatpush1.bf16.msra.mxu0 %v1084
  %1443 = vmatprep.subr.bf16.mxu0 0
  %1444 = vmatpush1.bf16.msra.mxu0 %v1085
  %1445 = vmatprep.subr.bf16.mxu0 0
  %1446 = vmatpush1.bf16.msra.mxu0 %v1086
  %1447 = vmatprep.subr.bf16.mxu0 0
  %1448 = vmatpush1.bf16.msra.mxu0 %v1437
  %1449 = vmatprep.subr.bf16.mxu0 0
  %1450 = vmatpush1.bf16.msra.mxu0 0
  %1451 = vmatprep.subr.bf16.mxu0 0
  %1452 = vmatpush1.bf16.msra.mxu0 0
  %1453 = vmatprep.subr.bf16.mxu0 0
  %1454 = vmatpush1.bf16.msra.mxu0 0
  %1455 = vmatprep.subr.bf16.mxu0 0
  %1456 = vmatpush1.bf16.msra.mxu0 0
  %1457 = vmatprep.subr.bf16.mxu0 0
  %1458 = vmatpush1.bf16.msra.mxu0 0
  %1459 = vmatprep.subr.bf16.mxu0 0
  %1460 = vmatpush1.bf16.msra.mxu0 0
  %1461 = vmatprep.subr.bf16.mxu0 0
  %1462 = vmatpush1.bf16.msra.mxu0 0
  %1463 = vmatprep.subr.bf16.mxu0 0
  %1464 = vmatpush1.bf16.msra.mxu0 0
  %1465 = vmatprep.subr.bf16.mxu0 0
  %1466 = vmatpush1.bf16.msra.mxu0 0
  %1467 = vmatprep.subr.bf16.mxu0 0
  %1468 = vmatpush1.bf16.msra.mxu0 0
  %1469 = vmatprep.subr.bf16.mxu0 0
  %1470 = vmatpush1.bf16.msra.mxu0 0
  %1471 = vmatprep.mubr.bf16.mxu0 0
  %1472 = vmatmul.mubr.bf16.gmra.mrb[0].mxu0 %v1094
  %v1473 = vpop.f32.mrb[0].mxu0
  %v1474 = vadd.f32 %v265, %v1473
  %v1475 = vpop.f32.mrb[0].mxu0
  %v1476 = vpop.f32.mrb[0].mxu0
  %v1477 = vadd.f32 %v266, %v1476
  %v1478 = vpop.f32.mrb[0].mxu0
  %1479 = vmatprep.mubr.bf16.mxu0 0
  %1480 = vmatmul.mubr.bf16.gmra.mrb[0].mxu0 %v1097
  %v1481 = vpop.f32.mrb[0].mxu0
  %v1482 = vadd.f32 %v267, %v1481
  %v1483 = vpop.f32.mrb[0].mxu0
  %v1484 = vpop.f32.mrb[0].mxu0
  %v1485 = vadd.f32 %v268, %v1484
  %v1486 = vpop.f32.mrb[0].mxu0
  %1487 = vmatprep.mubr.bf16.mxu0 0
  %1488 = vmatmul.mubr.bf16.gmra.mrb[0].mxu0 %v1100
  %v1489 = vpop.f32.mrb[0].mxu0
  %v1490 = vadd.f32 %v269, %v1489
  %v1491 = vpop.f32.mrb[0].mxu0
  %v1492 = vpop.f32.mrb[0].mxu0
  %v1493 = vadd.f32 %v270, %v1492
  %v1494 = vpop.f32.mrb[0].mxu0
  %1495 = vmatprep.mubr.bf16.mxu0 0
  %1496 = vmatmul.mubr.bf16.gmra.mrb[0].mxu0 %v1103
  %v1497 = vpop.f32.mrb[0].mxu0
  %v1498 = vadd.f32 %v271, %v1497
  %v1499 = vpop.f32.mrb[0].mxu0
  %v1500 = vpop.f32.mrb[0].mxu0
  %v1501 = vadd.f32 %v272, %v1500
  %v1502 = vpop.f32.mrb[0].mxu0
  %1503 = vmatprep.mubr.bf16.mxu0 0
  %1504 = vmatmul.mubr.bf16.gmra.mrb[0].mxu0 %v1106
  %v1505 = vpop.f32.mrb[0].mxu0
  %v1506 = vadd.f32 %v273, %v1505
  %v1507 = vpop.f32.mrb[0].mxu0
  %v1508 = vpop.f32.mrb[0].mxu0
  %v1509 = vadd.f32 %v274, %v1508
  %v1510 = vpop.f32.mrb[0].mxu0
  %1511 = vmatprep.mubr.bf16.mxu0 0
  %1512 = vmatmul.mubr.bf16.gmra.mrb[0].mxu0 %v1109
  %v1513 = vpop.f32.mrb[0].mxu0
  %v1514 = vadd.f32 %v275, %v1513
  %v1515 = vpop.f32.mrb[0].mxu0
  %v1516 = vpop.f32.mrb[0].mxu0
  %v1517 = vadd.f32 %v276, %v1516
  %v1518 = vpop.f32.mrb[0].mxu0
  %1519 = vmatprep.mubr.bf16.mxu0 0
  %1520 = vmatmul.mubr.bf16.gmra.mrb[0].mxu0 %v1112
  %v1521 = vpop.f32.mrb[0].mxu0
  %v1522 = vadd.f32 %v277, %v1521
  %v1523 = vpop.f32.mrb[0].mxu0
  %v1524 = vpop.f32.mrb[0].mxu0
  %v1525 = vadd.f32 %v278, %v1524
  %v1526 = vpop.f32.mrb[0].mxu0
  %1527 = vmatprep.mubr.bf16.mxu0 0
  %1528 = vmatmul.mubr.bf16.gmra.mrb[0].mxu0 %v1115
  %v1529 = vpop.f32.mrb[0].mxu0
  %v1530 = vadd.f32 %v279, %v1529
  %v1531 = vpop.f32.mrb[0].mxu0
  %v1532 = vpop.f32.mrb[0].mxu0
  %v1533 = vadd.f32 %v280, %v1532
  %v1534 = vpop.f32.mrb[0].mxu0
  %1535 = vmatprep.mubr.bf16.mxu0 0
  %1536 = vmatmul.mubr.bf16.gmra.mrb[0].mxu0 %v1118
  %v1537 = vpop.f32.mrb[0].mxu0
  %v1538 = vadd.f32 %v281, %v1537
  %v1539 = vpop.f32.mrb[0].mxu0
  %v1540 = vpop.f32.mrb[0].mxu0
  %v1541 = vadd.f32 %v282, %v1540
  %v1542 = vpop.f32.mrb[0].mxu0
  %1543 = vmatprep.mubr.bf16.mxu0 0
  %1544 = vmatmul.mubr.bf16.gmra.mrb[0].mxu0 %v1121
  %v1545 = vpop.f32.mrb[0].mxu0
  %v1546 = vadd.f32 %v283, %v1545
  %v1547 = vpop.f32.mrb[0].mxu0
  %v1548 = vpop.f32.mrb[0].mxu0
  %v1549 = vadd.f32 %v284, %v1548
  %v1550 = vpop.f32.mrb[0].mxu0
  %1551 = vmatprep.mubr.bf16.mxu0 0
  %1552 = vmatmul.mubr.bf16.gmra.mrb[0].mxu0 %v1124
  %v1553 = vpop.f32.mrb[0].mxu0
  %v1554 = vadd.f32 %v285, %v1553
  %v1555 = vpop.f32.mrb[0].mxu0
  %v1556 = vpop.f32.mrb[0].mxu0
  %v1557 = vadd.f32 %v286, %v1556
  %v1558 = vpop.f32.mrb[0].mxu0
  %1559 = vmatprep.mubr.bf16.mxu0 0
  %1560 = vmatmul.mubr.bf16.gmra.mrb[0].mxu0 %v1127
  %v1561 = vpop.f32.mrb[0].mxu0
  %v1562 = vadd.f32 %v287, %v1561
  %v1563 = vpop.f32.mrb[0].mxu0
  %v1564 = vpop.f32.mrb[0].mxu0
  %v1565 = vadd.f32 %v288, %v1564
  %v1566 = vpop.f32.mrb[0].mxu0
  %1567 = vmatprep.mubr.bf16.mxu0 0
  %1568 = vmatmul.mubr.bf16.gmra.mrb[0].mxu0 %v1130
  %v1569 = vpop.f32.mrb[0].mxu0
  %v1570 = vadd.f32 %v289, %v1569
  %v1571 = vpop.f32.mrb[0].mxu0
  %v1572 = vpop.f32.mrb[0].mxu0
  %v1573 = vadd.f32 %v290, %v1572
  %v1574 = vpop.f32.mrb[0].mxu0
  %1575 = vmatprep.mubr.bf16.mxu0 0
  %1576 = vmatmul.mubr.bf16.gmra.mrb[0].mxu0 %v1133
  %v1577 = vpop.f32.mrb[0].mxu0
  %v1578 = vadd.f32 %v291, %v1577
  %v1579 = vpop.f32.mrb[0].mxu0
  %v1580 = vpop.f32.mrb[0].mxu0
  %v1581 = vadd.f32 %v292, %v1580
  %v1582 = vpop.f32.mrb[0].mxu0
  %1583 = vmatprep.mubr.bf16.mxu0 0
  %1584 = vmatmul.mubr.bf16.gmra.mrb[0].mxu0 %v1136
  %v1585 = vpop.f32.mrb[0].mxu0
  %v1586 = vadd.f32 %v293, %v1585
  %v1587 = vpop.f32.mrb[0].mxu0
  %v1588 = vpop.f32.mrb[0].mxu0
  %v1589 = vadd.f32 %v294, %v1588
  %v1590 = vpop.f32.mrb[0].mxu0
  %1591 = vmatprep.mubr.bf16.mxu0 0
  %1592 = vmatmul.mubr.bf16.gmra.mrb[0].mxu0 %v1139
  %v1593 = vpop.f32.mrb[0].mxu0
  %v1594 = vadd.f32 %v295, %v1593
  %v1595 = vpop.f32.mrb[0].mxu0
  %v1596 = vpop.f32.mrb[0].mxu0
  %v1597 = vadd.f32 %v296, %v1596
  %v1598 = vpop.f32.mrb[0].mxu0
  %1599 = vmatprep.mubr.bf16.mxu0 0
  %1600 = vmatmul.mubr.bf16.gmra.mrb[0].mxu0 %v1142
  %v1601 = vpop.f32.mrb[0].mxu0
  %v1602 = vadd.f32 %v297, %v1601
  %v1603 = vpop.f32.mrb[0].mxu0
  %v1604 = vpop.f32.mrb[0].mxu0
  %v1605 = vadd.f32 %v298, %v1604
  %v1606 = vpop.f32.mrb[0].mxu0
  %1607 = vmatprep.mubr.bf16.mxu0 0
  %1608 = vmatmul.mubr.bf16.gmra.mrb[0].mxu0 %v1145
  %v1609 = vpop.f32.mrb[0].mxu0
  %v1610 = vadd.f32 %v299, %v1609
  %v1611 = vpop.f32.mrb[0].mxu0
  %v1612 = vpop.f32.mrb[0].mxu0
  %v1613 = vadd.f32 %v300, %v1612
  %v1614 = vpop.f32.mrb[0].mxu0
  %1615 = vmatprep.mubr.bf16.mxu0 0
  %1616 = vmatmul.mubr.bf16.gmra.mrb[0].mxu0 %v1148
  %v1617 = vpop.f32.mrb[0].mxu0
  %v1618 = vadd.f32 %v301, %v1617
  %v1619 = vpop.f32.mrb[0].mxu0
  %v1620 = vpop.f32.mrb[0].mxu0
  %v1621 = vadd.f32 %v302, %v1620
  %v1622 = vpop.f32.mrb[0].mxu0
  %1623 = vmatprep.mubr.bf16.mxu0 0
  %1624 = vmatmul.mubr.bf16.gmra.mrb[0].mxu0 %v1151
  %v1625 = vpop.f32.mrb[0].mxu0
  %v1626 = vadd.f32 %v303, %v1625
  %v1627 = vpop.f32.mrb[0].mxu0
  %v1628 = vpop.f32.mrb[0].mxu0
  %v1629 = vadd.f32 %v304, %v1628
  %v1630 = vpop.f32.mrb[0].mxu0
  %1631 = vmatprep.mubr.bf16.mxu0 0
  %1632 = vmatmul.mubr.bf16.gmra.mrb[0].mxu0 %v1154
  %v1633 = vpop.f32.mrb[0].mxu0
  %v1634 = vadd.f32 %v305, %v1633
  %v1635 = vpop.f32.mrb[0].mxu0
  %v1636 = vpop.f32.mrb[0].mxu0
  %v1637 = vadd.f32 %v306, %v1636
  %v1638 = vpop.f32.mrb[0].mxu0
  %1639 = vmatprep.mubr.bf16.mxu0 0
  %1640 = vmatmul.mubr.bf16.gmra.mrb[0].mxu0 %v1157
  %v1641 = vpop.f32.mrb[0].mxu0
  %v1642 = vadd.f32 %v307, %v1641
  %v1643 = vpop.f32.mrb[0].mxu0
  %v1644 = vpop.f32.mrb[0].mxu0
  %v1645 = vadd.f32 %v308, %v1644
  %v1646 = vpop.f32.mrb[0].mxu0
  %1647 = vmatprep.mubr.bf16.mxu0 0
  %1648 = vmatmul.mubr.bf16.gmra.mrb[0].mxu0 %v1160
  %v1649 = vpop.f32.mrb[0].mxu0
  %v1650 = vadd.f32 %v309, %v1649
  %v1651 = vpop.f32.mrb[0].mxu0
  %v1652 = vpop.f32.mrb[0].mxu0
  %v1653 = vadd.f32 %v310, %v1652
  %v1654 = vpop.f32.mrb[0].mxu0
  %1655 = vmatprep.mubr.bf16.mxu0 0
  %1656 = vmatmul.mubr.bf16.gmra.mrb[0].mxu0 %v1163
  %v1657 = vpop.f32.mrb[0].mxu0
  %v1658 = vadd.f32 %v311, %v1657
  %v1659 = vpop.f32.mrb[0].mxu0
  %v1660 = vpop.f32.mrb[0].mxu0
  %v1661 = vadd.f32 %v312, %v1660
  %v1662 = vpop.f32.mrb[0].mxu0
  %1663 = vmatprep.mubr.bf16.mxu0 0
  %1664 = vmatmul.mubr.bf16.gmra.mrb[0].mxu0 %v1166
  %v1665 = vpop.f32.mrb[0].mxu0
  %v1666 = vadd.f32 %v313, %v1665
  %v1667 = vpop.f32.mrb[0].mxu0
  %v1668 = vpop.f32.mrb[0].mxu0
  %v1669 = vadd.f32 %v314, %v1668
  %v1670 = vpop.f32.mrb[0].mxu0
  %1671 = vmatprep.mubr.bf16.mxu0 0
  %1672 = vmatmul.mubr.bf16.gmra.mrb[0].mxu0 %v1169
  %v1673 = vpop.f32.mrb[0].mxu0
  %v1674 = vadd.f32 %v315, %v1673
  %v1675 = vpop.f32.mrb[0].mxu0
  %v1676 = vpop.f32.mrb[0].mxu0
  %v1677 = vadd.f32 %v316, %v1676
  %v1678 = vpop.f32.mrb[0].mxu0
  %1679 = vmatprep.mubr.bf16.mxu0 0
  %1680 = vmatmul.mubr.bf16.gmra.mrb[0].mxu0 %v1172
  %v1681 = vpop.f32.mrb[0].mxu0
  %v1682 = vadd.f32 %v317, %v1681
  %v1683 = vpop.f32.mrb[0].mxu0
  %v1684 = vpop.f32.mrb[0].mxu0
  %v1685 = vadd.f32 %v318, %v1684
  %v1686 = vpop.f32.mrb[0].mxu0
  %1687 = vmatprep.mubr.bf16.mxu0 0
  %1688 = vmatmul.mubr.bf16.gmra.mrb[0].mxu0 %v1175
  %v1689 = vpop.f32.mrb[0].mxu0
  %v1690 = vadd.f32 %v319, %v1689
  %v1691 = vpop.f32.mrb[0].mxu0
  %v1692 = vpop.f32.mrb[0].mxu0
  %v1693 = vadd.f32 %v320, %v1692
  %v1694 = vpop.f32.mrb[0].mxu0
  %1695 = vmatprep.mubr.bf16.mxu0 0
  %1696 = vmatmul.mubr.bf16.gmra.mrb[0].mxu0 %v1178
  %v1697 = vpop.f32.mrb[0].mxu0
  %v1698 = vadd.f32 %v321, %v1697
  %v1699 = vpop.f32.mrb[0].mxu0
  %v1700 = vpop.f32.mrb[0].mxu0
  %v1701 = vadd.f32 %v322, %v1700
  %v1702 = vpop.f32.mrb[0].mxu0
  %1703 = vmatprep.mubr.bf16.mxu0 0
  %1704 = vmatmul.mubr.bf16.gmra.mrb[0].mxu0 %v1181
  %v1705 = vpop.f32.mrb[0].mxu0
  %v1706 = vadd.f32 %v323, %v1705
  %v1707 = vpop.f32.mrb[0].mxu0
  %v1708 = vpop.f32.mrb[0].mxu0
  %v1709 = vadd.f32 %v324, %v1708
  %v1710 = vpop.f32.mrb[0].mxu0
  %1711 = vmatprep.mubr.bf16.mxu0 0
  %1712 = vmatmul.mubr.bf16.gmra.mrb[0].mxu0 %v1184
  %v1713 = vpop.f32.mrb[0].mxu0
  %v1714 = vadd.f32 %v325, %v1713
  %v1715 = vpop.f32.mrb[0].mxu0
  %v1716 = vpop.f32.mrb[0].mxu0
  %v1717 = vadd.f32 %v326, %v1716
  %v1718 = vpop.f32.mrb[0].mxu0
  %1719 = vmatprep.mubr.bf16.mxu0 0
  %1720 = vmatmul.mubr.bf16.gmra.mrb[0].mxu0 %v1187
  %v1721 = vpop.f32.mrb[0].mxu0
  %v1722 = vadd.f32 %v327, %v1721
  %v1723 = vpop.f32.mrb[0].mxu0
  %v1724 = vpop.f32.mrb[0].mxu0
  %v1725 = vadd.f32 %v328, %v1724
  %v1726 = vpop.f32.mrb[0].mxu0
  %1727 = vmatprep.mubr.bf16.mxu0 0
  %1728 = vmatmul.mubr.bf16.gmra.mrb[0].mxu0 %v1190
  %v1729 = vpop.f32.mrb[0].mxu0
  %v1730 = vadd.f32 %v329, %v1729
  %v1731 = vpop.f32.mrb[0].mxu0
  %v1732 = vpop.f32.mrb[0].mxu0
  %v1733 = vadd.f32 %v330, %v1732
  %v1734 = vpop.f32.mrb[0].mxu0
  %1735 = vmatprep.mubr.bf16.mxu0 0
  %1736 = vmatmul.mubr.bf16.gmra.mrb[0].mxu0 %v1193
  %v1737 = vpop.f32.mrb[0].mxu0
  %v1738 = vadd.f32 %v331, %v1737
  %v1739 = vpop.f32.mrb[0].mxu0
  %v1740 = vpop.f32.mrb[0].mxu0
  %v1741 = vadd.f32 %v332, %v1740
  %v1742 = vpop.f32.mrb[0].mxu0
  %1743 = vmatprep.mubr.bf16.mxu0 0
  %1744 = vmatmul.mubr.bf16.gmra.mrb[0].mxu0 %v1196
  %v1745 = vpop.f32.mrb[0].mxu0
  %v1746 = vadd.f32 %v333, %v1745
  %v1747 = vpop.f32.mrb[0].mxu0
  %v1748 = vpop.f32.mrb[0].mxu0
  %v1749 = vadd.f32 %v334, %v1748
  %v1750 = vpop.f32.mrb[0].mxu0
  %1751 = vmatprep.mubr.bf16.mxu0 0
  %1752 = vmatmul.mubr.bf16.gmra.mrb[0].mxu0 %v1199
  %v1753 = vpop.f32.mrb[0].mxu0
  %v1754 = vadd.f32 %v335, %v1753
  %v1755 = vpop.f32.mrb[0].mxu0
  %v1756 = vpop.f32.mrb[0].mxu0
  %v1757 = vadd.f32 %v336, %v1756
  %v1758 = vpop.f32.mrb[0].mxu0
  %1759 = vmatprep.mubr.bf16.mxu0 0
  %1760 = vmatmul.mubr.bf16.gmra.mrb[0].mxu0 %v1202
  %v1761 = vpop.f32.mrb[0].mxu0
  %v1762 = vadd.f32 %v337, %v1761
  %v1763 = vpop.f32.mrb[0].mxu0
  %v1764 = vpop.f32.mrb[0].mxu0
  %v1765 = vadd.f32 %v338, %v1764
  %v1766 = vpop.f32.mrb[0].mxu0
  %1767 = vmatprep.mubr.bf16.mxu0 0
  %1768 = vmatmul.mubr.bf16.gmra.mrb[0].mxu0 %v1205
  %v1769 = vpop.f32.mrb[0].mxu0
  %v1770 = vadd.f32 %v339, %v1769
  %v1771 = vpop.f32.mrb[0].mxu0
  %v1772 = vpop.f32.mrb[0].mxu0
  %v1773 = vadd.f32 %v340, %v1772
  %v1774 = vpop.f32.mrb[0].mxu0
  %1775 = vmatprep.mubr.bf16.mxu0 0
  %1776 = vmatmul.mubr.bf16.gmra.mrb[0].mxu0 %v1208
  %v1777 = vpop.f32.mrb[0].mxu0
  %v1778 = vadd.f32 %v341, %v1777
  %v1779 = vpop.f32.mrb[0].mxu0
  %v1780 = vpop.f32.mrb[0].mxu0
  %v1781 = vadd.f32 %v342, %v1780
  %v1782 = vpop.f32.mrb[0].mxu0
  %1783 = vmatprep.mubr.bf16.mxu0 0
  %1784 = vmatmul.mubr.bf16.gmra.mrb[0].mxu0 %v1211
  %v1785 = vpop.f32.mrb[0].mxu0
  %v1786 = vadd.f32 %v343, %v1785
  %v1787 = vpop.f32.mrb[0].mxu0
  %v1788 = vpop.f32.mrb[0].mxu0
  %v1789 = vadd.f32 %v344, %v1788
  %v1790 = vpop.f32.mrb[0].mxu0
  %1791 = vmatprep.mubr.bf16.mxu0 0
  %1792 = vmatmul.mubr.bf16.gmra.mrb[0].mxu0 %v1214
  %v1793 = vpop.f32.mrb[0].mxu0
  %v1794 = vadd.f32 %v345, %v1793
  %v1795 = vpop.f32.mrb[0].mxu0
  %v1796 = vpop.f32.mrb[0].mxu0
  %v1797 = vadd.f32 %v346, %v1796
  %v1798 = vpop.f32.mrb[0].mxu0
  %1799 = vmatprep.mubr.bf16.mxu0 0
  %1800 = vmatmul.mubr.bf16.gmra.mrb[0].mxu0 %v1217
  %v1801 = vpop.f32.mrb[0].mxu0
  %v1802 = vadd.f32 %v347, %v1801
  %v1803 = vpop.f32.mrb[0].mxu0
  %v1804 = vpop.f32.mrb[0].mxu0
  %v1805 = vadd.f32 %v348, %v1804
  %v1806 = vpop.f32.mrb[0].mxu0
  %1807 = vmatprep.mubr.bf16.mxu0 0
  %1808 = vmatmul.mubr.bf16.gmra.mrb[0].mxu0 %v1220
  %v1809 = vpop.f32.mrb[0].mxu0
  %v1810 = vadd.f32 %v349, %v1809
  %v1811 = vpop.f32.mrb[0].mxu0
  %v1812 = vpop.f32.mrb[0].mxu0
  %v1813 = vadd.f32 %v350, %v1812
  %v1814 = vpop.f32.mrb[0].mxu0
  %1815 = vmatprep.mubr.bf16.mxu0 0
  %1816 = vmatmul.mubr.bf16.gmra.mrb[0].mxu0 %v1223
  %v1817 = vpop.f32.mrb[0].mxu0
  %v1818 = vadd.f32 %v351, %v1817
  %v1819 = vpop.f32.mrb[0].mxu0
  %v1820 = vpop.f32.mrb[0].mxu0
  %v1821 = vadd.f32 %v352, %v1820
  %v1822 = vpop.f32.mrb[0].mxu0
  %1823 = vmatprep.mubr.bf16.mxu0 0
  %1824 = vmatmul.mubr.bf16.gmra.mrb[0].mxu0 %v1226
  %v1825 = vpop.f32.mrb[0].mxu0
  %v1826 = vadd.f32 %v353, %v1825
  %v1827 = vpop.f32.mrb[0].mxu0
  %v1828 = vpop.f32.mrb[0].mxu0
  %v1829 = vadd.f32 %v354, %v1828
  %v1830 = vpop.f32.mrb[0].mxu0
  %1831 = vmatprep.mubr.bf16.mxu0 0
  %1832 = vmatmul.mubr.bf16.gmra.mrb[0].mxu0 %v1229
  %v1833 = vpop.f32.mrb[0].mxu0
  %v1834 = vadd.f32 %v355, %v1833
  %v1835 = vpop.f32.mrb[0].mxu0
  %v1836 = vpop.f32.mrb[0].mxu0
  %v1837 = vadd.f32 %v356, %v1836
  %v1838 = vpop.f32.mrb[0].mxu0
  %1839 = vmatprep.mubr.bf16.mxu0 0
  %1840 = vmatmul.mubr.bf16.gmra.mrb[0].mxu0 %v1232
  %v1841 = vpop.f32.mrb[0].mxu0
  %v1842 = vadd.f32 %v357, %v1841
  %v1843 = vpop.f32.mrb[0].mxu0
  %v1844 = vpop.f32.mrb[0].mxu0
  %v1845 = vadd.f32 %v358, %v1844
  %v1846 = vpop.f32.mrb[0].mxu0
  %1847 = vmatprep.mubr.bf16.mxu0 0
  %1848 = vmatmul.mubr.bf16.gmra.mrb[0].mxu0 %v1235
  %v1849 = vpop.f32.mrb[0].mxu0
  %v1850 = vadd.f32 %v359, %v1849
  %v1851 = vpop.f32.mrb[0].mxu0
  %v1852 = vpop.f32.mrb[0].mxu0
  %v1853 = vadd.f32 %v360, %v1852
  %v1854 = vpop.f32.mrb[0].mxu0
  %1855 = vmatprep.mubr.bf16.mxu0 0
  %1856 = vmatmul.mubr.bf16.gmra.mrb[0].mxu0 %v1238
  %v1857 = vpop.f32.mrb[0].mxu0
  %v1858 = vadd.f32 %v361, %v1857
  %v1859 = vpop.f32.mrb[0].mxu0
  %v1860 = vpop.f32.mrb[0].mxu0
  %v1861 = vadd.f32 %v362, %v1860
  %v1862 = vpop.f32.mrb[0].mxu0
  %1863 = vmatprep.mubr.bf16.mxu0 0
  %1864 = vmatmul.mubr.bf16.gmra.mrb[0].mxu0 %v1241
  %v1865 = vpop.f32.mrb[0].mxu0
  %v1866 = vadd.f32 %v363, %v1865
  %v1867 = vpop.f32.mrb[0].mxu0
  %v1868 = vpop.f32.mrb[0].mxu0
  %v1869 = vadd.f32 %v364, %v1868
  %v1870 = vpop.f32.mrb[0].mxu0
  %1871 = vmatprep.mubr.bf16.mxu0 0
  %1872 = vmatmul.mubr.bf16.gmra.mrb[0].mxu0 %v1244
  %v1873 = vpop.f32.mrb[0].mxu0
  %v1874 = vadd.f32 %v365, %v1873
  %v1875 = vpop.f32.mrb[0].mxu0
  %v1876 = vpop.f32.mrb[0].mxu0
  %v1877 = vadd.f32 %v366, %v1876
  %v1878 = vpop.f32.mrb[0].mxu0
  %1879 = vmatprep.mubr.bf16.mxu0 0
  %1880 = vmatmul.mubr.bf16.gmra.mrb[0].mxu0 %v1247
  %v1881 = vpop.f32.mrb[0].mxu0
  %v1882 = vadd.f32 %v367, %v1881
  %v1883 = vpop.f32.mrb[0].mxu0
  %v1884 = vpop.f32.mrb[0].mxu0
  %v1885 = vadd.f32 %v368, %v1884
  %v1886 = vpop.f32.mrb[0].mxu0
  %1887 = vmatprep.mubr.bf16.mxu0 0
  %1888 = vmatmul.mubr.bf16.gmra.mrb[0].mxu0 %v1250
  %v1889 = vpop.f32.mrb[0].mxu0
  %v1890 = vadd.f32 %v369, %v1889
  %v1891 = vpop.f32.mrb[0].mxu0
  %v1892 = vpop.f32.mrb[0].mxu0
  %v1893 = vadd.f32 %v370, %v1892
  %v1894 = vpop.f32.mrb[0].mxu0
  %1895 = vmatprep.mubr.bf16.mxu0 0
  %1896 = vmatmul.mubr.bf16.gmra.mrb[0].mxu0 %v1253
  %v1897 = vpop.f32.mrb[0].mxu0
  %v1898 = vadd.f32 %v371, %v1897
  %v1899 = vpop.f32.mrb[0].mxu0
  %v1900 = vpop.f32.mrb[0].mxu0
  %v1901 = vadd.f32 %v372, %v1900
  %v1902 = vpop.f32.mrb[0].mxu0
  %1903 = vmatprep.mubr.bf16.mxu0 0
  %1904 = vmatmul.mubr.bf16.gmra.mrb[0].mxu0 %v1256
  %v1905 = vpop.f32.mrb[0].mxu0
  %v1906 = vadd.f32 %v373, %v1905
  %v1907 = vpop.f32.mrb[0].mxu0
  %v1908 = vpop.f32.mrb[0].mxu0
  %v1909 = vadd.f32 %v374, %v1908
  %v1910 = vpop.f32.mrb[0].mxu0
  %1911 = vmatprep.mubr.bf16.mxu0 0
  %1912 = vmatmul.mubr.bf16.gmra.mrb[0].mxu0 %v1259
  %v1913 = vpop.f32.mrb[0].mxu0
  %v1914 = vadd.f32 %v375, %v1913
  %v1915 = vpop.f32.mrb[0].mxu0
  %v1916 = vpop.f32.mrb[0].mxu0
  %v1917 = vadd.f32 %v376, %v1916
  %v1918 = vpop.f32.mrb[0].mxu0
  %1919 = vmatprep.mubr.bf16.mxu0 0
  %1920 = vmatmul.mubr.bf16.gmra.mrb[0].mxu0 %v1262
  %v1921 = vpop.f32.mrb[0].mxu0
  %v1922 = vadd.f32 %v377, %v1921
  %v1923 = vpop.f32.mrb[0].mxu0
  %v1924 = vpop.f32.mrb[0].mxu0
  %v1925 = vadd.f32 %v378, %v1924
  %v1926 = vpop.f32.mrb[0].mxu0
  %1927 = vmatprep.mubr.bf16.mxu0 0
  %1928 = vmatmul.mubr.bf16.gmra.mrb[0].mxu0 %v1265
  %v1929 = vpop.f32.mrb[0].mxu0
  %v1930 = vadd.f32 %v379, %v1929
  %v1931 = vpop.f32.mrb[0].mxu0
  %v1932 = vpop.f32.mrb[0].mxu0
  %v1933 = vadd.f32 %v380, %v1932
  %v1934 = vpop.f32.mrb[0].mxu0
  %1935 = vmatprep.mubr.bf16.mxu0 0
  %1936 = vmatmul.mubr.bf16.gmra.mrb[0].mxu0 %v1268
  %v1937 = vpop.f32.mrb[0].mxu0
  %v1938 = vadd.f32 %v381, %v1937
  %v1939 = vpop.f32.mrb[0].mxu0
  %v1940 = vpop.f32.mrb[0].mxu0
  %v1941 = vadd.f32 %v382, %v1940
  %v1942 = vpop.f32.mrb[0].mxu0
  %1943 = vmatprep.mubr.bf16.mxu0 0
  %1944 = vmatmul.mubr.bf16.gmra.mrb[0].mxu0 %v1271
  %v1945 = vpop.f32.mrb[0].mxu0
  %v1946 = vadd.f32 %v383, %v1945
  %v1947 = vpop.f32.mrb[0].mxu0
  %v1948 = vpop.f32.mrb[0].mxu0
  %v1949 = vadd.f32 %v384, %v1948
  %v1950 = vpop.f32.mrb[0].mxu0
  %1951 = vmatprep.mubr.bf16.mxu0 0
  %1952 = vmatmul.mubr.bf16.gmra.mrb[0].mxu0 %v1274
  %v1953 = vpop.f32.mrb[0].mxu0
  %v1954 = vadd.f32 %v385, %v1953
  %v1955 = vpop.f32.mrb[0].mxu0
  %v1956 = vpop.f32.mrb[0].mxu0
  %v1957 = vadd.f32 %v386, %v1956
  %v1958 = vpop.f32.mrb[0].mxu0
  %1959 = vmatprep.mubr.bf16.mxu0 0
  %1960 = vmatmul.mubr.bf16.gmra.mrb[0].mxu0 %v1277
  %v1961 = vpop.f32.mrb[0].mxu0
  %v1962 = vadd.f32 %v387, %v1961
  %v1963 = vpop.f32.mrb[0].mxu0
  %v1964 = vpop.f32.mrb[0].mxu0
  %v1965 = vadd.f32 %v388, %v1964
  %v1966 = vpop.f32.mrb[0].mxu0
  %1967 = vmatprep.mubr.bf16.mxu0 0
  %1968 = vmatmul.mubr.bf16.gmra.mrb[0].mxu0 %v1280
  %v1969 = vpop.f32.mrb[0].mxu0
  %v1970 = vadd.f32 %v389, %v1969
  %v1971 = vpop.f32.mrb[0].mxu0
  %v1972 = vpop.f32.mrb[0].mxu0
  %v1973 = vadd.f32 %v390, %v1972
  %v1974 = vpop.f32.mrb[0].mxu0
  %1975 = vmatprep.mubr.bf16.mxu0 0
  %1976 = vmatmul.mubr.bf16.gmra.mrb[0].mxu0 %v1283
  %v1977 = vpop.f32.mrb[0].mxu0
  %v1978 = vadd.f32 %v391, %v1977
  %v1979 = vpop.f32.mrb[0].mxu0
  %v1980 = vpop.f32.mrb[0].mxu0
  %v1981 = vadd.f32 %v392, %v1980
  %v1982 = vpop.f32.mrb[0].mxu0
  %1983 = vmatprep.mubr.bf16.mxu0 0
  %1984 = vmatmul.mubr.bf16.gmra.mrb[0].mxu0 %v1286
  %v1985 = vpop.f32.mrb[0].mxu0
  %v1986 = vadd.f32 %v393, %v1985
  %v1987 = vpop.f32.mrb[0].mxu0
  %v1988 = vpop.f32.mrb[0].mxu0
  %v1989 = vadd.f32 %v394, %v1988
  %v1990 = vpop.f32.mrb[0].mxu0
  %1991 = vmatprep.mubr.bf16.mxu0 0
  %1992 = vmatmul.mubr.bf16.gmra.mrb[0].mxu0 %v1289
  %v1993 = vpop.f32.mrb[0].mxu0
  %v1994 = vadd.f32 %v395, %v1993
  %v1995 = vpop.f32.mrb[0].mxu0
  %v1996 = vpop.f32.mrb[0].mxu0
  %v1997 = vadd.f32 %v396, %v1996
  %v1998 = vpop.f32.mrb[0].mxu0
  %1999 = vmatprep.mubr.bf16.mxu0 0
  %2000 = vmatmul.mubr.bf16.gmra.mrb[0].mxu0 %v1292
  %v2001 = vpop.f32.mrb[0].mxu0
  %v2002 = vadd.f32 %v397, %v2001
  %v2003 = vpop.f32.mrb[0].mxu0
  %v2004 = vpop.f32.mrb[0].mxu0
  %v2005 = vadd.f32 %v398, %v2004
  %v2006 = vpop.f32.mrb[0].mxu0
  %2007 = vmatprep.mubr.bf16.mxu0 0
  %2008 = vmatmul.mubr.bf16.gmra.mrb[0].mxu0 %v1295
  %v2009 = vpop.f32.mrb[0].mxu0
  %v2010 = vadd.f32 %v399, %v2009
  %v2011 = vpop.f32.mrb[0].mxu0
  %v2012 = vpop.f32.mrb[0].mxu0
  %v2013 = vadd.f32 %v400, %v2012
  %v2014 = vpop.f32.mrb[0].mxu0
  %2015 = vmatprep.mubr.bf16.mxu0 0
  %2016 = vmatmul.mubr.bf16.gmra.mrb[0].mxu0 %v1298
  %v2017 = vpop.f32.mrb[0].mxu0
  %v2018 = vadd.f32 %v401, %v2017
  %v2019 = vpop.f32.mrb[0].mxu0
  %v2020 = vpop.f32.mrb[0].mxu0
  %v2021 = vadd.f32 %v402, %v2020
  %v2022 = vpop.f32.mrb[0].mxu0
  %2023 = vmatprep.mubr.bf16.mxu0 0
  %2024 = vmatmul.mubr.bf16.gmra.mrb[0].mxu0 %v1301
  %v2025 = vpop.f32.mrb[0].mxu0
  %v2026 = vadd.f32 %v403, %v2025
  %v2027 = vpop.f32.mrb[0].mxu0
  %v2028 = vpop.f32.mrb[0].mxu0
  %v2029 = vadd.f32 %v404, %v2028
  %v2030 = vpop.f32.mrb[0].mxu0
  %2031 = vmatprep.mubr.bf16.mxu0 0
  %2032 = vmatmul.mubr.bf16.gmra.mrb[0].mxu0 %v1304
  %v2033 = vpop.f32.mrb[0].mxu0
  %v2034 = vadd.f32 %v405, %v2033
  %v2035 = vpop.f32.mrb[0].mxu0
  %v2036 = vpop.f32.mrb[0].mxu0
  %v2037 = vadd.f32 %v406, %v2036
  %v2038 = vpop.f32.mrb[0].mxu0
  %2039 = vmatprep.mubr.bf16.mxu0 0
  %2040 = vmatmul.mubr.bf16.gmra.mrb[0].mxu0 %v1307
  %v2041 = vpop.f32.mrb[0].mxu0
  %v2042 = vadd.f32 %v407, %v2041
  %v2043 = vpop.f32.mrb[0].mxu0
  %v2044 = vpop.f32.mrb[0].mxu0
  %v2045 = vadd.f32 %v408, %v2044
  %v2046 = vpop.f32.mrb[0].mxu0
  %2047 = vmatprep.mubr.bf16.mxu0 0
  %2048 = vmatmul.mubr.bf16.gmra.mrb[0].mxu0 %v1310
  %v2049 = vpop.f32.mrb[0].mxu0
  %v2050 = vadd.f32 %v409, %v2049
  %v2051 = vpop.f32.mrb[0].mxu0
  %v2052 = vpop.f32.mrb[0].mxu0
  %v2053 = vadd.f32 %v410, %v2052
  %v2054 = vpop.f32.mrb[0].mxu0
  %2055 = vmatprep.mubr.bf16.mxu0 0
  %2056 = vmatmul.mubr.bf16.gmra.mrb[0].mxu0 %v1313
  %v2057 = vpop.f32.mrb[0].mxu0
  %v2058 = vadd.f32 %v411, %v2057
  %v2059 = vpop.f32.mrb[0].mxu0
  %v2060 = vpop.f32.mrb[0].mxu0
  %v2061 = vadd.f32 %v412, %v2060
  %v2062 = vpop.f32.mrb[0].mxu0
  %2063 = vmatprep.mubr.bf16.mxu0 0
  %2064 = vmatmul.mubr.bf16.gmra.mrb[0].mxu0 %v1316
  %v2065 = vpop.f32.mrb[0].mxu0
  %v2066 = vadd.f32 %v413, %v2065
  %v2067 = vpop.f32.mrb[0].mxu0
  %v2068 = vpop.f32.mrb[0].mxu0
  %v2069 = vadd.f32 %v414, %v2068
  %v2070 = vpop.f32.mrb[0].mxu0
  %2071 = vmatprep.mubr.bf16.mxu0 0
  %2072 = vmatmul.mubr.bf16.gmra.mrb[0].mxu0 %v1319
  %v2073 = vpop.f32.mrb[0].mxu0
  %v2074 = vadd.f32 %v415, %v2073
  %v2075 = vpop.f32.mrb[0].mxu0
  %v2076 = vpop.f32.mrb[0].mxu0
  %v2077 = vadd.f32 %v416, %v2076
  %v2078 = vpop.f32.mrb[0].mxu0
  %2079 = vmatprep.mubr.bf16.mxu0 0
  %2080 = vmatmul.mubr.bf16.gmra.mrb[0].mxu0 %v1322
  %v2081 = vpop.f32.mrb[0].mxu0
  %v2082 = vadd.f32 %v417, %v2081
  %v2083 = vpop.f32.mrb[0].mxu0
  %v2084 = vpop.f32.mrb[0].mxu0
  %v2085 = vadd.f32 %v418, %v2084
  %v2086 = vpop.f32.mrb[0].mxu0
  %2087 = vmatprep.mubr.bf16.mxu0 0
  %2088 = vmatmul.mubr.bf16.gmra.mrb[0].mxu0 %v1325
  %v2089 = vpop.f32.mrb[0].mxu0
  %v2090 = vadd.f32 %v419, %v2089
  %v2091 = vpop.f32.mrb[0].mxu0
  %v2092 = vpop.f32.mrb[0].mxu0
  %v2093 = vadd.f32 %v420, %v2092
  %v2094 = vpop.f32.mrb[0].mxu0
  %2095 = vmatprep.mubr.bf16.mxu0 0
  %2096 = vmatmul.mubr.bf16.gmra.mrb[0].mxu0 %v1328
  %v2097 = vpop.f32.mrb[0].mxu0
  %v2098 = vadd.f32 %v421, %v2097
  %v2099 = vpop.f32.mrb[0].mxu0
  %v2100 = vpop.f32.mrb[0].mxu0
  %v2101 = vadd.f32 %v422, %v2100
  %v2102 = vpop.f32.mrb[0].mxu0
  %2103 = vmatprep.mubr.bf16.mxu0 0
  %2104 = vmatmul.mubr.bf16.gmra.mrb[0].mxu0 %v1331
  %v2105 = vpop.f32.mrb[0].mxu0
  %v2106 = vadd.f32 %v423, %v2105
  %v2107 = vpop.f32.mrb[0].mxu0
  %v2108 = vpop.f32.mrb[0].mxu0
  %v2109 = vadd.f32 %v424, %v2108
  %v2110 = vpop.f32.mrb[0].mxu0
  %2111 = vmatprep.mubr.bf16.mxu0 0
  %2112 = vmatmul.mubr.bf16.gmra.mrb[0].mxu0 %v1334
  %v2113 = vpop.f32.mrb[0].mxu0
  %v2114 = vadd.f32 %v425, %v2113
  %v2115 = vpop.f32.mrb[0].mxu0
  %v2116 = vpop.f32.mrb[0].mxu0
  %v2117 = vadd.f32 %v426, %v2116
  %v2118 = vpop.f32.mrb[0].mxu0
  %2119 = vmatprep.mubr.bf16.mxu0 0
  %2120 = vmatmul.mubr.bf16.gmra.mrb[0].mxu0 %v1337
  %v2121 = vpop.f32.mrb[0].mxu0
  %v2122 = vadd.f32 %v427, %v2121
  %v2123 = vpop.f32.mrb[0].mxu0
  %v2124 = vpop.f32.mrb[0].mxu0
  %v2125 = vadd.f32 %v428, %v2124
  %v2126 = vpop.f32.mrb[0].mxu0
  %2127 = vmatprep.mubr.bf16.mxu0 0
  %2128 = vmatmul.mubr.bf16.gmra.mrb[0].mxu0 %v1340
  %v2129 = vpop.f32.mrb[0].mxu0
  %v2130 = vadd.f32 %v429, %v2129
  %v2131 = vpop.f32.mrb[0].mxu0
  %v2132 = vpop.f32.mrb[0].mxu0
  %v2133 = vadd.f32 %v430, %v2132
  %v2134 = vpop.f32.mrb[0].mxu0
  %2135 = vmatprep.mubr.bf16.mxu0 0
  %2136 = vmatmul.mubr.bf16.gmra.mrb[0].mxu0 %v1343
  %v2137 = vpop.f32.mrb[0].mxu0
  %v2138 = vadd.f32 %v431, %v2137
  %v2139 = vpop.f32.mrb[0].mxu0
  %v2140 = vpop.f32.mrb[0].mxu0
  %v2141 = vadd.f32 %v432, %v2140
  %v2142 = vpop.f32.mrb[0].mxu0
  %2143 = vmatprep.mubr.bf16.mxu0 0
  %2144 = vmatmul.mubr.bf16.gmra.mrb[0].mxu0 %v1346
  %v2145 = vpop.f32.mrb[0].mxu0
  %v2146 = vadd.f32 %v433, %v2145
  %v2147 = vpop.f32.mrb[0].mxu0
  %v2148 = vpop.f32.mrb[0].mxu0
  %v2149 = vadd.f32 %v434, %v2148
  %v2150 = vpop.f32.mrb[0].mxu0
  %2151 = vmatprep.mubr.bf16.mxu0 0
  %2152 = vmatmul.mubr.bf16.gmra.mrb[0].mxu0 %v1349
  %v2153 = vpop.f32.mrb[0].mxu0
  %v2154 = vadd.f32 %v435, %v2153
  %v2155 = vpop.f32.mrb[0].mxu0
  %v2156 = vpop.f32.mrb[0].mxu0
  %v2157 = vadd.f32 %v436, %v2156
  %v2158 = vpop.f32.mrb[0].mxu0
  %2159 = vmatprep.mubr.bf16.mxu0 0
  %2160 = vmatmul.mubr.bf16.gmra.mrb[0].mxu0 %v1352
  %v2161 = vpop.f32.mrb[0].mxu0
  %v2162 = vadd.f32 %v437, %v2161
  %v2163 = vpop.f32.mrb[0].mxu0
  %v2164 = vpop.f32.mrb[0].mxu0
  %v2165 = vadd.f32 %v438, %v2164
  %v2166 = vpop.f32.mrb[0].mxu0
  %2167 = vmatprep.mubr.bf16.mxu0 0
  %2168 = vmatmul.mubr.bf16.gmra.mrb[0].mxu0 %v1355
  %v2169 = vpop.f32.mrb[0].mxu0
  %v2170 = vadd.f32 %v439, %v2169
  %v2171 = vpop.f32.mrb[0].mxu0
  %v2172 = vpop.f32.mrb[0].mxu0
  %v2173 = vadd.f32 %v440, %v2172
  %v2174 = vpop.f32.mrb[0].mxu0
  %2175 = vmatprep.mubr.bf16.mxu0 0
  %2176 = vmatmul.mubr.bf16.gmra.mrb[0].mxu0 %v1358
  %v2177 = vpop.f32.mrb[0].mxu0
  %v2178 = vadd.f32 %v441, %v2177
  %v2179 = vpop.f32.mrb[0].mxu0
  %v2180 = vpop.f32.mrb[0].mxu0
  %v2181 = vadd.f32 %v442, %v2180
  %v2182 = vpop.f32.mrb[0].mxu0
  %2183 = vmatprep.mubr.bf16.mxu0 0
  %2184 = vmatmul.mubr.bf16.gmra.mrb[0].mxu0 %v1361
  %v2185 = vpop.f32.mrb[0].mxu0
  %v2186 = vadd.f32 %v443, %v2185
  %v2187 = vpop.f32.mrb[0].mxu0
  %v2188 = vpop.f32.mrb[0].mxu0
  %v2189 = vadd.f32 %v444, %v2188
  %v2190 = vpop.f32.mrb[0].mxu0
  %2191 = vmatprep.mubr.bf16.mxu0 0
  %2192 = vmatmul.mubr.bf16.gmra.mrb[0].mxu0 %v1364
  %v2193 = vpop.f32.mrb[0].mxu0
  %v2194 = vadd.f32 %v445, %v2193
  %v2195 = vpop.f32.mrb[0].mxu0
  %v2196 = vpop.f32.mrb[0].mxu0
  %v2197 = vadd.f32 %v446, %v2196
  %v2198 = vpop.f32.mrb[0].mxu0
  %2199 = vmatprep.mubr.bf16.mxu0 0
  %2200 = vmatmul.mubr.bf16.gmra.mrb[0].mxu0 %v1367
  %v2201 = vpop.f32.mrb[0].mxu0
  %v2202 = vadd.f32 %v447, %v2201
  %v2203 = vpop.f32.mrb[0].mxu0
  %v2204 = vpop.f32.mrb[0].mxu0
  %v2205 = vadd.f32 %v448, %v2204
  %v2206 = vpop.f32.mrb[0].mxu0
  %2207 = vmatprep.mubr.bf16.mxu0 0
  %2208 = vmatmul.mubr.bf16.gmra.mrb[0].mxu0 %v1370
  %v2209 = vpop.f32.mrb[0].mxu0
  %v2210 = vadd.f32 %v449, %v2209
  %v2211 = vpop.f32.mrb[0].mxu0
  %v2212 = vpop.f32.mrb[0].mxu0
  %v2213 = vadd.f32 %v450, %v2212
  %v2214 = vpop.f32.mrb[0].mxu0
  %2215 = vmatprep.mubr.bf16.mxu0 0
  %2216 = vmatmul.mubr.bf16.gmra.mrb[0].mxu0 %v1373
  %v2217 = vpop.f32.mrb[0].mxu0
  %v2218 = vadd.f32 %v451, %v2217
  %v2219 = vpop.f32.mrb[0].mxu0
  %v2220 = vpop.f32.mrb[0].mxu0
  %v2221 = vadd.f32 %v452, %v2220
  %v2222 = vpop.f32.mrb[0].mxu0
  %2223 = vmatprep.mubr.bf16.mxu0 0
  %2224 = vmatmul.mubr.bf16.gmra.mrb[0].mxu0 %v1376
  %v2225 = vpop.f32.mrb[0].mxu0
  %v2226 = vadd.f32 %v453, %v2225
  %v2227 = vpop.f32.mrb[0].mxu0
  %v2228 = vpop.f32.mrb[0].mxu0
  %v2229 = vadd.f32 %v454, %v2228
  %v2230 = vpop.f32.mrb[0].mxu0
  %2231 = vmatprep.mubr.bf16.mxu0 0
  %2232 = vmatmul.mubr.bf16.gmra.mrb[0].mxu0 %v1379
  %v2233 = vpop.f32.mrb[0].mxu0
  %v2234 = vadd.f32 %v455, %v2233
  %v2235 = vpop.f32.mrb[0].mxu0
  %v2236 = vpop.f32.mrb[0].mxu0
  %v2237 = vadd.f32 %v456, %v2236
  %v2238 = vpop.f32.mrb[0].mxu0
  %2239 = vmatprep.mubr.bf16.mxu0 0
  %2240 = vmatmul.mubr.bf16.gmra.mrb[0].mxu0 %v1382
  %v2241 = vpop.f32.mrb[0].mxu0
  %v2242 = vadd.f32 %v457, %v2241
  %v2243 = vpop.f32.mrb[0].mxu0
  %v2244 = vpop.f32.mrb[0].mxu0
  %v2245 = vadd.f32 %v458, %v2244
  %v2246 = vpop.f32.mrb[0].mxu0
  %2247 = vmatprep.mubr.bf16.mxu0 0
  %2248 = vmatmul.mubr.bf16.gmra.mrb[0].mxu0 %v1385
  %v2249 = vpop.f32.mrb[0].mxu0
  %v2250 = vadd.f32 %v459, %v2249
  %v2251 = vpop.f32.mrb[0].mxu0
  %v2252 = vpop.f32.mrb[0].mxu0
  %v2253 = vadd.f32 %v460, %v2252
  %v2254 = vpop.f32.mrb[0].mxu0
  %2255 = vmatprep.mubr.bf16.mxu0 0
  %2256 = vmatmul.mubr.bf16.gmra.mrb[0].mxu0 %v1388
  %v2257 = vpop.f32.mrb[0].mxu0
  %v2258 = vadd.f32 %v461, %v2257
  %v2259 = vpop.f32.mrb[0].mxu0
  %v2260 = vpop.f32.mrb[0].mxu0
  %v2261 = vadd.f32 %v462, %v2260
  %v2262 = vpop.f32.mrb[0].mxu0
  %2263 = vmatprep.mubr.bf16.mxu0 0
  %2264 = vmatmul.mubr.bf16.gmra.mrb[0].mxu0 %v1391
  %v2265 = vpop.f32.mrb[0].mxu0
  %v2266 = vadd.f32 %v463, %v2265
  %v2267 = vpop.f32.mrb[0].mxu0
  %v2268 = vpop.f32.mrb[0].mxu0
  %v2269 = vadd.f32 %v464, %v2268
  %v2270 = vpop.f32.mrb[0].mxu0
  %2271 = vmatprep.mubr.bf16.mxu0 0
  %2272 = vmatmul.mubr.bf16.gmra.mrb[0].mxu0 %v1394
  %v2273 = vpop.f32.mrb[0].mxu0
  %v2274 = vadd.f32 %v465, %v2273
  %v2275 = vpop.f32.mrb[0].mxu0
  %v2276 = vpop.f32.mrb[0].mxu0
  %v2277 = vadd.f32 %v466, %v2276
  %v2278 = vpop.f32.mrb[0].mxu0
  %2279 = vmatprep.mubr.bf16.mxu0 0
  %2280 = vmatmul.mubr.bf16.gmra.mrb[0].mxu0 %v1397
  %v2281 = vpop.f32.mrb[0].mxu0
  %v2282 = vadd.f32 %v467, %v2281
  %v2283 = vpop.f32.mrb[0].mxu0
  %v2284 = vpop.f32.mrb[0].mxu0
  %v2285 = vadd.f32 %v468, %v2284
  %v2286 = vpop.f32.mrb[0].mxu0
  %2287 = vmatprep.mubr.bf16.mxu0 0
  %2288 = vmatmul.mubr.bf16.gmra.mrb[0].mxu0 %v1400
  %v2289 = vpop.f32.mrb[0].mxu0
  %v2290 = vadd.f32 %v469, %v2289
  %v2291 = vpop.f32.mrb[0].mxu0
  %v2292 = vpop.f32.mrb[0].mxu0
  %v2293 = vadd.f32 %v470, %v2292
  %v2294 = vpop.f32.mrb[0].mxu0
  %2295 = vmatprep.mubr.bf16.mxu0 0
  %2296 = vmatmul.mubr.bf16.gmra.mrb[0].mxu0 %v1403
  %v2297 = vpop.f32.mrb[0].mxu0
  %v2298 = vadd.f32 %v471, %v2297
  %v2299 = vpop.f32.mrb[0].mxu0
  %v2300 = vpop.f32.mrb[0].mxu0
  %v2301 = vadd.f32 %v472, %v2300
  %v2302 = vpop.f32.mrb[0].mxu0
  %2303 = vmatprep.mubr.bf16.mxu0 0
  %2304 = vmatmul.mubr.bf16.gmra.mrb[0].mxu0 %v1406
  %v2305 = vpop.f32.mrb[0].mxu0
  %v2306 = vadd.f32 %v473, %v2305
  %v2307 = vpop.f32.mrb[0].mxu0
  %v2308 = vpop.f32.mrb[0].mxu0
  %v2309 = vadd.f32 %v474, %v2308
  %v2310 = vpop.f32.mrb[0].mxu0
  %2311 = vmatprep.mubr.bf16.mxu0 0
  %2312 = vmatmul.mubr.bf16.gmra.mrb[0].mxu0 %v1409
  %v2313 = vpop.f32.mrb[0].mxu0
  %v2314 = vadd.f32 %v475, %v2313
  %v2315 = vpop.f32.mrb[0].mxu0
  %v2316 = vpop.f32.mrb[0].mxu0
  %v2317 = vadd.f32 %v476, %v2316
  %v2318 = vpop.f32.mrb[0].mxu0
  %2319 = vmatprep.mubr.bf16.mxu0 0
  %2320 = vmatmul.mubr.bf16.gmra.mrb[0].mxu0 %v1412
  %v2321 = vpop.f32.mrb[0].mxu0
  %v2322 = vadd.f32 %v477, %v2321
  %v2323 = vpop.f32.mrb[0].mxu0
  %v2324 = vpop.f32.mrb[0].mxu0
  %v2325 = vadd.f32 %v478, %v2324
  %v2326 = vpop.f32.mrb[0].mxu0
  %2327 = vmatprep.mubr.bf16.mxu0 0
  %2328 = vmatmul.mubr.bf16.gmra.mrb[0].mxu0 %v1415
  %v2329 = vpop.f32.mrb[0].mxu0
  %v2330 = vadd.f32 %v479, %v2329
  %v2331 = vpop.f32.mrb[0].mxu0
  %v2332 = vpop.f32.mrb[0].mxu0
  %v2333 = vadd.f32 %v480, %v2332
  %v2334 = vpop.f32.mrb[0].mxu0
  %2335 = vmatprep.mubr.bf16.mxu0 0
  %2336 = vmatmul.mubr.bf16.gmra.mrb[0].mxu0 %v1418
  %v2337 = vpop.f32.mrb[0].mxu0
  %v2338 = vadd.f32 %v481, %v2337
  %v2339 = vpop.f32.mrb[0].mxu0
  %v2340 = vpop.f32.mrb[0].mxu0
  %v2341 = vadd.f32 %v482, %v2340
  %v2342 = vpop.f32.mrb[0].mxu0
  %2343 = vmatprep.mubr.bf16.mxu0 0
  %2344 = vmatmul.mubr.bf16.gmra.mrb[0].mxu0 %v1421
  %v2345 = vpop.f32.mrb[0].mxu0
  %v2346 = vadd.f32 %v483, %v2345
  %v2347 = vpop.f32.mrb[0].mxu0
  %v2348 = vpop.f32.mrb[0].mxu0
  %v2349 = vadd.f32 %v484, %v2348
  %v2350 = vpop.f32.mrb[0].mxu0
  %2351 = vmatprep.mubr.bf16.mxu0 0
  %2352 = vmatmul.mubr.bf16.gmra.mrb[0].mxu0 %v1424
  %v2353 = vpop.f32.mrb[0].mxu0
  %v2354 = vadd.f32 %v485, %v2353
  %v2355 = vpop.f32.mrb[0].mxu0
  %v2356 = vpop.f32.mrb[0].mxu0
  %v2357 = vadd.f32 %v486, %v2356
  %v2358 = vpop.f32.mrb[0].mxu0
  %2359 = vmatprep.mubr.bf16.mxu0 0
  %2360 = vmatmul.mubr.bf16.gmra.mrb[0].mxu0 %v1427
  %v2361 = vpop.f32.mrb[0].mxu0
  %v2362 = vadd.f32 %v487, %v2361
  %v2363 = vpop.f32.mrb[0].mxu0
  %v2364 = vpop.f32.mrb[0].mxu0
  %v2365 = vadd.f32 %v488, %v2364
  %v2366 = vpop.f32.mrb[0].mxu0
  %2367 = vmatprep.mubr.bf16.mxu0 0
  %2368 = vmatmul.mubr.bf16.gmra.mrb[0].mxu0 %v1430
  %v2369 = vpop.f32.mrb[0].mxu0
  %v2370 = vadd.f32 %v489, %v2369
  %v2371 = vpop.f32.mrb[0].mxu0
  %v2372 = vpop.f32.mrb[0].mxu0
  %v2373 = vadd.f32 %v490, %v2372
  %v2374 = vpop.f32.mrb[0].mxu0
  %2375 = vmatprep.mubr.bf16.mxu0 0
  %2376 = vmatmul.mubr.bf16.gmra.mrb[0].mxu0 %v1433
  %v2377 = vpop.f32.mrb[0].mxu0
  %v2378 = vadd.f32 %v491, %v2377
  %v2379 = vpop.f32.mrb[0].mxu0
  %v2380 = vpop.f32.mrb[0].mxu0
  %v2381 = vadd.f32 %v492, %v2380
  %v2382 = vpop.f32.mrb[0].mxu0
  %2383 = vdwg.mxu0
  %v2384 = vxor.u32 %v1474, 2147483648
  %v2385 = vxor.u32 %v1477, 2147483648
  %v2386 = vxor.u32 %v1482, 2147483648
  %v2387 = vxor.u32 %v1485, 2147483648
  %v2388 = vxor.u32 %v1490, 2147483648
  %v2389 = vxor.u32 %v1493, 2147483648
  %v2390 = vxor.u32 %v1498, 2147483648
  %v2391 = vxor.u32 %v1501, 2147483648
  %v2392 = vxor.u32 %v1506, 2147483648
  %v2393 = vxor.u32 %v1509, 2147483648
  %v2394 = vxor.u32 %v1514, 2147483648
  %v2395 = vxor.u32 %v1517, 2147483648
  %v2396 = vxor.u32 %v1522, 2147483648
  %v2397 = vxor.u32 %v1525, 2147483648
  %v2398 = vxor.u32 %v1530, 2147483648
  %v2399 = vxor.u32 %v1533, 2147483648
  %v2400 = vxor.u32 %v1538, 2147483648
  %v2401 = vxor.u32 %v1541, 2147483648
  %v2402 = vxor.u32 %v1546, 2147483648
  %v2403 = vxor.u32 %v1549, 2147483648
  %v2404 = vxor.u32 %v1554, 2147483648
  %v2405 = vxor.u32 %v1557, 2147483648
  %v2406 = vxor.u32 %v1562, 2147483648
  %v2407 = vxor.u32 %v1565, 2147483648
  %v2408 = vxor.u32 %v1570, 2147483648
  %v2409 = vxor.u32 %v1573, 2147483648
  %v2410 = vxor.u32 %v1578, 2147483648
  %v2411 = vxor.u32 %v1581, 2147483648
  %v2412 = vxor.u32 %v1586, 2147483648
  %v2413 = vxor.u32 %v1589, 2147483648
  %v2414 = vxor.u32 %v1594, 2147483648
  %v2415 = vxor.u32 %v1597, 2147483648
  %v2416 = vxor.u32 %v1602, 2147483648
  %v2417 = vxor.u32 %v1605, 2147483648
  %v2418 = vxor.u32 %v1610, 2147483648
  %v2419 = vxor.u32 %v1613, 2147483648
  %v2420 = vxor.u32 %v1618, 2147483648
  %v2421 = vxor.u32 %v1621, 2147483648
  %v2422 = vxor.u32 %v1626, 2147483648
  %v2423 = vxor.u32 %v1629, 2147483648
  %v2424 = vxor.u32 %v1634, 2147483648
  %v2425 = vxor.u32 %v1637, 2147483648
  %v2426 = vxor.u32 %v1642, 2147483648
  %v2427 = vxor.u32 %v1645, 2147483648
  %v2428 = vxor.u32 %v1650, 2147483648
  %v2429 = vxor.u32 %v1653, 2147483648
  %v2430 = vxor.u32 %v1658, 2147483648
  %v2431 = vxor.u32 %v1661, 2147483648
  %v2432 = vxor.u32 %v1666, 2147483648
  %v2433 = vxor.u32 %v1669, 2147483648
  %v2434 = vxor.u32 %v1674, 2147483648
  %v2435 = vxor.u32 %v1677, 2147483648
  %v2436 = vxor.u32 %v1682, 2147483648
  %v2437 = vxor.u32 %v1685, 2147483648
  %v2438 = vxor.u32 %v1690, 2147483648
  %v2439 = vxor.u32 %v1693, 2147483648
  %v2440 = vxor.u32 %v1698, 2147483648
  %v2441 = vxor.u32 %v1701, 2147483648
  %v2442 = vxor.u32 %v1706, 2147483648
  %v2443 = vxor.u32 %v1709, 2147483648
  %v2444 = vxor.u32 %v1714, 2147483648
  %v2445 = vxor.u32 %v1717, 2147483648
  %v2446 = vxor.u32 %v1722, 2147483648
  %v2447 = vxor.u32 %v1725, 2147483648
  %v2448 = vxor.u32 %v1730, 2147483648
  %v2449 = vxor.u32 %v1733, 2147483648
  %v2450 = vxor.u32 %v1738, 2147483648
  %v2451 = vxor.u32 %v1741, 2147483648
  %v2452 = vxor.u32 %v1746, 2147483648
  %v2453 = vxor.u32 %v1749, 2147483648
  %v2454 = vxor.u32 %v1754, 2147483648
  %v2455 = vxor.u32 %v1757, 2147483648
  %v2456 = vxor.u32 %v1762, 2147483648
  %v2457 = vxor.u32 %v1765, 2147483648
  %v2458 = vxor.u32 %v1770, 2147483648
  %v2459 = vxor.u32 %v1773, 2147483648
  %v2460 = vxor.u32 %v1778, 2147483648
  %v2461 = vxor.u32 %v1781, 2147483648
  %v2462 = vxor.u32 %v1786, 2147483648
  %v2463 = vxor.u32 %v1789, 2147483648
  %v2464 = vxor.u32 %v1794, 2147483648
  %v2465 = vxor.u32 %v1797, 2147483648
  %v2466 = vxor.u32 %v1802, 2147483648
  %v2467 = vxor.u32 %v1805, 2147483648
  %v2468 = vxor.u32 %v1810, 2147483648
  %v2469 = vxor.u32 %v1813, 2147483648
  %v2470 = vxor.u32 %v1818, 2147483648
  %v2471 = vxor.u32 %v1821, 2147483648
  %v2472 = vxor.u32 %v1826, 2147483648
  %v2473 = vxor.u32 %v1829, 2147483648
  %v2474 = vxor.u32 %v1834, 2147483648
  %v2475 = vxor.u32 %v1837, 2147483648
  %v2476 = vxor.u32 %v1842, 2147483648
  %v2477 = vxor.u32 %v1845, 2147483648
  %v2478 = vxor.u32 %v1850, 2147483648
  %v2479 = vxor.u32 %v1853, 2147483648
  %v2480 = vxor.u32 %v1858, 2147483648
  %v2481 = vxor.u32 %v1861, 2147483648
  %v2482 = vxor.u32 %v1866, 2147483648
  %v2483 = vxor.u32 %v1869, 2147483648
  %v2484 = vxor.u32 %v1874, 2147483648
  %v2485 = vxor.u32 %v1877, 2147483648
  %v2486 = vxor.u32 %v1882, 2147483648
  %v2487 = vxor.u32 %v1885, 2147483648
  %v2488 = vxor.u32 %v1890, 2147483648
  %v2489 = vxor.u32 %v1893, 2147483648
  %v2490 = vxor.u32 %v1898, 2147483648
  %v2491 = vxor.u32 %v1901, 2147483648
  %v2492 = vxor.u32 %v1906, 2147483648
  %v2493 = vxor.u32 %v1909, 2147483648
  %v2494 = vxor.u32 %v1914, 2147483648
  %v2495 = vxor.u32 %v1917, 2147483648
  %v2496 = vxor.u32 %v1922, 2147483648
  %v2497 = vxor.u32 %v1925, 2147483648
  %v2498 = vxor.u32 %v1930, 2147483648
  %v2499 = vxor.u32 %v1933, 2147483648
  %v2500 = vxor.u32 %v1938, 2147483648
  %v2501 = vxor.u32 %v1941, 2147483648
  %v2502 = vxor.u32 %v1946, 2147483648
  %v2503 = vxor.u32 %v1949, 2147483648
  %v2504 = vxor.u32 %v1954, 2147483648
  %v2505 = vxor.u32 %v1957, 2147483648
  %v2506 = vxor.u32 %v1962, 2147483648
  %v2507 = vxor.u32 %v1965, 2147483648
  %v2508 = vxor.u32 %v1970, 2147483648
  %v2509 = vxor.u32 %v1973, 2147483648
  %v2510 = vxor.u32 %v1978, 2147483648
  %v2511 = vxor.u32 %v1981, 2147483648
  %v2512 = vxor.u32 %v1986, 2147483648
  %v2513 = vxor.u32 %v1989, 2147483648
  %v2514 = vxor.u32 %v1994, 2147483648
  %v2515 = vxor.u32 %v1997, 2147483648
  %v2516 = vxor.u32 %v2002, 2147483648
  %v2517 = vxor.u32 %v2005, 2147483648
  %v2518 = vxor.u32 %v2010, 2147483648
  %v2519 = vxor.u32 %v2013, 2147483648
  %v2520 = vxor.u32 %v2018, 2147483648
  %v2521 = vxor.u32 %v2021, 2147483648
  %v2522 = vxor.u32 %v2026, 2147483648
  %v2523 = vxor.u32 %v2029, 2147483648
  %v2524 = vxor.u32 %v2034, 2147483648
  %v2525 = vxor.u32 %v2037, 2147483648
  %v2526 = vxor.u32 %v2042, 2147483648
  %v2527 = vxor.u32 %v2045, 2147483648
  %v2528 = vxor.u32 %v2050, 2147483648
  %v2529 = vxor.u32 %v2053, 2147483648
  %v2530 = vxor.u32 %v2058, 2147483648
  %v2531 = vxor.u32 %v2061, 2147483648
  %v2532 = vxor.u32 %v2066, 2147483648
  %v2533 = vxor.u32 %v2069, 2147483648
  %v2534 = vxor.u32 %v2074, 2147483648
  %v2535 = vxor.u32 %v2077, 2147483648
  %v2536 = vxor.u32 %v2082, 2147483648
  %v2537 = vxor.u32 %v2085, 2147483648
  %v2538 = vxor.u32 %v2090, 2147483648
  %v2539 = vxor.u32 %v2093, 2147483648
  %v2540 = vxor.u32 %v2098, 2147483648
  %v2541 = vxor.u32 %v2101, 2147483648
  %v2542 = vxor.u32 %v2106, 2147483648
  %v2543 = vxor.u32 %v2109, 2147483648
  %v2544 = vxor.u32 %v2114, 2147483648
  %v2545 = vxor.u32 %v2117, 2147483648
  %v2546 = vxor.u32 %v2122, 2147483648
  %v2547 = vxor.u32 %v2125, 2147483648
  %v2548 = vxor.u32 %v2130, 2147483648
  %v2549 = vxor.u32 %v2133, 2147483648
  %v2550 = vxor.u32 %v2138, 2147483648
  %v2551 = vxor.u32 %v2141, 2147483648
  %v2552 = vxor.u32 %v2146, 2147483648
  %v2553 = vxor.u32 %v2149, 2147483648
  %v2554 = vxor.u32 %v2154, 2147483648
  %v2555 = vxor.u32 %v2157, 2147483648
  %v2556 = vxor.u32 %v2162, 2147483648
  %v2557 = vxor.u32 %v2165, 2147483648
  %v2558 = vxor.u32 %v2170, 2147483648
  %v2559 = vxor.u32 %v2173, 2147483648
  %v2560 = vxor.u32 %v2178, 2147483648
  %v2561 = vxor.u32 %v2181, 2147483648
  %v2562 = vxor.u32 %v2186, 2147483648
  %v2563 = vxor.u32 %v2189, 2147483648
  %v2564 = vxor.u32 %v2194, 2147483648
  %v2565 = vxor.u32 %v2197, 2147483648
  %v2566 = vxor.u32 %v2202, 2147483648
  %v2567 = vxor.u32 %v2205, 2147483648
  %v2568 = vxor.u32 %v2210, 2147483648
  %v2569 = vxor.u32 %v2213, 2147483648
  %v2570 = vxor.u32 %v2218, 2147483648
  %v2571 = vxor.u32 %v2221, 2147483648
  %v2572 = vxor.u32 %v2226, 2147483648
  %v2573 = vxor.u32 %v2229, 2147483648
  %v2574 = vxor.u32 %v2234, 2147483648
  %v2575 = vxor.u32 %v2237, 2147483648
  %v2576 = vxor.u32 %v2242, 2147483648
  %v2577 = vxor.u32 %v2245, 2147483648
  %v2578 = vxor.u32 %v2250, 2147483648
  %v2579 = vxor.u32 %v2253, 2147483648
  %v2580 = vxor.u32 %v2258, 2147483648
  %v2581 = vxor.u32 %v2261, 2147483648
  %v2582 = vxor.u32 %v2266, 2147483648
  %v2583 = vxor.u32 %v2269, 2147483648
  %v2584 = vxor.u32 %v2274, 2147483648
  %v2585 = vxor.u32 %v2277, 2147483648
  %v2586 = vxor.u32 %v2282, 2147483648
  %v2587 = vxor.u32 %v2285, 2147483648
  %v2588 = vxor.u32 %v2290, 2147483648
  %v2589 = vxor.u32 %v2293, 2147483648
  %v2590 = vxor.u32 %v2298, 2147483648
  %v2591 = vxor.u32 %v2301, 2147483648
  %v2592 = vxor.u32 %v2306, 2147483648
  %v2593 = vxor.u32 %v2309, 2147483648
  %v2594 = vxor.u32 %v2314, 2147483648
  %v2595 = vxor.u32 %v2317, 2147483648
  %v2596 = vxor.u32 %v2322, 2147483648
  %v2597 = vxor.u32 %v2325, 2147483648
  %v2598 = vxor.u32 %v2330, 2147483648
  %v2599 = vxor.u32 %v2333, 2147483648
  %v2600 = vxor.u32 %v2338, 2147483648
  %v2601 = vxor.u32 %v2341, 2147483648
  %v2602 = vxor.u32 %v2346, 2147483648
  %v2603 = vxor.u32 %v2349, 2147483648
  %v2604 = vxor.u32 %v2354, 2147483648
  %v2605 = vxor.u32 %v2357, 2147483648
  %v2606 = vxor.u32 %v2362, 2147483648
  %v2607 = vxor.u32 %v2365, 2147483648
  %v2608 = vxor.u32 %v2370, 2147483648
  %v2609 = vxor.u32 %v2373, 2147483648
  %v2610 = vxor.u32 %v2378, 2147483648
  %v2611 = vxor.u32 %v2381, 2147483648
  %v2612 = vmul.f32 %v2384, 1.442695
  %v2613 = vpow.pop %v2612
  %v2614 = vmul.f32 %v2385, 1.442695
  %v2615 = vpow.pop %v2614
  %v2616 = vmul.f32 %v2386, 1.442695
  %v2617 = vpow.pop %v2616
  %v2618 = vmul.f32 %v2387, 1.442695
  %v2619 = vpow.pop %v2618
  %v2620 = vmul.f32 %v2388, 1.442695
  %v2621 = vpow.pop %v2620
  %v2622 = vmul.f32 %v2389, 1.442695
  %v2623 = vpow.pop %v2622
  %v2624 = vmul.f32 %v2390, 1.442695
  %v2625 = vpow.pop %v2624
  %v2626 = vmul.f32 %v2391, 1.442695
  %v2627 = vpow.pop %v2626
  %v2628 = vmul.f32 %v2392, 1.442695
  %v2629 = vpow.pop %v2628
  %v2630 = vmul.f32 %v2393, 1.442695
  %v2631 = vpow.pop %v2630
  %v2632 = vmul.f32 %v2394, 1.442695
  %v2633 = vpow.pop %v2632
  %v2634 = vmul.f32 %v2395, 1.442695
  %v2635 = vpow.pop %v2634
  %v2636 = vmul.f32 %v2396, 1.442695
  %v2637 = vpow.pop %v2636
  %v2638 = vmul.f32 %v2397, 1.442695
  %v2639 = vpow.pop %v2638
  %v2640 = vmul.f32 %v2398, 1.442695
  %v2641 = vpow.pop %v2640
  %v2642 = vmul.f32 %v2399, 1.442695
  %v2643 = vpow.pop %v2642
  %v2644 = vmul.f32 %v2400, 1.442695
  %v2645 = vpow.pop %v2644
  %v2646 = vmul.f32 %v2401, 1.442695
  %v2647 = vpow.pop %v2646
  %v2648 = vmul.f32 %v2402, 1.442695
  %v2649 = vpow.pop %v2648
  %v2650 = vmul.f32 %v2403, 1.442695
  %v2651 = vpow.pop %v2650
  %v2652 = vmul.f32 %v2404, 1.442695
  %v2653 = vpow.pop %v2652
  %v2654 = vmul.f32 %v2405, 1.442695
  %v2655 = vpow.pop %v2654
  %v2656 = vmul.f32 %v2406, 1.442695
  %v2657 = vpow.pop %v2656
  %v2658 = vmul.f32 %v2407, 1.442695
  %v2659 = vpow.pop %v2658
  %v2660 = vmul.f32 %v2408, 1.442695
  %v2661 = vpow.pop %v2660
  %v2662 = vmul.f32 %v2409, 1.442695
  %v2663 = vpow.pop %v2662
  %v2664 = vmul.f32 %v2410, 1.442695
  %v2665 = vpow.pop %v2664
  %v2666 = vmul.f32 %v2411, 1.442695
  %v2667 = vpow.pop %v2666
  %v2668 = vmul.f32 %v2412, 1.442695
  %v2669 = vpow.pop %v2668
  %v2670 = vmul.f32 %v2413, 1.442695
  %v2671 = vpow.pop %v2670
  %v2672 = vmul.f32 %v2414, 1.442695
  %v2673 = vpow.pop %v2672
  %v2674 = vmul.f32 %v2415, 1.442695
  %v2675 = vpow.pop %v2674
  %v2676 = vmul.f32 %v2416, 1.442695
  %v2677 = vpow.pop %v2676
  %v2678 = vmul.f32 %v2417, 1.442695
  %v2679 = vpow.pop %v2678
  %v2680 = vmul.f32 %v2418, 1.442695
  %v2681 = vpow.pop %v2680
  %v2682 = vmul.f32 %v2419, 1.442695
  %v2683 = vpow.pop %v2682
  %v2684 = vmul.f32 %v2420, 1.442695
  %v2685 = vpow.pop %v2684
  %v2686 = vmul.f32 %v2421, 1.442695
  %v2687 = vpow.pop %v2686
  %v2688 = vmul.f32 %v2422, 1.442695
  %v2689 = vpow.pop %v2688
  %v2690 = vmul.f32 %v2423, 1.442695
  %v2691 = vpow.pop %v2690
  %v2692 = vmul.f32 %v2424, 1.442695
  %v2693 = vpow.pop %v2692
  %v2694 = vmul.f32 %v2425, 1.442695
  %v2695 = vpow.pop %v2694
  %v2696 = vmul.f32 %v2426, 1.442695
  %v2697 = vpow.pop %v2696
  %v2698 = vmul.f32 %v2427, 1.442695
  %v2699 = vpow.pop %v2698
  %v2700 = vmul.f32 %v2428, 1.442695
  %v2701 = vpow.pop %v2700
  %v2702 = vmul.f32 %v2429, 1.442695
  %v2703 = vpow.pop %v2702
  %v2704 = vmul.f32 %v2430, 1.442695
  %v2705 = vpow.pop %v2704
  %v2706 = vmul.f32 %v2431, 1.442695
  %v2707 = vpow.pop %v2706
  %v2708 = vmul.f32 %v2432, 1.442695
  %v2709 = vpow.pop %v2708
  %v2710 = vmul.f32 %v2433, 1.442695
  %v2711 = vpow.pop %v2710
  %v2712 = vmul.f32 %v2434, 1.442695
  %v2713 = vpow.pop %v2712
  %v2714 = vmul.f32 %v2435, 1.442695
  %v2715 = vpow.pop %v2714
  %v2716 = vmul.f32 %v2436, 1.442695
  %v2717 = vpow.pop %v2716
  %v2718 = vmul.f32 %v2437, 1.442695
  %v2719 = vpow.pop %v2718
  %v2720 = vmul.f32 %v2438, 1.442695
  %v2721 = vpow.pop %v2720
  %v2722 = vmul.f32 %v2439, 1.442695
  %v2723 = vpow.pop %v2722
  %v2724 = vmul.f32 %v2440, 1.442695
  %v2725 = vpow.pop %v2724
  %v2726 = vmul.f32 %v2441, 1.442695
  %v2727 = vpow.pop %v2726
  %v2728 = vmul.f32 %v2442, 1.442695
  %v2729 = vpow.pop %v2728
  %v2730 = vmul.f32 %v2443, 1.442695
  %v2731 = vpow.pop %v2730
  %v2732 = vmul.f32 %v2444, 1.442695
  %v2733 = vpow.pop %v2732
  %v2734 = vmul.f32 %v2445, 1.442695
  %v2735 = vpow.pop %v2734
  %v2736 = vmul.f32 %v2446, 1.442695
  %v2737 = vpow.pop %v2736
  %v2738 = vmul.f32 %v2447, 1.442695
  %v2739 = vpow.pop %v2738
  %v2740 = vmul.f32 %v2448, 1.442695
  %v2741 = vpow.pop %v2740
  %v2742 = vmul.f32 %v2449, 1.442695
  %v2743 = vpow.pop %v2742
  %v2744 = vmul.f32 %v2450, 1.442695
  %v2745 = vpow.pop %v2744
  %v2746 = vmul.f32 %v2451, 1.442695
  %v2747 = vpow.pop %v2746
  %v2748 = vmul.f32 %v2452, 1.442695
  %v2749 = vpow.pop %v2748
  %v2750 = vmul.f32 %v2453, 1.442695
  %v2751 = vpow.pop %v2750
  %v2752 = vmul.f32 %v2454, 1.442695
  %v2753 = vpow.pop %v2752
  %v2754 = vmul.f32 %v2455, 1.442695
  %v2755 = vpow.pop %v2754
  %v2756 = vmul.f32 %v2456, 1.442695
  %v2757 = vpow.pop %v2756
  %v2758 = vmul.f32 %v2457, 1.442695
  %v2759 = vpow.pop %v2758
  %v2760 = vmul.f32 %v2458, 1.442695
  %v2761 = vpow.pop %v2760
  %v2762 = vmul.f32 %v2459, 1.442695
  %v2763 = vpow.pop %v2762
  %v2764 = vmul.f32 %v2460, 1.442695
  %v2765 = vpow.pop %v2764
  %v2766 = vmul.f32 %v2461, 1.442695
  %v2767 = vpow.pop %v2766
  %v2768 = vmul.f32 %v2462, 1.442695
  %v2769 = vpow.pop %v2768
  %v2770 = vmul.f32 %v2463, 1.442695
  %v2771 = vpow.pop %v2770
  %v2772 = vmul.f32 %v2464, 1.442695
  %v2773 = vpow.pop %v2772
  %v2774 = vmul.f32 %v2465, 1.442695
  %v2775 = vpow.pop %v2774
  %v2776 = vmul.f32 %v2466, 1.442695
  %v2777 = vpow.pop %v2776
  %v2778 = vmul.f32 %v2467, 1.442695
  %v2779 = vpow.pop %v2778
  %v2780 = vmul.f32 %v2468, 1.442695
  %v2781 = vpow.pop %v2780
  %v2782 = vmul.f32 %v2469, 1.442695
  %v2783 = vpow.pop %v2782
  %v2784 = vmul.f32 %v2470, 1.442695
  %v2785 = vpow.pop %v2784
  %v2786 = vmul.f32 %v2471, 1.442695
  %v2787 = vpow.pop %v2786
  %v2788 = vmul.f32 %v2472, 1.442695
  %v2789 = vpow.pop %v2788
  %v2790 = vmul.f32 %v2473, 1.442695
  %v2791 = vpow.pop %v2790
  %v2792 = vmul.f32 %v2474, 1.442695
  %v2793 = vpow.pop %v2792
  %v2794 = vmul.f32 %v2475, 1.442695
  %v2795 = vpow.pop %v2794
  %v2796 = vmul.f32 %v2476, 1.442695
  %v2797 = vpow.pop %v2796
  %v2798 = vmul.f32 %v2477, 1.442695
  %v2799 = vpow.pop %v2798
  %v2800 = vmul.f32 %v2478, 1.442695
  %v2801 = vpow.pop %v2800
  %v2802 = vmul.f32 %v2479, 1.442695
  %v2803 = vpow.pop %v2802
  %v2804 = vmul.f32 %v2480, 1.442695
  %v2805 = vpow.pop %v2804
  %v2806 = vmul.f32 %v2481, 1.442695
  %v2807 = vpow.pop %v2806
  %v2808 = vmul.f32 %v2482, 1.442695
  %v2809 = vpow.pop %v2808
  %v2810 = vmul.f32 %v2483, 1.442695
  %v2811 = vpow.pop %v2810
  %v2812 = vmul.f32 %v2484, 1.442695
  %v2813 = vpow.pop %v2812
  %v2814 = vmul.f32 %v2485, 1.442695
  %v2815 = vpow.pop %v2814
  %v2816 = vmul.f32 %v2486, 1.442695
  %v2817 = vpow.pop %v2816
  %v2818 = vmul.f32 %v2487, 1.442695
  %v2819 = vpow.pop %v2818
  %v2820 = vmul.f32 %v2488, 1.442695
  %v2821 = vpow.pop %v2820
  %v2822 = vmul.f32 %v2489, 1.442695
  %v2823 = vpow.pop %v2822
  %v2824 = vmul.f32 %v2490, 1.442695
  %v2825 = vpow.pop %v2824
  %v2826 = vmul.f32 %v2491, 1.442695
  %v2827 = vpow.pop %v2826
  %v2828 = vmul.f32 %v2492, 1.442695
  %v2829 = vpow.pop %v2828
  %v2830 = vmul.f32 %v2493, 1.442695
  %v2831 = vpow.pop %v2830
  %v2832 = vmul.f32 %v2494, 1.442695
  %v2833 = vpow.pop %v2832
  %v2834 = vmul.f32 %v2495, 1.442695
  %v2835 = vpow.pop %v2834
  %v2836 = vmul.f32 %v2496, 1.442695
  %v2837 = vpow.pop %v2836
  %v2838 = vmul.f32 %v2497, 1.442695
  %v2839 = vpow.pop %v2838
  %v2840 = vmul.f32 %v2498, 1.442695
  %v2841 = vpow.pop %v2840
  %v2842 = vmul.f32 %v2499, 1.442695
  %v2843 = vpow.pop %v2842
  %v2844 = vmul.f32 %v2500, 1.442695
  %v2845 = vpow.pop %v2844
  %v2846 = vmul.f32 %v2501, 1.442695
  %v2847 = vpow.pop %v2846
  %v2848 = vmul.f32 %v2502, 1.442695
  %v2849 = vpow.pop %v2848
  %v2850 = vmul.f32 %v2503, 1.442695
  %v2851 = vpow.pop %v2850
  %v2852 = vmul.f32 %v2504, 1.442695
  %v2853 = vpow.pop %v2852
  %v2854 = vmul.f32 %v2505, 1.442695
  %v2855 = vpow.pop %v2854
  %v2856 = vmul.f32 %v2506, 1.442695
  %v2857 = vpow.pop %v2856
  %v2858 = vmul.f32 %v2507, 1.442695
  %v2859 = vpow.pop %v2858
  %v2860 = vmul.f32 %v2508, 1.442695
  %v2861 = vpow.pop %v2860
  %v2862 = vmul.f32 %v2509, 1.442695
  %v2863 = vpow.pop %v2862
  %v2864 = vmul.f32 %v2510, 1.442695
  %v2865 = vpow.pop %v2864
  %v2866 = vmul.f32 %v2511, 1.442695
  %v2867 = vpow.pop %v2866
  %v2868 = vmul.f32 %v2512, 1.442695
  %v2869 = vpow.pop %v2868
  %v2870 = vmul.f32 %v2513, 1.442695
  %v2871 = vpow.pop %v2870
  %v2872 = vmul.f32 %v2514, 1.442695
  %v2873 = vpow.pop %v2872
  %v2874 = vmul.f32 %v2515, 1.442695
  %v2875 = vpow.pop %v2874
  %v2876 = vmul.f32 %v2516, 1.442695
  %v2877 = vpow.pop %v2876
  %v2878 = vmul.f32 %v2517, 1.442695
  %v2879 = vpow.pop %v2878
  %v2880 = vmul.f32 %v2518, 1.442695
  %v2881 = vpow.pop %v2880
  %v2882 = vmul.f32 %v2519, 1.442695
  %v2883 = vpow.pop %v2882
  %v2884 = vmul.f32 %v2520, 1.442695
  %v2885 = vpow.pop %v2884
  %v2886 = vmul.f32 %v2521, 1.442695
  %v2887 = vpow.pop %v2886
  %v2888 = vmul.f32 %v2522, 1.442695
  %v2889 = vpow.pop %v2888
  %v2890 = vmul.f32 %v2523, 1.442695
  %v2891 = vpow.pop %v2890
  %v2892 = vmul.f32 %v2524, 1.442695
  %v2893 = vpow.pop %v2892
  %v2894 = vmul.f32 %v2525, 1.442695
  %v2895 = vpow.pop %v2894
  %v2896 = vmul.f32 %v2526, 1.442695
  %v2897 = vpow.pop %v2896
  %v2898 = vmul.f32 %v2527, 1.442695
  %v2899 = vpow.pop %v2898
  %v2900 = vmul.f32 %v2528, 1.442695
  %v2901 = vpow.pop %v2900
  %v2902 = vmul.f32 %v2529, 1.442695
  %v2903 = vpow.pop %v2902
  %v2904 = vmul.f32 %v2530, 1.442695
  %v2905 = vpow.pop %v2904
  %v2906 = vmul.f32 %v2531, 1.442695
  %v2907 = vpow.pop %v2906
  %v2908 = vmul.f32 %v2532, 1.442695
  %v2909 = vpow.pop %v2908
  %v2910 = vmul.f32 %v2533, 1.442695
  %v2911 = vpow.pop %v2910
  %v2912 = vmul.f32 %v2534, 1.442695
  %v2913 = vpow.pop %v2912
  %v2914 = vmul.f32 %v2535, 1.442695
  %v2915 = vpow.pop %v2914
  %v2916 = vmul.f32 %v2536, 1.442695
  %v2917 = vpow.pop %v2916
  %v2918 = vmul.f32 %v2537, 1.442695
  %v2919 = vpow.pop %v2918
  %v2920 = vmul.f32 %v2538, 1.442695
  %v2921 = vpow.pop %v2920
  %v2922 = vmul.f32 %v2539, 1.442695
  %v2923 = vpow.pop %v2922
  %v2924 = vmul.f32 %v2540, 1.442695
  %v2925 = vpow.pop %v2924
  %v2926 = vmul.f32 %v2541, 1.442695
  %v2927 = vpow.pop %v2926
  %v2928 = vmul.f32 %v2542, 1.442695
  %v2929 = vpow.pop %v2928
  %v2930 = vmul.f32 %v2543, 1.442695
  %v2931 = vpow.pop %v2930
  %v2932 = vmul.f32 %v2544, 1.442695
  %v2933 = vpow.pop %v2932
  %v2934 = vmul.f32 %v2545, 1.442695
  %v2935 = vpow.pop %v2934
  %v2936 = vmul.f32 %v2546, 1.442695
  %v2937 = vpow.pop %v2936
  %v2938 = vmul.f32 %v2547, 1.442695
  %v2939 = vpow.pop %v2938
  %v2940 = vmul.f32 %v2548, 1.442695
  %v2941 = vpow.pop %v2940
  %v2942 = vmul.f32 %v2549, 1.442695
  %v2943 = vpow.pop %v2942
  %v2944 = vmul.f32 %v2550, 1.442695
  %v2945 = vpow.pop %v2944
  %v2946 = vmul.f32 %v2551, 1.442695
  %v2947 = vpow.pop %v2946
  %v2948 = vmul.f32 %v2552, 1.442695
  %v2949 = vpow.pop %v2948
  %v2950 = vmul.f32 %v2553, 1.442695
  %v2951 = vpow.pop %v2950
  %v2952 = vmul.f32 %v2554, 1.442695
  %v2953 = vpow.pop %v2952
  %v2954 = vmul.f32 %v2555, 1.442695
  %v2955 = vpow.pop %v2954
  %v2956 = vmul.f32 %v2556, 1.442695
  %v2957 = vpow.pop %v2956
  %v2958 = vmul.f32 %v2557, 1.442695
  %v2959 = vpow.pop %v2958
  %v2960 = vmul.f32 %v2558, 1.442695
  %v2961 = vpow.pop %v2960
  %v2962 = vmul.f32 %v2559, 1.442695
  %v2963 = vpow.pop %v2962
  %v2964 = vmul.f32 %v2560, 1.442695
  %v2965 = vpow.pop %v2964
  %v2966 = vmul.f32 %v2561, 1.442695
  %v2967 = vpow.pop %v2966
  %v2968 = vmul.f32 %v2562, 1.442695
  %v2969 = vpow.pop %v2968
  %v2970 = vmul.f32 %v2563, 1.442695
  %v2971 = vpow.pop %v2970
  %v2972 = vmul.f32 %v2564, 1.442695
  %v2973 = vpow.pop %v2972
  %v2974 = vmul.f32 %v2565, 1.442695
  %v2975 = vpow.pop %v2974
  %v2976 = vmul.f32 %v2566, 1.442695
  %v2977 = vpow.pop %v2976
  %v2978 = vmul.f32 %v2567, 1.442695
  %v2979 = vpow.pop %v2978
  %v2980 = vmul.f32 %v2568, 1.442695
  %v2981 = vpow.pop %v2980
  %v2982 = vmul.f32 %v2569, 1.442695
  %v2983 = vpow.pop %v2982
  %v2984 = vmul.f32 %v2570, 1.442695
  %v2985 = vpow.pop %v2984
  %v2986 = vmul.f32 %v2571, 1.442695
  %v2987 = vpow.pop %v2986
  %v2988 = vmul.f32 %v2572, 1.442695
  %v2989 = vpow.pop %v2988
  %v2990 = vmul.f32 %v2573, 1.442695
  %v2991 = vpow.pop %v2990
  %v2992 = vmul.f32 %v2574, 1.442695
  %v2993 = vpow.pop %v2992
  %v2994 = vmul.f32 %v2575, 1.442695
  %v2995 = vpow.pop %v2994
  %v2996 = vmul.f32 %v2576, 1.442695
  %v2997 = vpow.pop %v2996
  %v2998 = vmul.f32 %v2577, 1.442695
  %v2999 = vpow.pop %v2998
  %v3000 = vmul.f32 %v2578, 1.442695
  %v3001 = vpow.pop %v3000
  %v3002 = vmul.f32 %v2579, 1.442695
  %v3003 = vpow.pop %v3002
  %v3004 = vmul.f32 %v2580, 1.442695
  %v3005 = vpow.pop %v3004
  %v3006 = vmul.f32 %v2581, 1.442695
  %v3007 = vpow.pop %v3006
  %v3008 = vmul.f32 %v2582, 1.442695
  %v3009 = vpow.pop %v3008
  %v3010 = vmul.f32 %v2583, 1.442695
  %v3011 = vpow.pop %v3010
  %v3012 = vmul.f32 %v2584, 1.442695
  %v3013 = vpow.pop %v3012
  %v3014 = vmul.f32 %v2585, 1.442695
  %v3015 = vpow.pop %v3014
  %v3016 = vmul.f32 %v2586, 1.442695
  %v3017 = vpow.pop %v3016
  %v3018 = vmul.f32 %v2587, 1.442695
  %v3019 = vpow.pop %v3018
  %v3020 = vmul.f32 %v2588, 1.442695
  %v3021 = vpow.pop %v3020
  %v3022 = vmul.f32 %v2589, 1.442695
  %v3023 = vpow.pop %v3022
  %v3024 = vmul.f32 %v2590, 1.442695
  %v3025 = vpow.pop %v3024
  %v3026 = vmul.f32 %v2591, 1.442695
  %v3027 = vpow.pop %v3026
  %v3028 = vmul.f32 %v2592, 1.442695
  %v3029 = vpow.pop %v3028
  %v3030 = vmul.f32 %v2593, 1.442695
  %v3031 = vpow.pop %v3030
  %v3032 = vmul.f32 %v2594, 1.442695
  %v3033 = vpow.pop %v3032
  %v3034 = vmul.f32 %v2595, 1.442695
  %v3035 = vpow.pop %v3034
  %v3036 = vmul.f32 %v2596, 1.442695
  %v3037 = vpow.pop %v3036
  %v3038 = vmul.f32 %v2597, 1.442695
  %v3039 = vpow.pop %v3038
  %v3040 = vmul.f32 %v2598, 1.442695
  %v3041 = vpow.pop %v3040
  %v3042 = vmul.f32 %v2599, 1.442695
  %v3043 = vpow.pop %v3042
  %v3044 = vmul.f32 %v2600, 1.442695
  %v3045 = vpow.pop %v3044
  %v3046 = vmul.f32 %v2601, 1.442695
  %v3047 = vpow.pop %v3046
  %v3048 = vmul.f32 %v2602, 1.442695
  %v3049 = vpow.pop %v3048
  %v3050 = vmul.f32 %v2603, 1.442695
  %v3051 = vpow.pop %v3050
  %v3052 = vmul.f32 %v2604, 1.442695
  %v3053 = vpow.pop %v3052
  %v3054 = vmul.f32 %v2605, 1.442695
  %v3055 = vpow.pop %v3054
  %v3056 = vmul.f32 %v2606, 1.442695
  %v3057 = vpow.pop %v3056
  %v3058 = vmul.f32 %v2607, 1.442695
  %v3059 = vpow.pop %v3058
  %v3060 = vmul.f32 %v2608, 1.442695
  %v3061 = vpow.pop %v3060
  %v3062 = vmul.f32 %v2609, 1.442695
  %v3063 = vpow.pop %v3062
  %v3064 = vmul.f32 %v2610, 1.442695
  %v3065 = vpow.pop %v3064
  %v3066 = vmul.f32 %v2611, 1.442695
  %v3067 = vpow.pop %v3066
  %v3068 = vadd.f32 %v2613, 1.0
  %v3069 = vadd.f32 %v2615, 1.0
  %v3070 = vadd.f32 %v2617, 1.0
  %v3071 = vadd.f32 %v2619, 1.0
  %v3072 = vadd.f32 %v2621, 1.0
  %v3073 = vadd.f32 %v2623, 1.0
  %v3074 = vadd.f32 %v2625, 1.0
  %v3075 = vadd.f32 %v2627, 1.0
  %v3076 = vadd.f32 %v2629, 1.0
  %v3077 = vadd.f32 %v2631, 1.0
  %v3078 = vadd.f32 %v2633, 1.0
  %v3079 = vadd.f32 %v2635, 1.0
  %v3080 = vadd.f32 %v2637, 1.0
  %v3081 = vadd.f32 %v2639, 1.0
  %v3082 = vadd.f32 %v2641, 1.0
  %v3083 = vadd.f32 %v2643, 1.0
  %v3084 = vadd.f32 %v2645, 1.0
  %v3085 = vadd.f32 %v2647, 1.0
  %v3086 = vadd.f32 %v2649, 1.0
  %v3087 = vadd.f32 %v2651, 1.0
  %v3088 = vadd.f32 %v2653, 1.0
  %v3089 = vadd.f32 %v2655, 1.0
  %v3090 = vadd.f32 %v2657, 1.0
  %v3091 = vadd.f32 %v2659, 1.0
  %v3092 = vadd.f32 %v2661, 1.0
  %v3093 = vadd.f32 %v2663, 1.0
  %v3094 = vadd.f32 %v2665, 1.0
  %v3095 = vadd.f32 %v2667, 1.0
  %v3096 = vadd.f32 %v2669, 1.0
  %v3097 = vadd.f32 %v2671, 1.0
  %v3098 = vadd.f32 %v2673, 1.0
  %v3099 = vadd.f32 %v2675, 1.0
  %v3100 = vadd.f32 %v2677, 1.0
  %v3101 = vadd.f32 %v2679, 1.0
  %v3102 = vadd.f32 %v2681, 1.0
  %v3103 = vadd.f32 %v2683, 1.0
  %v3104 = vadd.f32 %v2685, 1.0
  %v3105 = vadd.f32 %v2687, 1.0
  %v3106 = vadd.f32 %v2689, 1.0
  %v3107 = vadd.f32 %v2691, 1.0
  %v3108 = vadd.f32 %v2693, 1.0
  %v3109 = vadd.f32 %v2695, 1.0
  %v3110 = vadd.f32 %v2697, 1.0
  %v3111 = vadd.f32 %v2699, 1.0
  %v3112 = vadd.f32 %v2701, 1.0
  %v3113 = vadd.f32 %v2703, 1.0
  %v3114 = vadd.f32 %v2705, 1.0
  %v3115 = vadd.f32 %v2707, 1.0
  %v3116 = vadd.f32 %v2709, 1.0
  %v3117 = vadd.f32 %v2711, 1.0
  %v3118 = vadd.f32 %v2713, 1.0
  %v3119 = vadd.f32 %v2715, 1.0
  %v3120 = vadd.f32 %v2717, 1.0
  %v3121 = vadd.f32 %v2719, 1.0
  %v3122 = vadd.f32 %v2721, 1.0
  %v3123 = vadd.f32 %v2723, 1.0
  %v3124 = vadd.f32 %v2725, 1.0
  %v3125 = vadd.f32 %v2727, 1.0
  %v3126 = vadd.f32 %v2729, 1.0
  %v3127 = vadd.f32 %v2731, 1.0
  %v3128 = vadd.f32 %v2733, 1.0
  %v3129 = vadd.f32 %v2735, 1.0
  %v3130 = vadd.f32 %v2737, 1.0
  %v3131 = vadd.f32 %v2739, 1.0
  %v3132 = vadd.f32 %v2741, 1.0
  %v3133 = vadd.f32 %v2743, 1.0
  %v3134 = vadd.f32 %v2745, 1.0
  %v3135 = vadd.f32 %v2747, 1.0
  %v3136 = vadd.f32 %v2749, 1.0
  %v3137 = vadd.f32 %v2751, 1.0
  %v3138 = vadd.f32 %v2753, 1.0
  %v3139 = vadd.f32 %v2755, 1.0
  %v3140 = vadd.f32 %v2757, 1.0
  %v3141 = vadd.f32 %v2759, 1.0
  %v3142 = vadd.f32 %v2761, 1.0
  %v3143 = vadd.f32 %v2763, 1.0
  %v3144 = vadd.f32 %v2765, 1.0
  %v3145 = vadd.f32 %v2767, 1.0
  %v3146 = vadd.f32 %v2769, 1.0
  %v3147 = vadd.f32 %v2771, 1.0
  %v3148 = vadd.f32 %v2773, 1.0
  %v3149 = vadd.f32 %v2775, 1.0
  %v3150 = vadd.f32 %v2777, 1.0
  %v3151 = vadd.f32 %v2779, 1.0
  %v3152 = vadd.f32 %v2781, 1.0
  %v3153 = vadd.f32 %v2783, 1.0
  %v3154 = vadd.f32 %v2785, 1.0
  %v3155 = vadd.f32 %v2787, 1.0
  %v3156 = vadd.f32 %v2789, 1.0
  %v3157 = vadd.f32 %v2791, 1.0
  %v3158 = vadd.f32 %v2793, 1.0
  %v3159 = vadd.f32 %v2795, 1.0
  %v3160 = vadd.f32 %v2797, 1.0
  %v3161 = vadd.f32 %v2799, 1.0
  %v3162 = vadd.f32 %v2801, 1.0
  %v3163 = vadd.f32 %v2803, 1.0
  %v3164 = vadd.f32 %v2805, 1.0
  %v3165 = vadd.f32 %v2807, 1.0
  %v3166 = vadd.f32 %v2809, 1.0
  %v3167 = vadd.f32 %v2811, 1.0
  %v3168 = vadd.f32 %v2813, 1.0
  %v3169 = vadd.f32 %v2815, 1.0
  %v3170 = vadd.f32 %v2817, 1.0
  %v3171 = vadd.f32 %v2819, 1.0
  %v3172 = vadd.f32 %v2821, 1.0
  %v3173 = vadd.f32 %v2823, 1.0
  %v3174 = vadd.f32 %v2825, 1.0
  %v3175 = vadd.f32 %v2827, 1.0
  %v3176 = vadd.f32 %v2829, 1.0
  %v3177 = vadd.f32 %v2831, 1.0
  %v3178 = vadd.f32 %v2833, 1.0
  %v3179 = vadd.f32 %v2835, 1.0
  %v3180 = vadd.f32 %v2837, 1.0
  %v3181 = vadd.f32 %v2839, 1.0
  %v3182 = vadd.f32 %v2841, 1.0
  %v3183 = vadd.f32 %v2843, 1.0
  %v3184 = vadd.f32 %v2845, 1.0
  %v3185 = vadd.f32 %v2847, 1.0
  %v3186 = vadd.f32 %v2849, 1.0
  %v3187 = vadd.f32 %v2851, 1.0
  %v3188 = vadd.f32 %v2853, 1.0
  %v3189 = vadd.f32 %v2855, 1.0
  %v3190 = vadd.f32 %v2857, 1.0
  %v3191 = vadd.f32 %v2859, 1.0
  %v3192 = vadd.f32 %v2861, 1.0
  %v3193 = vadd.f32 %v2863, 1.0
  %v3194 = vadd.f32 %v2865, 1.0
  %v3195 = vadd.f32 %v2867, 1.0
  %v3196 = vadd.f32 %v2869, 1.0
  %v3197 = vadd.f32 %v2871, 1.0
  %v3198 = vadd.f32 %v2873, 1.0
  %v3199 = vadd.f32 %v2875, 1.0
  %v3200 = vadd.f32 %v2877, 1.0
  %v3201 = vadd.f32 %v2879, 1.0
  %v3202 = vadd.f32 %v2881, 1.0
  %v3203 = vadd.f32 %v2883, 1.0
  %v3204 = vadd.f32 %v2885, 1.0
  %v3205 = vadd.f32 %v2887, 1.0
  %v3206 = vadd.f32 %v2889, 1.0
  %v3207 = vadd.f32 %v2891, 1.0
  %v3208 = vadd.f32 %v2893, 1.0
  %v3209 = vadd.f32 %v2895, 1.0
  %v3210 = vadd.f32 %v2897, 1.0
  %v3211 = vadd.f32 %v2899, 1.0
  %v3212 = vadd.f32 %v2901, 1.0
  %v3213 = vadd.f32 %v2903, 1.0
  %v3214 = vadd.f32 %v2905, 1.0
  %v3215 = vadd.f32 %v2907, 1.0
  %v3216 = vadd.f32 %v2909, 1.0
  %v3217 = vadd.f32 %v2911, 1.0
  %v3218 = vadd.f32 %v2913, 1.0
  %v3219 = vadd.f32 %v2915, 1.0
  %v3220 = vadd.f32 %v2917, 1.0
  %v3221 = vadd.f32 %v2919, 1.0
  %v3222 = vadd.f32 %v2921, 1.0
  %v3223 = vadd.f32 %v2923, 1.0
  %v3224 = vadd.f32 %v2925, 1.0
  %v3225 = vadd.f32 %v2927, 1.0
  %v3226 = vadd.f32 %v2929, 1.0
  %v3227 = vadd.f32 %v2931, 1.0
  %v3228 = vadd.f32 %v2933, 1.0
  %v3229 = vadd.f32 %v2935, 1.0
  %v3230 = vadd.f32 %v2937, 1.0
  %v3231 = vadd.f32 %v2939, 1.0
  %v3232 = vadd.f32 %v2941, 1.0
  %v3233 = vadd.f32 %v2943, 1.0
  %v3234 = vadd.f32 %v2945, 1.0
  %v3235 = vadd.f32 %v2947, 1.0
  %v3236 = vadd.f32 %v2949, 1.0
  %v3237 = vadd.f32 %v2951, 1.0
  %v3238 = vadd.f32 %v2953, 1.0
  %v3239 = vadd.f32 %v2955, 1.0
  %v3240 = vadd.f32 %v2957, 1.0
  %v3241 = vadd.f32 %v2959, 1.0
  %v3242 = vadd.f32 %v2961, 1.0
  %v3243 = vadd.f32 %v2963, 1.0
  %v3244 = vadd.f32 %v2965, 1.0
  %v3245 = vadd.f32 %v2967, 1.0
  %v3246 = vadd.f32 %v2969, 1.0
  %v3247 = vadd.f32 %v2971, 1.0
  %v3248 = vadd.f32 %v2973, 1.0
  %v3249 = vadd.f32 %v2975, 1.0
  %v3250 = vadd.f32 %v2977, 1.0
  %v3251 = vadd.f32 %v2979, 1.0
  %v3252 = vadd.f32 %v2981, 1.0
  %v3253 = vadd.f32 %v2983, 1.0
  %v3254 = vadd.f32 %v2985, 1.0
  %v3255 = vadd.f32 %v2987, 1.0
  %v3256 = vadd.f32 %v2989, 1.0
  %v3257 = vadd.f32 %v2991, 1.0
  %v3258 = vadd.f32 %v2993, 1.0
  %v3259 = vadd.f32 %v2995, 1.0
  %v3260 = vadd.f32 %v2997, 1.0
  %v3261 = vadd.f32 %v2999, 1.0
  %v3262 = vadd.f32 %v3001, 1.0
  %v3263 = vadd.f32 %v3003, 1.0
  %v3264 = vadd.f32 %v3005, 1.0
  %v3265 = vadd.f32 %v3007, 1.0
  %v3266 = vadd.f32 %v3009, 1.0
  %v3267 = vadd.f32 %v3011, 1.0
  %v3268 = vadd.f32 %v3013, 1.0
  %v3269 = vadd.f32 %v3015, 1.0
  %v3270 = vadd.f32 %v3017, 1.0
  %v3271 = vadd.f32 %v3019, 1.0
  %v3272 = vadd.f32 %v3021, 1.0
  %v3273 = vadd.f32 %v3023, 1.0
  %v3274 = vadd.f32 %v3025, 1.0
  %v3275 = vadd.f32 %v3027, 1.0
  %v3276 = vadd.f32 %v3029, 1.0
  %v3277 = vadd.f32 %v3031, 1.0
  %v3278 = vadd.f32 %v3033, 1.0
  %v3279 = vadd.f32 %v3035, 1.0
  %v3280 = vadd.f32 %v3037, 1.0
  %v3281 = vadd.f32 %v3039, 1.0
  %v3282 = vadd.f32 %v3041, 1.0
  %v3283 = vadd.f32 %v3043, 1.0
  %v3284 = vadd.f32 %v3045, 1.0
  %v3285 = vadd.f32 %v3047, 1.0
  %v3286 = vadd.f32 %v3049, 1.0
  %v3287 = vadd.f32 %v3051, 1.0
  %v3288 = vadd.f32 %v3053, 1.0
  %v3289 = vadd.f32 %v3055, 1.0
  %v3290 = vadd.f32 %v3057, 1.0
  %v3291 = vadd.f32 %v3059, 1.0
  %v3292 = vadd.f32 %v3061, 1.0
  %v3293 = vadd.f32 %v3063, 1.0
  %v3294 = vadd.f32 %v3065, 1.0
  %v3295 = vadd.f32 %v3067, 1.0
  %v3296 = vrcp.pop %v3068
  %v3297 = vmul.f32 1.0, %v3296
  %v3298 = vrcp.pop %v3069
  %v3299 = vmul.f32 1.0, %v3298
  %v3300 = vrcp.pop %v3070
  %v3301 = vmul.f32 1.0, %v3300
  %v3302 = vrcp.pop %v3071
  %v3303 = vmul.f32 1.0, %v3302
  %v3304 = vrcp.pop %v3072
  %v3305 = vmul.f32 1.0, %v3304
  %v3306 = vrcp.pop %v3073
  %v3307 = vmul.f32 1.0, %v3306
  %v3308 = vrcp.pop %v3074
  %v3309 = vmul.f32 1.0, %v3308
  %v3310 = vrcp.pop %v3075
  %v3311 = vmul.f32 1.0, %v3310
  %v3312 = vrcp.pop %v3076
  %v3313 = vmul.f32 1.0, %v3312
  %v3314 = vrcp.pop %v3077
  %v3315 = vmul.f32 1.0, %v3314
  %v3316 = vrcp.pop %v3078
  %v3317 = vmul.f32 1.0, %v3316
  %v3318 = vrcp.pop %v3079
  %v3319 = vmul.f32 1.0, %v3318
  %v3320 = vrcp.pop %v3080
  %v3321 = vmul.f32 1.0, %v3320
  %v3322 = vrcp.pop %v3081
  %v3323 = vmul.f32 1.0, %v3322
  %v3324 = vrcp.pop %v3082
  %v3325 = vmul.f32 1.0, %v3324
  %v3326 = vrcp.pop %v3083
  %v3327 = vmul.f32 1.0, %v3326
  %v3328 = vrcp.pop %v3084
  %v3329 = vmul.f32 1.0, %v3328
  %v3330 = vrcp.pop %v3085
  %v3331 = vmul.f32 1.0, %v3330
  %v3332 = vrcp.pop %v3086
  %v3333 = vmul.f32 1.0, %v3332
  %v3334 = vrcp.pop %v3087
  %v3335 = vmul.f32 1.0, %v3334
  %v3336 = vrcp.pop %v3088
  %v3337 = vmul.f32 1.0, %v3336
  %v3338 = vrcp.pop %v3089
  %v3339 = vmul.f32 1.0, %v3338
  %v3340 = vrcp.pop %v3090
  %v3341 = vmul.f32 1.0, %v3340
  %v3342 = vrcp.pop %v3091
  %v3343 = vmul.f32 1.0, %v3342
  %v3344 = vrcp.pop %v3092
  %v3345 = vmul.f32 1.0, %v3344
  %v3346 = vrcp.pop %v3093
  %v3347 = vmul.f32 1.0, %v3346
  %v3348 = vrcp.pop %v3094
  %v3349 = vmul.f32 1.0, %v3348
  %v3350 = vrcp.pop %v3095
  %v3351 = vmul.f32 1.0, %v3350
  %v3352 = vrcp.pop %v3096
  %v3353 = vmul.f32 1.0, %v3352
  %v3354 = vrcp.pop %v3097
  %v3355 = vmul.f32 1.0, %v3354
  %v3356 = vrcp.pop %v3098
  %v3357 = vmul.f32 1.0, %v3356
  %v3358 = vrcp.pop %v3099
  %v3359 = vmul.f32 1.0, %v3358
  %v3360 = vrcp.pop %v3100
  %v3361 = vmul.f32 1.0, %v3360
  %v3362 = vrcp.pop %v3101
  %v3363 = vmul.f32 1.0, %v3362
  %v3364 = vrcp.pop %v3102
  %v3365 = vmul.f32 1.0, %v3364
  %v3366 = vrcp.pop %v3103
  %v3367 = vmul.f32 1.0, %v3366
  %v3368 = vrcp.pop %v3104
  %v3369 = vmul.f32 1.0, %v3368
  %v3370 = vrcp.pop %v3105
  %v3371 = vmul.f32 1.0, %v3370
  %v3372 = vrcp.pop %v3106
  %v3373 = vmul.f32 1.0, %v3372
  %v3374 = vrcp.pop %v3107
  %v3375 = vmul.f32 1.0, %v3374
  %v3376 = vrcp.pop %v3108
  %v3377 = vmul.f32 1.0, %v3376
  %v3378 = vrcp.pop %v3109
  %v3379 = vmul.f32 1.0, %v3378
  %v3380 = vrcp.pop %v3110
  %v3381 = vmul.f32 1.0, %v3380
  %v3382 = vrcp.pop %v3111
  %v3383 = vmul.f32 1.0, %v3382
  %v3384 = vrcp.pop %v3112
  %v3385 = vmul.f32 1.0, %v3384
  %v3386 = vrcp.pop %v3113
  %v3387 = vmul.f32 1.0, %v3386
  %v3388 = vrcp.pop %v3114
  %v3389 = vmul.f32 1.0, %v3388
  %v3390 = vrcp.pop %v3115
  %v3391 = vmul.f32 1.0, %v3390
  %v3392 = vrcp.pop %v3116
  %v3393 = vmul.f32 1.0, %v3392
  %v3394 = vrcp.pop %v3117
  %v3395 = vmul.f32 1.0, %v3394
  %v3396 = vrcp.pop %v3118
  %v3397 = vmul.f32 1.0, %v3396
  %v3398 = vrcp.pop %v3119
  %v3399 = vmul.f32 1.0, %v3398
  %v3400 = vrcp.pop %v3120
  %v3401 = vmul.f32 1.0, %v3400
  %v3402 = vrcp.pop %v3121
  %v3403 = vmul.f32 1.0, %v3402
  %v3404 = vrcp.pop %v3122
  %v3405 = vmul.f32 1.0, %v3404
  %v3406 = vrcp.pop %v3123
  %v3407 = vmul.f32 1.0, %v3406
  %v3408 = vrcp.pop %v3124
  %v3409 = vmul.f32 1.0, %v3408
  %v3410 = vrcp.pop %v3125
  %v3411 = vmul.f32 1.0, %v3410
  %v3412 = vrcp.pop %v3126
  %v3413 = vmul.f32 1.0, %v3412
  %v3414 = vrcp.pop %v3127
  %v3415 = vmul.f32 1.0, %v3414
  %v3416 = vrcp.pop %v3128
  %v3417 = vmul.f32 1.0, %v3416
  %v3418 = vrcp.pop %v3129
  %v3419 = vmul.f32 1.0, %v3418
  %v3420 = vrcp.pop %v3130
  %v3421 = vmul.f32 1.0, %v3420
  %v3422 = vrcp.pop %v3131
  %v3423 = vmul.f32 1.0, %v3422
  %v3424 = vrcp.pop %v3132
  %v3425 = vmul.f32 1.0, %v3424
  %v3426 = vrcp.pop %v3133
  %v3427 = vmul.f32 1.0, %v3426
  %v3428 = vrcp.pop %v3134
  %v3429 = vmul.f32 1.0, %v3428
  %v3430 = vrcp.pop %v3135
  %v3431 = vmul.f32 1.0, %v3430
  %v3432 = vrcp.pop %v3136
  %v3433 = vmul.f32 1.0, %v3432
  %v3434 = vrcp.pop %v3137
  %v3435 = vmul.f32 1.0, %v3434
  %v3436 = vrcp.pop %v3138
  %v3437 = vmul.f32 1.0, %v3436
  %v3438 = vrcp.pop %v3139
  %v3439 = vmul.f32 1.0, %v3438
  %v3440 = vrcp.pop %v3140
  %v3441 = vmul.f32 1.0, %v3440
  %v3442 = vrcp.pop %v3141
  %v3443 = vmul.f32 1.0, %v3442
  %v3444 = vrcp.pop %v3142
  %v3445 = vmul.f32 1.0, %v3444
  %v3446 = vrcp.pop %v3143
  %v3447 = vmul.f32 1.0, %v3446
  %v3448 = vrcp.pop %v3144
  %v3449 = vmul.f32 1.0, %v3448
  %v3450 = vrcp.pop %v3145
  %v3451 = vmul.f32 1.0, %v3450
  %v3452 = vrcp.pop %v3146
  %v3453 = vmul.f32 1.0, %v3452
  %v3454 = vrcp.pop %v3147
  %v3455 = vmul.f32 1.0, %v3454
  %v3456 = vrcp.pop %v3148
  %v3457 = vmul.f32 1.0, %v3456
  %v3458 = vrcp.pop %v3149
  %v3459 = vmul.f32 1.0, %v3458
  %v3460 = vrcp.pop %v3150
  %v3461 = vmul.f32 1.0, %v3460
  %v3462 = vrcp.pop %v3151
  %v3463 = vmul.f32 1.0, %v3462
  %v3464 = vrcp.pop %v3152
  %v3465 = vmul.f32 1.0, %v3464
  %v3466 = vrcp.pop %v3153
  %v3467 = vmul.f32 1.0, %v3466
  %v3468 = vrcp.pop %v3154
  %v3469 = vmul.f32 1.0, %v3468
  %v3470 = vrcp.pop %v3155
  %v3471 = vmul.f32 1.0, %v3470
  %v3472 = vrcp.pop %v3156
  %v3473 = vmul.f32 1.0, %v3472
  %v3474 = vrcp.pop %v3157
  %v3475 = vmul.f32 1.0, %v3474
  %v3476 = vrcp.pop %v3158
  %v3477 = vmul.f32 1.0, %v3476
  %v3478 = vrcp.pop %v3159
  %v3479 = vmul.f32 1.0, %v3478
  %v3480 = vrcp.pop %v3160
  %v3481 = vmul.f32 1.0, %v3480
  %v3482 = vrcp.pop %v3161
  %v3483 = vmul.f32 1.0, %v3482
  %v3484 = vrcp.pop %v3162
  %v3485 = vmul.f32 1.0, %v3484
  %v3486 = vrcp.pop %v3163
  %v3487 = vmul.f32 1.0, %v3486
  %v3488 = vrcp.pop %v3164
  %v3489 = vmul.f32 1.0, %v3488
  %v3490 = vrcp.pop %v3165
  %v3491 = vmul.f32 1.0, %v3490
  %v3492 = vrcp.pop %v3166
  %v3493 = vmul.f32 1.0, %v3492
  %v3494 = vrcp.pop %v3167
  %v3495 = vmul.f32 1.0, %v3494
  %v3496 = vrcp.pop %v3168
  %v3497 = vmul.f32 1.0, %v3496
  %v3498 = vrcp.pop %v3169
  %v3499 = vmul.f32 1.0, %v3498
  %v3500 = vrcp.pop %v3170
  %v3501 = vmul.f32 1.0, %v3500
  %v3502 = vrcp.pop %v3171
  %v3503 = vmul.f32 1.0, %v3502
  %v3504 = vrcp.pop %v3172
  %v3505 = vmul.f32 1.0, %v3504
  %v3506 = vrcp.pop %v3173
  %v3507 = vmul.f32 1.0, %v3506
  %v3508 = vrcp.pop %v3174
  %v3509 = vmul.f32 1.0, %v3508
  %v3510 = vrcp.pop %v3175
  %v3511 = vmul.f32 1.0, %v3510
  %v3512 = vrcp.pop %v3176
  %v3513 = vmul.f32 1.0, %v3512
  %v3514 = vrcp.pop %v3177
  %v3515 = vmul.f32 1.0, %v3514
  %v3516 = vrcp.pop %v3178
  %v3517 = vmul.f32 1.0, %v3516
  %v3518 = vrcp.pop %v3179
  %v3519 = vmul.f32 1.0, %v3518
  %v3520 = vrcp.pop %v3180
  %v3521 = vmul.f32 1.0, %v3520
  %v3522 = vrcp.pop %v3181
  %v3523 = vmul.f32 1.0, %v3522
  %v3524 = vrcp.pop %v3182
  %v3525 = vmul.f32 1.0, %v3524
  %v3526 = vrcp.pop %v3183
  %v3527 = vmul.f32 1.0, %v3526
  %v3528 = vrcp.pop %v3184
  %v3529 = vmul.f32 1.0, %v3528
  %v3530 = vrcp.pop %v3185
  %v3531 = vmul.f32 1.0, %v3530
  %v3532 = vrcp.pop %v3186
  %v3533 = vmul.f32 1.0, %v3532
  %v3534 = vrcp.pop %v3187
  %v3535 = vmul.f32 1.0, %v3534
  %v3536 = vrcp.pop %v3188
  %v3537 = vmul.f32 1.0, %v3536
  %v3538 = vrcp.pop %v3189
  %v3539 = vmul.f32 1.0, %v3538
  %v3540 = vrcp.pop %v3190
  %v3541 = vmul.f32 1.0, %v3540
  %v3542 = vrcp.pop %v3191
  %v3543 = vmul.f32 1.0, %v3542
  %v3544 = vrcp.pop %v3192
  %v3545 = vmul.f32 1.0, %v3544
  %v3546 = vrcp.pop %v3193
  %v3547 = vmul.f32 1.0, %v3546
  %v3548 = vrcp.pop %v3194
  %v3549 = vmul.f32 1.0, %v3548
  %v3550 = vrcp.pop %v3195
  %v3551 = vmul.f32 1.0, %v3550
  %v3552 = vrcp.pop %v3196
  %v3553 = vmul.f32 1.0, %v3552
  %v3554 = vrcp.pop %v3197
  %v3555 = vmul.f32 1.0, %v3554
  %v3556 = vrcp.pop %v3198
  %v3557 = vmul.f32 1.0, %v3556
  %v3558 = vrcp.pop %v3199
  %v3559 = vmul.f32 1.0, %v3558
  %v3560 = vrcp.pop %v3200
  %v3561 = vmul.f32 1.0, %v3560
  %v3562 = vrcp.pop %v3201
  %v3563 = vmul.f32 1.0, %v3562
  %v3564 = vrcp.pop %v3202
  %v3565 = vmul.f32 1.0, %v3564
  %v3566 = vrcp.pop %v3203
  %v3567 = vmul.f32 1.0, %v3566
  %v3568 = vrcp.pop %v3204
  %v3569 = vmul.f32 1.0, %v3568
  %v3570 = vrcp.pop %v3205
  %v3571 = vmul.f32 1.0, %v3570
  %v3572 = vrcp.pop %v3206
  %v3573 = vmul.f32 1.0, %v3572
  %v3574 = vrcp.pop %v3207
  %v3575 = vmul.f32 1.0, %v3574
  %v3576 = vrcp.pop %v3208
  %v3577 = vmul.f32 1.0, %v3576
  %v3578 = vrcp.pop %v3209
  %v3579 = vmul.f32 1.0, %v3578
  %v3580 = vrcp.pop %v3210
  %v3581 = vmul.f32 1.0, %v3580
  %v3582 = vrcp.pop %v3211
  %v3583 = vmul.f32 1.0, %v3582
  %v3584 = vrcp.pop %v3212
  %v3585 = vmul.f32 1.0, %v3584
  %v3586 = vrcp.pop %v3213
  %v3587 = vmul.f32 1.0, %v3586
  %v3588 = vrcp.pop %v3214
  %v3589 = vmul.f32 1.0, %v3588
  %v3590 = vrcp.pop %v3215
  %v3591 = vmul.f32 1.0, %v3590
  %v3592 = vrcp.pop %v3216
  %v3593 = vmul.f32 1.0, %v3592
  %v3594 = vrcp.pop %v3217
  %v3595 = vmul.f32 1.0, %v3594
  %v3596 = vrcp.pop %v3218
  %v3597 = vmul.f32 1.0, %v3596
  %v3598 = vrcp.pop %v3219
  %v3599 = vmul.f32 1.0, %v3598
  %v3600 = vrcp.pop %v3220
  %v3601 = vmul.f32 1.0, %v3600
  %v3602 = vrcp.pop %v3221
  %v3603 = vmul.f32 1.0, %v3602
  %v3604 = vrcp.pop %v3222
  %v3605 = vmul.f32 1.0, %v3604
  %v3606 = vrcp.pop %v3223
  %v3607 = vmul.f32 1.0, %v3606
  %v3608 = vrcp.pop %v3224
  %v3609 = vmul.f32 1.0, %v3608
  %v3610 = vrcp.pop %v3225
  %v3611 = vmul.f32 1.0, %v3610
  %v3612 = vrcp.pop %v3226
  %v3613 = vmul.f32 1.0, %v3612
  %v3614 = vrcp.pop %v3227
  %v3615 = vmul.f32 1.0, %v3614
  %v3616 = vrcp.pop %v3228
  %v3617 = vmul.f32 1.0, %v3616
  %v3618 = vrcp.pop %v3229
  %v3619 = vmul.f32 1.0, %v3618
  %v3620 = vrcp.pop %v3230
  %v3621 = vmul.f32 1.0, %v3620
  %v3622 = vrcp.pop %v3231
  %v3623 = vmul.f32 1.0, %v3622
  %v3624 = vrcp.pop %v3232
  %v3625 = vmul.f32 1.0, %v3624
  %v3626 = vrcp.pop %v3233
  %v3627 = vmul.f32 1.0, %v3626
  %v3628 = vrcp.pop %v3234
  %v3629 = vmul.f32 1.0, %v3628
  %v3630 = vrcp.pop %v3235
  %v3631 = vmul.f32 1.0, %v3630
  %v3632 = vrcp.pop %v3236
  %v3633 = vmul.f32 1.0, %v3632
  %v3634 = vrcp.pop %v3237
  %v3635 = vmul.f32 1.0, %v3634
  %v3636 = vrcp.pop %v3238
  %v3637 = vmul.f32 1.0, %v3636
  %v3638 = vrcp.pop %v3239
  %v3639 = vmul.f32 1.0, %v3638
  %v3640 = vrcp.pop %v3240
  %v3641 = vmul.f32 1.0, %v3640
  %v3642 = vrcp.pop %v3241
  %v3643 = vmul.f32 1.0, %v3642
  %v3644 = vrcp.pop %v3242
  %v3645 = vmul.f32 1.0, %v3644
  %v3646 = vrcp.pop %v3243
  %v3647 = vmul.f32 1.0, %v3646
  %v3648 = vrcp.pop %v3244
  %v3649 = vmul.f32 1.0, %v3648
  %v3650 = vrcp.pop %v3245
  %v3651 = vmul.f32 1.0, %v3650
  %v3652 = vrcp.pop %v3246
  %v3653 = vmul.f32 1.0, %v3652
  %v3654 = vrcp.pop %v3247
  %v3655 = vmul.f32 1.0, %v3654
  %v3656 = vrcp.pop %v3248
  %v3657 = vmul.f32 1.0, %v3656
  %v3658 = vrcp.pop %v3249
  %v3659 = vmul.f32 1.0, %v3658
  %v3660 = vrcp.pop %v3250
  %v3661 = vmul.f32 1.0, %v3660
  %v3662 = vrcp.pop %v3251
  %v3663 = vmul.f32 1.0, %v3662
  %v3664 = vrcp.pop %v3252
  %v3665 = vmul.f32 1.0, %v3664
  %v3666 = vrcp.pop %v3253
  %v3667 = vmul.f32 1.0, %v3666
  %v3668 = vrcp.pop %v3254
  %v3669 = vmul.f32 1.0, %v3668
  %v3670 = vrcp.pop %v3255
  %v3671 = vmul.f32 1.0, %v3670
  %v3672 = vrcp.pop %v3256
  %v3673 = vmul.f32 1.0, %v3672
  %v3674 = vrcp.pop %v3257
  %v3675 = vmul.f32 1.0, %v3674
  %v3676 = vrcp.pop %v3258
  %v3677 = vmul.f32 1.0, %v3676
  %v3678 = vrcp.pop %v3259
  %v3679 = vmul.f32 1.0, %v3678
  %v3680 = vrcp.pop %v3260
  %v3681 = vmul.f32 1.0, %v3680
  %v3682 = vrcp.pop %v3261
  %v3683 = vmul.f32 1.0, %v3682
  %v3684 = vrcp.pop %v3262
  %v3685 = vmul.f32 1.0, %v3684
  %v3686 = vrcp.pop %v3263
  %v3687 = vmul.f32 1.0, %v3686
  %v3688 = vrcp.pop %v3264
  %v3689 = vmul.f32 1.0, %v3688
  %v3690 = vrcp.pop %v3265
  %v3691 = vmul.f32 1.0, %v3690
  %v3692 = vrcp.pop %v3266
  %v3693 = vmul.f32 1.0, %v3692
  %v3694 = vrcp.pop %v3267
  %v3695 = vmul.f32 1.0, %v3694
  %v3696 = vrcp.pop %v3268
  %v3697 = vmul.f32 1.0, %v3696
  %v3698 = vrcp.pop %v3269
  %v3699 = vmul.f32 1.0, %v3698
  %v3700 = vrcp.pop %v3270
  %v3701 = vmul.f32 1.0, %v3700
  %v3702 = vrcp.pop %v3271
  %v3703 = vmul.f32 1.0, %v3702
  %v3704 = vrcp.pop %v3272
  %v3705 = vmul.f32 1.0, %v3704
  %v3706 = vrcp.pop %v3273
  %v3707 = vmul.f32 1.0, %v3706
  %v3708 = vrcp.pop %v3274
  %v3709 = vmul.f32 1.0, %v3708
  %v3710 = vrcp.pop %v3275
  %v3711 = vmul.f32 1.0, %v3710
  %v3712 = vrcp.pop %v3276
  %v3713 = vmul.f32 1.0, %v3712
  %v3714 = vrcp.pop %v3277
  %v3715 = vmul.f32 1.0, %v3714
  %v3716 = vrcp.pop %v3278
  %v3717 = vmul.f32 1.0, %v3716
  %v3718 = vrcp.pop %v3279
  %v3719 = vmul.f32 1.0, %v3718
  %v3720 = vrcp.pop %v3280
  %v3721 = vmul.f32 1.0, %v3720
  %v3722 = vrcp.pop %v3281
  %v3723 = vmul.f32 1.0, %v3722
  %v3724 = vrcp.pop %v3282
  %v3725 = vmul.f32 1.0, %v3724
  %v3726 = vrcp.pop %v3283
  %v3727 = vmul.f32 1.0, %v3726
  %v3728 = vrcp.pop %v3284
  %v3729 = vmul.f32 1.0, %v3728
  %v3730 = vrcp.pop %v3285
  %v3731 = vmul.f32 1.0, %v3730
  %v3732 = vrcp.pop %v3286
  %v3733 = vmul.f32 1.0, %v3732
  %v3734 = vrcp.pop %v3287
  %v3735 = vmul.f32 1.0, %v3734
  %v3736 = vrcp.pop %v3288
  %v3737 = vmul.f32 1.0, %v3736
  %v3738 = vrcp.pop %v3289
  %v3739 = vmul.f32 1.0, %v3738
  %v3740 = vrcp.pop %v3290
  %v3741 = vmul.f32 1.0, %v3740
  %v3742 = vrcp.pop %v3291
  %v3743 = vmul.f32 1.0, %v3742
  %v3744 = vrcp.pop %v3292
  %v3745 = vmul.f32 1.0, %v3744
  %v3746 = vrcp.pop %v3293
  %v3747 = vmul.f32 1.0, %v3746
  %v3748 = vrcp.pop %v3294
  %v3749 = vmul.f32 1.0, %v3748
  %v3750 = vrcp.pop %v3295
  %v3751 = vmul.f32 1.0, %v3750
  %v3752 = vld [vmem:[%s1] sm:$0xff]
  %v3753 = vld [vmem:[%s1 + $0x8] sm:$0xff]
  %v3754 = vld [vmem:[%s1 + $0x10] sm:$0xff]
  %v3755 = vld [vmem:[%s1 + $0x18] sm:$0xff]
  %v3756 = vld [vmem:[%s1 + $0x20] sm:$0xff]
  %v3757 = vld [vmem:[%s1 + $0x28] sm:$0xff]
  %v3758 = vld [vmem:[%s1 + $0x30] sm:$0xff]
  %v3759 = vld [vmem:[%s1 + $0x38] sm:$0xff]
  %v3760 = vld [vmem:[%s1 + $0x40] sm:$0xff]
  %v3761 = vld [vmem:[%s1 + $0x48] sm:$0xff]
  %v3762 = vld [vmem:[%s1 + $0x50] sm:$0xff]
  %v3763 = vld [vmem:[%s1 + $0x58] sm:$0xff]
  %v3764 = vld [vmem:[%s1 + $0x60] sm:$0xff]
  %v3765 = vld [vmem:[%s1 + $0x68] sm:$0xff]
  %v3766 = vld [vmem:[%s1 + $0x70] sm:$0xff]
  %v3767 = vld [vmem:[%s1 + $0x78] sm:$0xff]
  %v3768 = vld [vmem:[%s1 + $0x80] sm:$0xff]
  %v3769 = vld [vmem:[%s1 + $0x88] sm:$0xff]
  %v3770 = vld [vmem:[%s1 + $0x90] sm:$0xff]
  %v3771 = vld [vmem:[%s1 + $0x98] sm:$0xff]
  %v3772 = vld [vmem:[%s1 + $0xa0] sm:$0xff]
  %v3773 = vld [vmem:[%s1 + $0xa8] sm:$0xff]
  %v3774 = vld [vmem:[%s1 + $0xb0] sm:$0xff]
  %v3775 = vld [vmem:[%s1 + $0xb8] sm:$0xff]
  %v3776 = vld [vmem:[%s1 + $0xc0] sm:$0xff]
  %v3777 = vld [vmem:[%s1 + $0xc8] sm:$0xff]
  %v3778 = vld [vmem:[%s1 + $0xd0] sm:$0xff]
  %v3779 = vld [vmem:[%s1 + $0xd8] sm:$0xff]
  %v3780 = vld [vmem:[%s1 + $0xe0] sm:$0xff]
  %v3781 = vld [vmem:[%s1 + $0xe8] sm:$0xff]
  %v3782 = vld [vmem:[%s1 + $0xf0] sm:$0xff]
  %v3783 = vld [vmem:[%s1 + $0xf8] sm:$0xff]
  %v3784 = vld [vmem:[%s1 + $0x100] sm:$0xff]
  %v3785 = vld [vmem:[%s1 + $0x108] sm:$0xff]
  %v3786 = vld [vmem:[%s1 + $0x110] sm:$0xff]
  %v3787 = vld [vmem:[%s1 + $0x118] sm:$0xff]
  %v3788 = vld [vmem:[%s1 + $0x120] sm:$0xff]
  %v3789 = vld [vmem:[%s1 + $0x128] sm:$0xff]
  %v3790 = vld [vmem:[%s1 + $0x130] sm:$0xff]
  %v3791 = vld [vmem:[%s1 + $0x138] sm:$0xff]
  %v3792 = vld [vmem:[%s1 + $0x140] sm:$0xff]
  %v3793 = vld [vmem:[%s1 + $0x148] sm:$0xff]
  %v3794 = vld [vmem:[%s1 + $0x150] sm:$0xff]
  %v3795 = vld [vmem:[%s1 + $0x158] sm:$0xff]
  %v3796 = vld [vmem:[%s1 + $0x160] sm:$0xff]
  %v3797 = vld [vmem:[%s1 + $0x168] sm:$0xff]
  %v3798 = vld [vmem:[%s1 + $0x170] sm:$0xff]
  %v3799 = vld [vmem:[%s1 + $0x178] sm:$0xff]
  %v3800 = vld [vmem:[%s1 + $0x180] sm:$0xff]
  %v3801 = vld [vmem:[%s1 + $0x188] sm:$0xff]
  %v3802 = vld [vmem:[%s1 + $0x190] sm:$0xff]
  %v3803 = vld [vmem:[%s1 + $0x198] sm:$0xff]
  %v3804 = vld [vmem:[%s1 + $0x1a0] sm:$0xff]
  %v3805 = vld [vmem:[%s1 + $0x1a8] sm:$0xff]
  %v3806 = vld [vmem:[%s1 + $0x1b0] sm:$0xff]
  %v3807 = vld [vmem:[%s1 + $0x1b8] sm:$0xff]
  %v3808 = vld [vmem:[%s1 + $0x1c0] sm:$0xff]
  %v3809 = vld [vmem:[%s1 + $0x1c8] sm:$0xff]
  %v3810 = vld [vmem:[%s1 + $0x1d0] sm:$0xff]
  %v3811 = vld [vmem:[%s1 + $0x1d8] sm:$0xff]
  %v3812 = vld [vmem:[%s1 + $0x1e0] sm:$0xff]
  %v3813 = vld [vmem:[%s1 + $0x1e8] sm:$0xff]
  %v3814 = vld [vmem:[%s1 + $0x1f0] sm:$0xff]
  %v3815 = vld [vmem:[%s1 + $0x1f8] sm:$0xff]
  %v3816 = vld [vmem:[%s1 + $0x200] sm:$0xff]
  %v3817 = vld [vmem:[%s1 + $0x208] sm:$0xff]
  %v3818 = vld [vmem:[%s1 + $0x210] sm:$0xff]
  %v3819 = vld [vmem:[%s1 + $0x218] sm:$0xff]
  %v3820 = vld [vmem:[%s1 + $0x220] sm:$0xff]
  %v3821 = vld [vmem:[%s1 + $0x228] sm:$0xff]
  %v3822 = vld [vmem:[%s1 + $0x230] sm:$0xff]
  %v3823 = vld [vmem:[%s1 + $0x238] sm:$0xff]
  %v3824 = vld [vmem:[%s1 + $0x240] sm:$0xff]
  %v3825 = vld [vmem:[%s1 + $0x248] sm:$0xff]
  %v3826 = vld [vmem:[%s1 + $0x250] sm:$0xff]
  %v3827 = vld [vmem:[%s1 + $0x258] sm:$0xff]
  %v3828 = vld [vmem:[%s1 + $0x260] sm:$0xff]
  %v3829 = vld [vmem:[%s1 + $0x268] sm:$0xff]
  %v3830 = vld [vmem:[%s1 + $0x270] sm:$0xff]
  %v3831 = vld [vmem:[%s1 + $0x278] sm:$0xff]
  %v3832 = vld [vmem:[%s1 + $0x280] sm:$0xff]
  %v3833 = vld [vmem:[%s1 + $0x288] sm:$0xff]
  %v3834 = vld [vmem:[%s1 + $0x290] sm:$0xff]
  %v3835 = vld [vmem:[%s1 + $0x298] sm:$0xff]
  %v3836 = vld [vmem:[%s1 + $0x2a0] sm:$0xff]
  %v3837 = vld [vmem:[%s1 + $0x2a8] sm:$0xff]
  %v3838 = vld [vmem:[%s1 + $0x2b0] sm:$0xff]
  %v3839 = vld [vmem:[%s1 + $0x2b8] sm:$0xff]
  %v3840 = vld [vmem:[%s1 + $0x2c0] sm:$0xff]
  %v3841 = vld [vmem:[%s1 + $0x2c8] sm:$0xff]
  %v3842 = vld [vmem:[%s1 + $0x2d0] sm:$0xff]
  %v3843 = vld [vmem:[%s1 + $0x2d8] sm:$0xff]
  %v3844 = vld [vmem:[%s1 + $0x2e0] sm:$0xff]
  %v3845 = vld [vmem:[%s1 + $0x2e8] sm:$0xff]
  %v3846 = vld [vmem:[%s1 + $0x2f0] sm:$0xff]
  %v3847 = vld [vmem:[%s1 + $0x2f8] sm:$0xff]
  %v3848 = vld [vmem:[%s1 + $0x300] sm:$0xff]
  %v3849 = vld [vmem:[%s1 + $0x308] sm:$0xff]
  %v3850 = vld [vmem:[%s1 + $0x310] sm:$0xff]
  %v3851 = vld [vmem:[%s1 + $0x318] sm:$0xff]
  %v3852 = vld [vmem:[%s1 + $0x320] sm:$0xff]
  %v3853 = vld [vmem:[%s1 + $0x328] sm:$0xff]
  %v3854 = vld [vmem:[%s1 + $0x330] sm:$0xff]
  %v3855 = vld [vmem:[%s1 + $0x338] sm:$0xff]
  %v3856 = vld [vmem:[%s1 + $0x340] sm:$0xff]
  %v3857 = vld [vmem:[%s1 + $0x348] sm:$0xff]
  %v3858 = vld [vmem:[%s1 + $0x350] sm:$0xff]
  %v3859 = vld [vmem:[%s1 + $0x358] sm:$0xff]
  %v3860 = vld [vmem:[%s1 + $0x360] sm:$0xff]
  %v3861 = vld [vmem:[%s1 + $0x368] sm:$0xff]
  %v3862 = vld [vmem:[%s1 + $0x370] sm:$0xff]
  %v3863 = vld [vmem:[%s1 + $0x378] sm:$0xff]
  %v3864 = vld [vmem:[%s1 + $0x380] sm:$0xff]
  %v3865 = vld [vmem:[%s1 + $0x388] sm:$0xff]
  %v3866 = vld [vmem:[%s1 + $0x390] sm:$0xff]
  %v3867 = vld [vmem:[%s1 + $0x398] sm:$0xff]
  %v3868 = vld [vmem:[%s1 + $0x3a0] sm:$0xff]
  %v3869 = vld [vmem:[%s1 + $0x3a8] sm:$0xff]
  %v3870 = vld [vmem:[%s1 + $0x3b0] sm:$0xff]
  %v3871 = vld [vmem:[%s1 + $0x3b8] sm:$0xff]
  %v3872 = vld [vmem:[%s1 + $0x3c0] sm:$0xff]
  %v3873 = vld [vmem:[%s1 + $0x3c8] sm:$0xff]
  %v3874 = vld [vmem:[%s1 + $0x3d0] sm:$0xff]
  %v3875 = vld [vmem:[%s1 + $0x3d8] sm:$0xff]
  %v3876 = vld [vmem:[%s1 + $0x3e0] sm:$0xff]
  %v3877 = vld [vmem:[%s1 + $0x3e8] sm:$0xff]
  %v3878 = vld [vmem:[%s1 + $0x3f0] sm:$0xff]
  %v3879 = vld [vmem:[%s1 + $0x3f8] sm:$0xff]
  %v3880 = vld [vmem:[%s1 + $0x400] sm:$0xff]
  %v3881 = vld [vmem:[%s1 + $0x408] sm:$0xff]
  %v3882 = vld [vmem:[%s1 + $0x410] sm:$0xff]
  %v3883 = vld [vmem:[%s1 + $0x418] sm:$0xff]
  %v3884 = vld [vmem:[%s1 + $0x420] sm:$0xff]
  %v3885 = vld [vmem:[%s1 + $0x428] sm:$0xff]
  %v3886 = vld [vmem:[%s1 + $0x430] sm:$0xff]
  %v3887 = vld [vmem:[%s1 + $0x438] sm:$0xff]
  %v3888 = vld [vmem:[%s1 + $0x440] sm:$0xff]
  %v3889 = vld [vmem:[%s1 + $0x448] sm:$0xff]
  %v3890 = vld [vmem:[%s1 + $0x450] sm:$0xff]
  %v3891 = vld [vmem:[%s1 + $0x458] sm:$0xff]
  %v3892 = vld [vmem:[%s1 + $0x460] sm:$0xff]
  %v3893 = vld [vmem:[%s1 + $0x468] sm:$0xff]
  %v3894 = vld [vmem:[%s1 + $0x470] sm:$0xff]
  %v3895 = vld [vmem:[%s1 + $0x478] sm:$0xff]
  %v3896 = vld [vmem:[%s1 + $0x480] sm:$0xff]
  %v3897 = vld [vmem:[%s1 + $0x488] sm:$0xff]
  %v3898 = vld [vmem:[%s1 + $0x490] sm:$0xff]
  %v3899 = vld [vmem:[%s1 + $0x498] sm:$0xff]
  %v3900 = vld [vmem:[%s1 + $0x4a0] sm:$0xff]
  %v3901 = vld [vmem:[%s1 + $0x4a8] sm:$0xff]
  %v3902 = vld [vmem:[%s1 + $0x4b0] sm:$0xff]
  %v3903 = vld [vmem:[%s1 + $0x4b8] sm:$0xff]
  %v3904 = vld [vmem:[%s1 + $0x4c0] sm:$0xff]
  %v3905 = vld [vmem:[%s1 + $0x4c8] sm:$0xff]
  %v3906 = vld [vmem:[%s1 + $0x4d0] sm:$0xff]
  %v3907 = vld [vmem:[%s1 + $0x4d8] sm:$0xff]
  %v3908 = vld [vmem:[%s1 + $0x4e0] sm:$0xff]
  %v3909 = vld [vmem:[%s1 + $0x4e8] sm:$0xff]
  %v3910 = vld [vmem:[%s1 + $0x4f0] sm:$0xff]
  %v3911 = vld [vmem:[%s1 + $0x4f8] sm:$0xff]
  %v3912 = vld [vmem:[%s1 + $0x500] sm:$0xff]
  %v3913 = vld [vmem:[%s1 + $0x508] sm:$0xff]
  %v3914 = vld [vmem:[%s1 + $0x510] sm:$0xff]
  %v3915 = vld [vmem:[%s1 + $0x518] sm:$0xff]
  %v3916 = vld [vmem:[%s1 + $0x520] sm:$0xff]
  %v3917 = vld [vmem:[%s1 + $0x528] sm:$0xff]
  %v3918 = vld [vmem:[%s1 + $0x530] sm:$0xff]
  %v3919 = vld [vmem:[%s1 + $0x538] sm:$0xff]
  %v3920 = vld [vmem:[%s1 + $0x540] sm:$0xff]
  %v3921 = vld [vmem:[%s1 + $0x548] sm:$0xff]
  %v3922 = vld [vmem:[%s1 + $0x550] sm:$0xff]
  %v3923 = vld [vmem:[%s1 + $0x558] sm:$0xff]
  %v3924 = vld [vmem:[%s1 + $0x560] sm:$0xff]
  %v3925 = vld [vmem:[%s1 + $0x568] sm:$0xff]
  %v3926 = vld [vmem:[%s1 + $0x570] sm:$0xff]
  %v3927 = vld [vmem:[%s1 + $0x578] sm:$0xff]
  %v3928 = vld [vmem:[%s1 + $0x580] sm:$0xff]
  %v3929 = vld [vmem:[%s1 + $0x588] sm:$0xff]
  %v3930 = vld [vmem:[%s1 + $0x590] sm:$0xff]
  %v3931 = vld [vmem:[%s1 + $0x598] sm:$0xff]
  %v3932 = vld [vmem:[%s1 + $0x5a0] sm:$0xff]
  %v3933 = vld [vmem:[%s1 + $0x5a8] sm:$0xff]
  %v3934 = vld [vmem:[%s1 + $0x5b0] sm:$0xff]
  %v3935 = vld [vmem:[%s1 + $0x5b8] sm:$0xff]
  %v3936 = vld [vmem:[%s1 + $0x5c0] sm:$0xff]
  %v3937 = vld [vmem:[%s1 + $0x5c8] sm:$0xff]
  %v3938 = vld [vmem:[%s1 + $0x5d0] sm:$0xff]
  %v3939 = vld [vmem:[%s1 + $0x5d8] sm:$0xff]
  %v3940 = vld [vmem:[%s1 + $0x5e0] sm:$0xff]
  %v3941 = vld [vmem:[%s1 + $0x5e8] sm:$0xff]
  %v3942 = vld [vmem:[%s1 + $0x5f0] sm:$0xff]
  %v3943 = vld [vmem:[%s1 + $0x5f8] sm:$0xff]
  %v3944 = vld [vmem:[%s1 + $0x600] sm:$0xff]
  %v3945 = vld [vmem:[%s1 + $0x608] sm:$0xff]
  %v3946 = vld [vmem:[%s1 + $0x610] sm:$0xff]
  %v3947 = vld [vmem:[%s1 + $0x618] sm:$0xff]
  %v3948 = vld [vmem:[%s1 + $0x620] sm:$0xff]
  %v3949 = vld [vmem:[%s1 + $0x628] sm:$0xff]
  %v3950 = vld [vmem:[%s1 + $0x630] sm:$0xff]
  %v3951 = vld [vmem:[%s1 + $0x638] sm:$0xff]
  %v3952 = vld [vmem:[%s1 + $0x640] sm:$0xff]
  %v3953 = vld [vmem:[%s1 + $0x648] sm:$0xff]
  %v3954 = vld [vmem:[%s1 + $0x650] sm:$0xff]
  %v3955 = vld [vmem:[%s1 + $0x658] sm:$0xff]
  %v3956 = vld [vmem:[%s1 + $0x660] sm:$0xff]
  %v3957 = vld [vmem:[%s1 + $0x668] sm:$0xff]
  %v3958 = vld [vmem:[%s1 + $0x670] sm:$0xff]
  %v3959 = vld [vmem:[%s1 + $0x678] sm:$0xff]
  %v3960 = vld [vmem:[%s1 + $0x680] sm:$0xff]
  %v3961 = vld [vmem:[%s1 + $0x688] sm:$0xff]
  %v3962 = vld [vmem:[%s1 + $0x690] sm:$0xff]
  %v3963 = vld [vmem:[%s1 + $0x698] sm:$0xff]
  %v3964 = vld [vmem:[%s1 + $0x6a0] sm:$0xff]
  %v3965 = vld [vmem:[%s1 + $0x6a8] sm:$0xff]
  %v3966 = vld [vmem:[%s1 + $0x6b0] sm:$0xff]
  %v3967 = vld [vmem:[%s1 + $0x6b8] sm:$0xff]
  %v3968 = vld [vmem:[%s1 + $0x6c0] sm:$0xff]
  %v3969 = vld [vmem:[%s1 + $0x6c8] sm:$0xff]
  %v3970 = vld [vmem:[%s1 + $0x6d0] sm:$0xff]
  %v3971 = vld [vmem:[%s1 + $0x6d8] sm:$0xff]
  %v3972 = vld [vmem:[%s1 + $0x6e0] sm:$0xff]
  %v3973 = vld [vmem:[%s1 + $0x6e8] sm:$0xff]
  %v3974 = vld [vmem:[%s1 + $0x6f0] sm:$0xff]
  %v3975 = vld [vmem:[%s1 + $0x6f8] sm:$0xff]
  %v3976 = vld [vmem:[%s1 + $0x700] sm:$0xff]
  %v3977 = vld [vmem:[%s1 + $0x708] sm:$0xff]
  %v3978 = vld [vmem:[%s1 + $0x710] sm:$0xff]
  %v3979 = vld [vmem:[%s1 + $0x718] sm:$0xff]
  %3981 = vset.pattern.permute.xlu0 0
  %3982 = vperm.xlu0 %3981, %v3297
  %v3983 = vpop.permute.xlu0 %3982
  %3986 = vset.pattern.permute.xlu0 0
  %3987 = vperm.xlu0 %3986, %v3299
  %v3988 = vpop.permute.xlu0 %3987
  %3991 = vset.pattern.permute.xlu0 0
  %3992 = vperm.xlu0 %3991, %v3301
  %v3993 = vpop.permute.xlu0 %3992
  %3996 = vset.pattern.permute.xlu0 0
  %3997 = vperm.xlu0 %3996, %v3303
  %v3998 = vpop.permute.xlu0 %3997
  %4001 = vset.pattern.permute.xlu0 0
  %4002 = vperm.xlu0 %4001, %v3305
  %v4003 = vpop.permute.xlu0 %4002
  %4006 = vset.pattern.permute.xlu0 0
  %4007 = vperm.xlu0 %4006, %v3307
  %v4008 = vpop.permute.xlu0 %4007
  %4011 = vset.pattern.permute.xlu0 0
  %4012 = vperm.xlu0 %4011, %v3309
  %v4013 = vpop.permute.xlu0 %4012
  %4016 = vset.pattern.permute.xlu0 0
  %4017 = vperm.xlu0 %4016, %v3311
  %v4018 = vpop.permute.xlu0 %4017
  %4021 = vset.pattern.permute.xlu0 0
  %4022 = vperm.xlu0 %4021, %v3313
  %v4023 = vpop.permute.xlu0 %4022
  %4026 = vset.pattern.permute.xlu0 0
  %4027 = vperm.xlu0 %4026, %v3315
  %v4028 = vpop.permute.xlu0 %4027
  %4031 = vset.pattern.permute.xlu0 0
  %4032 = vperm.xlu0 %4031, %v3317
  %v4033 = vpop.permute.xlu0 %4032
  %4036 = vset.pattern.permute.xlu0 0
  %4037 = vperm.xlu0 %4036, %v3319
  %v4038 = vpop.permute.xlu0 %4037
  %4041 = vset.pattern.permute.xlu0 0
  %4042 = vperm.xlu0 %4041, %v3321
  %v4043 = vpop.permute.xlu0 %4042
  %4046 = vset.pattern.permute.xlu0 0
  %4047 = vperm.xlu0 %4046, %v3323
  %v4048 = vpop.permute.xlu0 %4047
  %4051 = vset.pattern.permute.xlu0 0
  %4052 = vperm.xlu0 %4051, %v3325
  %v4053 = vpop.permute.xlu0 %4052
  %4056 = vset.pattern.permute.xlu0 0
  %4057 = vperm.xlu0 %4056, %v3327
  %v4058 = vpop.permute.xlu0 %4057
  %4061 = vset.pattern.permute.xlu0 0
  %4062 = vperm.xlu0 %4061, %v3329
  %v4063 = vpop.permute.xlu0 %4062
  %4066 = vset.pattern.permute.xlu0 0
  %4067 = vperm.xlu0 %4066, %v3331
  %v4068 = vpop.permute.xlu0 %4067
  %4071 = vset.pattern.permute.xlu0 0
  %4072 = vperm.xlu0 %4071, %v3333
  %v4073 = vpop.permute.xlu0 %4072
  %4076 = vset.pattern.permute.xlu0 0
  %4077 = vperm.xlu0 %4076, %v3335
  %v4078 = vpop.permute.xlu0 %4077
  %4081 = vset.pattern.permute.xlu0 0
  %4082 = vperm.xlu0 %4081, %v3337
  %v4083 = vpop.permute.xlu0 %4082
  %4086 = vset.pattern.permute.xlu0 0
  %4087 = vperm.xlu0 %4086, %v3339
  %v4088 = vpop.permute.xlu0 %4087
  %4091 = vset.pattern.permute.xlu0 0
  %4092 = vperm.xlu0 %4091, %v3341
  %v4093 = vpop.permute.xlu0 %4092
  %4096 = vset.pattern.permute.xlu0 0
  %4097 = vperm.xlu0 %4096, %v3343
  %v4098 = vpop.permute.xlu0 %4097
  %4101 = vset.pattern.permute.xlu0 0
  %4102 = vperm.xlu0 %4101, %v3345
  %v4103 = vpop.permute.xlu0 %4102
  %4106 = vset.pattern.permute.xlu0 0
  %4107 = vperm.xlu0 %4106, %v3347
  %v4108 = vpop.permute.xlu0 %4107
  %4111 = vset.pattern.permute.xlu0 0
  %4112 = vperm.xlu0 %4111, %v3349
  %v4113 = vpop.permute.xlu0 %4112
  %4116 = vset.pattern.permute.xlu0 0
  %4117 = vperm.xlu0 %4116, %v3351
  %v4118 = vpop.permute.xlu0 %4117
  %4121 = vset.pattern.permute.xlu0 0
  %4122 = vperm.xlu0 %4121, %v3353
  %v4123 = vpop.permute.xlu0 %4122
  %4126 = vset.pattern.permute.xlu0 0
  %4127 = vperm.xlu0 %4126, %v3355
  %v4128 = vpop.permute.xlu0 %4127
  %4131 = vset.pattern.permute.xlu0 0
  %4132 = vperm.xlu0 %4131, %v3357
  %v4133 = vpop.permute.xlu0 %4132
  %4136 = vset.pattern.permute.xlu0 0
  %4137 = vperm.xlu0 %4136, %v3359
  %v4138 = vpop.permute.xlu0 %4137
  %4141 = vset.pattern.permute.xlu0 0
  %4142 = vperm.xlu0 %4141, %v3361
  %v4143 = vpop.permute.xlu0 %4142
  %4146 = vset.pattern.permute.xlu0 0
  %4147 = vperm.xlu0 %4146, %v3363
  %v4148 = vpop.permute.xlu0 %4147
  %4151 = vset.pattern.permute.xlu0 0
  %4152 = vperm.xlu0 %4151, %v3365
  %v4153 = vpop.permute.xlu0 %4152
  %4156 = vset.pattern.permute.xlu0 0
  %4157 = vperm.xlu0 %4156, %v3367
  %v4158 = vpop.permute.xlu0 %4157
  %4161 = vset.pattern.permute.xlu0 0
  %4162 = vperm.xlu0 %4161, %v3369
  %v4163 = vpop.permute.xlu0 %4162
  %4166 = vset.pattern.permute.xlu0 0
  %4167 = vperm.xlu0 %4166, %v3371
  %v4168 = vpop.permute.xlu0 %4167
  %4171 = vset.pattern.permute.xlu0 0
  %4172 = vperm.xlu0 %4171, %v3373
  %v4173 = vpop.permute.xlu0 %4172
  %4176 = vset.pattern.permute.xlu0 0
  %4177 = vperm.xlu0 %4176, %v3375
  %v4178 = vpop.permute.xlu0 %4177
  %4181 = vset.pattern.permute.xlu0 0
  %4182 = vperm.xlu0 %4181, %v3377
  %v4183 = vpop.permute.xlu0 %4182
  %4186 = vset.pattern.permute.xlu0 0
  %4187 = vperm.xlu0 %4186, %v3379
  %v4188 = vpop.permute.xlu0 %4187
  %4191 = vset.pattern.permute.xlu0 0
  %4192 = vperm.xlu0 %4191, %v3381
  %v4193 = vpop.permute.xlu0 %4192
  %4196 = vset.pattern.permute.xlu0 0
  %4197 = vperm.xlu0 %4196, %v3383
  %v4198 = vpop.permute.xlu0 %4197
  %4201 = vset.pattern.permute.xlu0 0
  %4202 = vperm.xlu0 %4201, %v3385
  %v4203 = vpop.permute.xlu0 %4202
  %4206 = vset.pattern.permute.xlu0 0
  %4207 = vperm.xlu0 %4206, %v3387
  %v4208 = vpop.permute.xlu0 %4207
  %4211 = vset.pattern.permute.xlu0 0
  %4212 = vperm.xlu0 %4211, %v3389
  %v4213 = vpop.permute.xlu0 %4212
  %4216 = vset.pattern.permute.xlu0 0
  %4217 = vperm.xlu0 %4216, %v3391
  %v4218 = vpop.permute.xlu0 %4217
  %4221 = vset.pattern.permute.xlu0 0
  %4222 = vperm.xlu0 %4221, %v3393
  %v4223 = vpop.permute.xlu0 %4222
  %4226 = vset.pattern.permute.xlu0 0
  %4227 = vperm.xlu0 %4226, %v3395
  %v4228 = vpop.permute.xlu0 %4227
  %4231 = vset.pattern.permute.xlu0 0
  %4232 = vperm.xlu0 %4231, %v3397
  %v4233 = vpop.permute.xlu0 %4232
  %4236 = vset.pattern.permute.xlu0 0
  %4237 = vperm.xlu0 %4236, %v3399
  %v4238 = vpop.permute.xlu0 %4237
  %4241 = vset.pattern.permute.xlu0 0
  %4242 = vperm.xlu0 %4241, %v3401
  %v4243 = vpop.permute.xlu0 %4242
  %4246 = vset.pattern.permute.xlu0 0
  %4247 = vperm.xlu0 %4246, %v3403
  %v4248 = vpop.permute.xlu0 %4247
  %4251 = vset.pattern.permute.xlu0 0
  %4252 = vperm.xlu0 %4251, %v3405
  %v4253 = vpop.permute.xlu0 %4252
  %4256 = vset.pattern.permute.xlu0 0
  %4257 = vperm.xlu0 %4256, %v3407
  %v4258 = vpop.permute.xlu0 %4257
  %4261 = vset.pattern.permute.xlu0 0
  %4262 = vperm.xlu0 %4261, %v3409
  %v4263 = vpop.permute.xlu0 %4262
  %4266 = vset.pattern.permute.xlu0 0
  %4267 = vperm.xlu0 %4266, %v3411
  %v4268 = vpop.permute.xlu0 %4267
  %4271 = vset.pattern.permute.xlu0 0
  %4272 = vperm.xlu0 %4271, %v3413
  %v4273 = vpop.permute.xlu0 %4272
  %4276 = vset.pattern.permute.xlu0 0
  %4277 = vperm.xlu0 %4276, %v3415
  %v4278 = vpop.permute.xlu0 %4277
  %4281 = vset.pattern.permute.xlu0 0
  %4282 = vperm.xlu0 %4281, %v3417
  %v4283 = vpop.permute.xlu0 %4282
  %4286 = vset.pattern.permute.xlu0 0
  %4287 = vperm.xlu0 %4286, %v3419
  %v4288 = vpop.permute.xlu0 %4287
  %4291 = vset.pattern.permute.xlu0 0
  %4292 = vperm.xlu0 %4291, %v3421
  %v4293 = vpop.permute.xlu0 %4292
  %4296 = vset.pattern.permute.xlu0 0
  %4297 = vperm.xlu0 %4296, %v3423
  %v4298 = vpop.permute.xlu0 %4297
  %4301 = vset.pattern.permute.xlu0 0
  %4302 = vperm.xlu0 %4301, %v3425
  %v4303 = vpop.permute.xlu0 %4302
  %4306 = vset.pattern.permute.xlu0 0
  %4307 = vperm.xlu0 %4306, %v3427
  %v4308 = vpop.permute.xlu0 %4307
  %4311 = vset.pattern.permute.xlu0 0
  %4312 = vperm.xlu0 %4311, %v3429
  %v4313 = vpop.permute.xlu0 %4312
  %4316 = vset.pattern.permute.xlu0 0
  %4317 = vperm.xlu0 %4316, %v3431
  %v4318 = vpop.permute.xlu0 %4317
  %4321 = vset.pattern.permute.xlu0 0
  %4322 = vperm.xlu0 %4321, %v3433
  %v4323 = vpop.permute.xlu0 %4322
  %4326 = vset.pattern.permute.xlu0 0
  %4327 = vperm.xlu0 %4326, %v3435
  %v4328 = vpop.permute.xlu0 %4327
  %4331 = vset.pattern.permute.xlu0 0
  %4332 = vperm.xlu0 %4331, %v3437
  %v4333 = vpop.permute.xlu0 %4332
  %4336 = vset.pattern.permute.xlu0 0
  %4337 = vperm.xlu0 %4336, %v3439
  %v4338 = vpop.permute.xlu0 %4337
  %4341 = vset.pattern.permute.xlu0 0
  %4342 = vperm.xlu0 %4341, %v3441
  %v4343 = vpop.permute.xlu0 %4342
  %4346 = vset.pattern.permute.xlu0 0
  %4347 = vperm.xlu0 %4346, %v3443
  %v4348 = vpop.permute.xlu0 %4347
  %4351 = vset.pattern.permute.xlu0 0
  %4352 = vperm.xlu0 %4351, %v3445
  %v4353 = vpop.permute.xlu0 %4352
  %4356 = vset.pattern.permute.xlu0 0
  %4357 = vperm.xlu0 %4356, %v3447
  %v4358 = vpop.permute.xlu0 %4357
  %4361 = vset.pattern.permute.xlu0 0
  %4362 = vperm.xlu0 %4361, %v3449
  %v4363 = vpop.permute.xlu0 %4362
  %4366 = vset.pattern.permute.xlu0 0
  %4367 = vperm.xlu0 %4366, %v3451
  %v4368 = vpop.permute.xlu0 %4367
  %4371 = vset.pattern.permute.xlu0 0
  %4372 = vperm.xlu0 %4371, %v3453
  %v4373 = vpop.permute.xlu0 %4372
  %4376 = vset.pattern.permute.xlu0 0
  %4377 = vperm.xlu0 %4376, %v3455
  %v4378 = vpop.permute.xlu0 %4377
  %4381 = vset.pattern.permute.xlu0 0
  %4382 = vperm.xlu0 %4381, %v3457
  %v4383 = vpop.permute.xlu0 %4382
  %4386 = vset.pattern.permute.xlu0 0
  %4387 = vperm.xlu0 %4386, %v3459
  %v4388 = vpop.permute.xlu0 %4387
  %4391 = vset.pattern.permute.xlu0 0
  %4392 = vperm.xlu0 %4391, %v3461
  %v4393 = vpop.permute.xlu0 %4392
  %4396 = vset.pattern.permute.xlu0 0
  %4397 = vperm.xlu0 %4396, %v3463
  %v4398 = vpop.permute.xlu0 %4397
  %4401 = vset.pattern.permute.xlu0 0
  %4402 = vperm.xlu0 %4401, %v3465
  %v4403 = vpop.permute.xlu0 %4402
  %4406 = vset.pattern.permute.xlu0 0
  %4407 = vperm.xlu0 %4406, %v3467
  %v4408 = vpop.permute.xlu0 %4407
  %4411 = vset.pattern.permute.xlu0 0
  %4412 = vperm.xlu0 %4411, %v3469
  %v4413 = vpop.permute.xlu0 %4412
  %4416 = vset.pattern.permute.xlu0 0
  %4417 = vperm.xlu0 %4416, %v3471
  %v4418 = vpop.permute.xlu0 %4417
  %4421 = vset.pattern.permute.xlu0 0
  %4422 = vperm.xlu0 %4421, %v3473
  %v4423 = vpop.permute.xlu0 %4422
  %4426 = vset.pattern.permute.xlu0 0
  %4427 = vperm.xlu0 %4426, %v3475
  %v4428 = vpop.permute.xlu0 %4427
  %4431 = vset.pattern.permute.xlu0 0
  %4432 = vperm.xlu0 %4431, %v3477
  %v4433 = vpop.permute.xlu0 %4432
  %4436 = vset.pattern.permute.xlu0 0
  %4437 = vperm.xlu0 %4436, %v3479
  %v4438 = vpop.permute.xlu0 %4437
  %4441 = vset.pattern.permute.xlu0 0
  %4442 = vperm.xlu0 %4441, %v3481
  %v4443 = vpop.permute.xlu0 %4442
  %4446 = vset.pattern.permute.xlu0 0
  %4447 = vperm.xlu0 %4446, %v3483
  %v4448 = vpop.permute.xlu0 %4447
  %4451 = vset.pattern.permute.xlu0 0
  %4452 = vperm.xlu0 %4451, %v3485
  %v4453 = vpop.permute.xlu0 %4452
  %4456 = vset.pattern.permute.xlu0 0
  %4457 = vperm.xlu0 %4456, %v3487
  %v4458 = vpop.permute.xlu0 %4457
  %4461 = vset.pattern.permute.xlu0 0
  %4462 = vperm.xlu0 %4461, %v3489
  %v4463 = vpop.permute.xlu0 %4462
  %4466 = vset.pattern.permute.xlu0 0
  %4467 = vperm.xlu0 %4466, %v3491
  %v4468 = vpop.permute.xlu0 %4467
  %4471 = vset.pattern.permute.xlu0 0
  %4472 = vperm.xlu0 %4471, %v3493
  %v4473 = vpop.permute.xlu0 %4472
  %4476 = vset.pattern.permute.xlu0 0
  %4477 = vperm.xlu0 %4476, %v3495
  %v4478 = vpop.permute.xlu0 %4477
  %4481 = vset.pattern.permute.xlu0 0
  %4482 = vperm.xlu0 %4481, %v3497
  %v4483 = vpop.permute.xlu0 %4482
  %4486 = vset.pattern.permute.xlu0 0
  %4487 = vperm.xlu0 %4486, %v3499
  %v4488 = vpop.permute.xlu0 %4487
  %4491 = vset.pattern.permute.xlu0 0
  %4492 = vperm.xlu0 %4491, %v3501
  %v4493 = vpop.permute.xlu0 %4492
  %4496 = vset.pattern.permute.xlu0 0
  %4497 = vperm.xlu0 %4496, %v3503
  %v4498 = vpop.permute.xlu0 %4497
  %4501 = vset.pattern.permute.xlu0 0
  %4502 = vperm.xlu0 %4501, %v3505
  %v4503 = vpop.permute.xlu0 %4502
  %4506 = vset.pattern.permute.xlu0 0
  %4507 = vperm.xlu0 %4506, %v3507
  %v4508 = vpop.permute.xlu0 %4507
  %4511 = vset.pattern.permute.xlu0 0
  %4512 = vperm.xlu0 %4511, %v3509
  %v4513 = vpop.permute.xlu0 %4512
  %4516 = vset.pattern.permute.xlu0 0
  %4517 = vperm.xlu0 %4516, %v3511
  %v4518 = vpop.permute.xlu0 %4517
  %4521 = vset.pattern.permute.xlu0 0
  %4522 = vperm.xlu0 %4521, %v3513
  %v4523 = vpop.permute.xlu0 %4522
  %4526 = vset.pattern.permute.xlu0 0
  %4527 = vperm.xlu0 %4526, %v3515
  %v4528 = vpop.permute.xlu0 %4527
  %4531 = vset.pattern.permute.xlu0 0
  %4532 = vperm.xlu0 %4531, %v3517
  %v4533 = vpop.permute.xlu0 %4532
  %4536 = vset.pattern.permute.xlu0 0
  %4537 = vperm.xlu0 %4536, %v3519
  %v4538 = vpop.permute.xlu0 %4537
  %4541 = vset.pattern.permute.xlu0 0
  %4542 = vperm.xlu0 %4541, %v3521
  %v4543 = vpop.permute.xlu0 %4542
  %4546 = vset.pattern.permute.xlu0 0
  %4547 = vperm.xlu0 %4546, %v3523
  %v4548 = vpop.permute.xlu0 %4547
  %4551 = vset.pattern.permute.xlu0 0
  %4552 = vperm.xlu0 %4551, %v3525
  %v4553 = vpop.permute.xlu0 %4552
  %4556 = vset.pattern.permute.xlu0 0
  %4557 = vperm.xlu0 %4556, %v3527
  %v4558 = vpop.permute.xlu0 %4557
  %4561 = vset.pattern.permute.xlu0 0
  %4562 = vperm.xlu0 %4561, %v3529
  %v4563 = vpop.permute.xlu0 %4562
  %4566 = vset.pattern.permute.xlu0 0
  %4567 = vperm.xlu0 %4566, %v3531
  %v4568 = vpop.permute.xlu0 %4567
  %4571 = vset.pattern.permute.xlu0 0
  %4572 = vperm.xlu0 %4571, %v3533
  %v4573 = vpop.permute.xlu0 %4572
  %4576 = vset.pattern.permute.xlu0 0
  %4577 = vperm.xlu0 %4576, %v3535
  %v4578 = vpop.permute.xlu0 %4577
  %4581 = vset.pattern.permute.xlu0 0
  %4582 = vperm.xlu0 %4581, %v3537
  %v4583 = vpop.permute.xlu0 %4582
  %4586 = vset.pattern.permute.xlu0 0
  %4587 = vperm.xlu0 %4586, %v3539
  %v4588 = vpop.permute.xlu0 %4587
  %4591 = vset.pattern.permute.xlu0 0
  %4592 = vperm.xlu0 %4591, %v3541
  %v4593 = vpop.permute.xlu0 %4592
  %4596 = vset.pattern.permute.xlu0 0
  %4597 = vperm.xlu0 %4596, %v3543
  %v4598 = vpop.permute.xlu0 %4597
  %4601 = vset.pattern.permute.xlu0 0
  %4602 = vperm.xlu0 %4601, %v3545
  %v4603 = vpop.permute.xlu0 %4602
  %4606 = vset.pattern.permute.xlu0 0
  %4607 = vperm.xlu0 %4606, %v3547
  %v4608 = vpop.permute.xlu0 %4607
  %4611 = vset.pattern.permute.xlu0 0
  %4612 = vperm.xlu0 %4611, %v3549
  %v4613 = vpop.permute.xlu0 %4612
  %4616 = vset.pattern.permute.xlu0 0
  %4617 = vperm.xlu0 %4616, %v3551
  %v4618 = vpop.permute.xlu0 %4617
  %4621 = vset.pattern.permute.xlu0 0
  %4622 = vperm.xlu0 %4621, %v3553
  %v4623 = vpop.permute.xlu0 %4622
  %4626 = vset.pattern.permute.xlu0 0
  %4627 = vperm.xlu0 %4626, %v3555
  %v4628 = vpop.permute.xlu0 %4627
  %4631 = vset.pattern.permute.xlu0 0
  %4632 = vperm.xlu0 %4631, %v3557
  %v4633 = vpop.permute.xlu0 %4632
  %4636 = vset.pattern.permute.xlu0 0
  %4637 = vperm.xlu0 %4636, %v3559
  %v4638 = vpop.permute.xlu0 %4637
  %4641 = vset.pattern.permute.xlu0 0
  %4642 = vperm.xlu0 %4641, %v3561
  %v4643 = vpop.permute.xlu0 %4642
  %4646 = vset.pattern.permute.xlu0 0
  %4647 = vperm.xlu0 %4646, %v3563
  %v4648 = vpop.permute.xlu0 %4647
  %4651 = vset.pattern.permute.xlu0 0
  %4652 = vperm.xlu0 %4651, %v3565
  %v4653 = vpop.permute.xlu0 %4652
  %4656 = vset.pattern.permute.xlu0 0
  %4657 = vperm.xlu0 %4656, %v3567
  %v4658 = vpop.permute.xlu0 %4657
  %4661 = vset.pattern.permute.xlu0 0
  %4662 = vperm.xlu0 %4661, %v3569
  %v4663 = vpop.permute.xlu0 %4662
  %4666 = vset.pattern.permute.xlu0 0
  %4667 = vperm.xlu0 %4666, %v3571
  %v4668 = vpop.permute.xlu0 %4667
  %4671 = vset.pattern.permute.xlu0 0
  %4672 = vperm.xlu0 %4671, %v3573
  %v4673 = vpop.permute.xlu0 %4672
  %4676 = vset.pattern.permute.xlu0 0
  %4677 = vperm.xlu0 %4676, %v3575
  %v4678 = vpop.permute.xlu0 %4677
  %4681 = vset.pattern.permute.xlu0 0
  %4682 = vperm.xlu0 %4681, %v3577
  %v4683 = vpop.permute.xlu0 %4682
  %4686 = vset.pattern.permute.xlu0 0
  %4687 = vperm.xlu0 %4686, %v3579
  %v4688 = vpop.permute.xlu0 %4687
  %4691 = vset.pattern.permute.xlu0 0
  %4692 = vperm.xlu0 %4691, %v3581
  %v4693 = vpop.permute.xlu0 %4692
  %4696 = vset.pattern.permute.xlu0 0
  %4697 = vperm.xlu0 %4696, %v3583
  %v4698 = vpop.permute.xlu0 %4697
  %4701 = vset.pattern.permute.xlu0 0
  %4702 = vperm.xlu0 %4701, %v3585
  %v4703 = vpop.permute.xlu0 %4702
  %4706 = vset.pattern.permute.xlu0 0
  %4707 = vperm.xlu0 %4706, %v3587
  %v4708 = vpop.permute.xlu0 %4707
  %4711 = vset.pattern.permute.xlu0 0
  %4712 = vperm.xlu0 %4711, %v3589
  %v4713 = vpop.permute.xlu0 %4712
  %4716 = vset.pattern.permute.xlu0 0
  %4717 = vperm.xlu0 %4716, %v3591
  %v4718 = vpop.permute.xlu0 %4717
  %4721 = vset.pattern.permute.xlu0 0
  %4722 = vperm.xlu0 %4721, %v3593
  %v4723 = vpop.permute.xlu0 %4722
  %4726 = vset.pattern.permute.xlu0 0
  %4727 = vperm.xlu0 %4726, %v3595
  %v4728 = vpop.permute.xlu0 %4727
  %4731 = vset.pattern.permute.xlu0 0
  %4732 = vperm.xlu0 %4731, %v3597
  %v4733 = vpop.permute.xlu0 %4732
  %4736 = vset.pattern.permute.xlu0 0
  %4737 = vperm.xlu0 %4736, %v3599
  %v4738 = vpop.permute.xlu0 %4737
  %4741 = vset.pattern.permute.xlu0 0
  %4742 = vperm.xlu0 %4741, %v3601
  %v4743 = vpop.permute.xlu0 %4742
  %4746 = vset.pattern.permute.xlu0 0
  %4747 = vperm.xlu0 %4746, %v3603
  %v4748 = vpop.permute.xlu0 %4747
  %4751 = vset.pattern.permute.xlu0 0
  %4752 = vperm.xlu0 %4751, %v3605
  %v4753 = vpop.permute.xlu0 %4752
  %4756 = vset.pattern.permute.xlu0 0
  %4757 = vperm.xlu0 %4756, %v3607
  %v4758 = vpop.permute.xlu0 %4757
  %4761 = vset.pattern.permute.xlu0 0
  %4762 = vperm.xlu0 %4761, %v3609
  %v4763 = vpop.permute.xlu0 %4762
  %4766 = vset.pattern.permute.xlu0 0
  %4767 = vperm.xlu0 %4766, %v3611
  %v4768 = vpop.permute.xlu0 %4767
  %4771 = vset.pattern.permute.xlu0 0
  %4772 = vperm.xlu0 %4771, %v3613
  %v4773 = vpop.permute.xlu0 %4772
  %4776 = vset.pattern.permute.xlu0 0
  %4777 = vperm.xlu0 %4776, %v3615
  %v4778 = vpop.permute.xlu0 %4777
  %4781 = vset.pattern.permute.xlu0 0
  %4782 = vperm.xlu0 %4781, %v3617
  %v4783 = vpop.permute.xlu0 %4782
  %4786 = vset.pattern.permute.xlu0 0
  %4787 = vperm.xlu0 %4786, %v3619
  %v4788 = vpop.permute.xlu0 %4787
  %4791 = vset.pattern.permute.xlu0 0
  %4792 = vperm.xlu0 %4791, %v3621
  %v4793 = vpop.permute.xlu0 %4792
  %4796 = vset.pattern.permute.xlu0 0
  %4797 = vperm.xlu0 %4796, %v3623
  %v4798 = vpop.permute.xlu0 %4797
  %4801 = vset.pattern.permute.xlu0 0
  %4802 = vperm.xlu0 %4801, %v3625
  %v4803 = vpop.permute.xlu0 %4802
  %4806 = vset.pattern.permute.xlu0 0
  %4807 = vperm.xlu0 %4806, %v3627
  %v4808 = vpop.permute.xlu0 %4807
  %4811 = vset.pattern.permute.xlu0 0
  %4812 = vperm.xlu0 %4811, %v3629
  %v4813 = vpop.permute.xlu0 %4812
  %4816 = vset.pattern.permute.xlu0 0
  %4817 = vperm.xlu0 %4816, %v3631
  %v4818 = vpop.permute.xlu0 %4817
  %4821 = vset.pattern.permute.xlu0 0
  %4822 = vperm.xlu0 %4821, %v3633
  %v4823 = vpop.permute.xlu0 %4822
  %4826 = vset.pattern.permute.xlu0 0
  %4827 = vperm.xlu0 %4826, %v3635
  %v4828 = vpop.permute.xlu0 %4827
  %4831 = vset.pattern.permute.xlu0 0
  %4832 = vperm.xlu0 %4831, %v3637
  %v4833 = vpop.permute.xlu0 %4832
  %4836 = vset.pattern.permute.xlu0 0
  %4837 = vperm.xlu0 %4836, %v3639
  %v4838 = vpop.permute.xlu0 %4837
  %4841 = vset.pattern.permute.xlu0 0
  %4842 = vperm.xlu0 %4841, %v3641
  %v4843 = vpop.permute.xlu0 %4842
  %4846 = vset.pattern.permute.xlu0 0
  %4847 = vperm.xlu0 %4846, %v3643
  %v4848 = vpop.permute.xlu0 %4847
  %4851 = vset.pattern.permute.xlu0 0
  %4852 = vperm.xlu0 %4851, %v3645
  %v4853 = vpop.permute.xlu0 %4852
  %4856 = vset.pattern.permute.xlu0 0
  %4857 = vperm.xlu0 %4856, %v3647
  %v4858 = vpop.permute.xlu0 %4857
  %4861 = vset.pattern.permute.xlu0 0
  %4862 = vperm.xlu0 %4861, %v3649
  %v4863 = vpop.permute.xlu0 %4862
  %4866 = vset.pattern.permute.xlu0 0
  %4867 = vperm.xlu0 %4866, %v3651
  %v4868 = vpop.permute.xlu0 %4867
  %4871 = vset.pattern.permute.xlu0 0
  %4872 = vperm.xlu0 %4871, %v3653
  %v4873 = vpop.permute.xlu0 %4872
  %4876 = vset.pattern.permute.xlu0 0
  %4877 = vperm.xlu0 %4876, %v3655
  %v4878 = vpop.permute.xlu0 %4877
  %4881 = vset.pattern.permute.xlu0 0
  %4882 = vperm.xlu0 %4881, %v3657
  %v4883 = vpop.permute.xlu0 %4882
  %4886 = vset.pattern.permute.xlu0 0
  %4887 = vperm.xlu0 %4886, %v3659
  %v4888 = vpop.permute.xlu0 %4887
  %4891 = vset.pattern.permute.xlu0 0
  %4892 = vperm.xlu0 %4891, %v3661
  %v4893 = vpop.permute.xlu0 %4892
  %4896 = vset.pattern.permute.xlu0 0
  %4897 = vperm.xlu0 %4896, %v3663
  %v4898 = vpop.permute.xlu0 %4897
  %4901 = vset.pattern.permute.xlu0 0
  %4902 = vperm.xlu0 %4901, %v3665
  %v4903 = vpop.permute.xlu0 %4902
  %4906 = vset.pattern.permute.xlu0 0
  %4907 = vperm.xlu0 %4906, %v3667
  %v4908 = vpop.permute.xlu0 %4907
  %4911 = vset.pattern.permute.xlu0 0
  %4912 = vperm.xlu0 %4911, %v3669
  %v4913 = vpop.permute.xlu0 %4912
  %4916 = vset.pattern.permute.xlu0 0
  %4917 = vperm.xlu0 %4916, %v3671
  %v4918 = vpop.permute.xlu0 %4917
  %4921 = vset.pattern.permute.xlu0 0
  %4922 = vperm.xlu0 %4921, %v3673
  %v4923 = vpop.permute.xlu0 %4922
  %4926 = vset.pattern.permute.xlu0 0
  %4927 = vperm.xlu0 %4926, %v3675
  %v4928 = vpop.permute.xlu0 %4927
  %4931 = vset.pattern.permute.xlu0 0
  %4932 = vperm.xlu0 %4931, %v3677
  %v4933 = vpop.permute.xlu0 %4932
  %4936 = vset.pattern.permute.xlu0 0
  %4937 = vperm.xlu0 %4936, %v3679
  %v4938 = vpop.permute.xlu0 %4937
  %4941 = vset.pattern.permute.xlu0 0
  %4942 = vperm.xlu0 %4941, %v3681
  %v4943 = vpop.permute.xlu0 %4942
  %4946 = vset.pattern.permute.xlu0 0
  %4947 = vperm.xlu0 %4946, %v3683
  %v4948 = vpop.permute.xlu0 %4947
  %4951 = vset.pattern.permute.xlu0 0
  %4952 = vperm.xlu0 %4951, %v3685
  %v4953 = vpop.permute.xlu0 %4952
  %4956 = vset.pattern.permute.xlu0 0
  %4957 = vperm.xlu0 %4956, %v3687
  %v4958 = vpop.permute.xlu0 %4957
  %4961 = vset.pattern.permute.xlu0 0
  %4962 = vperm.xlu0 %4961, %v3689
  %v4963 = vpop.permute.xlu0 %4962
  %4966 = vset.pattern.permute.xlu0 0
  %4967 = vperm.xlu0 %4966, %v3691
  %v4968 = vpop.permute.xlu0 %4967
  %4971 = vset.pattern.permute.xlu0 0
  %4972 = vperm.xlu0 %4971, %v3693
  %v4973 = vpop.permute.xlu0 %4972
  %4976 = vset.pattern.permute.xlu0 0
  %4977 = vperm.xlu0 %4976, %v3695
  %v4978 = vpop.permute.xlu0 %4977
  %4981 = vset.pattern.permute.xlu0 0
  %4982 = vperm.xlu0 %4981, %v3697
  %v4983 = vpop.permute.xlu0 %4982
  %4986 = vset.pattern.permute.xlu0 0
  %4987 = vperm.xlu0 %4986, %v3699
  %v4988 = vpop.permute.xlu0 %4987
  %4991 = vset.pattern.permute.xlu0 0
  %4992 = vperm.xlu0 %4991, %v3701
  %v4993 = vpop.permute.xlu0 %4992
  %4996 = vset.pattern.permute.xlu0 0
  %4997 = vperm.xlu0 %4996, %v3703
  %v4998 = vpop.permute.xlu0 %4997
  %5001 = vset.pattern.permute.xlu0 0
  %5002 = vperm.xlu0 %5001, %v3705
  %v5003 = vpop.permute.xlu0 %5002
  %5006 = vset.pattern.permute.xlu0 0
  %5007 = vperm.xlu0 %5006, %v3707
  %v5008 = vpop.permute.xlu0 %5007
  %5011 = vset.pattern.permute.xlu0 0
  %5012 = vperm.xlu0 %5011, %v3709
  %v5013 = vpop.permute.xlu0 %5012
  %5016 = vset.pattern.permute.xlu0 0
  %5017 = vperm.xlu0 %5016, %v3711
  %v5018 = vpop.permute.xlu0 %5017
  %5021 = vset.pattern.permute.xlu0 0
  %5022 = vperm.xlu0 %5021, %v3713
  %v5023 = vpop.permute.xlu0 %5022
  %5026 = vset.pattern.permute.xlu0 0
  %5027 = vperm.xlu0 %5026, %v3715
  %v5028 = vpop.permute.xlu0 %5027
  %5031 = vset.pattern.permute.xlu0 0
  %5032 = vperm.xlu0 %5031, %v3717
  %v5033 = vpop.permute.xlu0 %5032
  %5036 = vset.pattern.permute.xlu0 0
  %5037 = vperm.xlu0 %5036, %v3719
  %v5038 = vpop.permute.xlu0 %5037
  %5041 = vset.pattern.permute.xlu0 0
  %5042 = vperm.xlu0 %5041, %v3721
  %v5043 = vpop.permute.xlu0 %5042
  %5046 = vset.pattern.permute.xlu0 0
  %5047 = vperm.xlu0 %5046, %v3723
  %v5048 = vpop.permute.xlu0 %5047
  %5051 = vset.pattern.permute.xlu0 0
  %5052 = vperm.xlu0 %5051, %v3725
  %v5053 = vpop.permute.xlu0 %5052
  %5056 = vset.pattern.permute.xlu0 0
  %5057 = vperm.xlu0 %5056, %v3727
  %v5058 = vpop.permute.xlu0 %5057
  %5061 = vset.pattern.permute.xlu0 0
  %5062 = vperm.xlu0 %5061, %v3729
  %v5063 = vpop.permute.xlu0 %5062
  %5066 = vset.pattern.permute.xlu0 0
  %5067 = vperm.xlu0 %5066, %v3731
  %v5068 = vpop.permute.xlu0 %5067
  %5071 = vset.pattern.permute.xlu0 0
  %5072 = vperm.xlu0 %5071, %v3733
  %v5073 = vpop.permute.xlu0 %5072
  %5076 = vset.pattern.permute.xlu0 0
  %5077 = vperm.xlu0 %5076, %v3735
  %v5078 = vpop.permute.xlu0 %5077
  %5081 = vset.pattern.permute.xlu0 0
  %5082 = vperm.xlu0 %5081, %v3737
  %v5083 = vpop.permute.xlu0 %5082
  %5086 = vset.pattern.permute.xlu0 0
  %5087 = vperm.xlu0 %5086, %v3739
  %v5088 = vpop.permute.xlu0 %5087
  %5091 = vset.pattern.permute.xlu0 0
  %5092 = vperm.xlu0 %5091, %v3741
  %v5093 = vpop.permute.xlu0 %5092
  %5096 = vset.pattern.permute.xlu0 0
  %5097 = vperm.xlu0 %5096, %v3743
  %v5098 = vpop.permute.xlu0 %5097
  %5101 = vset.pattern.permute.xlu0 0
  %5102 = vperm.xlu0 %5101, %v3745
  %v5103 = vpop.permute.xlu0 %5102
  %5106 = vset.pattern.permute.xlu0 0
  %5107 = vperm.xlu0 %5106, %v3747
  %v5108 = vpop.permute.xlu0 %5107
  %5111 = vset.pattern.permute.xlu0 0
  %5112 = vperm.xlu0 %5111, %v3749
  %v5113 = vpop.permute.xlu0 %5112
  %5116 = vset.pattern.permute.xlu0 0
  %5117 = vperm.xlu0 %5116, %v3751
  %v5118 = vpop.permute.xlu0 %5117
  %v5120 = vmul.f32 %v3752, %v3983
  %v5121 = vmul.f32 %v3753, %v3988
  %v5122 = vmul.f32 %v3754, %v3993
  %v5123 = vmul.f32 %v3755, %v3998
  %v5124 = vmul.f32 %v3756, %v4003
  %v5125 = vmul.f32 %v3757, %v4008
  %v5126 = vmul.f32 %v3758, %v4013
  %v5127 = vmul.f32 %v3759, %v4018
  %v5128 = vmul.f32 %v3760, %v4023
  %v5129 = vmul.f32 %v3761, %v4028
  %v5130 = vmul.f32 %v3762, %v4033
  %v5131 = vmul.f32 %v3763, %v4038
  %v5132 = vmul.f32 %v3764, %v4043
  %v5133 = vmul.f32 %v3765, %v4048
  %v5134 = vmul.f32 %v3766, %v4053
  %v5135 = vmul.f32 %v3767, %v4058
  %v5136 = vmul.f32 %v3768, %v4063
  %v5137 = vmul.f32 %v3769, %v4068
  %v5138 = vmul.f32 %v3770, %v4073
  %v5139 = vmul.f32 %v3771, %v4078
  %v5140 = vmul.f32 %v3772, %v4083
  %v5141 = vmul.f32 %v3773, %v4088
  %v5142 = vmul.f32 %v3774, %v4093
  %v5143 = vmul.f32 %v3775, %v4098
  %v5144 = vmul.f32 %v3776, %v4103
  %v5145 = vmul.f32 %v3777, %v4108
  %v5146 = vmul.f32 %v3778, %v4113
  %v5147 = vmul.f32 %v3779, %v4118
  %v5148 = vmul.f32 %v3780, %v4123
  %v5149 = vmul.f32 %v3781, %v4128
  %v5150 = vmul.f32 %v3782, %v4133
  %v5151 = vmul.f32 %v3783, %v4138
  %v5152 = vmul.f32 %v3784, %v4143
  %v5153 = vmul.f32 %v3785, %v4148
  %v5154 = vmul.f32 %v3786, %v4153
  %v5155 = vmul.f32 %v3787, %v4158
  %v5156 = vmul.f32 %v3788, %v4163
  %v5157 = vmul.f32 %v3789, %v4168
  %v5158 = vmul.f32 %v3790, %v4173
  %v5159 = vmul.f32 %v3791, %v4178
  %v5160 = vmul.f32 %v3792, %v4183
  %v5161 = vmul.f32 %v3793, %v4188
  %v5162 = vmul.f32 %v3794, %v4193
  %v5163 = vmul.f32 %v3795, %v4198
  %v5164 = vmul.f32 %v3796, %v4203
  %v5165 = vmul.f32 %v3797, %v4208
  %v5166 = vmul.f32 %v3798, %v4213
  %v5167 = vmul.f32 %v3799, %v4218
  %v5168 = vmul.f32 %v3800, %v4223
  %v5169 = vmul.f32 %v3801, %v4228
  %v5170 = vmul.f32 %v3802, %v4233
  %v5171 = vmul.f32 %v3803, %v4238
  %v5172 = vmul.f32 %v3804, %v4243
  %v5173 = vmul.f32 %v3805, %v4248
  %v5174 = vmul.f32 %v3806, %v4253
  %v5175 = vmul.f32 %v3807, %v4258
  %v5176 = vmul.f32 %v3808, %v4263
  %v5177 = vmul.f32 %v3809, %v4268
  %v5178 = vmul.f32 %v3810, %v4273
  %v5179 = vmul.f32 %v3811, %v4278
  %v5180 = vmul.f32 %v3812, %v4283
  %v5181 = vmul.f32 %v3813, %v4288
  %v5182 = vmul.f32 %v3814, %v4293
  %v5183 = vmul.f32 %v3815, %v4298
  %v5184 = vmul.f32 %v3816, %v4303
  %v5185 = vmul.f32 %v3817, %v4308
  %v5186 = vmul.f32 %v3818, %v4313
  %v5187 = vmul.f32 %v3819, %v4318
  %v5188 = vmul.f32 %v3820, %v4323
  %v5189 = vmul.f32 %v3821, %v4328
  %v5190 = vmul.f32 %v3822, %v4333
  %v5191 = vmul.f32 %v3823, %v4338
  %v5192 = vmul.f32 %v3824, %v4343
  %v5193 = vmul.f32 %v3825, %v4348
  %v5194 = vmul.f32 %v3826, %v4353
  %v5195 = vmul.f32 %v3827, %v4358
  %v5196 = vmul.f32 %v3828, %v4363
  %v5197 = vmul.f32 %v3829, %v4368
  %v5198 = vmul.f32 %v3830, %v4373
  %v5199 = vmul.f32 %v3831, %v4378
  %v5200 = vmul.f32 %v3832, %v4383
  %v5201 = vmul.f32 %v3833, %v4388
  %v5202 = vmul.f32 %v3834, %v4393
  %v5203 = vmul.f32 %v3835, %v4398
  %v5204 = vmul.f32 %v3836, %v4403
  %v5205 = vmul.f32 %v3837, %v4408
  %v5206 = vmul.f32 %v3838, %v4413
  %v5207 = vmul.f32 %v3839, %v4418
  %v5208 = vmul.f32 %v3840, %v4423
  %v5209 = vmul.f32 %v3841, %v4428
  %v5210 = vmul.f32 %v3842, %v4433
  %v5211 = vmul.f32 %v3843, %v4438
  %v5212 = vmul.f32 %v3844, %v4443
  %v5213 = vmul.f32 %v3845, %v4448
  %v5214 = vmul.f32 %v3846, %v4453
  %v5215 = vmul.f32 %v3847, %v4458
  %v5216 = vmul.f32 %v3848, %v4463
  %v5217 = vmul.f32 %v3849, %v4468
  %v5218 = vmul.f32 %v3850, %v4473
  %v5219 = vmul.f32 %v3851, %v4478
  %v5220 = vmul.f32 %v3852, %v4483
  %v5221 = vmul.f32 %v3853, %v4488
  %v5222 = vmul.f32 %v3854, %v4493
  %v5223 = vmul.f32 %v3855, %v4498
  %v5224 = vmul.f32 %v3856, %v4503
  %v5225 = vmul.f32 %v3857, %v4508
  %v5226 = vmul.f32 %v3858, %v4513
  %v5227 = vmul.f32 %v3859, %v4518
  %v5228 = vmul.f32 %v3860, %v4523
  %v5229 = vmul.f32 %v3861, %v4528
  %v5230 = vmul.f32 %v3862, %v4533
  %v5231 = vmul.f32 %v3863, %v4538
  %v5232 = vmul.f32 %v3864, %v4543
  %v5233 = vmul.f32 %v3865, %v4548
  %v5234 = vmul.f32 %v3866, %v4553
  %v5235 = vmul.f32 %v3867, %v4558
  %v5236 = vmul.f32 %v3868, %v4563
  %v5237 = vmul.f32 %v3869, %v4568
  %v5238 = vmul.f32 %v3870, %v4573
  %v5239 = vmul.f32 %v3871, %v4578
  %v5240 = vmul.f32 %v3872, %v4583
  %v5241 = vmul.f32 %v3873, %v4588
  %v5242 = vmul.f32 %v3874, %v4593
  %v5243 = vmul.f32 %v3875, %v4598
  %v5244 = vmul.f32 %v3876, %v4603
  %v5245 = vmul.f32 %v3877, %v4608
  %v5246 = vmul.f32 %v3878, %v4613
  %v5247 = vmul.f32 %v3879, %v4618
  %v5248 = vmul.f32 %v3880, %v4623
  %v5249 = vmul.f32 %v3881, %v4628
  %v5250 = vmul.f32 %v3882, %v4633
  %v5251 = vmul.f32 %v3883, %v4638
  %v5252 = vmul.f32 %v3884, %v4643
  %v5253 = vmul.f32 %v3885, %v4648
  %v5254 = vmul.f32 %v3886, %v4653
  %v5255 = vmul.f32 %v3887, %v4658
  %v5256 = vmul.f32 %v3888, %v4663
  %v5257 = vmul.f32 %v3889, %v4668
  %v5258 = vmul.f32 %v3890, %v4673
  %v5259 = vmul.f32 %v3891, %v4678
  %v5260 = vmul.f32 %v3892, %v4683
  %v5261 = vmul.f32 %v3893, %v4688
  %v5262 = vmul.f32 %v3894, %v4693
  %v5263 = vmul.f32 %v3895, %v4698
  %v5264 = vmul.f32 %v3896, %v4703
  %v5265 = vmul.f32 %v3897, %v4708
  %v5266 = vmul.f32 %v3898, %v4713
  %v5267 = vmul.f32 %v3899, %v4718
  %v5268 = vmul.f32 %v3900, %v4723
  %v5269 = vmul.f32 %v3901, %v4728
  %v5270 = vmul.f32 %v3902, %v4733
  %v5271 = vmul.f32 %v3903, %v4738
  %v5272 = vmul.f32 %v3904, %v4743
  %v5273 = vmul.f32 %v3905, %v4748
  %v5274 = vmul.f32 %v3906, %v4753
  %v5275 = vmul.f32 %v3907, %v4758
  %v5276 = vmul.f32 %v3908, %v4763
  %v5277 = vmul.f32 %v3909, %v4768
  %v5278 = vmul.f32 %v3910, %v4773
  %v5279 = vmul.f32 %v3911, %v4778
  %v5280 = vmul.f32 %v3912, %v4783
  %v5281 = vmul.f32 %v3913, %v4788
  %v5282 = vmul.f32 %v3914, %v4793
  %v5283 = vmul.f32 %v3915, %v4798
  %v5284 = vmul.f32 %v3916, %v4803
  %v5285 = vmul.f32 %v3917, %v4808
  %v5286 = vmul.f32 %v3918, %v4813
  %v5287 = vmul.f32 %v3919, %v4818
  %v5288 = vmul.f32 %v3920, %v4823
  %v5289 = vmul.f32 %v3921, %v4828
  %v5290 = vmul.f32 %v3922, %v4833
  %v5291 = vmul.f32 %v3923, %v4838
  %v5292 = vmul.f32 %v3924, %v4843
  %v5293 = vmul.f32 %v3925, %v4848
  %v5294 = vmul.f32 %v3926, %v4853
  %v5295 = vmul.f32 %v3927, %v4858
  %v5296 = vmul.f32 %v3928, %v4863
  %v5297 = vmul.f32 %v3929, %v4868
  %v5298 = vmul.f32 %v3930, %v4873
  %v5299 = vmul.f32 %v3931, %v4878
  %v5300 = vmul.f32 %v3932, %v4883
  %v5301 = vmul.f32 %v3933, %v4888
  %v5302 = vmul.f32 %v3934, %v4893
  %v5303 = vmul.f32 %v3935, %v4898
  %v5304 = vmul.f32 %v3936, %v4903
  %v5305 = vmul.f32 %v3937, %v4908
  %v5306 = vmul.f32 %v3938, %v4913
  %v5307 = vmul.f32 %v3939, %v4918
  %v5308 = vmul.f32 %v3940, %v4923
  %v5309 = vmul.f32 %v3941, %v4928
  %v5310 = vmul.f32 %v3942, %v4933
  %v5311 = vmul.f32 %v3943, %v4938
  %v5312 = vmul.f32 %v3944, %v4943
  %v5313 = vmul.f32 %v3945, %v4948
  %v5314 = vmul.f32 %v3946, %v4953
  %v5315 = vmul.f32 %v3947, %v4958
  %v5316 = vmul.f32 %v3948, %v4963
  %v5317 = vmul.f32 %v3949, %v4968
  %v5318 = vmul.f32 %v3950, %v4973
  %v5319 = vmul.f32 %v3951, %v4978
  %v5320 = vmul.f32 %v3952, %v4983
  %v5321 = vmul.f32 %v3953, %v4988
  %v5322 = vmul.f32 %v3954, %v4993
  %v5323 = vmul.f32 %v3955, %v4998
  %v5324 = vmul.f32 %v3956, %v5003
  %v5325 = vmul.f32 %v3957, %v5008
  %v5326 = vmul.f32 %v3958, %v5013
  %v5327 = vmul.f32 %v3959, %v5018
  %v5328 = vmul.f32 %v3960, %v5023
  %v5329 = vmul.f32 %v3961, %v5028
  %v5330 = vmul.f32 %v3962, %v5033
  %v5331 = vmul.f32 %v3963, %v5038
  %v5332 = vmul.f32 %v3964, %v5043
  %v5333 = vmul.f32 %v3965, %v5048
  %v5334 = vmul.f32 %v3966, %v5053
  %v5335 = vmul.f32 %v3967, %v5058
  %v5336 = vmul.f32 %v3968, %v5063
  %v5337 = vmul.f32 %v3969, %v5068
  %v5338 = vmul.f32 %v3970, %v5073
  %v5339 = vmul.f32 %v3971, %v5078
  %v5340 = vmul.f32 %v3972, %v5083
  %v5341 = vmul.f32 %v3973, %v5088
  %v5342 = vmul.f32 %v3974, %v5093
  %v5343 = vmul.f32 %v3975, %v5098
  %v5344 = vmul.f32 %v3976, %v5103
  %v5345 = vmul.f32 %v3977, %v5108
  %v5346 = vmul.f32 %v3978, %v5113
  %v5347 = vmul.f32 %v3979, %v5118
  %v5348 = vpack.c.bf16 %v5121, %v5120
  %v5349 = vpack.c.bf16 %v5123, %v5122
  %v5350 = vpack.c.bf16 %v5125, %v5124
  %v5351 = vpack.c.bf16 %v5127, %v5126
  %v5352 = vpack.c.bf16 %v5129, %v5128
  %v5353 = vpack.c.bf16 %v5131, %v5130
  %v5354 = vpack.c.bf16 %v5133, %v5132
  %v5355 = vpack.c.bf16 %v5135, %v5134
  %v5356 = vpack.c.bf16 %v5137, %v5136
  %v5357 = vpack.c.bf16 %v5139, %v5138
  %v5358 = vpack.c.bf16 %v5141, %v5140
  %v5359 = vpack.c.bf16 %v5143, %v5142
  %v5360 = vpack.c.bf16 %v5145, %v5144
  %v5361 = vpack.c.bf16 %v5147, %v5146
  %v5362 = vpack.c.bf16 %v5149, %v5148
  %v5363 = vpack.c.bf16 %v5151, %v5150
  %v5364 = vpack.c.bf16 %v5153, %v5152
  %v5365 = vpack.c.bf16 %v5155, %v5154
  %v5366 = vpack.c.bf16 %v5157, %v5156
  %v5367 = vpack.c.bf16 %v5159, %v5158
  %v5368 = vpack.c.bf16 %v5161, %v5160
  %v5369 = vpack.c.bf16 %v5163, %v5162
  %v5370 = vpack.c.bf16 %v5165, %v5164
  %v5371 = vpack.c.bf16 %v5167, %v5166
  %v5372 = vpack.c.bf16 %v5169, %v5168
  %v5373 = vpack.c.bf16 %v5171, %v5170
  %v5374 = vpack.c.bf16 %v5173, %v5172
  %v5375 = vpack.c.bf16 %v5175, %v5174
  %v5376 = vpack.c.bf16 %v5177, %v5176
  %v5377 = vpack.c.bf16 %v5179, %v5178
  %v5378 = vpack.c.bf16 %v5181, %v5180
  %v5379 = vpack.c.bf16 %v5183, %v5182
  %v5380 = vpack.c.bf16 %v5185, %v5184
  %v5381 = vpack.c.bf16 %v5187, %v5186
  %v5382 = vpack.c.bf16 %v5189, %v5188
  %v5383 = vpack.c.bf16 %v5191, %v5190
  %v5384 = vpack.c.bf16 %v5193, %v5192
  %v5385 = vpack.c.bf16 %v5195, %v5194
  %v5386 = vpack.c.bf16 %v5197, %v5196
  %v5387 = vpack.c.bf16 %v5199, %v5198
  %v5388 = vpack.c.bf16 %v5201, %v5200
  %v5389 = vpack.c.bf16 %v5203, %v5202
  %v5390 = vpack.c.bf16 %v5205, %v5204
  %v5391 = vpack.c.bf16 %v5207, %v5206
  %v5392 = vpack.c.bf16 %v5209, %v5208
  %v5393 = vpack.c.bf16 %v5211, %v5210
  %v5394 = vpack.c.bf16 %v5213, %v5212
  %v5395 = vpack.c.bf16 %v5215, %v5214
  %v5396 = vpack.c.bf16 %v5217, %v5216
  %v5397 = vpack.c.bf16 %v5219, %v5218
  %v5398 = vpack.c.bf16 %v5221, %v5220
  %v5399 = vpack.c.bf16 %v5223, %v5222
  %v5400 = vpack.c.bf16 %v5225, %v5224
  %v5401 = vpack.c.bf16 %v5227, %v5226
  %v5402 = vpack.c.bf16 %v5229, %v5228
  %v5403 = vpack.c.bf16 %v5231, %v5230
  %v5404 = vpack.c.bf16 %v5233, %v5232
  %v5405 = vpack.c.bf16 %v5235, %v5234
  %v5406 = vpack.c.bf16 %v5237, %v5236
  %v5407 = vpack.c.bf16 %v5239, %v5238
  %v5408 = vpack.c.bf16 %v5241, %v5240
  %v5409 = vpack.c.bf16 %v5243, %v5242
  %v5410 = vpack.c.bf16 %v5245, %v5244
  %v5411 = vpack.c.bf16 %v5247, %v5246
  %v5412 = vpack.c.bf16 %v5249, %v5248
  %v5413 = vpack.c.bf16 %v5251, %v5250
  %v5414 = vpack.c.bf16 %v5253, %v5252
  %v5415 = vpack.c.bf16 %v5255, %v5254
  %v5416 = vpack.c.bf16 %v5257, %v5256
  %v5417 = vpack.c.bf16 %v5259, %v5258
  %v5418 = vpack.c.bf16 %v5261, %v5260
  %v5419 = vpack.c.bf16 %v5263, %v5262
  %v5420 = vpack.c.bf16 %v5265, %v5264
  %v5421 = vpack.c.bf16 %v5267, %v5266
  %v5422 = vpack.c.bf16 %v5269, %v5268
  %v5423 = vpack.c.bf16 %v5271, %v5270
  %v5424 = vpack.c.bf16 %v5273, %v5272
  %v5425 = vpack.c.bf16 %v5275, %v5274
  %v5426 = vpack.c.bf16 %v5277, %v5276
  %v5427 = vpack.c.bf16 %v5279, %v5278
  %v5428 = vpack.c.bf16 %v5281, %v5280
  %v5429 = vpack.c.bf16 %v5283, %v5282
  %v5430 = vpack.c.bf16 %v5285, %v5284
  %v5431 = vpack.c.bf16 %v5287, %v5286
  %v5432 = vpack.c.bf16 %v5289, %v5288
  %v5433 = vpack.c.bf16 %v5291, %v5290
  %v5434 = vpack.c.bf16 %v5293, %v5292
  %v5435 = vpack.c.bf16 %v5295, %v5294
  %v5436 = vpack.c.bf16 %v5297, %v5296
  %v5437 = vpack.c.bf16 %v5299, %v5298
  %v5438 = vpack.c.bf16 %v5301, %v5300
  %v5439 = vpack.c.bf16 %v5303, %v5302
  %v5440 = vpack.c.bf16 %v5305, %v5304
  %v5441 = vpack.c.bf16 %v5307, %v5306
  %v5442 = vpack.c.bf16 %v5309, %v5308
  %v5443 = vpack.c.bf16 %v5311, %v5310
  %v5444 = vpack.c.bf16 %v5313, %v5312
  %v5445 = vpack.c.bf16 %v5315, %v5314
  %v5446 = vpack.c.bf16 %v5317, %v5316
  %v5447 = vpack.c.bf16 %v5319, %v5318
  %v5448 = vpack.c.bf16 %v5321, %v5320
  %v5449 = vpack.c.bf16 %v5323, %v5322
  %v5450 = vpack.c.bf16 %v5325, %v5324
  %v5451 = vpack.c.bf16 %v5327, %v5326
  %v5452 = vpack.c.bf16 %v5329, %v5328
  %v5453 = vpack.c.bf16 %v5331, %v5330
  %v5454 = vpack.c.bf16 %v5333, %v5332
  %v5455 = vpack.c.bf16 %v5335, %v5334
  %v5456 = vpack.c.bf16 %v5337, %v5336
  %v5457 = vpack.c.bf16 %v5339, %v5338
  %v5458 = vpack.c.bf16 %v5341, %v5340
  %v5459 = vpack.c.bf16 %v5343, %v5342
  %v5460 = vpack.c.bf16 %v5345, %v5344
  %v5461 = vpack.c.bf16 %v5347, %v5346
  %v5462 = vld [vmem:[%s4] sm:$0xff]
  %v5463 = vld [vmem:[%s4 + $0x8] sm:$0xff]
  %v5464 = vld [vmem:[%s4 + $0x10] sm:$0xff]
  %v5465 = vld [vmem:[%s4 + $0x18] sm:$0xff]
  %v5466 = vld [vmem:[%s4 + $0x20] sm:$0xff]
  %v5467 = vld [vmem:[%s4 + $0x28] sm:$0xff]
  %v5468 = vld [vmem:[%s4 + $0x30] sm:$0xff]
  %v5469 = vld [vmem:[%s4 + $0x38] sm:$0xf]
  %v5470 = vld [vmem:[%s4 + $0x3c] sm:$0xff]
  %v5471 = vld [vmem:[%s4 + $0x44] sm:$0xff]
  %v5472 = vld [vmem:[%s4 + $0x4c] sm:$0xff]
  %v5473 = vld [vmem:[%s4 + $0x54] sm:$0xff]
  %v5474 = vld [vmem:[%s4 + $0x5c] sm:$0xff]
  %v5475 = vld [vmem:[%s4 + $0x64] sm:$0xff]
  %v5476 = vld [vmem:[%s4 + $0x6c] sm:$0xff]
  %v5477 = vld [vmem:[%s4 + $0x74] sm:$0xf]
  %v5478 = vld [vmem:[%s4 + $0x78] sm:$0xff]
  %v5479 = vld [vmem:[%s4 + $0x80] sm:$0xff]
  %v5480 = vld [vmem:[%s4 + $0x88] sm:$0xff]
  %v5481 = vld [vmem:[%s4 + $0x90] sm:$0xff]
  %v5482 = vld [vmem:[%s4 + $0x98] sm:$0xff]
  %v5483 = vld [vmem:[%s4 + $0xa0] sm:$0xff]
  %v5484 = vld [vmem:[%s4 + $0xa8] sm:$0xff]
  %v5485 = vld [vmem:[%s4 + $0xb0] sm:$0xf]
  %v5486 = vld [vmem:[%s4 + $0xb4] sm:$0xff]
  %v5487 = vld [vmem:[%s4 + $0xbc] sm:$0xff]
  %v5488 = vld [vmem:[%s4 + $0xc4] sm:$0xff]
  %v5489 = vld [vmem:[%s4 + $0xcc] sm:$0xff]
  %v5490 = vld [vmem:[%s4 + $0xd4] sm:$0xff]
  %v5491 = vld [vmem:[%s4 + $0xdc] sm:$0xff]
  %v5492 = vld [vmem:[%s4 + $0xe4] sm:$0xff]
  %v5493 = vld [vmem:[%s4 + $0xec] sm:$0xf]
  %v5494 = vld [vmem:[%s4 + $0xf0] sm:$0xff]
  %v5495 = vld [vmem:[%s4 + $0xf8] sm:$0xff]
  %v5496 = vld [vmem:[%s4 + $0x100] sm:$0xff]
  %v5497 = vld [vmem:[%s4 + $0x108] sm:$0xff]
  %v5498 = vld [vmem:[%s4 + $0x110] sm:$0xff]
  %v5499 = vld [vmem:[%s4 + $0x118] sm:$0xff]
  %v5500 = vld [vmem:[%s4 + $0x120] sm:$0xff]
  %v5501 = vld [vmem:[%s4 + $0x128] sm:$0xf]
  %v5502 = vld [vmem:[%s4 + $0x12c] sm:$0xff]
  %v5503 = vld [vmem:[%s4 + $0x134] sm:$0xff]
  %v5504 = vld [vmem:[%s4 + $0x13c] sm:$0xff]
  %v5505 = vld [vmem:[%s4 + $0x144] sm:$0xff]
  %v5506 = vld [vmem:[%s4 + $0x14c] sm:$0xff]
  %v5507 = vld [vmem:[%s4 + $0x154] sm:$0xff]
  %v5508 = vld [vmem:[%s4 + $0x15c] sm:$0xff]
  %v5509 = vld [vmem:[%s4 + $0x164] sm:$0xf]
  %v5510 = vld [vmem:[%s4 + $0x168] sm:$0xff]
  %v5511 = vld [vmem:[%s4 + $0x170] sm:$0xff]
  %v5512 = vld [vmem:[%s4 + $0x178] sm:$0xff]
  %v5513 = vld [vmem:[%s4 + $0x180] sm:$0xff]
  %v5514 = vld [vmem:[%s4 + $0x188] sm:$0xff]
  %v5515 = vld [vmem:[%s4 + $0x190] sm:$0xff]
  %v5516 = vld [vmem:[%s4 + $0x198] sm:$0xff]
  %v5517 = vld [vmem:[%s4 + $0x1a0] sm:$0xf]
  %v5518 = vld [vmem:[%s4 + $0x1a4] sm:$0xff]
  %v5519 = vld [vmem:[%s4 + $0x1ac] sm:$0xff]
  %v5520 = vld [vmem:[%s4 + $0x1b4] sm:$0xff]
  %v5521 = vld [vmem:[%s4 + $0x1bc] sm:$0xff]
  %v5522 = vld [vmem:[%s4 + $0x1c4] sm:$0xff]
  %v5523 = vld [vmem:[%s4 + $0x1cc] sm:$0xff]
  %v5524 = vld [vmem:[%s4 + $0x1d4] sm:$0xff]
  %v5525 = vld [vmem:[%s4 + $0x1dc] sm:$0xf]
  %v5526 = vld [vmem:[%s4 + $0x1e0] sm:$0xff]
  %v5527 = vld [vmem:[%s4 + $0x1e8] sm:$0xff]
  %v5528 = vld [vmem:[%s4 + $0x1f0] sm:$0xff]
  %v5529 = vld [vmem:[%s4 + $0x1f8] sm:$0xff]
  %v5530 = vld [vmem:[%s4 + $0x200] sm:$0xff]
  %v5531 = vld [vmem:[%s4 + $0x208] sm:$0xff]
  %v5532 = vld [vmem:[%s4 + $0x210] sm:$0xff]
  %v5533 = vld [vmem:[%s4 + $0x218] sm:$0xf]
  %v5534 = vld [vmem:[%s4 + $0x21c] sm:$0xff]
  %v5535 = vld [vmem:[%s4 + $0x224] sm:$0xff]
  %v5536 = vld [vmem:[%s4 + $0x22c] sm:$0xff]
  %v5537 = vld [vmem:[%s4 + $0x234] sm:$0xff]
  %v5538 = vld [vmem:[%s4 + $0x23c] sm:$0xff]
  %v5539 = vld [vmem:[%s4 + $0x244] sm:$0xff]
  %v5540 = vld [vmem:[%s4 + $0x24c] sm:$0xff]
  %v5541 = vld [vmem:[%s4 + $0x254] sm:$0xf]
  %v5542 = vld [vmem:[%s4 + $0x258] sm:$0xff]
  %v5543 = vld [vmem:[%s4 + $0x260] sm:$0xff]
  %v5544 = vld [vmem:[%s4 + $0x268] sm:$0xff]
  %v5545 = vld [vmem:[%s4 + $0x270] sm:$0xff]
  %v5546 = vld [vmem:[%s4 + $0x278] sm:$0xff]
  %v5547 = vld [vmem:[%s4 + $0x280] sm:$0xff]
  %v5548 = vld [vmem:[%s4 + $0x288] sm:$0xff]
  %v5549 = vld [vmem:[%s4 + $0x290] sm:$0xf]
  %v5550 = vld [vmem:[%s4 + $0x294] sm:$0xff]
  %v5551 = vld [vmem:[%s4 + $0x29c] sm:$0xff]
  %v5552 = vld [vmem:[%s4 + $0x2a4] sm:$0xff]
  %v5553 = vld [vmem:[%s4 + $0x2ac] sm:$0xff]
  %v5554 = vld [vmem:[%s4 + $0x2b4] sm:$0xff]
  %v5555 = vld [vmem:[%s4 + $0x2bc] sm:$0xff]
  %v5556 = vld [vmem:[%s4 + $0x2c4] sm:$0xff]
  %v5557 = vld [vmem:[%s4 + $0x2cc] sm:$0xf]
  %v5558 = vld [vmem:[%s4 + $0x2d0] sm:$0xff]
  %v5559 = vld [vmem:[%s4 + $0x2d8] sm:$0xff]
  %v5560 = vld [vmem:[%s4 + $0x2e0] sm:$0xff]
  %v5561 = vld [vmem:[%s4 + $0x2e8] sm:$0xff]
  %v5562 = vld [vmem:[%s4 + $0x2f0] sm:$0xff]
  %v5563 = vld [vmem:[%s4 + $0x2f8] sm:$0xff]
  %v5564 = vld [vmem:[%s4 + $0x300] sm:$0xff]
  %v5565 = vld [vmem:[%s4 + $0x308] sm:$0xf]
  %v5566 = vld [vmem:[%s4 + $0x30c] sm:$0xff]
  %v5567 = vld [vmem:[%s4 + $0x314] sm:$0xff]
  %v5568 = vld [vmem:[%s4 + $0x31c] sm:$0xff]
  %v5569 = vld [vmem:[%s4 + $0x324] sm:$0xff]
  %v5570 = vld [vmem:[%s4 + $0x32c] sm:$0xff]
  %v5571 = vld [vmem:[%s4 + $0x334] sm:$0xff]
  %v5572 = vld [vmem:[%s4 + $0x33c] sm:$0xff]
  %v5573 = vld [vmem:[%s4 + $0x344] sm:$0xf]
  %v5574 = vld [vmem:[%s4 + $0x348] sm:$0xff]
  %v5575 = vld [vmem:[%s4 + $0x350] sm:$0xff]
  %v5576 = vld [vmem:[%s4 + $0x358] sm:$0xff]
  %v5577 = vld [vmem:[%s4 + $0x360] sm:$0xff]
  %v5578 = vld [vmem:[%s4 + $0x368] sm:$0xff]
  %v5579 = vld [vmem:[%s4 + $0x370] sm:$0xff]
  %v5580 = vld [vmem:[%s4 + $0x378] sm:$0xff]
  %v5581 = vld [vmem:[%s4 + $0x380] sm:$0xf]
  %v5582 = vld [vmem:[%s4 + $0x384] sm:$0xff]
  %v5583 = vld [vmem:[%s4 + $0x38c] sm:$0xff]
  %v5584 = vld [vmem:[%s4 + $0x394] sm:$0xff]
  %v5585 = vld [vmem:[%s4 + $0x39c] sm:$0xff]
  %v5586 = vld [vmem:[%s4 + $0x3a4] sm:$0xff]
  %v5587 = vld [vmem:[%s4 + $0x3ac] sm:$0xff]
  %v5588 = vld [vmem:[%s4 + $0x3b4] sm:$0xff]
  %v5589 = vld [vmem:[%s4 + $0x3bc] sm:$0xf]
  %v5590 = vld [vmem:[%s4 + $0x3c0] sm:$0xff]
  %v5591 = vld [vmem:[%s4 + $0x3c8] sm:$0xff]
  %v5592 = vld [vmem:[%s4 + $0x3d0] sm:$0xff]
  %v5593 = vld [vmem:[%s4 + $0x3d8] sm:$0xff]
  %v5594 = vld [vmem:[%s4 + $0x3e0] sm:$0xff]
  %v5595 = vld [vmem:[%s4 + $0x3e8] sm:$0xff]
  %v5596 = vld [vmem:[%s4 + $0x3f0] sm:$0xff]
  %v5597 = vld [vmem:[%s4 + $0x3f8] sm:$0xf]
  %v5598 = vld [vmem:[%s4 + $0x3fc] sm:$0xff]
  %v5599 = vld [vmem:[%s4 + $0x404] sm:$0xff]
  %v5600 = vld [vmem:[%s4 + $0x40c] sm:$0xff]
  %v5601 = vld [vmem:[%s4 + $0x414] sm:$0xff]
  %v5602 = vld [vmem:[%s4 + $0x41c] sm:$0xff]
  %v5603 = vld [vmem:[%s4 + $0x424] sm:$0xff]
  %v5604 = vld [vmem:[%s4 + $0x42c] sm:$0xff]
  %v5605 = vld [vmem:[%s4 + $0x434] sm:$0xf]
  %v5606 = vld [vmem:[%s4 + $0x438] sm:$0xff]
  %v5607 = vld [vmem:[%s4 + $0x440] sm:$0xff]
  %v5608 = vld [vmem:[%s4 + $0x448] sm:$0xff]
  %v5609 = vld [vmem:[%s4 + $0x450] sm:$0xff]
  %v5610 = vld [vmem:[%s4 + $0x458] sm:$0xff]
  %v5611 = vld [vmem:[%s4 + $0x460] sm:$0xff]
  %v5612 = vld [vmem:[%s4 + $0x468] sm:$0xff]
  %v5613 = vld [vmem:[%s4 + $0x470] sm:$0xf]
  %v5614 = vld [vmem:[%s4 + $0x474] sm:$0xff]
  %v5615 = vld [vmem:[%s4 + $0x47c] sm:$0xff]
  %v5616 = vld [vmem:[%s4 + $0x484] sm:$0xff]
  %v5617 = vld [vmem:[%s4 + $0x48c] sm:$0xff]
  %v5618 = vld [vmem:[%s4 + $0x494] sm:$0xff]
  %v5619 = vld [vmem:[%s4 + $0x49c] sm:$0xff]
  %v5620 = vld [vmem:[%s4 + $0x4a4] sm:$0xff]
  %v5621 = vld [vmem:[%s4 + $0x4ac] sm:$0xf]
  %v5622 = vld [vmem:[%s4 + $0x4b0] sm:$0xff]
  %v5623 = vld [vmem:[%s4 + $0x4b8] sm:$0xff]
  %v5624 = vld [vmem:[%s4 + $0x4c0] sm:$0xff]
  %v5625 = vld [vmem:[%s4 + $0x4c8] sm:$0xff]
  %v5626 = vld [vmem:[%s4 + $0x4d0] sm:$0xff]
  %v5627 = vld [vmem:[%s4 + $0x4d8] sm:$0xff]
  %v5628 = vld [vmem:[%s4 + $0x4e0] sm:$0xff]
  %v5629 = vld [vmem:[%s4 + $0x4e8] sm:$0xf]
  %v5630 = vld [vmem:[%s4 + $0x4ec] sm:$0xff]
  %v5631 = vld [vmem:[%s4 + $0x4f4] sm:$0xff]
  %v5632 = vld [vmem:[%s4 + $0x4fc] sm:$0xff]
  %v5633 = vld [vmem:[%s4 + $0x504] sm:$0xff]
  %v5634 = vld [vmem:[%s4 + $0x50c] sm:$0xff]
  %v5635 = vld [vmem:[%s4 + $0x514] sm:$0xff]
  %v5636 = vld [vmem:[%s4 + $0x51c] sm:$0xff]
  %v5637 = vld [vmem:[%s4 + $0x524] sm:$0xf]
  %v5638 = vld [vmem:[%s4 + $0x528] sm:$0xff]
  %v5639 = vld [vmem:[%s4 + $0x530] sm:$0xff]
  %v5640 = vld [vmem:[%s4 + $0x538] sm:$0xff]
  %v5641 = vld [vmem:[%s4 + $0x540] sm:$0xff]
  %v5642 = vld [vmem:[%s4 + $0x548] sm:$0xff]
  %v5643 = vld [vmem:[%s4 + $0x550] sm:$0xff]
  %v5644 = vld [vmem:[%s4 + $0x558] sm:$0xff]
  %v5645 = vld [vmem:[%s4 + $0x560] sm:$0xf]
  %v5646 = vld [vmem:[%s4 + $0x564] sm:$0xff]
  %v5647 = vld [vmem:[%s4 + $0x56c] sm:$0xff]
  %v5648 = vld [vmem:[%s4 + $0x574] sm:$0xff]
  %v5649 = vld [vmem:[%s4 + $0x57c] sm:$0xff]
  %v5650 = vld [vmem:[%s4 + $0x584] sm:$0xff]
  %v5651 = vld [vmem:[%s4 + $0x58c] sm:$0xff]
  %v5652 = vld [vmem:[%s4 + $0x594] sm:$0xff]
  %v5653 = vld [vmem:[%s4 + $0x59c] sm:$0xf]
  %v5654 = vld [vmem:[%s4 + $0x5a0] sm:$0xff]
  %v5655 = vld [vmem:[%s4 + $0x5a8] sm:$0xff]
  %v5656 = vld [vmem:[%s4 + $0x5b0] sm:$0xff]
  %v5657 = vld [vmem:[%s4 + $0x5b8] sm:$0xff]
  %v5658 = vld [vmem:[%s4 + $0x5c0] sm:$0xff]
  %v5659 = vld [vmem:[%s4 + $0x5c8] sm:$0xff]
  %v5660 = vld [vmem:[%s4 + $0x5d0] sm:$0xff]
  %v5661 = vld [vmem:[%s4 + $0x5d8] sm:$0xf]
  %v5662 = vld [vmem:[%s4 + $0x5dc] sm:$0xff]
  %v5663 = vld [vmem:[%s4 + $0x5e4] sm:$0xff]
  %v5664 = vld [vmem:[%s4 + $0x5ec] sm:$0xff]
  %v5665 = vld [vmem:[%s4 + $0x5f4] sm:$0xff]
  %v5666 = vld [vmem:[%s4 + $0x5fc] sm:$0xff]
  %v5667 = vld [vmem:[%s4 + $0x604] sm:$0xff]
  %v5668 = vld [vmem:[%s4 + $0x60c] sm:$0xff]
  %v5669 = vld [vmem:[%s4 + $0x614] sm:$0xf]
  %v5670 = vld [vmem:[%s4 + $0x618] sm:$0xff]
  %v5671 = vld [vmem:[%s4 + $0x620] sm:$0xff]
  %v5672 = vld [vmem:[%s4 + $0x628] sm:$0xff]
  %v5673 = vld [vmem:[%s4 + $0x630] sm:$0xff]
  %v5674 = vld [vmem:[%s4 + $0x638] sm:$0xff]
  %v5675 = vld [vmem:[%s4 + $0x640] sm:$0xff]
  %v5676 = vld [vmem:[%s4 + $0x648] sm:$0xff]
  %v5677 = vld [vmem:[%s4 + $0x650] sm:$0xf]
  %v5678 = vld [vmem:[%s4 + $0x654] sm:$0xff]
  %v5679 = vld [vmem:[%s4 + $0x65c] sm:$0xff]
  %v5680 = vld [vmem:[%s4 + $0x664] sm:$0xff]
  %v5681 = vld [vmem:[%s4 + $0x66c] sm:$0xff]
  %v5682 = vld [vmem:[%s4 + $0x674] sm:$0xff]
  %v5683 = vld [vmem:[%s4 + $0x67c] sm:$0xff]
  %v5684 = vld [vmem:[%s4 + $0x684] sm:$0xff]
  %v5685 = vld [vmem:[%s4 + $0x68c] sm:$0xf]
  %v5686 = vld [vmem:[%s4 + $0x690] sm:$0xff]
  %v5687 = vld [vmem:[%s4 + $0x698] sm:$0xff]
  %v5688 = vld [vmem:[%s4 + $0x6a0] sm:$0xff]
  %v5689 = vld [vmem:[%s4 + $0x6a8] sm:$0xff]
  %v5690 = vld [vmem:[%s4 + $0x6b0] sm:$0xff]
  %v5691 = vld [vmem:[%s4 + $0x6b8] sm:$0xff]
  %v5692 = vld [vmem:[%s4 + $0x6c0] sm:$0xff]
  %v5693 = vld [vmem:[%s4 + $0x6c8] sm:$0xf]
  %v5694 = vld [vmem:[%s4 + $0x6cc] sm:$0xff]
  %v5695 = vld [vmem:[%s4 + $0x6d4] sm:$0xff]
  %v5696 = vld [vmem:[%s4 + $0x6dc] sm:$0xff]
  %v5697 = vld [vmem:[%s4 + $0x6e4] sm:$0xff]
  %v5698 = vld [vmem:[%s4 + $0x6ec] sm:$0xff]
  %v5699 = vld [vmem:[%s4 + $0x6f4] sm:$0xff]
  %v5700 = vld [vmem:[%s4 + $0x6fc] sm:$0xff]
  %v5701 = vld [vmem:[%s4 + $0x704] sm:$0xf]
  %v5702 = vld [vmem:[%s4 + $0x708] sm:$0xff]
  %v5703 = vld [vmem:[%s4 + $0x710] sm:$0xff]
  %v5704 = vld [vmem:[%s4 + $0x718] sm:$0xff]
  %v5705 = vld [vmem:[%s4 + $0x720] sm:$0xff]
  %v5706 = vld [vmem:[%s4 + $0x728] sm:$0xff]
  %v5707 = vld [vmem:[%s4 + $0x730] sm:$0xff]
  %v5708 = vld [vmem:[%s4 + $0x738] sm:$0xff]
  %v5709 = vld [vmem:[%s4 + $0x740] sm:$0xf]
  %v5710 = vld [vmem:[%s4 + $0x744] sm:$0xff]
  %v5711 = vld [vmem:[%s4 + $0x74c] sm:$0xff]
  %v5712 = vld [vmem:[%s4 + $0x754] sm:$0xff]
  %v5713 = vld [vmem:[%s4 + $0x75c] sm:$0xff]
  %v5714 = vld [vmem:[%s4 + $0x764] sm:$0xff]
  %v5715 = vld [vmem:[%s4 + $0x76c] sm:$0xff]
  %v5716 = vld [vmem:[%s4 + $0x774] sm:$0xff]
  %v5717 = vld [vmem:[%s4 + $0x77c] sm:$0xf]
  %v5718 = vld [vmem:[%s4 + $0x780] sm:$0xff]
  %v5719 = vld [vmem:[%s4 + $0x788] sm:$0xff]
  %v5720 = vld [vmem:[%s4 + $0x790] sm:$0xff]
  %v5721 = vld [vmem:[%s4 + $0x798] sm:$0xff]
  %v5722 = vld [vmem:[%s4 + $0x7a0] sm:$0xff]
  %v5723 = vld [vmem:[%s4 + $0x7a8] sm:$0xff]
  %v5724 = vld [vmem:[%s4 + $0x7b0] sm:$0xff]
  %v5725 = vld [vmem:[%s4 + $0x7b8] sm:$0xf]
  %v5726 = vld [vmem:[%s4 + $0x7bc] sm:$0xff]
  %v5727 = vld [vmem:[%s4 + $0x7c4] sm:$0xff]
  %v5728 = vld [vmem:[%s4 + $0x7cc] sm:$0xff]
  %v5729 = vld [vmem:[%s4 + $0x7d4] sm:$0xff]
  %v5730 = vld [vmem:[%s4 + $0x7dc] sm:$0xff]
  %v5731 = vld [vmem:[%s4 + $0x7e4] sm:$0xff]
  %v5732 = vld [vmem:[%s4 + $0x7ec] sm:$0xff]
  %v5733 = vld [vmem:[%s4 + $0x7f4] sm:$0xf]
  %v5734 = vld [vmem:[%s4 + $0x7f8] sm:$0xff]
  %v5735 = vld [vmem:[%s4 + $0x800] sm:$0xff]
  %v5736 = vld [vmem:[%s4 + $0x808] sm:$0xff]
  %v5737 = vld [vmem:[%s4 + $0x810] sm:$0xff]
  %v5738 = vld [vmem:[%s4 + $0x818] sm:$0xff]
  %v5739 = vld [vmem:[%s4 + $0x820] sm:$0xff]
  %v5740 = vld [vmem:[%s4 + $0x828] sm:$0xff]
  %v5741 = vld [vmem:[%s4 + $0x830] sm:$0xf]
  %v5742 = vld [vmem:[%s4 + $0x834] sm:$0xff]
  %v5743 = vld [vmem:[%s4 + $0x83c] sm:$0xff]
  %v5744 = vld [vmem:[%s4 + $0x844] sm:$0xff]
  %v5745 = vld [vmem:[%s4 + $0x84c] sm:$0xff]
  %v5746 = vld [vmem:[%s4 + $0x854] sm:$0xff]
  %v5747 = vld [vmem:[%s4 + $0x85c] sm:$0xff]
  %v5748 = vld [vmem:[%s4 + $0x864] sm:$0xff]
  %v5749 = vld [vmem:[%s4 + $0x86c] sm:$0xf]
  %v5750 = vld [vmem:[%s4 + $0x870] sm:$0xff]
  %v5751 = vld [vmem:[%s4 + $0x878] sm:$0xff]
  %v5752 = vld [vmem:[%s4 + $0x880] sm:$0xff]
  %v5753 = vld [vmem:[%s4 + $0x888] sm:$0xff]
  %v5754 = vld [vmem:[%s4 + $0x890] sm:$0xff]
  %v5755 = vld [vmem:[%s4 + $0x898] sm:$0xff]
  %v5756 = vld [vmem:[%s4 + $0x8a0] sm:$0xff]
  %v5757 = vld [vmem:[%s4 + $0x8a8] sm:$0xf]
  %v5758 = vld [vmem:[%s4 + $0x8ac] sm:$0xff]
  %v5759 = vld [vmem:[%s4 + $0x8b4] sm:$0xff]
  %v5760 = vld [vmem:[%s4 + $0x8bc] sm:$0xff]
  %v5761 = vld [vmem:[%s4 + $0x8c4] sm:$0xff]
  %v5762 = vld [vmem:[%s4 + $0x8cc] sm:$0xff]
  %v5763 = vld [vmem:[%s4 + $0x8d4] sm:$0xff]
  %v5764 = vld [vmem:[%s4 + $0x8dc] sm:$0xff]
  %v5765 = vld [vmem:[%s4 + $0x8e4] sm:$0xf]
  %v6070 = vunpack.c.l.b16 %v5462
  %v6071 = vunpack.c.h.b16 %v5462
  %v6072 = vunpack.c.l.b16 %v5463
  %v6073 = vunpack.c.h.b16 %v5463
  %v6074 = vunpack.c.l.b16 %v5464
  %v6075 = vunpack.c.h.b16 %v5464
  %v6076 = vunpack.c.l.b16 %v5465
  %v6077 = vunpack.c.h.b16 %v5465
  %v6078 = vunpack.c.l.b16 %v5466
  %v6079 = vunpack.c.h.b16 %v5466
  %v6080 = vunpack.c.l.b16 %v5467
  %v6081 = vunpack.c.h.b16 %v5467
  %v6082 = vunpack.c.l.b16 %v5468
  %v6083 = vunpack.c.h.b16 %v5468
  %v6084 = vunpack.c.l.b16 %v5469
  %v6085 = vunpack.c.l.b16 %v5470
  %v6086 = vunpack.c.h.b16 %v5470
  %v6087 = vunpack.c.l.b16 %v5471
  %v6088 = vunpack.c.h.b16 %v5471
  %v6089 = vunpack.c.l.b16 %v5472
  %v6090 = vunpack.c.h.b16 %v5472
  %v6091 = vunpack.c.l.b16 %v5473
  %v6092 = vunpack.c.h.b16 %v5473
  %v6093 = vunpack.c.l.b16 %v5474
  %v6094 = vunpack.c.h.b16 %v5474
  %v6095 = vunpack.c.l.b16 %v5475
  %v6096 = vunpack.c.h.b16 %v5475
  %v6097 = vunpack.c.l.b16 %v5476
  %v6098 = vunpack.c.h.b16 %v5476
  %v6099 = vunpack.c.l.b16 %v5477
  %v6100 = vunpack.c.l.b16 %v5478
  %v6101 = vunpack.c.h.b16 %v5478
  %v6102 = vunpack.c.l.b16 %v5479
  %v6103 = vunpack.c.h.b16 %v5479
  %v6104 = vunpack.c.l.b16 %v5480
  %v6105 = vunpack.c.h.b16 %v5480
  %v6106 = vunpack.c.l.b16 %v5481
  %v6107 = vunpack.c.h.b16 %v5481
  %v6108 = vunpack.c.l.b16 %v5482
  %v6109 = vunpack.c.h.b16 %v5482
  %v6110 = vunpack.c.l.b16 %v5483
  %v6111 = vunpack.c.h.b16 %v5483
  %v6112 = vunpack.c.l.b16 %v5484
  %v6113 = vunpack.c.h.b16 %v5484
  %v6114 = vunpack.c.l.b16 %v5485
  %v6115 = vunpack.c.l.b16 %v5486
  %v6116 = vunpack.c.h.b16 %v5486
  %v6117 = vunpack.c.l.b16 %v5487
  %v6118 = vunpack.c.h.b16 %v5487
  %v6119 = vunpack.c.l.b16 %v5488
  %v6120 = vunpack.c.h.b16 %v5488
  %v6121 = vunpack.c.l.b16 %v5489
  %v6122 = vunpack.c.h.b16 %v5489
  %v6123 = vunpack.c.l.b16 %v5490
  %v6124 = vunpack.c.h.b16 %v5490
  %v6125 = vunpack.c.l.b16 %v5491
  %v6126 = vunpack.c.h.b16 %v5491
  %v6127 = vunpack.c.l.b16 %v5492
  %v6128 = vunpack.c.h.b16 %v5492
  %v6129 = vunpack.c.l.b16 %v5493
  %v6130 = vunpack.c.l.b16 %v5494
  %v6131 = vunpack.c.h.b16 %v5494
  %v6132 = vunpack.c.l.b16 %v5495
  %v6133 = vunpack.c.h.b16 %v5495
  %v6134 = vunpack.c.l.b16 %v5496
  %v6135 = vunpack.c.h.b16 %v5496
  %v6136 = vunpack.c.l.b16 %v5497
  %v6137 = vunpack.c.h.b16 %v5497
  %v6138 = vunpack.c.l.b16 %v5498
  %v6139 = vunpack.c.h.b16 %v5498
  %v6140 = vunpack.c.l.b16 %v5499
  %v6141 = vunpack.c.h.b16 %v5499
  %v6142 = vunpack.c.l.b16 %v5500
  %v6143 = vunpack.c.h.b16 %v5500
  %v6144 = vunpack.c.l.b16 %v5501
  %v6145 = vunpack.c.l.b16 %v5502
  %v6146 = vunpack.c.h.b16 %v5502
  %v6147 = vunpack.c.l.b16 %v5503
  %v6148 = vunpack.c.h.b16 %v5503
  %v6149 = vunpack.c.l.b16 %v5504
  %v6150 = vunpack.c.h.b16 %v5504
  %v6151 = vunpack.c.l.b16 %v5505
  %v6152 = vunpack.c.h.b16 %v5505
  %v6153 = vunpack.c.l.b16 %v5506
  %v6154 = vunpack.c.h.b16 %v5506
  %v6155 = vunpack.c.l.b16 %v5507
  %v6156 = vunpack.c.h.b16 %v5507
  %v6157 = vunpack.c.l.b16 %v5508
  %v6158 = vunpack.c.h.b16 %v5508
  %v6159 = vunpack.c.l.b16 %v5509
  %v6160 = vunpack.c.l.b16 %v5510
  %v6161 = vunpack.c.h.b16 %v5510
  %v6162 = vunpack.c.l.b16 %v5511
  %v6163 = vunpack.c.h.b16 %v5511
  %v6164 = vunpack.c.l.b16 %v5512
  %v6165 = vunpack.c.h.b16 %v5512
  %v6166 = vunpack.c.l.b16 %v5513
  %v6167 = vunpack.c.h.b16 %v5513
  %v6168 = vunpack.c.l.b16 %v5514
  %v6169 = vunpack.c.h.b16 %v5514
  %v6170 = vunpack.c.l.b16 %v5515
  %v6171 = vunpack.c.h.b16 %v5515
  %v6172 = vunpack.c.l.b16 %v5516
  %v6173 = vunpack.c.h.b16 %v5516
  %v6174 = vunpack.c.l.b16 %v5517
  %v6175 = vunpack.c.l.b16 %v5518
  %v6176 = vunpack.c.h.b16 %v5518
  %v6177 = vunpack.c.l.b16 %v5519
  %v6178 = vunpack.c.h.b16 %v5519
  %v6179 = vunpack.c.l.b16 %v5520
  %v6180 = vunpack.c.h.b16 %v5520
  %v6181 = vunpack.c.l.b16 %v5521
  %v6182 = vunpack.c.h.b16 %v5521
  %v6183 = vunpack.c.l.b16 %v5522
  %v6184 = vunpack.c.h.b16 %v5522
  %v6185 = vunpack.c.l.b16 %v5523
  %v6186 = vunpack.c.h.b16 %v5523
  %v6187 = vunpack.c.l.b16 %v5524
  %v6188 = vunpack.c.h.b16 %v5524
  %v6189 = vunpack.c.l.b16 %v5525
  %v6190 = vunpack.c.l.b16 %v5526
  %v6191 = vunpack.c.h.b16 %v5526
  %v6192 = vunpack.c.l.b16 %v5527
  %v6193 = vunpack.c.h.b16 %v5527
  %v6194 = vunpack.c.l.b16 %v5528
  %v6195 = vunpack.c.h.b16 %v5528
  %v6196 = vunpack.c.l.b16 %v5529
  %v6197 = vunpack.c.h.b16 %v5529
  %v6198 = vunpack.c.l.b16 %v5530
  %v6199 = vunpack.c.h.b16 %v5530
  %v6200 = vunpack.c.l.b16 %v5531
  %v6201 = vunpack.c.h.b16 %v5531
  %v6202 = vunpack.c.l.b16 %v5532
  %v6203 = vunpack.c.h.b16 %v5532
  %v6204 = vunpack.c.l.b16 %v5533
  %v6205 = vunpack.c.l.b16 %v5534
  %v6206 = vunpack.c.h.b16 %v5534
  %v6207 = vunpack.c.l.b16 %v5535
  %v6208 = vunpack.c.h.b16 %v5535
  %v6209 = vunpack.c.l.b16 %v5536
  %v6210 = vunpack.c.h.b16 %v5536
  %v6211 = vunpack.c.l.b16 %v5537
  %v6212 = vunpack.c.h.b16 %v5537
  %v6213 = vunpack.c.l.b16 %v5538
  %v6214 = vunpack.c.h.b16 %v5538
  %v6215 = vunpack.c.l.b16 %v5539
  %v6216 = vunpack.c.h.b16 %v5539
  %v6217 = vunpack.c.l.b16 %v5540
  %v6218 = vunpack.c.h.b16 %v5540
  %v6219 = vunpack.c.l.b16 %v5541
  %v6220 = vunpack.c.l.b16 %v5542
  %v6221 = vunpack.c.h.b16 %v5542
  %v6222 = vunpack.c.l.b16 %v5543
  %v6223 = vunpack.c.h.b16 %v5543
  %v6224 = vunpack.c.l.b16 %v5544
  %v6225 = vunpack.c.h.b16 %v5544
  %v6226 = vunpack.c.l.b16 %v5545
  %v6227 = vunpack.c.h.b16 %v5545
  %v6228 = vunpack.c.l.b16 %v5546
  %v6229 = vunpack.c.h.b16 %v5546
  %v6230 = vunpack.c.l.b16 %v5547
  %v6231 = vunpack.c.h.b16 %v5547
  %v6232 = vunpack.c.l.b16 %v5548
  %v6233 = vunpack.c.h.b16 %v5548
  %v6234 = vunpack.c.l.b16 %v5549
  %v6235 = vunpack.c.l.b16 %v5550
  %v6236 = vunpack.c.h.b16 %v5550
  %v6237 = vunpack.c.l.b16 %v5551
  %v6238 = vunpack.c.h.b16 %v5551
  %v6239 = vunpack.c.l.b16 %v5552
  %v6240 = vunpack.c.h.b16 %v5552
  %v6241 = vunpack.c.l.b16 %v5553
  %v6242 = vunpack.c.h.b16 %v5553
  %v6243 = vunpack.c.l.b16 %v5554
  %v6244 = vunpack.c.h.b16 %v5554
  %v6245 = vunpack.c.l.b16 %v5555
  %v6246 = vunpack.c.h.b16 %v5555
  %v6247 = vunpack.c.l.b16 %v5556
  %v6248 = vunpack.c.h.b16 %v5556
  %v6249 = vunpack.c.l.b16 %v5557
  %v6250 = vunpack.c.l.b16 %v5558
  %v6251 = vunpack.c.h.b16 %v5558
  %v6252 = vunpack.c.l.b16 %v5559
  %v6253 = vunpack.c.h.b16 %v5559
  %v6254 = vunpack.c.l.b16 %v5560
  %v6255 = vunpack.c.h.b16 %v5560
  %v6256 = vunpack.c.l.b16 %v5561
  %v6257 = vunpack.c.h.b16 %v5561
  %v6258 = vunpack.c.l.b16 %v5562
  %v6259 = vunpack.c.h.b16 %v5562
  %v6260 = vunpack.c.l.b16 %v5563
  %v6261 = vunpack.c.h.b16 %v5563
  %v6262 = vunpack.c.l.b16 %v5564
  %v6263 = vunpack.c.h.b16 %v5564
  %v6264 = vunpack.c.l.b16 %v5565
  %v6265 = vunpack.c.l.b16 %v5566
  %v6266 = vunpack.c.h.b16 %v5566
  %v6267 = vunpack.c.l.b16 %v5567
  %v6268 = vunpack.c.h.b16 %v5567
  %v6269 = vunpack.c.l.b16 %v5568
  %v6270 = vunpack.c.h.b16 %v5568
  %v6271 = vunpack.c.l.b16 %v5569
  %v6272 = vunpack.c.h.b16 %v5569
  %v6273 = vunpack.c.l.b16 %v5570
  %v6274 = vunpack.c.h.b16 %v5570
  %v6275 = vunpack.c.l.b16 %v5571
  %v6276 = vunpack.c.h.b16 %v5571
  %v6277 = vunpack.c.l.b16 %v5572
  %v6278 = vunpack.c.h.b16 %v5572
  %v6279 = vunpack.c.l.b16 %v5573
  %v6280 = vunpack.c.l.b16 %v5574
  %v6281 = vunpack.c.h.b16 %v5574
  %v6282 = vunpack.c.l.b16 %v5575
  %v6283 = vunpack.c.h.b16 %v5575
  %v6284 = vunpack.c.l.b16 %v5576
  %v6285 = vunpack.c.h.b16 %v5576
  %v6286 = vunpack.c.l.b16 %v5577
  %v6287 = vunpack.c.h.b16 %v5577
  %v6288 = vunpack.c.l.b16 %v5578
  %v6289 = vunpack.c.h.b16 %v5578
  %v6290 = vunpack.c.l.b16 %v5579
  %v6291 = vunpack.c.h.b16 %v5579
  %v6292 = vunpack.c.l.b16 %v5580
  %v6293 = vunpack.c.h.b16 %v5580
  %v6294 = vunpack.c.l.b16 %v5581
  %v6295 = vunpack.c.l.b16 %v5582
  %v6296 = vunpack.c.h.b16 %v5582
  %v6297 = vunpack.c.l.b16 %v5583
  %v6298 = vunpack.c.h.b16 %v5583
  %v6299 = vunpack.c.l.b16 %v5584
  %v6300 = vunpack.c.h.b16 %v5584
  %v6301 = vunpack.c.l.b16 %v5585
  %v6302 = vunpack.c.h.b16 %v5585
  %v6303 = vunpack.c.l.b16 %v5586
  %v6304 = vunpack.c.h.b16 %v5586
  %v6305 = vunpack.c.l.b16 %v5587
  %v6306 = vunpack.c.h.b16 %v5587
  %v6307 = vunpack.c.l.b16 %v5588
  %v6308 = vunpack.c.h.b16 %v5588
  %v6309 = vunpack.c.l.b16 %v5589
  %v6310 = vunpack.c.l.b16 %v5590
  %v6311 = vunpack.c.h.b16 %v5590
  %v6312 = vunpack.c.l.b16 %v5591
  %v6313 = vunpack.c.h.b16 %v5591
  %v6314 = vunpack.c.l.b16 %v5592
  %v6315 = vunpack.c.h.b16 %v5592
  %v6316 = vunpack.c.l.b16 %v5593
  %v6317 = vunpack.c.h.b16 %v5593
  %v6318 = vunpack.c.l.b16 %v5594
  %v6319 = vunpack.c.h.b16 %v5594
  %v6320 = vunpack.c.l.b16 %v5595
  %v6321 = vunpack.c.h.b16 %v5595
  %v6322 = vunpack.c.l.b16 %v5596
  %v6323 = vunpack.c.h.b16 %v5596
  %v6324 = vunpack.c.l.b16 %v5597
  %v6325 = vunpack.c.l.b16 %v5598
  %v6326 = vunpack.c.h.b16 %v5598
  %v6327 = vunpack.c.l.b16 %v5599
  %v6328 = vunpack.c.h.b16 %v5599
  %v6329 = vunpack.c.l.b16 %v5600
  %v6330 = vunpack.c.h.b16 %v5600
  %v6331 = vunpack.c.l.b16 %v5601
  %v6332 = vunpack.c.h.b16 %v5601
  %v6333 = vunpack.c.l.b16 %v5602
  %v6334 = vunpack.c.h.b16 %v5602
  %v6335 = vunpack.c.l.b16 %v5603
  %v6336 = vunpack.c.h.b16 %v5603
  %v6337 = vunpack.c.l.b16 %v5604
  %v6338 = vunpack.c.h.b16 %v5604
  %v6339 = vunpack.c.l.b16 %v5605
  %v6340 = vunpack.c.l.b16 %v5606
  %v6341 = vunpack.c.h.b16 %v5606
  %v6342 = vunpack.c.l.b16 %v5607
  %v6343 = vunpack.c.h.b16 %v5607
  %v6344 = vunpack.c.l.b16 %v5608
  %v6345 = vunpack.c.h.b16 %v5608
  %v6346 = vunpack.c.l.b16 %v5609
  %v6347 = vunpack.c.h.b16 %v5609
  %v6348 = vunpack.c.l.b16 %v5610
  %v6349 = vunpack.c.h.b16 %v5610
  %v6350 = vunpack.c.l.b16 %v5611
  %v6351 = vunpack.c.h.b16 %v5611
  %v6352 = vunpack.c.l.b16 %v5612
  %v6353 = vunpack.c.h.b16 %v5612
  %v6354 = vunpack.c.l.b16 %v5613
  %v6355 = vunpack.c.l.b16 %v5614
  %v6356 = vunpack.c.h.b16 %v5614
  %v6357 = vunpack.c.l.b16 %v5615
  %v6358 = vunpack.c.h.b16 %v5615
  %v6359 = vunpack.c.l.b16 %v5616
  %v6360 = vunpack.c.h.b16 %v5616
  %v6361 = vunpack.c.l.b16 %v5617
  %v6362 = vunpack.c.h.b16 %v5617
  %v6363 = vunpack.c.l.b16 %v5618
  %v6364 = vunpack.c.h.b16 %v5618
  %v6365 = vunpack.c.l.b16 %v5619
  %v6366 = vunpack.c.h.b16 %v5619
  %v6367 = vunpack.c.l.b16 %v5620
  %v6368 = vunpack.c.h.b16 %v5620
  %v6369 = vunpack.c.l.b16 %v5621
  %v6370 = vunpack.c.l.b16 %v5622
  %v6371 = vunpack.c.h.b16 %v5622
  %v6372 = vunpack.c.l.b16 %v5623
  %v6373 = vunpack.c.h.b16 %v5623
  %v6374 = vunpack.c.l.b16 %v5624
  %v6375 = vunpack.c.h.b16 %v5624
  %v6376 = vunpack.c.l.b16 %v5625
  %v6377 = vunpack.c.h.b16 %v5625
  %v6378 = vunpack.c.l.b16 %v5626
  %v6379 = vunpack.c.h.b16 %v5626
  %v6380 = vunpack.c.l.b16 %v5627
  %v6381 = vunpack.c.h.b16 %v5627
  %v6382 = vunpack.c.l.b16 %v5628
  %v6383 = vunpack.c.h.b16 %v5628
  %v6384 = vunpack.c.l.b16 %v5629
  %v6385 = vunpack.c.l.b16 %v5630
  %v6386 = vunpack.c.h.b16 %v5630
  %v6387 = vunpack.c.l.b16 %v5631
  %v6388 = vunpack.c.h.b16 %v5631
  %v6389 = vunpack.c.l.b16 %v5632
  %v6390 = vunpack.c.h.b16 %v5632
  %v6391 = vunpack.c.l.b16 %v5633
  %v6392 = vunpack.c.h.b16 %v5633
  %v6393 = vunpack.c.l.b16 %v5634
  %v6394 = vunpack.c.h.b16 %v5634
  %v6395 = vunpack.c.l.b16 %v5635
  %v6396 = vunpack.c.h.b16 %v5635
  %v6397 = vunpack.c.l.b16 %v5636
  %v6398 = vunpack.c.h.b16 %v5636
  %v6399 = vunpack.c.l.b16 %v5637
  %v6400 = vunpack.c.l.b16 %v5638
  %v6401 = vunpack.c.h.b16 %v5638
  %v6402 = vunpack.c.l.b16 %v5639
  %v6403 = vunpack.c.h.b16 %v5639
  %v6404 = vunpack.c.l.b16 %v5640
  %v6405 = vunpack.c.h.b16 %v5640
  %v6406 = vunpack.c.l.b16 %v5641
  %v6407 = vunpack.c.h.b16 %v5641
  %v6408 = vunpack.c.l.b16 %v5642
  %v6409 = vunpack.c.h.b16 %v5642
  %v6410 = vunpack.c.l.b16 %v5643
  %v6411 = vunpack.c.h.b16 %v5643
  %v6412 = vunpack.c.l.b16 %v5644
  %v6413 = vunpack.c.h.b16 %v5644
  %v6414 = vunpack.c.l.b16 %v5645
  %v6415 = vunpack.c.l.b16 %v5646
  %v6416 = vunpack.c.h.b16 %v5646
  %v6417 = vunpack.c.l.b16 %v5647
  %v6418 = vunpack.c.h.b16 %v5647
  %v6419 = vunpack.c.l.b16 %v5648
  %v6420 = vunpack.c.h.b16 %v5648
  %v6421 = vunpack.c.l.b16 %v5649
  %v6422 = vunpack.c.h.b16 %v5649
  %v6423 = vunpack.c.l.b16 %v5650
  %v6424 = vunpack.c.h.b16 %v5650
  %v6425 = vunpack.c.l.b16 %v5651
  %v6426 = vunpack.c.h.b16 %v5651
  %v6427 = vunpack.c.l.b16 %v5652
  %v6428 = vunpack.c.h.b16 %v5652
  %v6429 = vunpack.c.l.b16 %v5653
  %v6430 = vunpack.c.l.b16 %v5654
  %v6431 = vunpack.c.h.b16 %v5654
  %v6432 = vunpack.c.l.b16 %v5655
  %v6433 = vunpack.c.h.b16 %v5655
  %v6434 = vunpack.c.l.b16 %v5656
  %v6435 = vunpack.c.h.b16 %v5656
  %v6436 = vunpack.c.l.b16 %v5657
  %v6437 = vunpack.c.h.b16 %v5657
  %v6438 = vunpack.c.l.b16 %v5658
  %v6439 = vunpack.c.h.b16 %v5658
  %v6440 = vunpack.c.l.b16 %v5659
  %v6441 = vunpack.c.h.b16 %v5659
  %v6442 = vunpack.c.l.b16 %v5660
  %v6443 = vunpack.c.h.b16 %v5660
  %v6444 = vunpack.c.l.b16 %v5661
  %v6445 = vunpack.c.l.b16 %v5662
  %v6446 = vunpack.c.h.b16 %v5662
  %v6447 = vunpack.c.l.b16 %v5663
  %v6448 = vunpack.c.h.b16 %v5663
  %v6449 = vunpack.c.l.b16 %v5664
  %v6450 = vunpack.c.h.b16 %v5664
  %v6451 = vunpack.c.l.b16 %v5665
  %v6452 = vunpack.c.h.b16 %v5665
  %v6453 = vunpack.c.l.b16 %v5666
  %v6454 = vunpack.c.h.b16 %v5666
  %v6455 = vunpack.c.l.b16 %v5667
  %v6456 = vunpack.c.h.b16 %v5667
  %v6457 = vunpack.c.l.b16 %v5668
  %v6458 = vunpack.c.h.b16 %v5668
  %v6459 = vunpack.c.l.b16 %v5669
  %v6460 = vunpack.c.l.b16 %v5670
  %v6461 = vunpack.c.h.b16 %v5670
  %v6462 = vunpack.c.l.b16 %v5671
  %v6463 = vunpack.c.h.b16 %v5671
  %v6464 = vunpack.c.l.b16 %v5672
  %v6465 = vunpack.c.h.b16 %v5672
  %v6466 = vunpack.c.l.b16 %v5673
  %v6467 = vunpack.c.h.b16 %v5673
  %v6468 = vunpack.c.l.b16 %v5674
  %v6469 = vunpack.c.h.b16 %v5674
  %v6470 = vunpack.c.l.b16 %v5675
  %v6471 = vunpack.c.h.b16 %v5675
  %v6472 = vunpack.c.l.b16 %v5676
  %v6473 = vunpack.c.h.b16 %v5676
  %v6474 = vunpack.c.l.b16 %v5677
  %v6475 = vunpack.c.l.b16 %v5678
  %v6476 = vunpack.c.h.b16 %v5678
  %v6477 = vunpack.c.l.b16 %v5679
  %v6478 = vunpack.c.h.b16 %v5679
  %v6479 = vunpack.c.l.b16 %v5680
  %v6480 = vunpack.c.h.b16 %v5680
  %v6481 = vunpack.c.l.b16 %v5681
  %v6482 = vunpack.c.h.b16 %v5681
  %v6483 = vunpack.c.l.b16 %v5682
  %v6484 = vunpack.c.h.b16 %v5682
  %v6485 = vunpack.c.l.b16 %v5683
  %v6486 = vunpack.c.h.b16 %v5683
  %v6487 = vunpack.c.l.b16 %v5684
  %v6488 = vunpack.c.h.b16 %v5684
  %v6489 = vunpack.c.l.b16 %v5685
  %v6490 = vunpack.c.l.b16 %v5686
  %v6491 = vunpack.c.h.b16 %v5686
  %v6492 = vunpack.c.l.b16 %v5687
  %v6493 = vunpack.c.h.b16 %v5687
  %v6494 = vunpack.c.l.b16 %v5688
  %v6495 = vunpack.c.h.b16 %v5688
  %v6496 = vunpack.c.l.b16 %v5689
  %v6497 = vunpack.c.h.b16 %v5689
  %v6498 = vunpack.c.l.b16 %v5690
  %v6499 = vunpack.c.h.b16 %v5690
  %v6500 = vunpack.c.l.b16 %v5691
  %v6501 = vunpack.c.h.b16 %v5691
  %v6502 = vunpack.c.l.b16 %v5692
  %v6503 = vunpack.c.h.b16 %v5692
  %v6504 = vunpack.c.l.b16 %v5693
  %v6505 = vunpack.c.l.b16 %v5694
  %v6506 = vunpack.c.h.b16 %v5694
  %v6507 = vunpack.c.l.b16 %v5695
  %v6508 = vunpack.c.h.b16 %v5695
  %v6509 = vunpack.c.l.b16 %v5696
  %v6510 = vunpack.c.h.b16 %v5696
  %v6511 = vunpack.c.l.b16 %v5697
  %v6512 = vunpack.c.h.b16 %v5697
  %v6513 = vunpack.c.l.b16 %v5698
  %v6514 = vunpack.c.h.b16 %v5698
  %v6515 = vunpack.c.l.b16 %v5699
  %v6516 = vunpack.c.h.b16 %v5699
  %v6517 = vunpack.c.l.b16 %v5700
  %v6518 = vunpack.c.h.b16 %v5700
  %v6519 = vunpack.c.l.b16 %v5701
  %v6520 = vunpack.c.l.b16 %v5702
  %v6521 = vunpack.c.h.b16 %v5702
  %v6522 = vunpack.c.l.b16 %v5703
  %v6523 = vunpack.c.h.b16 %v5703
  %v6524 = vunpack.c.l.b16 %v5704
  %v6525 = vunpack.c.h.b16 %v5704
  %v6526 = vunpack.c.l.b16 %v5705
  %v6527 = vunpack.c.h.b16 %v5705
  %v6528 = vunpack.c.l.b16 %v5706
  %v6529 = vunpack.c.h.b16 %v5706
  %v6530 = vunpack.c.l.b16 %v5707
  %v6531 = vunpack.c.h.b16 %v5707
  %v6532 = vunpack.c.l.b16 %v5708
  %v6533 = vunpack.c.h.b16 %v5708
  %v6534 = vunpack.c.l.b16 %v5709
  %v6535 = vunpack.c.l.b16 %v5710
  %v6536 = vunpack.c.h.b16 %v5710
  %v6537 = vunpack.c.l.b16 %v5711
  %v6538 = vunpack.c.h.b16 %v5711
  %v6539 = vunpack.c.l.b16 %v5712
  %v6540 = vunpack.c.h.b16 %v5712
  %v6541 = vunpack.c.l.b16 %v5713
  %v6542 = vunpack.c.h.b16 %v5713
  %v6543 = vunpack.c.l.b16 %v5714
  %v6544 = vunpack.c.h.b16 %v5714
  %v6545 = vunpack.c.l.b16 %v5715
  %v6546 = vunpack.c.h.b16 %v5715
  %v6547 = vunpack.c.l.b16 %v5716
  %v6548 = vunpack.c.h.b16 %v5716
  %v6549 = vunpack.c.l.b16 %v5717
  %v6550 = vunpack.c.l.b16 %v5718
  %v6551 = vunpack.c.h.b16 %v5718
  %v6552 = vunpack.c.l.b16 %v5719
  %v6553 = vunpack.c.h.b16 %v5719
  %v6554 = vunpack.c.l.b16 %v5720
  %v6555 = vunpack.c.h.b16 %v5720
  %v6556 = vunpack.c.l.b16 %v5721
  %v6557 = vunpack.c.h.b16 %v5721
  %v6558 = vunpack.c.l.b16 %v5722
  %v6559 = vunpack.c.h.b16 %v5722
  %v6560 = vunpack.c.l.b16 %v5723
  %v6561 = vunpack.c.h.b16 %v5723
  %v6562 = vunpack.c.l.b16 %v5724
  %v6563 = vunpack.c.h.b16 %v5724
  %v6564 = vunpack.c.l.b16 %v5725
  %v6565 = vunpack.c.l.b16 %v5726
  %v6566 = vunpack.c.h.b16 %v5726
  %v6567 = vunpack.c.l.b16 %v5727
  %v6568 = vunpack.c.h.b16 %v5727
  %v6569 = vunpack.c.l.b16 %v5728
  %v6570 = vunpack.c.h.b16 %v5728
  %v6571 = vunpack.c.l.b16 %v5729
  %v6572 = vunpack.c.h.b16 %v5729
  %v6573 = vunpack.c.l.b16 %v5730
  %v6574 = vunpack.c.h.b16 %v5730
  %v6575 = vunpack.c.l.b16 %v5731
  %v6576 = vunpack.c.h.b16 %v5731
  %v6577 = vunpack.c.l.b16 %v5732
  %v6578 = vunpack.c.h.b16 %v5732
  %v6579 = vunpack.c.l.b16 %v5733
  %v6580 = vunpack.c.l.b16 %v5734
  %v6581 = vunpack.c.h.b16 %v5734
  %v6582 = vunpack.c.l.b16 %v5735
  %v6583 = vunpack.c.h.b16 %v5735
  %v6584 = vunpack.c.l.b16 %v5736
  %v6585 = vunpack.c.h.b16 %v5736
  %v6586 = vunpack.c.l.b16 %v5737
  %v6587 = vunpack.c.h.b16 %v5737
  %v6588 = vunpack.c.l.b16 %v5738
  %v6589 = vunpack.c.h.b16 %v5738
  %v6590 = vunpack.c.l.b16 %v5739
  %v6591 = vunpack.c.h.b16 %v5739
  %v6592 = vunpack.c.l.b16 %v5740
  %v6593 = vunpack.c.h.b16 %v5740
  %v6594 = vunpack.c.l.b16 %v5741
  %v6595 = vunpack.c.l.b16 %v5742
  %v6596 = vunpack.c.h.b16 %v5742
  %v6597 = vunpack.c.l.b16 %v5743
  %v6598 = vunpack.c.h.b16 %v5743
  %v6599 = vunpack.c.l.b16 %v5744
  %v6600 = vunpack.c.h.b16 %v5744
  %v6601 = vunpack.c.l.b16 %v5745
  %v6602 = vunpack.c.h.b16 %v5745
  %v6603 = vunpack.c.l.b16 %v5746
  %v6604 = vunpack.c.h.b16 %v5746
  %v6605 = vunpack.c.l.b16 %v5747
  %v6606 = vunpack.c.h.b16 %v5747
  %v6607 = vunpack.c.l.b16 %v5748
  %v6608 = vunpack.c.h.b16 %v5748
  %v6609 = vunpack.c.l.b16 %v5749
  %v6610 = vunpack.c.l.b16 %v5750
  %v6611 = vunpack.c.h.b16 %v5750
  %v6612 = vunpack.c.l.b16 %v5751
  %v6613 = vunpack.c.h.b16 %v5751
  %v6614 = vunpack.c.l.b16 %v5752
  %v6615 = vunpack.c.h.b16 %v5752
  %v6616 = vunpack.c.l.b16 %v5753
  %v6617 = vunpack.c.h.b16 %v5753
  %v6618 = vunpack.c.l.b16 %v5754
  %v6619 = vunpack.c.h.b16 %v5754
  %v6620 = vunpack.c.l.b16 %v5755
  %v6621 = vunpack.c.h.b16 %v5755
  %v6622 = vunpack.c.l.b16 %v5756
  %v6623 = vunpack.c.h.b16 %v5756
  %v6624 = vunpack.c.l.b16 %v5757
  %v6625 = vunpack.c.l.b16 %v5758
  %v6626 = vunpack.c.h.b16 %v5758
  %v6627 = vunpack.c.l.b16 %v5759
  %v6628 = vunpack.c.h.b16 %v5759
  %v6629 = vunpack.c.l.b16 %v5760
  %v6630 = vunpack.c.h.b16 %v5760
  %v6631 = vunpack.c.l.b16 %v5761
  %v6632 = vunpack.c.h.b16 %v5761
  %v6633 = vunpack.c.l.b16 %v5762
  %v6634 = vunpack.c.h.b16 %v5762
  %v6635 = vunpack.c.l.b16 %v5763
  %v6636 = vunpack.c.h.b16 %v5763
  %v6637 = vunpack.c.l.b16 %v5764
  %v6638 = vunpack.c.h.b16 %v5764
  %v6639 = vunpack.c.l.b16 %v5765
  %v6640 = vpack.c.b16 %v6085, %v6070
  %v6641 = vpack.c.b16 %v6086, %v6071
  %v6642 = vpack.c.b16 %v6087, %v6072
  %v6643 = vpack.c.b16 %v6088, %v6073
  %v6644 = vpack.c.b16 %v6089, %v6074
  %v6645 = vpack.c.b16 %v6090, %v6075
  %v6646 = vpack.c.b16 %v6091, %v6076
  %v6647 = vpack.c.b16 %v6092, %v6077
  %v6648 = vpack.c.b16 %v6093, %v6078
  %v6649 = vpack.c.b16 %v6094, %v6079
  %v6650 = vpack.c.b16 %v6095, %v6080
  %v6651 = vpack.c.b16 %v6096, %v6081
  %v6652 = vpack.c.b16 %v6097, %v6082
  %v6653 = vpack.c.b16 %v6098, %v6083
  %v6654 = vpack.c.b16 %v6099, %v6084
  %v6655 = vpack.c.b16 %v6115, %v6100
  %v6656 = vpack.c.b16 %v6116, %v6101
  %v6657 = vpack.c.b16 %v6117, %v6102
  %v6658 = vpack.c.b16 %v6118, %v6103
  %v6659 = vpack.c.b16 %v6119, %v6104
  %v6660 = vpack.c.b16 %v6120, %v6105
  %v6661 = vpack.c.b16 %v6121, %v6106
  %v6662 = vpack.c.b16 %v6122, %v6107
  %v6663 = vpack.c.b16 %v6123, %v6108
  %v6664 = vpack.c.b16 %v6124, %v6109
  %v6665 = vpack.c.b16 %v6125, %v6110
  %v6666 = vpack.c.b16 %v6126, %v6111
  %v6667 = vpack.c.b16 %v6127, %v6112
  %v6668 = vpack.c.b16 %v6128, %v6113
  %v6669 = vpack.c.b16 %v6129, %v6114
  %v6670 = vpack.c.b16 %v6145, %v6130
  %v6671 = vpack.c.b16 %v6146, %v6131
  %v6672 = vpack.c.b16 %v6147, %v6132
  %v6673 = vpack.c.b16 %v6148, %v6133
  %v6674 = vpack.c.b16 %v6149, %v6134
  %v6675 = vpack.c.b16 %v6150, %v6135
  %v6676 = vpack.c.b16 %v6151, %v6136
  %v6677 = vpack.c.b16 %v6152, %v6137
  %v6678 = vpack.c.b16 %v6153, %v6138
  %v6679 = vpack.c.b16 %v6154, %v6139
  %v6680 = vpack.c.b16 %v6155, %v6140
  %v6681 = vpack.c.b16 %v6156, %v6141
  %v6682 = vpack.c.b16 %v6157, %v6142
  %v6683 = vpack.c.b16 %v6158, %v6143
  %v6684 = vpack.c.b16 %v6159, %v6144
  %v6685 = vpack.c.b16 %v6175, %v6160
  %v6686 = vpack.c.b16 %v6176, %v6161
  %v6687 = vpack.c.b16 %v6177, %v6162
  %v6688 = vpack.c.b16 %v6178, %v6163
  %v6689 = vpack.c.b16 %v6179, %v6164
  %v6690 = vpack.c.b16 %v6180, %v6165
  %v6691 = vpack.c.b16 %v6181, %v6166
  %v6692 = vpack.c.b16 %v6182, %v6167
  %v6693 = vpack.c.b16 %v6183, %v6168
  %v6694 = vpack.c.b16 %v6184, %v6169
  %v6695 = vpack.c.b16 %v6185, %v6170
  %v6696 = vpack.c.b16 %v6186, %v6171
  %v6697 = vpack.c.b16 %v6187, %v6172
  %v6698 = vpack.c.b16 %v6188, %v6173
  %v6699 = vpack.c.b16 %v6189, %v6174
  %v6700 = vpack.c.b16 %v6205, %v6190
  %v6701 = vpack.c.b16 %v6206, %v6191
  %v6702 = vpack.c.b16 %v6207, %v6192
  %v6703 = vpack.c.b16 %v6208, %v6193
  %v6704 = vpack.c.b16 %v6209, %v6194
  %v6705 = vpack.c.b16 %v6210, %v6195
  %v6706 = vpack.c.b16 %v6211, %v6196
  %v6707 = vpack.c.b16 %v6212, %v6197
  %v6708 = vpack.c.b16 %v6213, %v6198
  %v6709 = vpack.c.b16 %v6214, %v6199
  %v6710 = vpack.c.b16 %v6215, %v6200
  %v6711 = vpack.c.b16 %v6216, %v6201
  %v6712 = vpack.c.b16 %v6217, %v6202
  %v6713 = vpack.c.b16 %v6218, %v6203
  %v6714 = vpack.c.b16 %v6219, %v6204
  %v6715 = vpack.c.b16 %v6235, %v6220
  %v6716 = vpack.c.b16 %v6236, %v6221
  %v6717 = vpack.c.b16 %v6237, %v6222
  %v6718 = vpack.c.b16 %v6238, %v6223
  %v6719 = vpack.c.b16 %v6239, %v6224
  %v6720 = vpack.c.b16 %v6240, %v6225
  %v6721 = vpack.c.b16 %v6241, %v6226
  %v6722 = vpack.c.b16 %v6242, %v6227
  %v6723 = vpack.c.b16 %v6243, %v6228
  %v6724 = vpack.c.b16 %v6244, %v6229
  %v6725 = vpack.c.b16 %v6245, %v6230
  %v6726 = vpack.c.b16 %v6246, %v6231
  %v6727 = vpack.c.b16 %v6247, %v6232
  %v6728 = vpack.c.b16 %v6248, %v6233
  %v6729 = vpack.c.b16 %v6249, %v6234
  %v6730 = vpack.c.b16 %v6265, %v6250
  %v6731 = vpack.c.b16 %v6266, %v6251
  %v6732 = vpack.c.b16 %v6267, %v6252
  %v6733 = vpack.c.b16 %v6268, %v6253
  %v6734 = vpack.c.b16 %v6269, %v6254
  %v6735 = vpack.c.b16 %v6270, %v6255
  %v6736 = vpack.c.b16 %v6271, %v6256
  %v6737 = vpack.c.b16 %v6272, %v6257
  %v6738 = vpack.c.b16 %v6273, %v6258
  %v6739 = vpack.c.b16 %v6274, %v6259
  %v6740 = vpack.c.b16 %v6275, %v6260
  %v6741 = vpack.c.b16 %v6276, %v6261
  %v6742 = vpack.c.b16 %v6277, %v6262
  %v6743 = vpack.c.b16 %v6278, %v6263
  %v6744 = vpack.c.b16 %v6279, %v6264
  %v6745 = vpack.c.b16 %v6295, %v6280
  %v6746 = vpack.c.b16 %v6296, %v6281
  %v6747 = vpack.c.b16 %v6297, %v6282
  %v6748 = vpack.c.b16 %v6298, %v6283
  %v6749 = vpack.c.b16 %v6299, %v6284
  %v6750 = vpack.c.b16 %v6300, %v6285
  %v6751 = vpack.c.b16 %v6301, %v6286
  %v6752 = vpack.c.b16 %v6302, %v6287
  %v6753 = vpack.c.b16 %v6303, %v6288
  %v6754 = vpack.c.b16 %v6304, %v6289
  %v6755 = vpack.c.b16 %v6305, %v6290
  %v6756 = vpack.c.b16 %v6306, %v6291
  %v6757 = vpack.c.b16 %v6307, %v6292
  %v6758 = vpack.c.b16 %v6308, %v6293
  %v6759 = vpack.c.b16 %v6309, %v6294
  %v6760 = vpack.c.b16 %v6325, %v6310
  %v6761 = vpack.c.b16 %v6326, %v6311
  %v6762 = vpack.c.b16 %v6327, %v6312
  %v6763 = vpack.c.b16 %v6328, %v6313
  %v6764 = vpack.c.b16 %v6329, %v6314
  %v6765 = vpack.c.b16 %v6330, %v6315
  %v6766 = vpack.c.b16 %v6331, %v6316
  %v6767 = vpack.c.b16 %v6332, %v6317
  %v6768 = vpack.c.b16 %v6333, %v6318
  %v6769 = vpack.c.b16 %v6334, %v6319
  %v6770 = vpack.c.b16 %v6335, %v6320
  %v6771 = vpack.c.b16 %v6336, %v6321
  %v6772 = vpack.c.b16 %v6337, %v6322
  %v6773 = vpack.c.b16 %v6338, %v6323
  %v6774 = vpack.c.b16 %v6339, %v6324
  %v6775 = vpack.c.b16 %v6355, %v6340
  %v6776 = vpack.c.b16 %v6356, %v6341
  %v6777 = vpack.c.b16 %v6357, %v6342
  %v6778 = vpack.c.b16 %v6358, %v6343
  %v6779 = vpack.c.b16 %v6359, %v6344
  %v6780 = vpack.c.b16 %v6360, %v6345
  %v6781 = vpack.c.b16 %v6361, %v6346
  %v6782 = vpack.c.b16 %v6362, %v6347
  %v6783 = vpack.c.b16 %v6363, %v6348
  %v6784 = vpack.c.b16 %v6364, %v6349
  %v6785 = vpack.c.b16 %v6365, %v6350
  %v6786 = vpack.c.b16 %v6366, %v6351
  %v6787 = vpack.c.b16 %v6367, %v6352
  %v6788 = vpack.c.b16 %v6368, %v6353
  %v6789 = vpack.c.b16 %v6369, %v6354
  %v6790 = vpack.c.b16 %v6385, %v6370
  %v6791 = vpack.c.b16 %v6386, %v6371
  %v6792 = vpack.c.b16 %v6387, %v6372
  %v6793 = vpack.c.b16 %v6388, %v6373
  %v6794 = vpack.c.b16 %v6389, %v6374
  %v6795 = vpack.c.b16 %v6390, %v6375
  %v6796 = vpack.c.b16 %v6391, %v6376
  %v6797 = vpack.c.b16 %v6392, %v6377
  %v6798 = vpack.c.b16 %v6393, %v6378
  %v6799 = vpack.c.b16 %v6394, %v6379
  %v6800 = vpack.c.b16 %v6395, %v6380
  %v6801 = vpack.c.b16 %v6396, %v6381
  %v6802 = vpack.c.b16 %v6397, %v6382
  %v6803 = vpack.c.b16 %v6398, %v6383
  %v6804 = vpack.c.b16 %v6399, %v6384
  %v6805 = vpack.c.b16 %v6415, %v6400
  %v6806 = vpack.c.b16 %v6416, %v6401
  %v6807 = vpack.c.b16 %v6417, %v6402
  %v6808 = vpack.c.b16 %v6418, %v6403
  %v6809 = vpack.c.b16 %v6419, %v6404
  %v6810 = vpack.c.b16 %v6420, %v6405
  %v6811 = vpack.c.b16 %v6421, %v6406
  %v6812 = vpack.c.b16 %v6422, %v6407
  %v6813 = vpack.c.b16 %v6423, %v6408
  %v6814 = vpack.c.b16 %v6424, %v6409
  %v6815 = vpack.c.b16 %v6425, %v6410
  %v6816 = vpack.c.b16 %v6426, %v6411
  %v6817 = vpack.c.b16 %v6427, %v6412
  %v6818 = vpack.c.b16 %v6428, %v6413
  %v6819 = vpack.c.b16 %v6429, %v6414
  %v6820 = vpack.c.b16 %v6445, %v6430
  %v6821 = vpack.c.b16 %v6446, %v6431
  %v6822 = vpack.c.b16 %v6447, %v6432
  %v6823 = vpack.c.b16 %v6448, %v6433
  %v6824 = vpack.c.b16 %v6449, %v6434
  %v6825 = vpack.c.b16 %v6450, %v6435
  %v6826 = vpack.c.b16 %v6451, %v6436
  %v6827 = vpack.c.b16 %v6452, %v6437
  %v6828 = vpack.c.b16 %v6453, %v6438
  %v6829 = vpack.c.b16 %v6454, %v6439
  %v6830 = vpack.c.b16 %v6455, %v6440
  %v6831 = vpack.c.b16 %v6456, %v6441
  %v6832 = vpack.c.b16 %v6457, %v6442
  %v6833 = vpack.c.b16 %v6458, %v6443
  %v6834 = vpack.c.b16 %v6459, %v6444
  %v6835 = vpack.c.b16 %v6475, %v6460
  %v6836 = vpack.c.b16 %v6476, %v6461
  %v6837 = vpack.c.b16 %v6477, %v6462
  %v6838 = vpack.c.b16 %v6478, %v6463
  %v6839 = vpack.c.b16 %v6479, %v6464
  %v6840 = vpack.c.b16 %v6480, %v6465
  %v6841 = vpack.c.b16 %v6481, %v6466
  %v6842 = vpack.c.b16 %v6482, %v6467
  %v6843 = vpack.c.b16 %v6483, %v6468
  %v6844 = vpack.c.b16 %v6484, %v6469
  %v6845 = vpack.c.b16 %v6485, %v6470
  %v6846 = vpack.c.b16 %v6486, %v6471
  %v6847 = vpack.c.b16 %v6487, %v6472
  %v6848 = vpack.c.b16 %v6488, %v6473
  %v6849 = vpack.c.b16 %v6489, %v6474
  %v6850 = vpack.c.b16 %v6505, %v6490
  %v6851 = vpack.c.b16 %v6506, %v6491
  %v6852 = vpack.c.b16 %v6507, %v6492
  %v6853 = vpack.c.b16 %v6508, %v6493
  %v6854 = vpack.c.b16 %v6509, %v6494
  %v6855 = vpack.c.b16 %v6510, %v6495
  %v6856 = vpack.c.b16 %v6511, %v6496
  %v6857 = vpack.c.b16 %v6512, %v6497
  %v6858 = vpack.c.b16 %v6513, %v6498
  %v6859 = vpack.c.b16 %v6514, %v6499
  %v6860 = vpack.c.b16 %v6515, %v6500
  %v6861 = vpack.c.b16 %v6516, %v6501
  %v6862 = vpack.c.b16 %v6517, %v6502
  %v6863 = vpack.c.b16 %v6518, %v6503
  %v6864 = vpack.c.b16 %v6519, %v6504
  %v6865 = vpack.c.b16 %v6535, %v6520
  %v6866 = vpack.c.b16 %v6536, %v6521
  %v6867 = vpack.c.b16 %v6537, %v6522
  %v6868 = vpack.c.b16 %v6538, %v6523
  %v6869 = vpack.c.b16 %v6539, %v6524
  %v6870 = vpack.c.b16 %v6540, %v6525
  %v6871 = vpack.c.b16 %v6541, %v6526
  %v6872 = vpack.c.b16 %v6542, %v6527
  %v6873 = vpack.c.b16 %v6543, %v6528
  %v6874 = vpack.c.b16 %v6544, %v6529
  %v6875 = vpack.c.b16 %v6545, %v6530
  %v6876 = vpack.c.b16 %v6546, %v6531
  %v6877 = vpack.c.b16 %v6547, %v6532
  %v6878 = vpack.c.b16 %v6548, %v6533
  %v6879 = vpack.c.b16 %v6549, %v6534
  %v6880 = vpack.c.b16 %v6565, %v6550
  %v6881 = vpack.c.b16 %v6566, %v6551
  %v6882 = vpack.c.b16 %v6567, %v6552
  %v6883 = vpack.c.b16 %v6568, %v6553
  %v6884 = vpack.c.b16 %v6569, %v6554
  %v6885 = vpack.c.b16 %v6570, %v6555
  %v6886 = vpack.c.b16 %v6571, %v6556
  %v6887 = vpack.c.b16 %v6572, %v6557
  %v6888 = vpack.c.b16 %v6573, %v6558
  %v6889 = vpack.c.b16 %v6574, %v6559
  %v6890 = vpack.c.b16 %v6575, %v6560
  %v6891 = vpack.c.b16 %v6576, %v6561
  %v6892 = vpack.c.b16 %v6577, %v6562
  %v6893 = vpack.c.b16 %v6578, %v6563
  %v6894 = vpack.c.b16 %v6579, %v6564
  %v6895 = vpack.c.b16 %v6595, %v6580
  %v6896 = vpack.c.b16 %v6596, %v6581
  %v6897 = vpack.c.b16 %v6597, %v6582
  %v6898 = vpack.c.b16 %v6598, %v6583
  %v6899 = vpack.c.b16 %v6599, %v6584
  %v6900 = vpack.c.b16 %v6600, %v6585
  %v6901 = vpack.c.b16 %v6601, %v6586
  %v6902 = vpack.c.b16 %v6602, %v6587
  %v6903 = vpack.c.b16 %v6603, %v6588
  %v6904 = vpack.c.b16 %v6604, %v6589
  %v6905 = vpack.c.b16 %v6605, %v6590
  %v6906 = vpack.c.b16 %v6606, %v6591
  %v6907 = vpack.c.b16 %v6607, %v6592
  %v6908 = vpack.c.b16 %v6608, %v6593
  %v6909 = vpack.c.b16 %v6609, %v6594
  %v6910 = vpack.c.b16 %v6625, %v6610
  %v6911 = vpack.c.b16 %v6626, %v6611
  %v6912 = vpack.c.b16 %v6627, %v6612
  %v6913 = vpack.c.b16 %v6628, %v6613
  %v6914 = vpack.c.b16 %v6629, %v6614
  %v6915 = vpack.c.b16 %v6630, %v6615
  %v6916 = vpack.c.b16 %v6631, %v6616
  %v6917 = vpack.c.b16 %v6632, %v6617
  %v6918 = vpack.c.b16 %v6633, %v6618
  %v6919 = vpack.c.b16 %v6634, %v6619
  %v6920 = vpack.c.b16 %v6635, %v6620
  %v6921 = vpack.c.b16 %v6636, %v6621
  %v6922 = vpack.c.b16 %v6637, %v6622
  %v6923 = vpack.c.b16 %v6638, %v6623
  %v6924 = vpack.c.b16 %v6639, %v6624
  %vm7191 = vcmask 261120
  %v7193 = vsel %vm7191, %v6654, 0
  %v7196 = vsel %vm7191, %v6669, 0
  %v7199 = vsel %vm7191, %v6684, 0
  %v7202 = vsel %vm7191, %v6699, 0
  %v7205 = vsel %vm7191, %v6714, 0
  %v7208 = vsel %vm7191, %v6729, 0
  %v7211 = vsel %vm7191, %v6744, 0
  %v7214 = vsel %vm7191, %v6759, 0
  %v7217 = vsel %vm7191, %v6774, 0
  %v7220 = vsel %vm7191, %v6789, 0
  %v7223 = vsel %vm7191, %v6804, 0
  %v7226 = vsel %vm7191, %v6819, 0
  %v7229 = vsel %vm7191, %v6834, 0
  %v7232 = vsel %vm7191, %v6849, 0
  %v7235 = vsel %vm7191, %v6864, 0
  %v7238 = vsel %vm7191, %v6879, 0
  %v7241 = vsel %vm7191, %v6894, 0
  %v7244 = vsel %vm7191, %v6909, 0
  %v7247 = vsel %vm7191, %v6924, 0
  %7249 = vmatprep.subr.bf16.mxu0 0
  %7250 = vmatpush1.bf16.msra.mxu0 %v5348
  %7251 = vmatprep.subr.bf16.mxu0 0
  %7252 = vmatpush1.bf16.msra.mxu0 %v5349
  %7253 = vmatprep.subr.bf16.mxu0 0
  %7254 = vmatpush1.bf16.msra.mxu0 %v5350
  %7255 = vmatprep.subr.bf16.mxu0 0
  %7256 = vmatpush1.bf16.msra.mxu0 %v5351
  %7257 = vmatprep.subr.bf16.mxu0 0
  %7258 = vmatpush1.bf16.msra.mxu0 %v5352
  %7259 = vmatprep.subr.bf16.mxu0 0
  %7260 = vmatpush1.bf16.msra.mxu0 %v5353
  %7261 = vmatprep.subr.bf16.mxu0 0
  %7262 = vmatpush1.bf16.msra.mxu0 %v5354
  %7263 = vmatprep.subr.bf16.mxu0 0
  %7264 = vmatpush1.bf16.msra.mxu0 %v5355
  %7265 = vmatprep.subr.bf16.mxu0 0
  %7266 = vmatpush1.bf16.msra.mxu0 %v5356
  %7267 = vmatprep.subr.bf16.mxu0 0
  %7268 = vmatpush1.bf16.msra.mxu0 %v5357
  %7269 = vmatprep.subr.bf16.mxu0 0
  %7270 = vmatpush1.bf16.msra.mxu0 %v5358
  %7271 = vmatprep.subr.bf16.mxu0 0
  %7272 = vmatpush1.bf16.msra.mxu0 %v5359
  %7273 = vmatprep.subr.bf16.mxu0 0
  %7274 = vmatpush1.bf16.msra.mxu0 %v5360
  %7275 = vmatprep.subr.bf16.mxu0 0
  %7276 = vmatpush1.bf16.msra.mxu0 %v5361
  %7277 = vmatprep.subr.bf16.mxu0 0
  %7278 = vmatpush1.bf16.msra.mxu0 %v5362
  %7279 = vmatprep.subr.bf16.mxu0 0
  %7280 = vmatpush1.bf16.msra.mxu0 %v5363
  %7281 = vmatprep.mubr.bf16.mxu0 %v6641
  %7282 = vmatmul.mubr.bf16.gmra.mrb[0].mxu0 %v6640
  %v7283 = vpop.f32.mrb[0].mxu0
  %v7284 = vadd.f32 0.0, %v7283
  %v7285 = vpop.f32.mrb[0].mxu0
  %v7286 = vpop.f32.mrb[0].mxu0
  %v7287 = vadd.f32 0.0, %v7286
  %v7288 = vpop.f32.mrb[0].mxu0
  %7289 = vmatprep.mubr.bf16.mxu0 %v6656
  %7290 = vmatmul.mubr.bf16.gmra.mrb[0].mxu0 %v6655
  %v7291 = vpop.f32.mrb[0].mxu0
  %v7292 = vadd.f32 0.0, %v7291
  %v7293 = vpop.f32.mrb[0].mxu0
  %v7294 = vpop.f32.mrb[0].mxu0
  %v7295 = vadd.f32 0.0, %v7294
  %v7296 = vpop.f32.mrb[0].mxu0
  %7297 = vmatprep.mubr.bf16.mxu0 %v6671
  %7298 = vmatmul.mubr.bf16.gmra.mrb[0].mxu0 %v6670
  %v7299 = vpop.f32.mrb[0].mxu0
  %v7300 = vadd.f32 0.0, %v7299
  %v7301 = vpop.f32.mrb[0].mxu0
  %v7302 = vpop.f32.mrb[0].mxu0
  %v7303 = vadd.f32 0.0, %v7302
  %v7304 = vpop.f32.mrb[0].mxu0
  %7305 = vmatprep.mubr.bf16.mxu0 %v6686
  %7306 = vmatmul.mubr.bf16.gmra.mrb[0].mxu0 %v6685
  %v7307 = vpop.f32.mrb[0].mxu0
  %v7308 = vadd.f32 0.0, %v7307
  %v7309 = vpop.f32.mrb[0].mxu0
  %v7310 = vpop.f32.mrb[0].mxu0
  %v7311 = vadd.f32 0.0, %v7310
  %v7312 = vpop.f32.mrb[0].mxu0
  %7313 = vmatprep.mubr.bf16.mxu0 %v6701
  %7314 = vmatmul.mubr.bf16.gmra.mrb[0].mxu0 %v6700
  %v7315 = vpop.f32.mrb[0].mxu0
  %v7316 = vadd.f32 0.0, %v7315
  %v7317 = vpop.f32.mrb[0].mxu0
  %v7318 = vpop.f32.mrb[0].mxu0
  %v7319 = vadd.f32 0.0, %v7318
  %v7320 = vpop.f32.mrb[0].mxu0
  %7321 = vmatprep.mubr.bf16.mxu0 %v6716
  %7322 = vmatmul.mubr.bf16.gmra.mrb[0].mxu0 %v6715
  %v7323 = vpop.f32.mrb[0].mxu0
  %v7324 = vadd.f32 0.0, %v7323
  %v7325 = vpop.f32.mrb[0].mxu0
  %v7326 = vpop.f32.mrb[0].mxu0
  %v7327 = vadd.f32 0.0, %v7326
  %v7328 = vpop.f32.mrb[0].mxu0
  %7329 = vmatprep.mubr.bf16.mxu0 %v6731
  %7330 = vmatmul.mubr.bf16.gmra.mrb[0].mxu0 %v6730
  %v7331 = vpop.f32.mrb[0].mxu0
  %v7332 = vadd.f32 0.0, %v7331
  %v7333 = vpop.f32.mrb[0].mxu0
  %v7334 = vpop.f32.mrb[0].mxu0
  %v7335 = vadd.f32 0.0, %v7334
  %v7336 = vpop.f32.mrb[0].mxu0
  %7337 = vmatprep.mubr.bf16.mxu0 %v6746
  %7338 = vmatmul.mubr.bf16.gmra.mrb[0].mxu0 %v6745
  %v7339 = vpop.f32.mrb[0].mxu0
  %v7340 = vadd.f32 0.0, %v7339
  %v7341 = vpop.f32.mrb[0].mxu0
  %v7342 = vpop.f32.mrb[0].mxu0
  %v7343 = vadd.f32 0.0, %v7342
  %v7344 = vpop.f32.mrb[0].mxu0
  %7345 = vmatprep.mubr.bf16.mxu0 %v6761
  %7346 = vmatmul.mubr.bf16.gmra.mrb[0].mxu0 %v6760
  %v7347 = vpop.f32.mrb[0].mxu0
  %v7348 = vadd.f32 0.0, %v7347
  %v7349 = vpop.f32.mrb[0].mxu0
  %v7350 = vpop.f32.mrb[0].mxu0
  %v7351 = vadd.f32 0.0, %v7350
  %v7352 = vpop.f32.mrb[0].mxu0
  %7353 = vmatprep.mubr.bf16.mxu0 %v6776
  %7354 = vmatmul.mubr.bf16.gmra.mrb[0].mxu0 %v6775
  %v7355 = vpop.f32.mrb[0].mxu0
  %v7356 = vadd.f32 0.0, %v7355
  %v7357 = vpop.f32.mrb[0].mxu0
  %v7358 = vpop.f32.mrb[0].mxu0
  %v7359 = vadd.f32 0.0, %v7358
  %v7360 = vpop.f32.mrb[0].mxu0
  %7361 = vmatprep.mubr.bf16.mxu0 %v6791
  %7362 = vmatmul.mubr.bf16.gmra.mrb[0].mxu0 %v6790
  %v7363 = vpop.f32.mrb[0].mxu0
  %v7364 = vadd.f32 0.0, %v7363
  %v7365 = vpop.f32.mrb[0].mxu0
  %v7366 = vpop.f32.mrb[0].mxu0
  %v7367 = vadd.f32 0.0, %v7366
  %v7368 = vpop.f32.mrb[0].mxu0
  %7369 = vmatprep.mubr.bf16.mxu0 %v6806
  %7370 = vmatmul.mubr.bf16.gmra.mrb[0].mxu0 %v6805
  %v7371 = vpop.f32.mrb[0].mxu0
  %v7372 = vadd.f32 0.0, %v7371
  %v7373 = vpop.f32.mrb[0].mxu0
  %v7374 = vpop.f32.mrb[0].mxu0
  %v7375 = vadd.f32 0.0, %v7374
  %v7376 = vpop.f32.mrb[0].mxu0
  %7377 = vmatprep.mubr.bf16.mxu0 %v6821
  %7378 = vmatmul.mubr.bf16.gmra.mrb[0].mxu0 %v6820
  %v7379 = vpop.f32.mrb[0].mxu0
  %v7380 = vadd.f32 0.0, %v7379
  %v7381 = vpop.f32.mrb[0].mxu0
  %v7382 = vpop.f32.mrb[0].mxu0
  %v7383 = vadd.f32 0.0, %v7382
  %v7384 = vpop.f32.mrb[0].mxu0
  %7385 = vmatprep.mubr.bf16.mxu0 %v6836
  %7386 = vmatmul.mubr.bf16.gmra.mrb[0].mxu0 %v6835
  %v7387 = vpop.f32.mrb[0].mxu0
  %v7388 = vadd.f32 0.0, %v7387
  %v7389 = vpop.f32.mrb[0].mxu0
  %v7390 = vpop.f32.mrb[0].mxu0
  %v7391 = vadd.f32 0.0, %v7390
  %v7392 = vpop.f32.mrb[0].mxu0
  %7393 = vmatprep.mubr.bf16.mxu0 %v6851
  %7394 = vmatmul.mubr.bf16.gmra.mrb[0].mxu0 %v6850
  %v7395 = vpop.f32.mrb[0].mxu0
  %v7396 = vadd.f32 0.0, %v7395
  %v7397 = vpop.f32.mrb[0].mxu0
  %v7398 = vpop.f32.mrb[0].mxu0
  %v7399 = vadd.f32 0.0, %v7398
  %v7400 = vpop.f32.mrb[0].mxu0
  %7401 = vmatprep.mubr.bf16.mxu0 %v6866
  %7402 = vmatmul.mubr.bf16.gmra.mrb[0].mxu0 %v6865
  %v7403 = vpop.f32.mrb[0].mxu0
  %v7404 = vadd.f32 0.0, %v7403
  %v7405 = vpop.f32.mrb[0].mxu0
  %v7406 = vpop.f32.mrb[0].mxu0
  %v7407 = vadd.f32 0.0, %v7406
  %v7408 = vpop.f32.mrb[0].mxu0
  %7409 = vmatprep.mubr.bf16.mxu0 %v6881
  %7410 = vmatmul.mubr.bf16.gmra.mrb[0].mxu0 %v6880
  %v7411 = vpop.f32.mrb[0].mxu0
  %v7412 = vadd.f32 0.0, %v7411
  %v7413 = vpop.f32.mrb[0].mxu0
  %v7414 = vpop.f32.mrb[0].mxu0
  %v7415 = vadd.f32 0.0, %v7414
  %v7416 = vpop.f32.mrb[0].mxu0
  %7417 = vmatprep.mubr.bf16.mxu0 %v6896
  %7418 = vmatmul.mubr.bf16.gmra.mrb[0].mxu0 %v6895
  %v7419 = vpop.f32.mrb[0].mxu0
  %v7420 = vadd.f32 0.0, %v7419
  %v7421 = vpop.f32.mrb[0].mxu0
  %v7422 = vpop.f32.mrb[0].mxu0
  %v7423 = vadd.f32 0.0, %v7422
  %v7424 = vpop.f32.mrb[0].mxu0
  %7425 = vmatprep.mubr.bf16.mxu0 %v6911
  %7426 = vmatmul.mubr.bf16.gmra.mrb[0].mxu0 %v6910
  %v7427 = vpop.f32.mrb[0].mxu0
  %v7428 = vadd.f32 0.0, %v7427
  %v7429 = vpop.f32.mrb[0].mxu0
  %v7430 = vpop.f32.mrb[0].mxu0
  %v7431 = vadd.f32 0.0, %v7430
  %v7432 = vpop.f32.mrb[0].mxu0
  %7433 = vdwg.mxu0
  %7434 = vmatprep.subr.bf16.mxu0 0
  %7435 = vmatpush1.bf16.msra.mxu0 %v5364
  %7436 = vmatprep.subr.bf16.mxu0 0
  %7437 = vmatpush1.bf16.msra.mxu0 %v5365
  %7438 = vmatprep.subr.bf16.mxu0 0
  %7439 = vmatpush1.bf16.msra.mxu0 %v5366
  %7440 = vmatprep.subr.bf16.mxu0 0
  %7441 = vmatpush1.bf16.msra.mxu0 %v5367
  %7442 = vmatprep.subr.bf16.mxu0 0
  %7443 = vmatpush1.bf16.msra.mxu0 %v5368
  %7444 = vmatprep.subr.bf16.mxu0 0
  %7445 = vmatpush1.bf16.msra.mxu0 %v5369
  %7446 = vmatprep.subr.bf16.mxu0 0
  %7447 = vmatpush1.bf16.msra.mxu0 %v5370
  %7448 = vmatprep.subr.bf16.mxu0 0
  %7449 = vmatpush1.bf16.msra.mxu0 %v5371
  %7450 = vmatprep.subr.bf16.mxu0 0
  %7451 = vmatpush1.bf16.msra.mxu0 %v5372
  %7452 = vmatprep.subr.bf16.mxu0 0
  %7453 = vmatpush1.bf16.msra.mxu0 %v5373
  %7454 = vmatprep.subr.bf16.mxu0 0
  %7455 = vmatpush1.bf16.msra.mxu0 %v5374
  %7456 = vmatprep.subr.bf16.mxu0 0
  %7457 = vmatpush1.bf16.msra.mxu0 %v5375
  %7458 = vmatprep.subr.bf16.mxu0 0
  %7459 = vmatpush1.bf16.msra.mxu0 %v5376
  %7460 = vmatprep.subr.bf16.mxu0 0
  %7461 = vmatpush1.bf16.msra.mxu0 %v5377
  %7462 = vmatprep.subr.bf16.mxu0 0
  %7463 = vmatpush1.bf16.msra.mxu0 %v5378
  %7464 = vmatprep.subr.bf16.mxu0 0
  %7465 = vmatpush1.bf16.msra.mxu0 %v5379
  %7466 = vmatprep.mubr.bf16.mxu0 %v6643
  %7467 = vmatmul.mubr.bf16.gmra.mrb[0].mxu0 %v6642
  %v7468 = vpop.f32.mrb[0].mxu0
  %v7469 = vadd.f32 %v7284, %v7468
  %v7470 = vpop.f32.mrb[0].mxu0
  %v7471 = vpop.f32.mrb[0].mxu0
  %v7472 = vadd.f32 %v7287, %v7471
  %v7473 = vpop.f32.mrb[0].mxu0
  %7474 = vmatprep.mubr.bf16.mxu0 %v6658
  %7475 = vmatmul.mubr.bf16.gmra.mrb[0].mxu0 %v6657
  %v7476 = vpop.f32.mrb[0].mxu0
  %v7477 = vadd.f32 %v7292, %v7476
  %v7478 = vpop.f32.mrb[0].mxu0
  %v7479 = vpop.f32.mrb[0].mxu0
  %v7480 = vadd.f32 %v7295, %v7479
  %v7481 = vpop.f32.mrb[0].mxu0
  %7482 = vmatprep.mubr.bf16.mxu0 %v6673
  %7483 = vmatmul.mubr.bf16.gmra.mrb[0].mxu0 %v6672
  %v7484 = vpop.f32.mrb[0].mxu0
  %v7485 = vadd.f32 %v7300, %v7484
  %v7486 = vpop.f32.mrb[0].mxu0
  %v7487 = vpop.f32.mrb[0].mxu0
  %v7488 = vadd.f32 %v7303, %v7487
  %v7489 = vpop.f32.mrb[0].mxu0
  %7490 = vmatprep.mubr.bf16.mxu0 %v6688
  %7491 = vmatmul.mubr.bf16.gmra.mrb[0].mxu0 %v6687
  %v7492 = vpop.f32.mrb[0].mxu0
  %v7493 = vadd.f32 %v7308, %v7492
  %v7494 = vpop.f32.mrb[0].mxu0
  %v7495 = vpop.f32.mrb[0].mxu0
  %v7496 = vadd.f32 %v7311, %v7495
  %v7497 = vpop.f32.mrb[0].mxu0
  %7498 = vmatprep.mubr.bf16.mxu0 %v6703
  %7499 = vmatmul.mubr.bf16.gmra.mrb[0].mxu0 %v6702
  %v7500 = vpop.f32.mrb[0].mxu0
  %v7501 = vadd.f32 %v7316, %v7500
  %v7502 = vpop.f32.mrb[0].mxu0
  %v7503 = vpop.f32.mrb[0].mxu0
  %v7504 = vadd.f32 %v7319, %v7503
  %v7505 = vpop.f32.mrb[0].mxu0
  %7506 = vmatprep.mubr.bf16.mxu0 %v6718
  %7507 = vmatmul.mubr.bf16.gmra.mrb[0].mxu0 %v6717
  %v7508 = vpop.f32.mrb[0].mxu0
  %v7509 = vadd.f32 %v7324, %v7508
  %v7510 = vpop.f32.mrb[0].mxu0
  %v7511 = vpop.f32.mrb[0].mxu0
  %v7512 = vadd.f32 %v7327, %v7511
  %v7513 = vpop.f32.mrb[0].mxu0
  %7514 = vmatprep.mubr.bf16.mxu0 %v6733
  %7515 = vmatmul.mubr.bf16.gmra.mrb[0].mxu0 %v6732
  %v7516 = vpop.f32.mrb[0].mxu0
  %v7517 = vadd.f32 %v7332, %v7516
  %v7518 = vpop.f32.mrb[0].mxu0
  %v7519 = vpop.f32.mrb[0].mxu0
  %v7520 = vadd.f32 %v7335, %v7519
  %v7521 = vpop.f32.mrb[0].mxu0
  %7522 = vmatprep.mubr.bf16.mxu0 %v6748
  %7523 = vmatmul.mubr.bf16.gmra.mrb[0].mxu0 %v6747
  %v7524 = vpop.f32.mrb[0].mxu0
  %v7525 = vadd.f32 %v7340, %v7524
  %v7526 = vpop.f32.mrb[0].mxu0
  %v7527 = vpop.f32.mrb[0].mxu0
  %v7528 = vadd.f32 %v7343, %v7527
  %v7529 = vpop.f32.mrb[0].mxu0
  %7530 = vmatprep.mubr.bf16.mxu0 %v6763
  %7531 = vmatmul.mubr.bf16.gmra.mrb[0].mxu0 %v6762
  %v7532 = vpop.f32.mrb[0].mxu0
  %v7533 = vadd.f32 %v7348, %v7532
  %v7534 = vpop.f32.mrb[0].mxu0
  %v7535 = vpop.f32.mrb[0].mxu0
  %v7536 = vadd.f32 %v7351, %v7535
  %v7537 = vpop.f32.mrb[0].mxu0
  %7538 = vmatprep.mubr.bf16.mxu0 %v6778
  %7539 = vmatmul.mubr.bf16.gmra.mrb[0].mxu0 %v6777
  %v7540 = vpop.f32.mrb[0].mxu0
  %v7541 = vadd.f32 %v7356, %v7540
  %v7542 = vpop.f32.mrb[0].mxu0
  %v7543 = vpop.f32.mrb[0].mxu0
  %v7544 = vadd.f32 %v7359, %v7543
  %v7545 = vpop.f32.mrb[0].mxu0
  %7546 = vmatprep.mubr.bf16.mxu0 %v6793
  %7547 = vmatmul.mubr.bf16.gmra.mrb[0].mxu0 %v6792
  %v7548 = vpop.f32.mrb[0].mxu0
  %v7549 = vadd.f32 %v7364, %v7548
  %v7550 = vpop.f32.mrb[0].mxu0
  %v7551 = vpop.f32.mrb[0].mxu0
  %v7552 = vadd.f32 %v7367, %v7551
  %v7553 = vpop.f32.mrb[0].mxu0
  %7554 = vmatprep.mubr.bf16.mxu0 %v6808
  %7555 = vmatmul.mubr.bf16.gmra.mrb[0].mxu0 %v6807
  %v7556 = vpop.f32.mrb[0].mxu0
  %v7557 = vadd.f32 %v7372, %v7556
  %v7558 = vpop.f32.mrb[0].mxu0
  %v7559 = vpop.f32.mrb[0].mxu0
  %v7560 = vadd.f32 %v7375, %v7559
  %v7561 = vpop.f32.mrb[0].mxu0
  %7562 = vmatprep.mubr.bf16.mxu0 %v6823
  %7563 = vmatmul.mubr.bf16.gmra.mrb[0].mxu0 %v6822
  %v7564 = vpop.f32.mrb[0].mxu0
  %v7565 = vadd.f32 %v7380, %v7564
  %v7566 = vpop.f32.mrb[0].mxu0
  %v7567 = vpop.f32.mrb[0].mxu0
  %v7568 = vadd.f32 %v7383, %v7567
  %v7569 = vpop.f32.mrb[0].mxu0
  %7570 = vmatprep.mubr.bf16.mxu0 %v6838
  %7571 = vmatmul.mubr.bf16.gmra.mrb[0].mxu0 %v6837
  %v7572 = vpop.f32.mrb[0].mxu0
  %v7573 = vadd.f32 %v7388, %v7572
  %v7574 = vpop.f32.mrb[0].mxu0
  %v7575 = vpop.f32.mrb[0].mxu0
  %v7576 = vadd.f32 %v7391, %v7575
  %v7577 = vpop.f32.mrb[0].mxu0
  %7578 = vmatprep.mubr.bf16.mxu0 %v6853
  %7579 = vmatmul.mubr.bf16.gmra.mrb[0].mxu0 %v6852
  %v7580 = vpop.f32.mrb[0].mxu0
  %v7581 = vadd.f32 %v7396, %v7580
  %v7582 = vpop.f32.mrb[0].mxu0
  %v7583 = vpop.f32.mrb[0].mxu0
  %v7584 = vadd.f32 %v7399, %v7583
  %v7585 = vpop.f32.mrb[0].mxu0
  %7586 = vmatprep.mubr.bf16.mxu0 %v6868
  %7587 = vmatmul.mubr.bf16.gmra.mrb[0].mxu0 %v6867
  %v7588 = vpop.f32.mrb[0].mxu0
  %v7589 = vadd.f32 %v7404, %v7588
  %v7590 = vpop.f32.mrb[0].mxu0
  %v7591 = vpop.f32.mrb[0].mxu0
  %v7592 = vadd.f32 %v7407, %v7591
  %v7593 = vpop.f32.mrb[0].mxu0
  %7594 = vmatprep.mubr.bf16.mxu0 %v6883
  %7595 = vmatmul.mubr.bf16.gmra.mrb[0].mxu0 %v6882
  %v7596 = vpop.f32.mrb[0].mxu0
  %v7597 = vadd.f32 %v7412, %v7596
  %v7598 = vpop.f32.mrb[0].mxu0
  %v7599 = vpop.f32.mrb[0].mxu0
  %v7600 = vadd.f32 %v7415, %v7599
  %v7601 = vpop.f32.mrb[0].mxu0
  %7602 = vmatprep.mubr.bf16.mxu0 %v6898
  %7603 = vmatmul.mubr.bf16.gmra.mrb[0].mxu0 %v6897
  %v7604 = vpop.f32.mrb[0].mxu0
  %v7605 = vadd.f32 %v7420, %v7604
  %v7606 = vpop.f32.mrb[0].mxu0
  %v7607 = vpop.f32.mrb[0].mxu0
  %v7608 = vadd.f32 %v7423, %v7607
  %v7609 = vpop.f32.mrb[0].mxu0
  %7610 = vmatprep.mubr.bf16.mxu0 %v6913
  %7611 = vmatmul.mubr.bf16.gmra.mrb[0].mxu0 %v6912
  %v7612 = vpop.f32.mrb[0].mxu0
  %v7613 = vadd.f32 %v7428, %v7612
  %v7614 = vpop.f32.mrb[0].mxu0
  %v7615 = vpop.f32.mrb[0].mxu0
  %v7616 = vadd.f32 %v7431, %v7615
  %v7617 = vpop.f32.mrb[0].mxu0
  %7618 = vdwg.mxu0
  %7619 = vmatprep.subr.bf16.mxu0 0
  %7620 = vmatpush1.bf16.msra.mxu0 %v5380
  %7621 = vmatprep.subr.bf16.mxu0 0
  %7622 = vmatpush1.bf16.msra.mxu0 %v5381
  %7623 = vmatprep.subr.bf16.mxu0 0
  %7624 = vmatpush1.bf16.msra.mxu0 %v5382
  %7625 = vmatprep.subr.bf16.mxu0 0
  %7626 = vmatpush1.bf16.msra.mxu0 %v5383
  %7627 = vmatprep.subr.bf16.mxu0 0
  %7628 = vmatpush1.bf16.msra.mxu0 %v5384
  %7629 = vmatprep.subr.bf16.mxu0 0
  %7630 = vmatpush1.bf16.msra.mxu0 %v5385
  %7631 = vmatprep.subr.bf16.mxu0 0
  %7632 = vmatpush1.bf16.msra.mxu0 %v5386
  %7633 = vmatprep.subr.bf16.mxu0 0
  %7634 = vmatpush1.bf16.msra.mxu0 %v5387
  %7635 = vmatprep.subr.bf16.mxu0 0
  %7636 = vmatpush1.bf16.msra.mxu0 %v5388
  %7637 = vmatprep.subr.bf16.mxu0 0
  %7638 = vmatpush1.bf16.msra.mxu0 %v5389
  %7639 = vmatprep.subr.bf16.mxu0 0
  %7640 = vmatpush1.bf16.msra.mxu0 %v5390
  %7641 = vmatprep.subr.bf16.mxu0 0
  %7642 = vmatpush1.bf16.msra.mxu0 %v5391
  %7643 = vmatprep.subr.bf16.mxu0 0
  %7644 = vmatpush1.bf16.msra.mxu0 %v5392
  %7645 = vmatprep.subr.bf16.mxu0 0
  %7646 = vmatpush1.bf16.msra.mxu0 %v5393
  %7647 = vmatprep.subr.bf16.mxu0 0
  %7648 = vmatpush1.bf16.msra.mxu0 %v5394
  %7649 = vmatprep.subr.bf16.mxu0 0
  %7650 = vmatpush1.bf16.msra.mxu0 %v5395
  %7651 = vmatprep.mubr.bf16.mxu0 %v6645
  %7652 = vmatmul.mubr.bf16.gmra.mrb[0].mxu0 %v6644
  %v7653 = vpop.f32.mrb[0].mxu0
  %v7654 = vadd.f32 %v7469, %v7653
  %v7655 = vpop.f32.mrb[0].mxu0
  %v7656 = vpop.f32.mrb[0].mxu0
  %v7657 = vadd.f32 %v7472, %v7656
  %v7658 = vpop.f32.mrb[0].mxu0
  %7659 = vmatprep.mubr.bf16.mxu0 %v6660
  %7660 = vmatmul.mubr.bf16.gmra.mrb[0].mxu0 %v6659
  %v7661 = vpop.f32.mrb[0].mxu0
  %v7662 = vadd.f32 %v7477, %v7661
  %v7663 = vpop.f32.mrb[0].mxu0
  %v7664 = vpop.f32.mrb[0].mxu0
  %v7665 = vadd.f32 %v7480, %v7664
  %v7666 = vpop.f32.mrb[0].mxu0
  %7667 = vmatprep.mubr.bf16.mxu0 %v6675
  %7668 = vmatmul.mubr.bf16.gmra.mrb[0].mxu0 %v6674
  %v7669 = vpop.f32.mrb[0].mxu0
  %v7670 = vadd.f32 %v7485, %v7669
  %v7671 = vpop.f32.mrb[0].mxu0
  %v7672 = vpop.f32.mrb[0].mxu0
  %v7673 = vadd.f32 %v7488, %v7672
  %v7674 = vpop.f32.mrb[0].mxu0
  %7675 = vmatprep.mubr.bf16.mxu0 %v6690
  %7676 = vmatmul.mubr.bf16.gmra.mrb[0].mxu0 %v6689
  %v7677 = vpop.f32.mrb[0].mxu0
  %v7678 = vadd.f32 %v7493, %v7677
  %v7679 = vpop.f32.mrb[0].mxu0
  %v7680 = vpop.f32.mrb[0].mxu0
  %v7681 = vadd.f32 %v7496, %v7680
  %v7682 = vpop.f32.mrb[0].mxu0
  %7683 = vmatprep.mubr.bf16.mxu0 %v6705
  %7684 = vmatmul.mubr.bf16.gmra.mrb[0].mxu0 %v6704
  %v7685 = vpop.f32.mrb[0].mxu0
  %v7686 = vadd.f32 %v7501, %v7685
  %v7687 = vpop.f32.mrb[0].mxu0
  %v7688 = vpop.f32.mrb[0].mxu0
  %v7689 = vadd.f32 %v7504, %v7688
  %v7690 = vpop.f32.mrb[0].mxu0
  %7691 = vmatprep.mubr.bf16.mxu0 %v6720
  %7692 = vmatmul.mubr.bf16.gmra.mrb[0].mxu0 %v6719
  %v7693 = vpop.f32.mrb[0].mxu0
  %v7694 = vadd.f32 %v7509, %v7693
  %v7695 = vpop.f32.mrb[0].mxu0
  %v7696 = vpop.f32.mrb[0].mxu0
  %v7697 = vadd.f32 %v7512, %v7696
  %v7698 = vpop.f32.mrb[0].mxu0
  %7699 = vmatprep.mubr.bf16.mxu0 %v6735
  %7700 = vmatmul.mubr.bf16.gmra.mrb[0].mxu0 %v6734
  %v7701 = vpop.f32.mrb[0].mxu0
  %v7702 = vadd.f32 %v7517, %v7701
  %v7703 = vpop.f32.mrb[0].mxu0
  %v7704 = vpop.f32.mrb[0].mxu0
  %v7705 = vadd.f32 %v7520, %v7704
  %v7706 = vpop.f32.mrb[0].mxu0
  %7707 = vmatprep.mubr.bf16.mxu0 %v6750
  %7708 = vmatmul.mubr.bf16.gmra.mrb[0].mxu0 %v6749
  %v7709 = vpop.f32.mrb[0].mxu0
  %v7710 = vadd.f32 %v7525, %v7709
  %v7711 = vpop.f32.mrb[0].mxu0
  %v7712 = vpop.f32.mrb[0].mxu0
  %v7713 = vadd.f32 %v7528, %v7712
  %v7714 = vpop.f32.mrb[0].mxu0
  %7715 = vmatprep.mubr.bf16.mxu0 %v6765
  %7716 = vmatmul.mubr.bf16.gmra.mrb[0].mxu0 %v6764
  %v7717 = vpop.f32.mrb[0].mxu0
  %v7718 = vadd.f32 %v7533, %v7717
  %v7719 = vpop.f32.mrb[0].mxu0
  %v7720 = vpop.f32.mrb[0].mxu0
  %v7721 = vadd.f32 %v7536, %v7720
  %v7722 = vpop.f32.mrb[0].mxu0
  %7723 = vmatprep.mubr.bf16.mxu0 %v6780
  %7724 = vmatmul.mubr.bf16.gmra.mrb[0].mxu0 %v6779
  %v7725 = vpop.f32.mrb[0].mxu0
  %v7726 = vadd.f32 %v7541, %v7725
  %v7727 = vpop.f32.mrb[0].mxu0
  %v7728 = vpop.f32.mrb[0].mxu0
  %v7729 = vadd.f32 %v7544, %v7728
  %v7730 = vpop.f32.mrb[0].mxu0
  %7731 = vmatprep.mubr.bf16.mxu0 %v6795
  %7732 = vmatmul.mubr.bf16.gmra.mrb[0].mxu0 %v6794
  %v7733 = vpop.f32.mrb[0].mxu0
  %v7734 = vadd.f32 %v7549, %v7733
  %v7735 = vpop.f32.mrb[0].mxu0
  %v7736 = vpop.f32.mrb[0].mxu0
  %v7737 = vadd.f32 %v7552, %v7736
  %v7738 = vpop.f32.mrb[0].mxu0
  %7739 = vmatprep.mubr.bf16.mxu0 %v6810
  %7740 = vmatmul.mubr.bf16.gmra.mrb[0].mxu0 %v6809
  %v7741 = vpop.f32.mrb[0].mxu0
  %v7742 = vadd.f32 %v7557, %v7741
  %v7743 = vpop.f32.mrb[0].mxu0
  %v7744 = vpop.f32.mrb[0].mxu0
  %v7745 = vadd.f32 %v7560, %v7744
  %v7746 = vpop.f32.mrb[0].mxu0
  %7747 = vmatprep.mubr.bf16.mxu0 %v6825
  %7748 = vmatmul.mubr.bf16.gmra.mrb[0].mxu0 %v6824
  %v7749 = vpop.f32.mrb[0].mxu0
  %v7750 = vadd.f32 %v7565, %v7749
  %v7751 = vpop.f32.mrb[0].mxu0
  %v7752 = vpop.f32.mrb[0].mxu0
  %v7753 = vadd.f32 %v7568, %v7752
  %v7754 = vpop.f32.mrb[0].mxu0
  %7755 = vmatprep.mubr.bf16.mxu0 %v6840
  %7756 = vmatmul.mubr.bf16.gmra.mrb[0].mxu0 %v6839
  %v7757 = vpop.f32.mrb[0].mxu0
  %v7758 = vadd.f32 %v7573, %v7757
  %v7759 = vpop.f32.mrb[0].mxu0
  %v7760 = vpop.f32.mrb[0].mxu0
  %v7761 = vadd.f32 %v7576, %v7760
  %v7762 = vpop.f32.mrb[0].mxu0
  %7763 = vmatprep.mubr.bf16.mxu0 %v6855
  %7764 = vmatmul.mubr.bf16.gmra.mrb[0].mxu0 %v6854
  %v7765 = vpop.f32.mrb[0].mxu0
  %v7766 = vadd.f32 %v7581, %v7765
  %v7767 = vpop.f32.mrb[0].mxu0
  %v7768 = vpop.f32.mrb[0].mxu0
  %v7769 = vadd.f32 %v7584, %v7768
  %v7770 = vpop.f32.mrb[0].mxu0
  %7771 = vmatprep.mubr.bf16.mxu0 %v6870
  %7772 = vmatmul.mubr.bf16.gmra.mrb[0].mxu0 %v6869
  %v7773 = vpop.f32.mrb[0].mxu0
  %v7774 = vadd.f32 %v7589, %v7773
  %v7775 = vpop.f32.mrb[0].mxu0
  %v7776 = vpop.f32.mrb[0].mxu0
  %v7777 = vadd.f32 %v7592, %v7776
  %v7778 = vpop.f32.mrb[0].mxu0
  %7779 = vmatprep.mubr.bf16.mxu0 %v6885
  %7780 = vmatmul.mubr.bf16.gmra.mrb[0].mxu0 %v6884
  %v7781 = vpop.f32.mrb[0].mxu0
  %v7782 = vadd.f32 %v7597, %v7781
  %v7783 = vpop.f32.mrb[0].mxu0
  %v7784 = vpop.f32.mrb[0].mxu0
  %v7785 = vadd.f32 %v7600, %v7784
  %v7786 = vpop.f32.mrb[0].mxu0
  %7787 = vmatprep.mubr.bf16.mxu0 %v6900
  %7788 = vmatmul.mubr.bf16.gmra.mrb[0].mxu0 %v6899
  %v7789 = vpop.f32.mrb[0].mxu0
  %v7790 = vadd.f32 %v7605, %v7789
  %v7791 = vpop.f32.mrb[0].mxu0
  %v7792 = vpop.f32.mrb[0].mxu0
  %v7793 = vadd.f32 %v7608, %v7792
  %v7794 = vpop.f32.mrb[0].mxu0
  %7795 = vmatprep.mubr.bf16.mxu0 %v6915
  %7796 = vmatmul.mubr.bf16.gmra.mrb[0].mxu0 %v6914
  %v7797 = vpop.f32.mrb[0].mxu0
  %v7798 = vadd.f32 %v7613, %v7797
  %v7799 = vpop.f32.mrb[0].mxu0
  %v7800 = vpop.f32.mrb[0].mxu0
  %v7801 = vadd.f32 %v7616, %v7800
  %v7802 = vpop.f32.mrb[0].mxu0
  %7803 = vdwg.mxu0
  %7804 = vmatprep.subr.bf16.mxu0 0
  %7805 = vmatpush1.bf16.msra.mxu0 %v5396
  %7806 = vmatprep.subr.bf16.mxu0 0
  %7807 = vmatpush1.bf16.msra.mxu0 %v5397
  %7808 = vmatprep.subr.bf16.mxu0 0
  %7809 = vmatpush1.bf16.msra.mxu0 %v5398
  %7810 = vmatprep.subr.bf16.mxu0 0
  %7811 = vmatpush1.bf16.msra.mxu0 %v5399
  %7812 = vmatprep.subr.bf16.mxu0 0
  %7813 = vmatpush1.bf16.msra.mxu0 %v5400
  %7814 = vmatprep.subr.bf16.mxu0 0
  %7815 = vmatpush1.bf16.msra.mxu0 %v5401
  %7816 = vmatprep.subr.bf16.mxu0 0
  %7817 = vmatpush1.bf16.msra.mxu0 %v5402
  %7818 = vmatprep.subr.bf16.mxu0 0
  %7819 = vmatpush1.bf16.msra.mxu0 %v5403
  %7820 = vmatprep.subr.bf16.mxu0 0
  %7821 = vmatpush1.bf16.msra.mxu0 %v5404
  %7822 = vmatprep.subr.bf16.mxu0 0
  %7823 = vmatpush1.bf16.msra.mxu0 %v5405
  %7824 = vmatprep.subr.bf16.mxu0 0
  %7825 = vmatpush1.bf16.msra.mxu0 %v5406
  %7826 = vmatprep.subr.bf16.mxu0 0
  %7827 = vmatpush1.bf16.msra.mxu0 %v5407
  %7828 = vmatprep.subr.bf16.mxu0 0
  %7829 = vmatpush1.bf16.msra.mxu0 %v5408
  %7830 = vmatprep.subr.bf16.mxu0 0
  %7831 = vmatpush1.bf16.msra.mxu0 %v5409
  %7832 = vmatprep.subr.bf16.mxu0 0
  %7833 = vmatpush1.bf16.msra.mxu0 %v5410
  %7834 = vmatprep.subr.bf16.mxu0 0
  %7835 = vmatpush1.bf16.msra.mxu0 %v5411
  %7836 = vmatprep.mubr.bf16.mxu0 %v6647
  %7837 = vmatmul.mubr.bf16.gmra.mrb[0].mxu0 %v6646
  %v7838 = vpop.f32.mrb[0].mxu0
  %v7839 = vadd.f32 %v7654, %v7838
  %v7840 = vpop.f32.mrb[0].mxu0
  %v7841 = vpop.f32.mrb[0].mxu0
  %v7842 = vadd.f32 %v7657, %v7841
  %v7843 = vpop.f32.mrb[0].mxu0
  %7844 = vmatprep.mubr.bf16.mxu0 %v6662
  %7845 = vmatmul.mubr.bf16.gmra.mrb[0].mxu0 %v6661
  %v7846 = vpop.f32.mrb[0].mxu0
  %v7847 = vadd.f32 %v7662, %v7846
  %v7848 = vpop.f32.mrb[0].mxu0
  %v7849 = vpop.f32.mrb[0].mxu0
  %v7850 = vadd.f32 %v7665, %v7849
  %v7851 = vpop.f32.mrb[0].mxu0
  %7852 = vmatprep.mubr.bf16.mxu0 %v6677
  %7853 = vmatmul.mubr.bf16.gmra.mrb[0].mxu0 %v6676
  %v7854 = vpop.f32.mrb[0].mxu0
  %v7855 = vadd.f32 %v7670, %v7854
  %v7856 = vpop.f32.mrb[0].mxu0
  %v7857 = vpop.f32.mrb[0].mxu0
  %v7858 = vadd.f32 %v7673, %v7857
  %v7859 = vpop.f32.mrb[0].mxu0
  %7860 = vmatprep.mubr.bf16.mxu0 %v6692
  %7861 = vmatmul.mubr.bf16.gmra.mrb[0].mxu0 %v6691
  %v7862 = vpop.f32.mrb[0].mxu0
  %v7863 = vadd.f32 %v7678, %v7862
  %v7864 = vpop.f32.mrb[0].mxu0
  %v7865 = vpop.f32.mrb[0].mxu0
  %v7866 = vadd.f32 %v7681, %v7865
  %v7867 = vpop.f32.mrb[0].mxu0
  %7868 = vmatprep.mubr.bf16.mxu0 %v6707
  %7869 = vmatmul.mubr.bf16.gmra.mrb[0].mxu0 %v6706
  %v7870 = vpop.f32.mrb[0].mxu0
  %v7871 = vadd.f32 %v7686, %v7870
  %v7872 = vpop.f32.mrb[0].mxu0
  %v7873 = vpop.f32.mrb[0].mxu0
  %v7874 = vadd.f32 %v7689, %v7873
  %v7875 = vpop.f32.mrb[0].mxu0
  %7876 = vmatprep.mubr.bf16.mxu0 %v6722
  %7877 = vmatmul.mubr.bf16.gmra.mrb[0].mxu0 %v6721
  %v7878 = vpop.f32.mrb[0].mxu0
  %v7879 = vadd.f32 %v7694, %v7878
  %v7880 = vpop.f32.mrb[0].mxu0
  %v7881 = vpop.f32.mrb[0].mxu0
  %v7882 = vadd.f32 %v7697, %v7881
  %v7883 = vpop.f32.mrb[0].mxu0
  %7884 = vmatprep.mubr.bf16.mxu0 %v6737
  %7885 = vmatmul.mubr.bf16.gmra.mrb[0].mxu0 %v6736
  %v7886 = vpop.f32.mrb[0].mxu0
  %v7887 = vadd.f32 %v7702, %v7886
  %v7888 = vpop.f32.mrb[0].mxu0
  %v7889 = vpop.f32.mrb[0].mxu0
  %v7890 = vadd.f32 %v7705, %v7889
  %v7891 = vpop.f32.mrb[0].mxu0
  %7892 = vmatprep.mubr.bf16.mxu0 %v6752
  %7893 = vmatmul.mubr.bf16.gmra.mrb[0].mxu0 %v6751
  %v7894 = vpop.f32.mrb[0].mxu0
  %v7895 = vadd.f32 %v7710, %v7894
  %v7896 = vpop.f32.mrb[0].mxu0
  %v7897 = vpop.f32.mrb[0].mxu0
  %v7898 = vadd.f32 %v7713, %v7897
  %v7899 = vpop.f32.mrb[0].mxu0
  %7900 = vmatprep.mubr.bf16.mxu0 %v6767
  %7901 = vmatmul.mubr.bf16.gmra.mrb[0].mxu0 %v6766
  %v7902 = vpop.f32.mrb[0].mxu0
  %v7903 = vadd.f32 %v7718, %v7902
  %v7904 = vpop.f32.mrb[0].mxu0
  %v7905 = vpop.f32.mrb[0].mxu0
  %v7906 = vadd.f32 %v7721, %v7905
  %v7907 = vpop.f32.mrb[0].mxu0
  %7908 = vmatprep.mubr.bf16.mxu0 %v6782
  %7909 = vmatmul.mubr.bf16.gmra.mrb[0].mxu0 %v6781
  %v7910 = vpop.f32.mrb[0].mxu0
  %v7911 = vadd.f32 %v7726, %v7910
  %v7912 = vpop.f32.mrb[0].mxu0
  %v7913 = vpop.f32.mrb[0].mxu0
  %v7914 = vadd.f32 %v7729, %v7913
  %v7915 = vpop.f32.mrb[0].mxu0
  %7916 = vmatprep.mubr.bf16.mxu0 %v6797
  %7917 = vmatmul.mubr.bf16.gmra.mrb[0].mxu0 %v6796
  %v7918 = vpop.f32.mrb[0].mxu0
  %v7919 = vadd.f32 %v7734, %v7918
  %v7920 = vpop.f32.mrb[0].mxu0
  %v7921 = vpop.f32.mrb[0].mxu0
  %v7922 = vadd.f32 %v7737, %v7921
  %v7923 = vpop.f32.mrb[0].mxu0
  %7924 = vmatprep.mubr.bf16.mxu0 %v6812
  %7925 = vmatmul.mubr.bf16.gmra.mrb[0].mxu0 %v6811
  %v7926 = vpop.f32.mrb[0].mxu0
  %v7927 = vadd.f32 %v7742, %v7926
  %v7928 = vpop.f32.mrb[0].mxu0
  %v7929 = vpop.f32.mrb[0].mxu0
  %v7930 = vadd.f32 %v7745, %v7929
  %v7931 = vpop.f32.mrb[0].mxu0
  %7932 = vmatprep.mubr.bf16.mxu0 %v6827
  %7933 = vmatmul.mubr.bf16.gmra.mrb[0].mxu0 %v6826
  %v7934 = vpop.f32.mrb[0].mxu0
  %v7935 = vadd.f32 %v7750, %v7934
  %v7936 = vpop.f32.mrb[0].mxu0
  %v7937 = vpop.f32.mrb[0].mxu0
  %v7938 = vadd.f32 %v7753, %v7937
  %v7939 = vpop.f32.mrb[0].mxu0
  %7940 = vmatprep.mubr.bf16.mxu0 %v6842
  %7941 = vmatmul.mubr.bf16.gmra.mrb[0].mxu0 %v6841
  %v7942 = vpop.f32.mrb[0].mxu0
  %v7943 = vadd.f32 %v7758, %v7942
  %v7944 = vpop.f32.mrb[0].mxu0
  %v7945 = vpop.f32.mrb[0].mxu0
  %v7946 = vadd.f32 %v7761, %v7945
  %v7947 = vpop.f32.mrb[0].mxu0
  %7948 = vmatprep.mubr.bf16.mxu0 %v6857
  %7949 = vmatmul.mubr.bf16.gmra.mrb[0].mxu0 %v6856
  %v7950 = vpop.f32.mrb[0].mxu0
  %v7951 = vadd.f32 %v7766, %v7950
  %v7952 = vpop.f32.mrb[0].mxu0
  %v7953 = vpop.f32.mrb[0].mxu0
  %v7954 = vadd.f32 %v7769, %v7953
  %v7955 = vpop.f32.mrb[0].mxu0
  %7956 = vmatprep.mubr.bf16.mxu0 %v6872
  %7957 = vmatmul.mubr.bf16.gmra.mrb[0].mxu0 %v6871
  %v7958 = vpop.f32.mrb[0].mxu0
  %v7959 = vadd.f32 %v7774, %v7958
  %v7960 = vpop.f32.mrb[0].mxu0
  %v7961 = vpop.f32.mrb[0].mxu0
  %v7962 = vadd.f32 %v7777, %v7961
  %v7963 = vpop.f32.mrb[0].mxu0
  %7964 = vmatprep.mubr.bf16.mxu0 %v6887
  %7965 = vmatmul.mubr.bf16.gmra.mrb[0].mxu0 %v6886
  %v7966 = vpop.f32.mrb[0].mxu0
  %v7967 = vadd.f32 %v7782, %v7966
  %v7968 = vpop.f32.mrb[0].mxu0
  %v7969 = vpop.f32.mrb[0].mxu0
  %v7970 = vadd.f32 %v7785, %v7969
  %v7971 = vpop.f32.mrb[0].mxu0
  %7972 = vmatprep.mubr.bf16.mxu0 %v6902
  %7973 = vmatmul.mubr.bf16.gmra.mrb[0].mxu0 %v6901
  %v7974 = vpop.f32.mrb[0].mxu0
  %v7975 = vadd.f32 %v7790, %v7974
  %v7976 = vpop.f32.mrb[0].mxu0
  %v7977 = vpop.f32.mrb[0].mxu0
  %v7978 = vadd.f32 %v7793, %v7977
  %v7979 = vpop.f32.mrb[0].mxu0
  %7980 = vmatprep.mubr.bf16.mxu0 %v6917
  %7981 = vmatmul.mubr.bf16.gmra.mrb[0].mxu0 %v6916
  %v7982 = vpop.f32.mrb[0].mxu0
  %v7983 = vadd.f32 %v7798, %v7982
  %v7984 = vpop.f32.mrb[0].mxu0
  %v7985 = vpop.f32.mrb[0].mxu0
  %v7986 = vadd.f32 %v7801, %v7985
  %v7987 = vpop.f32.mrb[0].mxu0
  %7988 = vdwg.mxu0
  %7989 = vmatprep.subr.bf16.mxu0 0
  %7990 = vmatpush1.bf16.msra.mxu0 %v5412
  %7991 = vmatprep.subr.bf16.mxu0 0
  %7992 = vmatpush1.bf16.msra.mxu0 %v5413
  %7993 = vmatprep.subr.bf16.mxu0 0
  %7994 = vmatpush1.bf16.msra.mxu0 %v5414
  %7995 = vmatprep.subr.bf16.mxu0 0
  %7996 = vmatpush1.bf16.msra.mxu0 %v5415
  %7997 = vmatprep.subr.bf16.mxu0 0
  %7998 = vmatpush1.bf16.msra.mxu0 %v5416
  %7999 = vmatprep.subr.bf16.mxu0 0
  %8000 = vmatpush1.bf16.msra.mxu0 %v5417
  %8001 = vmatprep.subr.bf16.mxu0 0
  %8002 = vmatpush1.bf16.msra.mxu0 %v5418
  %8003 = vmatprep.subr.bf16.mxu0 0
  %8004 = vmatpush1.bf16.msra.mxu0 %v5419
  %8005 = vmatprep.subr.bf16.mxu0 0
  %8006 = vmatpush1.bf16.msra.mxu0 %v5420
  %8007 = vmatprep.subr.bf16.mxu0 0
  %8008 = vmatpush1.bf16.msra.mxu0 %v5421
  %8009 = vmatprep.subr.bf16.mxu0 0
  %8010 = vmatpush1.bf16.msra.mxu0 %v5422
  %8011 = vmatprep.subr.bf16.mxu0 0
  %8012 = vmatpush1.bf16.msra.mxu0 %v5423
  %8013 = vmatprep.subr.bf16.mxu0 0
  %8014 = vmatpush1.bf16.msra.mxu0 %v5424
  %8015 = vmatprep.subr.bf16.mxu0 0
  %8016 = vmatpush1.bf16.msra.mxu0 %v5425
  %8017 = vmatprep.subr.bf16.mxu0 0
  %8018 = vmatpush1.bf16.msra.mxu0 %v5426
  %8019 = vmatprep.subr.bf16.mxu0 0
  %8020 = vmatpush1.bf16.msra.mxu0 %v5427
  %8021 = vmatprep.mubr.bf16.mxu0 %v6649
  %8022 = vmatmul.mubr.bf16.gmra.mrb[0].mxu0 %v6648
  %v8023 = vpop.f32.mrb[0].mxu0
  %v8024 = vadd.f32 %v7839, %v8023
  %v8025 = vpop.f32.mrb[0].mxu0
  %v8026 = vpop.f32.mrb[0].mxu0
  %v8027 = vadd.f32 %v7842, %v8026
  %v8028 = vpop.f32.mrb[0].mxu0
  %8029 = vmatprep.mubr.bf16.mxu0 %v6664
  %8030 = vmatmul.mubr.bf16.gmra.mrb[0].mxu0 %v6663
  %v8031 = vpop.f32.mrb[0].mxu0
  %v8032 = vadd.f32 %v7847, %v8031
  %v8033 = vpop.f32.mrb[0].mxu0
  %v8034 = vpop.f32.mrb[0].mxu0
  %v8035 = vadd.f32 %v7850, %v8034
  %v8036 = vpop.f32.mrb[0].mxu0
  %8037 = vmatprep.mubr.bf16.mxu0 %v6679
  %8038 = vmatmul.mubr.bf16.gmra.mrb[0].mxu0 %v6678
  %v8039 = vpop.f32.mrb[0].mxu0
  %v8040 = vadd.f32 %v7855, %v8039
  %v8041 = vpop.f32.mrb[0].mxu0
  %v8042 = vpop.f32.mrb[0].mxu0
  %v8043 = vadd.f32 %v7858, %v8042
  %v8044 = vpop.f32.mrb[0].mxu0
  %8045 = vmatprep.mubr.bf16.mxu0 %v6694
  %8046 = vmatmul.mubr.bf16.gmra.mrb[0].mxu0 %v6693
  %v8047 = vpop.f32.mrb[0].mxu0
  %v8048 = vadd.f32 %v7863, %v8047
  %v8049 = vpop.f32.mrb[0].mxu0
  %v8050 = vpop.f32.mrb[0].mxu0
  %v8051 = vadd.f32 %v7866, %v8050
  %v8052 = vpop.f32.mrb[0].mxu0
  %8053 = vmatprep.mubr.bf16.mxu0 %v6709
  %8054 = vmatmul.mubr.bf16.gmra.mrb[0].mxu0 %v6708
  %v8055 = vpop.f32.mrb[0].mxu0
  %v8056 = vadd.f32 %v7871, %v8055
  %v8057 = vpop.f32.mrb[0].mxu0
  %v8058 = vpop.f32.mrb[0].mxu0
  %v8059 = vadd.f32 %v7874, %v8058
  %v8060 = vpop.f32.mrb[0].mxu0
  %8061 = vmatprep.mubr.bf16.mxu0 %v6724
  %8062 = vmatmul.mubr.bf16.gmra.mrb[0].mxu0 %v6723
  %v8063 = vpop.f32.mrb[0].mxu0
  %v8064 = vadd.f32 %v7879, %v8063
  %v8065 = vpop.f32.mrb[0].mxu0
  %v8066 = vpop.f32.mrb[0].mxu0
  %v8067 = vadd.f32 %v7882, %v8066
  %v8068 = vpop.f32.mrb[0].mxu0
  %8069 = vmatprep.mubr.bf16.mxu0 %v6739
  %8070 = vmatmul.mubr.bf16.gmra.mrb[0].mxu0 %v6738
  %v8071 = vpop.f32.mrb[0].mxu0
  %v8072 = vadd.f32 %v7887, %v8071
  %v8073 = vpop.f32.mrb[0].mxu0
  %v8074 = vpop.f32.mrb[0].mxu0
  %v8075 = vadd.f32 %v7890, %v8074
  %v8076 = vpop.f32.mrb[0].mxu0
  %8077 = vmatprep.mubr.bf16.mxu0 %v6754
  %8078 = vmatmul.mubr.bf16.gmra.mrb[0].mxu0 %v6753
  %v8079 = vpop.f32.mrb[0].mxu0
  %v8080 = vadd.f32 %v7895, %v8079
  %v8081 = vpop.f32.mrb[0].mxu0
  %v8082 = vpop.f32.mrb[0].mxu0
  %v8083 = vadd.f32 %v7898, %v8082
  %v8084 = vpop.f32.mrb[0].mxu0
  %8085 = vmatprep.mubr.bf16.mxu0 %v6769
  %8086 = vmatmul.mubr.bf16.gmra.mrb[0].mxu0 %v6768
  %v8087 = vpop.f32.mrb[0].mxu0
  %v8088 = vadd.f32 %v7903, %v8087
  %v8089 = vpop.f32.mrb[0].mxu0
  %v8090 = vpop.f32.mrb[0].mxu0
  %v8091 = vadd.f32 %v7906, %v8090
  %v8092 = vpop.f32.mrb[0].mxu0
  %8093 = vmatprep.mubr.bf16.mxu0 %v6784
  %8094 = vmatmul.mubr.bf16.gmra.mrb[0].mxu0 %v6783
  %v8095 = vpop.f32.mrb[0].mxu0
  %v8096 = vadd.f32 %v7911, %v8095
  %v8097 = vpop.f32.mrb[0].mxu0
  %v8098 = vpop.f32.mrb[0].mxu0
  %v8099 = vadd.f32 %v7914, %v8098
  %v8100 = vpop.f32.mrb[0].mxu0
  %8101 = vmatprep.mubr.bf16.mxu0 %v6799
  %8102 = vmatmul.mubr.bf16.gmra.mrb[0].mxu0 %v6798
  %v8103 = vpop.f32.mrb[0].mxu0
  %v8104 = vadd.f32 %v7919, %v8103
  %v8105 = vpop.f32.mrb[0].mxu0
  %v8106 = vpop.f32.mrb[0].mxu0
  %v8107 = vadd.f32 %v7922, %v8106
  %v8108 = vpop.f32.mrb[0].mxu0
  %8109 = vmatprep.mubr.bf16.mxu0 %v6814
  %8110 = vmatmul.mubr.bf16.gmra.mrb[0].mxu0 %v6813
  %v8111 = vpop.f32.mrb[0].mxu0
  %v8112 = vadd.f32 %v7927, %v8111
  %v8113 = vpop.f32.mrb[0].mxu0
  %v8114 = vpop.f32.mrb[0].mxu0
  %v8115 = vadd.f32 %v7930, %v8114
  %v8116 = vpop.f32.mrb[0].mxu0
  %8117 = vmatprep.mubr.bf16.mxu0 %v6829
  %8118 = vmatmul.mubr.bf16.gmra.mrb[0].mxu0 %v6828
  %v8119 = vpop.f32.mrb[0].mxu0
  %v8120 = vadd.f32 %v7935, %v8119
  %v8121 = vpop.f32.mrb[0].mxu0
  %v8122 = vpop.f32.mrb[0].mxu0
  %v8123 = vadd.f32 %v7938, %v8122
  %v8124 = vpop.f32.mrb[0].mxu0
  %8125 = vmatprep.mubr.bf16.mxu0 %v6844
  %8126 = vmatmul.mubr.bf16.gmra.mrb[0].mxu0 %v6843
  %v8127 = vpop.f32.mrb[0].mxu0
  %v8128 = vadd.f32 %v7943, %v8127
  %v8129 = vpop.f32.mrb[0].mxu0
  %v8130 = vpop.f32.mrb[0].mxu0
  %v8131 = vadd.f32 %v7946, %v8130
  %v8132 = vpop.f32.mrb[0].mxu0
  %8133 = vmatprep.mubr.bf16.mxu0 %v6859
  %8134 = vmatmul.mubr.bf16.gmra.mrb[0].mxu0 %v6858
  %v8135 = vpop.f32.mrb[0].mxu0
  %v8136 = vadd.f32 %v7951, %v8135
  %v8137 = vpop.f32.mrb[0].mxu0
  %v8138 = vpop.f32.mrb[0].mxu0
  %v8139 = vadd.f32 %v7954, %v8138
  %v8140 = vpop.f32.mrb[0].mxu0
  %8141 = vmatprep.mubr.bf16.mxu0 %v6874
  %8142 = vmatmul.mubr.bf16.gmra.mrb[0].mxu0 %v6873
  %v8143 = vpop.f32.mrb[0].mxu0
  %v8144 = vadd.f32 %v7959, %v8143
  %v8145 = vpop.f32.mrb[0].mxu0
  %v8146 = vpop.f32.mrb[0].mxu0
  %v8147 = vadd.f32 %v7962, %v8146
  %v8148 = vpop.f32.mrb[0].mxu0
  %8149 = vmatprep.mubr.bf16.mxu0 %v6889
  %8150 = vmatmul.mubr.bf16.gmra.mrb[0].mxu0 %v6888
  %v8151 = vpop.f32.mrb[0].mxu0
  %v8152 = vadd.f32 %v7967, %v8151
  %v8153 = vpop.f32.mrb[0].mxu0
  %v8154 = vpop.f32.mrb[0].mxu0
  %v8155 = vadd.f32 %v7970, %v8154
  %v8156 = vpop.f32.mrb[0].mxu0
  %8157 = vmatprep.mubr.bf16.mxu0 %v6904
  %8158 = vmatmul.mubr.bf16.gmra.mrb[0].mxu0 %v6903
  %v8159 = vpop.f32.mrb[0].mxu0
  %v8160 = vadd.f32 %v7975, %v8159
  %v8161 = vpop.f32.mrb[0].mxu0
  %v8162 = vpop.f32.mrb[0].mxu0
  %v8163 = vadd.f32 %v7978, %v8162
  %v8164 = vpop.f32.mrb[0].mxu0
  %8165 = vmatprep.mubr.bf16.mxu0 %v6919
  %8166 = vmatmul.mubr.bf16.gmra.mrb[0].mxu0 %v6918
  %v8167 = vpop.f32.mrb[0].mxu0
  %v8168 = vadd.f32 %v7983, %v8167
  %v8169 = vpop.f32.mrb[0].mxu0
  %v8170 = vpop.f32.mrb[0].mxu0
  %v8171 = vadd.f32 %v7986, %v8170
  %v8172 = vpop.f32.mrb[0].mxu0
  %8173 = vdwg.mxu0
  %8174 = vmatprep.subr.bf16.mxu0 0
  %8175 = vmatpush1.bf16.msra.mxu0 %v5428
  %8176 = vmatprep.subr.bf16.mxu0 0
  %8177 = vmatpush1.bf16.msra.mxu0 %v5429
  %8178 = vmatprep.subr.bf16.mxu0 0
  %8179 = vmatpush1.bf16.msra.mxu0 %v5430
  %8180 = vmatprep.subr.bf16.mxu0 0
  %8181 = vmatpush1.bf16.msra.mxu0 %v5431
  %8182 = vmatprep.subr.bf16.mxu0 0
  %8183 = vmatpush1.bf16.msra.mxu0 %v5432
  %8184 = vmatprep.subr.bf16.mxu0 0
  %8185 = vmatpush1.bf16.msra.mxu0 %v5433
  %8186 = vmatprep.subr.bf16.mxu0 0
  %8187 = vmatpush1.bf16.msra.mxu0 %v5434
  %8188 = vmatprep.subr.bf16.mxu0 0
  %8189 = vmatpush1.bf16.msra.mxu0 %v5435
  %8190 = vmatprep.subr.bf16.mxu0 0
  %8191 = vmatpush1.bf16.msra.mxu0 %v5436
  %8192 = vmatprep.subr.bf16.mxu0 0
  %8193 = vmatpush1.bf16.msra.mxu0 %v5437
  %8194 = vmatprep.subr.bf16.mxu0 0
  %8195 = vmatpush1.bf16.msra.mxu0 %v5438
  %8196 = vmatprep.subr.bf16.mxu0 0
  %8197 = vmatpush1.bf16.msra.mxu0 %v5439
  %8198 = vmatprep.subr.bf16.mxu0 0
  %8199 = vmatpush1.bf16.msra.mxu0 %v5440
  %8200 = vmatprep.subr.bf16.mxu0 0
  %8201 = vmatpush1.bf16.msra.mxu0 %v5441
  %8202 = vmatprep.subr.bf16.mxu0 0
  %8203 = vmatpush1.bf16.msra.mxu0 %v5442
  %8204 = vmatprep.subr.bf16.mxu0 0
  %8205 = vmatpush1.bf16.msra.mxu0 %v5443
  %8206 = vmatprep.mubr.bf16.mxu0 %v6651
  %8207 = vmatmul.mubr.bf16.gmra.mrb[0].mxu0 %v6650
  %v8208 = vpop.f32.mrb[0].mxu0
  %v8209 = vadd.f32 %v8024, %v8208
  %v8210 = vpop.f32.mrb[0].mxu0
  %v8211 = vpop.f32.mrb[0].mxu0
  %v8212 = vadd.f32 %v8027, %v8211
  %v8213 = vpop.f32.mrb[0].mxu0
  %8214 = vmatprep.mubr.bf16.mxu0 %v6666
  %8215 = vmatmul.mubr.bf16.gmra.mrb[0].mxu0 %v6665
  %v8216 = vpop.f32.mrb[0].mxu0
  %v8217 = vadd.f32 %v8032, %v8216
  %v8218 = vpop.f32.mrb[0].mxu0
  %v8219 = vpop.f32.mrb[0].mxu0
  %v8220 = vadd.f32 %v8035, %v8219
  %v8221 = vpop.f32.mrb[0].mxu0
  %8222 = vmatprep.mubr.bf16.mxu0 %v6681
  %8223 = vmatmul.mubr.bf16.gmra.mrb[0].mxu0 %v6680
  %v8224 = vpop.f32.mrb[0].mxu0
  %v8225 = vadd.f32 %v8040, %v8224
  %v8226 = vpop.f32.mrb[0].mxu0
  %v8227 = vpop.f32.mrb[0].mxu0
  %v8228 = vadd.f32 %v8043, %v8227
  %v8229 = vpop.f32.mrb[0].mxu0
  %8230 = vmatprep.mubr.bf16.mxu0 %v6696
  %8231 = vmatmul.mubr.bf16.gmra.mrb[0].mxu0 %v6695
  %v8232 = vpop.f32.mrb[0].mxu0
  %v8233 = vadd.f32 %v8048, %v8232
  %v8234 = vpop.f32.mrb[0].mxu0
  %v8235 = vpop.f32.mrb[0].mxu0
  %v8236 = vadd.f32 %v8051, %v8235
  %v8237 = vpop.f32.mrb[0].mxu0
  %8238 = vmatprep.mubr.bf16.mxu0 %v6711
  %8239 = vmatmul.mubr.bf16.gmra.mrb[0].mxu0 %v6710
  %v8240 = vpop.f32.mrb[0].mxu0
  %v8241 = vadd.f32 %v8056, %v8240
  %v8242 = vpop.f32.mrb[0].mxu0
  %v8243 = vpop.f32.mrb[0].mxu0
  %v8244 = vadd.f32 %v8059, %v8243
  %v8245 = vpop.f32.mrb[0].mxu0
  %8246 = vmatprep.mubr.bf16.mxu0 %v6726
  %8247 = vmatmul.mubr.bf16.gmra.mrb[0].mxu0 %v6725
  %v8248 = vpop.f32.mrb[0].mxu0
  %v8249 = vadd.f32 %v8064, %v8248
  %v8250 = vpop.f32.mrb[0].mxu0
  %v8251 = vpop.f32.mrb[0].mxu0
  %v8252 = vadd.f32 %v8067, %v8251
  %v8253 = vpop.f32.mrb[0].mxu0
  %8254 = vmatprep.mubr.bf16.mxu0 %v6741
  %8255 = vmatmul.mubr.bf16.gmra.mrb[0].mxu0 %v6740
  %v8256 = vpop.f32.mrb[0].mxu0
  %v8257 = vadd.f32 %v8072, %v8256
  %v8258 = vpop.f32.mrb[0].mxu0
  %v8259 = vpop.f32.mrb[0].mxu0
  %v8260 = vadd.f32 %v8075, %v8259
  %v8261 = vpop.f32.mrb[0].mxu0
  %8262 = vmatprep.mubr.bf16.mxu0 %v6756
  %8263 = vmatmul.mubr.bf16.gmra.mrb[0].mxu0 %v6755
  %v8264 = vpop.f32.mrb[0].mxu0
  %v8265 = vadd.f32 %v8080, %v8264
  %v8266 = vpop.f32.mrb[0].mxu0
  %v8267 = vpop.f32.mrb[0].mxu0
  %v8268 = vadd.f32 %v8083, %v8267
  %v8269 = vpop.f32.mrb[0].mxu0
  %8270 = vmatprep.mubr.bf16.mxu0 %v6771
  %8271 = vmatmul.mubr.bf16.gmra.mrb[0].mxu0 %v6770
  %v8272 = vpop.f32.mrb[0].mxu0
  %v8273 = vadd.f32 %v8088, %v8272
  %v8274 = vpop.f32.mrb[0].mxu0
  %v8275 = vpop.f32.mrb[0].mxu0
  %v8276 = vadd.f32 %v8091, %v8275
  %v8277 = vpop.f32.mrb[0].mxu0
  %8278 = vmatprep.mubr.bf16.mxu0 %v6786
  %8279 = vmatmul.mubr.bf16.gmra.mrb[0].mxu0 %v6785
  %v8280 = vpop.f32.mrb[0].mxu0
  %v8281 = vadd.f32 %v8096, %v8280
  %v8282 = vpop.f32.mrb[0].mxu0
  %v8283 = vpop.f32.mrb[0].mxu0
  %v8284 = vadd.f32 %v8099, %v8283
  %v8285 = vpop.f32.mrb[0].mxu0
  %8286 = vmatprep.mubr.bf16.mxu0 %v6801
  %8287 = vmatmul.mubr.bf16.gmra.mrb[0].mxu0 %v6800
  %v8288 = vpop.f32.mrb[0].mxu0
  %v8289 = vadd.f32 %v8104, %v8288
  %v8290 = vpop.f32.mrb[0].mxu0
  %v8291 = vpop.f32.mrb[0].mxu0
  %v8292 = vadd.f32 %v8107, %v8291
  %v8293 = vpop.f32.mrb[0].mxu0
  %8294 = vmatprep.mubr.bf16.mxu0 %v6816
  %8295 = vmatmul.mubr.bf16.gmra.mrb[0].mxu0 %v6815
  %v8296 = vpop.f32.mrb[0].mxu0
  %v8297 = vadd.f32 %v8112, %v8296
  %v8298 = vpop.f32.mrb[0].mxu0
  %v8299 = vpop.f32.mrb[0].mxu0
  %v8300 = vadd.f32 %v8115, %v8299
  %v8301 = vpop.f32.mrb[0].mxu0
  %8302 = vmatprep.mubr.bf16.mxu0 %v6831
  %8303 = vmatmul.mubr.bf16.gmra.mrb[0].mxu0 %v6830
  %v8304 = vpop.f32.mrb[0].mxu0
  %v8305 = vadd.f32 %v8120, %v8304
  %v8306 = vpop.f32.mrb[0].mxu0
  %v8307 = vpop.f32.mrb[0].mxu0
  %v8308 = vadd.f32 %v8123, %v8307
  %v8309 = vpop.f32.mrb[0].mxu0
  %8310 = vmatprep.mubr.bf16.mxu0 %v6846
  %8311 = vmatmul.mubr.bf16.gmra.mrb[0].mxu0 %v6845
  %v8312 = vpop.f32.mrb[0].mxu0
  %v8313 = vadd.f32 %v8128, %v8312
  %v8314 = vpop.f32.mrb[0].mxu0
  %v8315 = vpop.f32.mrb[0].mxu0
  %v8316 = vadd.f32 %v8131, %v8315
  %v8317 = vpop.f32.mrb[0].mxu0
  %8318 = vmatprep.mubr.bf16.mxu0 %v6861
  %8319 = vmatmul.mubr.bf16.gmra.mrb[0].mxu0 %v6860
  %v8320 = vpop.f32.mrb[0].mxu0
  %v8321 = vadd.f32 %v8136, %v8320
  %v8322 = vpop.f32.mrb[0].mxu0
  %v8323 = vpop.f32.mrb[0].mxu0
  %v8324 = vadd.f32 %v8139, %v8323
  %v8325 = vpop.f32.mrb[0].mxu0
  %8326 = vmatprep.mubr.bf16.mxu0 %v6876
  %8327 = vmatmul.mubr.bf16.gmra.mrb[0].mxu0 %v6875
  %v8328 = vpop.f32.mrb[0].mxu0
  %v8329 = vadd.f32 %v8144, %v8328
  %v8330 = vpop.f32.mrb[0].mxu0
  %v8331 = vpop.f32.mrb[0].mxu0
  %v8332 = vadd.f32 %v8147, %v8331
  %v8333 = vpop.f32.mrb[0].mxu0
  %8334 = vmatprep.mubr.bf16.mxu0 %v6891
  %8335 = vmatmul.mubr.bf16.gmra.mrb[0].mxu0 %v6890
  %v8336 = vpop.f32.mrb[0].mxu0
  %v8337 = vadd.f32 %v8152, %v8336
  %v8338 = vpop.f32.mrb[0].mxu0
  %v8339 = vpop.f32.mrb[0].mxu0
  %v8340 = vadd.f32 %v8155, %v8339
  %v8341 = vpop.f32.mrb[0].mxu0
  %8342 = vmatprep.mubr.bf16.mxu0 %v6906
  %8343 = vmatmul.mubr.bf16.gmra.mrb[0].mxu0 %v6905
  %v8344 = vpop.f32.mrb[0].mxu0
  %v8345 = vadd.f32 %v8160, %v8344
  %v8346 = vpop.f32.mrb[0].mxu0
  %v8347 = vpop.f32.mrb[0].mxu0
  %v8348 = vadd.f32 %v8163, %v8347
  %v8349 = vpop.f32.mrb[0].mxu0
  %8350 = vmatprep.mubr.bf16.mxu0 %v6921
  %8351 = vmatmul.mubr.bf16.gmra.mrb[0].mxu0 %v6920
  %v8352 = vpop.f32.mrb[0].mxu0
  %v8353 = vadd.f32 %v8168, %v8352
  %v8354 = vpop.f32.mrb[0].mxu0
  %v8355 = vpop.f32.mrb[0].mxu0
  %v8356 = vadd.f32 %v8171, %v8355
  %v8357 = vpop.f32.mrb[0].mxu0
  %8358 = vdwg.mxu0
  %8359 = vmatprep.subr.bf16.mxu0 0
  %8360 = vmatpush1.bf16.msra.mxu0 %v5444
  %8361 = vmatprep.subr.bf16.mxu0 0
  %8362 = vmatpush1.bf16.msra.mxu0 %v5445
  %8363 = vmatprep.subr.bf16.mxu0 0
  %8364 = vmatpush1.bf16.msra.mxu0 %v5446
  %8365 = vmatprep.subr.bf16.mxu0 0
  %8366 = vmatpush1.bf16.msra.mxu0 %v5447
  %8367 = vmatprep.subr.bf16.mxu0 0
  %8368 = vmatpush1.bf16.msra.mxu0 %v5448
  %8369 = vmatprep.subr.bf16.mxu0 0
  %8370 = vmatpush1.bf16.msra.mxu0 %v5449
  %8371 = vmatprep.subr.bf16.mxu0 0
  %8372 = vmatpush1.bf16.msra.mxu0 %v5450
  %8373 = vmatprep.subr.bf16.mxu0 0
  %8374 = vmatpush1.bf16.msra.mxu0 %v5451
  %8375 = vmatprep.subr.bf16.mxu0 0
  %8376 = vmatpush1.bf16.msra.mxu0 %v5452
  %8377 = vmatprep.subr.bf16.mxu0 0
  %8378 = vmatpush1.bf16.msra.mxu0 %v5453
  %8379 = vmatprep.subr.bf16.mxu0 0
  %8380 = vmatpush1.bf16.msra.mxu0 %v5454
  %8381 = vmatprep.subr.bf16.mxu0 0
  %8382 = vmatpush1.bf16.msra.mxu0 %v5455
  %8383 = vmatprep.subr.bf16.mxu0 0
  %8384 = vmatpush1.bf16.msra.mxu0 %v5456
  %8385 = vmatprep.subr.bf16.mxu0 0
  %8386 = vmatpush1.bf16.msra.mxu0 %v5457
  %8387 = vmatprep.subr.bf16.mxu0 0
  %8388 = vmatpush1.bf16.msra.mxu0 %v5458
  %8389 = vmatprep.subr.bf16.mxu0 0
  %8390 = vmatpush1.bf16.msra.mxu0 %v5459
  %8391 = vmatprep.mubr.bf16.mxu0 %v6653
  %8392 = vmatmul.mubr.bf16.gmra.mrb[0].mxu0 %v6652
  %v8393 = vpop.f32.mrb[0].mxu0
  %v8394 = vadd.f32 %v8209, %v8393
  %v8395 = vpop.f32.mrb[0].mxu0
  %v8396 = vpop.f32.mrb[0].mxu0
  %v8397 = vadd.f32 %v8212, %v8396
  %v8398 = vpop.f32.mrb[0].mxu0
  %8399 = vmatprep.mubr.bf16.mxu0 %v6668
  %8400 = vmatmul.mubr.bf16.gmra.mrb[0].mxu0 %v6667
  %v8401 = vpop.f32.mrb[0].mxu0
  %v8402 = vadd.f32 %v8217, %v8401
  %v8403 = vpop.f32.mrb[0].mxu0
  %v8404 = vpop.f32.mrb[0].mxu0
  %v8405 = vadd.f32 %v8220, %v8404
  %v8406 = vpop.f32.mrb[0].mxu0
  %8407 = vmatprep.mubr.bf16.mxu0 %v6683
  %8408 = vmatmul.mubr.bf16.gmra.mrb[0].mxu0 %v6682
  %v8409 = vpop.f32.mrb[0].mxu0
  %v8410 = vadd.f32 %v8225, %v8409
  %v8411 = vpop.f32.mrb[0].mxu0
  %v8412 = vpop.f32.mrb[0].mxu0
  %v8413 = vadd.f32 %v8228, %v8412
  %v8414 = vpop.f32.mrb[0].mxu0
  %8415 = vmatprep.mubr.bf16.mxu0 %v6698
  %8416 = vmatmul.mubr.bf16.gmra.mrb[0].mxu0 %v6697
  %v8417 = vpop.f32.mrb[0].mxu0
  %v8418 = vadd.f32 %v8233, %v8417
  %v8419 = vpop.f32.mrb[0].mxu0
  %v8420 = vpop.f32.mrb[0].mxu0
  %v8421 = vadd.f32 %v8236, %v8420
  %v8422 = vpop.f32.mrb[0].mxu0
  %8423 = vmatprep.mubr.bf16.mxu0 %v6713
  %8424 = vmatmul.mubr.bf16.gmra.mrb[0].mxu0 %v6712
  %v8425 = vpop.f32.mrb[0].mxu0
  %v8426 = vadd.f32 %v8241, %v8425
  %v8427 = vpop.f32.mrb[0].mxu0
  %v8428 = vpop.f32.mrb[0].mxu0
  %v8429 = vadd.f32 %v8244, %v8428
  %v8430 = vpop.f32.mrb[0].mxu0
  %8431 = vmatprep.mubr.bf16.mxu0 %v6728
  %8432 = vmatmul.mubr.bf16.gmra.mrb[0].mxu0 %v6727
  %v8433 = vpop.f32.mrb[0].mxu0
  %v8434 = vadd.f32 %v8249, %v8433
  %v8435 = vpop.f32.mrb[0].mxu0
  %v8436 = vpop.f32.mrb[0].mxu0
  %v8437 = vadd.f32 %v8252, %v8436
  %v8438 = vpop.f32.mrb[0].mxu0
  %8439 = vmatprep.mubr.bf16.mxu0 %v6743
  %8440 = vmatmul.mubr.bf16.gmra.mrb[0].mxu0 %v6742
  %v8441 = vpop.f32.mrb[0].mxu0
  %v8442 = vadd.f32 %v8257, %v8441
  %v8443 = vpop.f32.mrb[0].mxu0
  %v8444 = vpop.f32.mrb[0].mxu0
  %v8445 = vadd.f32 %v8260, %v8444
  %v8446 = vpop.f32.mrb[0].mxu0
  %8447 = vmatprep.mubr.bf16.mxu0 %v6758
  %8448 = vmatmul.mubr.bf16.gmra.mrb[0].mxu0 %v6757
  %v8449 = vpop.f32.mrb[0].mxu0
  %v8450 = vadd.f32 %v8265, %v8449
  %v8451 = vpop.f32.mrb[0].mxu0
  %v8452 = vpop.f32.mrb[0].mxu0
  %v8453 = vadd.f32 %v8268, %v8452
  %v8454 = vpop.f32.mrb[0].mxu0
  %8455 = vmatprep.mubr.bf16.mxu0 %v6773
  %8456 = vmatmul.mubr.bf16.gmra.mrb[0].mxu0 %v6772
  %v8457 = vpop.f32.mrb[0].mxu0
  %v8458 = vadd.f32 %v8273, %v8457
  %v8459 = vpop.f32.mrb[0].mxu0
  %v8460 = vpop.f32.mrb[0].mxu0
  %v8461 = vadd.f32 %v8276, %v8460
  %v8462 = vpop.f32.mrb[0].mxu0
  %8463 = vmatprep.mubr.bf16.mxu0 %v6788
  %8464 = vmatmul.mubr.bf16.gmra.mrb[0].mxu0 %v6787
  %v8465 = vpop.f32.mrb[0].mxu0
  %v8466 = vadd.f32 %v8281, %v8465
  %v8467 = vpop.f32.mrb[0].mxu0
  %v8468 = vpop.f32.mrb[0].mxu0
  %v8469 = vadd.f32 %v8284, %v8468
  %v8470 = vpop.f32.mrb[0].mxu0
  %8471 = vmatprep.mubr.bf16.mxu0 %v6803
  %8472 = vmatmul.mubr.bf16.gmra.mrb[0].mxu0 %v6802
  %v8473 = vpop.f32.mrb[0].mxu0
  %v8474 = vadd.f32 %v8289, %v8473
  %v8475 = vpop.f32.mrb[0].mxu0
  %v8476 = vpop.f32.mrb[0].mxu0
  %v8477 = vadd.f32 %v8292, %v8476
  %v8478 = vpop.f32.mrb[0].mxu0
  %8479 = vmatprep.mubr.bf16.mxu0 %v6818
  %8480 = vmatmul.mubr.bf16.gmra.mrb[0].mxu0 %v6817
  %v8481 = vpop.f32.mrb[0].mxu0
  %v8482 = vadd.f32 %v8297, %v8481
  %v8483 = vpop.f32.mrb[0].mxu0
  %v8484 = vpop.f32.mrb[0].mxu0
  %v8485 = vadd.f32 %v8300, %v8484
  %v8486 = vpop.f32.mrb[0].mxu0
  %8487 = vmatprep.mubr.bf16.mxu0 %v6833
  %8488 = vmatmul.mubr.bf16.gmra.mrb[0].mxu0 %v6832
  %v8489 = vpop.f32.mrb[0].mxu0
  %v8490 = vadd.f32 %v8305, %v8489
  %v8491 = vpop.f32.mrb[0].mxu0
  %v8492 = vpop.f32.mrb[0].mxu0
  %v8493 = vadd.f32 %v8308, %v8492
  %v8494 = vpop.f32.mrb[0].mxu0
  %8495 = vmatprep.mubr.bf16.mxu0 %v6848
  %8496 = vmatmul.mubr.bf16.gmra.mrb[0].mxu0 %v6847
  %v8497 = vpop.f32.mrb[0].mxu0
  %v8498 = vadd.f32 %v8313, %v8497
  %v8499 = vpop.f32.mrb[0].mxu0
  %v8500 = vpop.f32.mrb[0].mxu0
  %v8501 = vadd.f32 %v8316, %v8500
  %v8502 = vpop.f32.mrb[0].mxu0
  %8503 = vmatprep.mubr.bf16.mxu0 %v6863
  %8504 = vmatmul.mubr.bf16.gmra.mrb[0].mxu0 %v6862
  %v8505 = vpop.f32.mrb[0].mxu0
  %v8506 = vadd.f32 %v8321, %v8505
  %v8507 = vpop.f32.mrb[0].mxu0
  %v8508 = vpop.f32.mrb[0].mxu0
  %v8509 = vadd.f32 %v8324, %v8508
  %v8510 = vpop.f32.mrb[0].mxu0
  %8511 = vmatprep.mubr.bf16.mxu0 %v6878
  %8512 = vmatmul.mubr.bf16.gmra.mrb[0].mxu0 %v6877
  %v8513 = vpop.f32.mrb[0].mxu0
  %v8514 = vadd.f32 %v8329, %v8513
  %v8515 = vpop.f32.mrb[0].mxu0
  %v8516 = vpop.f32.mrb[0].mxu0
  %v8517 = vadd.f32 %v8332, %v8516
  %v8518 = vpop.f32.mrb[0].mxu0
  %8519 = vmatprep.mubr.bf16.mxu0 %v6893
  %8520 = vmatmul.mubr.bf16.gmra.mrb[0].mxu0 %v6892
  %v8521 = vpop.f32.mrb[0].mxu0
  %v8522 = vadd.f32 %v8337, %v8521
  %v8523 = vpop.f32.mrb[0].mxu0
  %v8524 = vpop.f32.mrb[0].mxu0
  %v8525 = vadd.f32 %v8340, %v8524
  %v8526 = vpop.f32.mrb[0].mxu0
  %8527 = vmatprep.mubr.bf16.mxu0 %v6908
  %8528 = vmatmul.mubr.bf16.gmra.mrb[0].mxu0 %v6907
  %v8529 = vpop.f32.mrb[0].mxu0
  %v8530 = vadd.f32 %v8345, %v8529
  %v8531 = vpop.f32.mrb[0].mxu0
  %v8532 = vpop.f32.mrb[0].mxu0
  %v8533 = vadd.f32 %v8348, %v8532
  %v8534 = vpop.f32.mrb[0].mxu0
  %8535 = vmatprep.mubr.bf16.mxu0 %v6923
  %8536 = vmatmul.mubr.bf16.gmra.mrb[0].mxu0 %v6922
  %v8537 = vpop.f32.mrb[0].mxu0
  %v8538 = vadd.f32 %v8353, %v8537
  %v8539 = vpop.f32.mrb[0].mxu0
  %v8540 = vpop.f32.mrb[0].mxu0
  %v8541 = vadd.f32 %v8356, %v8540
  %v8542 = vpop.f32.mrb[0].mxu0
  %8543 = vdwg.mxu0
  %8544 = vmatprep.subr.bf16.mxu0 0
  %8545 = vmatpush1.bf16.msra.mxu0 %v5460
  %8546 = vmatprep.subr.bf16.mxu0 0
  %8547 = vmatpush1.bf16.msra.mxu0 %v5461
  %8548 = vmatprep.subr.bf16.mxu0 0
  %8549 = vmatpush1.bf16.msra.mxu0 0
  %8550 = vmatprep.subr.bf16.mxu0 0
  %8551 = vmatpush1.bf16.msra.mxu0 0
  %8552 = vmatprep.subr.bf16.mxu0 0
  %8553 = vmatpush1.bf16.msra.mxu0 0
  %8554 = vmatprep.subr.bf16.mxu0 0
  %8555 = vmatpush1.bf16.msra.mxu0 0
  %8556 = vmatprep.subr.bf16.mxu0 0
  %8557 = vmatpush1.bf16.msra.mxu0 0
  %8558 = vmatprep.subr.bf16.mxu0 0
  %8559 = vmatpush1.bf16.msra.mxu0 0
  %8560 = vmatprep.subr.bf16.mxu0 0
  %8561 = vmatpush1.bf16.msra.mxu0 0
  %8562 = vmatprep.subr.bf16.mxu0 0
  %8563 = vmatpush1.bf16.msra.mxu0 0
  %8564 = vmatprep.subr.bf16.mxu0 0
  %8565 = vmatpush1.bf16.msra.mxu0 0
  %8566 = vmatprep.subr.bf16.mxu0 0
  %8567 = vmatpush1.bf16.msra.mxu0 0
  %8568 = vmatprep.subr.bf16.mxu0 0
  %8569 = vmatpush1.bf16.msra.mxu0 0
  %8570 = vmatprep.subr.bf16.mxu0 0
  %8571 = vmatpush1.bf16.msra.mxu0 0
  %8572 = vmatprep.subr.bf16.mxu0 0
  %8573 = vmatpush1.bf16.msra.mxu0 0
  %8574 = vmatprep.subr.bf16.mxu0 0
  %8575 = vmatpush1.bf16.msra.mxu0 0
  %8576 = vmatprep.mubr.bf16.mxu0 0
  %8577 = vmatmul.mubr.bf16.gmra.mrb[0].mxu0 %v7193
  %v8578 = vpop.f32.mrb[0].mxu0
  %v8579 = vadd.f32 %v8394, %v8578
  %v8580 = vpop.f32.mrb[0].mxu0
  %v8581 = vpop.f32.mrb[0].mxu0
  %v8582 = vadd.f32 %v8397, %v8581
  %v8583 = vpop.f32.mrb[0].mxu0
  %8584 = vmatprep.mubr.bf16.mxu0 0
  %8585 = vmatmul.mubr.bf16.gmra.mrb[0].mxu0 %v7196
  %v8586 = vpop.f32.mrb[0].mxu0
  %v8587 = vadd.f32 %v8402, %v8586
  %v8588 = vpop.f32.mrb[0].mxu0
  %v8589 = vpop.f32.mrb[0].mxu0
  %v8590 = vadd.f32 %v8405, %v8589
  %v8591 = vpop.f32.mrb[0].mxu0
  %8592 = vmatprep.mubr.bf16.mxu0 0
  %8593 = vmatmul.mubr.bf16.gmra.mrb[0].mxu0 %v7199
  %v8594 = vpop.f32.mrb[0].mxu0
  %v8595 = vadd.f32 %v8410, %v8594
  %v8596 = vpop.f32.mrb[0].mxu0
  %v8597 = vpop.f32.mrb[0].mxu0
  %v8598 = vadd.f32 %v8413, %v8597
  %v8599 = vpop.f32.mrb[0].mxu0
  %8600 = vmatprep.mubr.bf16.mxu0 0
  %8601 = vmatmul.mubr.bf16.gmra.mrb[0].mxu0 %v7202
  %v8602 = vpop.f32.mrb[0].mxu0
  %v8603 = vadd.f32 %v8418, %v8602
  %v8604 = vpop.f32.mrb[0].mxu0
  %v8605 = vpop.f32.mrb[0].mxu0
  %v8606 = vadd.f32 %v8421, %v8605
  %v8607 = vpop.f32.mrb[0].mxu0
  %8608 = vmatprep.mubr.bf16.mxu0 0
  %8609 = vmatmul.mubr.bf16.gmra.mrb[0].mxu0 %v7205
  %v8610 = vpop.f32.mrb[0].mxu0
  %v8611 = vadd.f32 %v8426, %v8610
  %v8612 = vpop.f32.mrb[0].mxu0
  %v8613 = vpop.f32.mrb[0].mxu0
  %v8614 = vadd.f32 %v8429, %v8613
  %v8615 = vpop.f32.mrb[0].mxu0
  %8616 = vmatprep.mubr.bf16.mxu0 0
  %8617 = vmatmul.mubr.bf16.gmra.mrb[0].mxu0 %v7208
  %v8618 = vpop.f32.mrb[0].mxu0
  %v8619 = vadd.f32 %v8434, %v8618
  %v8620 = vpop.f32.mrb[0].mxu0
  %v8621 = vpop.f32.mrb[0].mxu0
  %v8622 = vadd.f32 %v8437, %v8621
  %v8623 = vpop.f32.mrb[0].mxu0
  %8624 = vmatprep.mubr.bf16.mxu0 0
  %8625 = vmatmul.mubr.bf16.gmra.mrb[0].mxu0 %v7211
  %v8626 = vpop.f32.mrb[0].mxu0
  %v8627 = vadd.f32 %v8442, %v8626
  %v8628 = vpop.f32.mrb[0].mxu0
  %v8629 = vpop.f32.mrb[0].mxu0
  %v8630 = vadd.f32 %v8445, %v8629
  %v8631 = vpop.f32.mrb[0].mxu0
  %8632 = vmatprep.mubr.bf16.mxu0 0
  %8633 = vmatmul.mubr.bf16.gmra.mrb[0].mxu0 %v7214
  %v8634 = vpop.f32.mrb[0].mxu0
  %v8635 = vadd.f32 %v8450, %v8634
  %v8636 = vpop.f32.mrb[0].mxu0
  %v8637 = vpop.f32.mrb[0].mxu0
  %v8638 = vadd.f32 %v8453, %v8637
  %v8639 = vpop.f32.mrb[0].mxu0
  %8640 = vmatprep.mubr.bf16.mxu0 0
  %8641 = vmatmul.mubr.bf16.gmra.mrb[0].mxu0 %v7217
  %v8642 = vpop.f32.mrb[0].mxu0
  %v8643 = vadd.f32 %v8458, %v8642
  %v8644 = vpop.f32.mrb[0].mxu0
  %v8645 = vpop.f32.mrb[0].mxu0
  %v8646 = vadd.f32 %v8461, %v8645
  %v8647 = vpop.f32.mrb[0].mxu0
  %8648 = vmatprep.mubr.bf16.mxu0 0
  %8649 = vmatmul.mubr.bf16.gmra.mrb[0].mxu0 %v7220
  %v8650 = vpop.f32.mrb[0].mxu0
  %v8651 = vadd.f32 %v8466, %v8650
  %v8652 = vpop.f32.mrb[0].mxu0
  %v8653 = vpop.f32.mrb[0].mxu0
  %v8654 = vadd.f32 %v8469, %v8653
  %v8655 = vpop.f32.mrb[0].mxu0
  %8656 = vmatprep.mubr.bf16.mxu0 0
  %8657 = vmatmul.mubr.bf16.gmra.mrb[0].mxu0 %v7223
  %v8658 = vpop.f32.mrb[0].mxu0
  %v8659 = vadd.f32 %v8474, %v8658
  %v8660 = vpop.f32.mrb[0].mxu0
  %v8661 = vpop.f32.mrb[0].mxu0
  %v8662 = vadd.f32 %v8477, %v8661
  %v8663 = vpop.f32.mrb[0].mxu0
  %8664 = vmatprep.mubr.bf16.mxu0 0
  %8665 = vmatmul.mubr.bf16.gmra.mrb[0].mxu0 %v7226
  %v8666 = vpop.f32.mrb[0].mxu0
  %v8667 = vadd.f32 %v8482, %v8666
  %v8668 = vpop.f32.mrb[0].mxu0
  %v8669 = vpop.f32.mrb[0].mxu0
  %v8670 = vadd.f32 %v8485, %v8669
  %v8671 = vpop.f32.mrb[0].mxu0
  %8672 = vmatprep.mubr.bf16.mxu0 0
  %8673 = vmatmul.mubr.bf16.gmra.mrb[0].mxu0 %v7229
  %v8674 = vpop.f32.mrb[0].mxu0
  %v8675 = vadd.f32 %v8490, %v8674
  %v8676 = vpop.f32.mrb[0].mxu0
  %v8677 = vpop.f32.mrb[0].mxu0
  %v8678 = vadd.f32 %v8493, %v8677
  %v8679 = vpop.f32.mrb[0].mxu0
  %8680 = vmatprep.mubr.bf16.mxu0 0
  %8681 = vmatmul.mubr.bf16.gmra.mrb[0].mxu0 %v7232
  %v8682 = vpop.f32.mrb[0].mxu0
  %v8683 = vadd.f32 %v8498, %v8682
  %v8684 = vpop.f32.mrb[0].mxu0
  %v8685 = vpop.f32.mrb[0].mxu0
  %v8686 = vadd.f32 %v8501, %v8685
  %v8687 = vpop.f32.mrb[0].mxu0
  %8688 = vmatprep.mubr.bf16.mxu0 0
  %8689 = vmatmul.mubr.bf16.gmra.mrb[0].mxu0 %v7235
  %v8690 = vpop.f32.mrb[0].mxu0
  %v8691 = vadd.f32 %v8506, %v8690
  %v8692 = vpop.f32.mrb[0].mxu0
  %v8693 = vpop.f32.mrb[0].mxu0
  %v8694 = vadd.f32 %v8509, %v8693
  %v8695 = vpop.f32.mrb[0].mxu0
  %8696 = vmatprep.mubr.bf16.mxu0 0
  %8697 = vmatmul.mubr.bf16.gmra.mrb[0].mxu0 %v7238
  %v8698 = vpop.f32.mrb[0].mxu0
  %v8699 = vadd.f32 %v8514, %v8698
  %v8700 = vpop.f32.mrb[0].mxu0
  %v8701 = vpop.f32.mrb[0].mxu0
  %v8702 = vadd.f32 %v8517, %v8701
  %v8703 = vpop.f32.mrb[0].mxu0
  %8704 = vmatprep.mubr.bf16.mxu0 0
  %8705 = vmatmul.mubr.bf16.gmra.mrb[0].mxu0 %v7241
  %v8706 = vpop.f32.mrb[0].mxu0
  %v8707 = vadd.f32 %v8522, %v8706
  %v8708 = vpop.f32.mrb[0].mxu0
  %v8709 = vpop.f32.mrb[0].mxu0
  %v8710 = vadd.f32 %v8525, %v8709
  %v8711 = vpop.f32.mrb[0].mxu0
  %8712 = vmatprep.mubr.bf16.mxu0 0
  %8713 = vmatmul.mubr.bf16.gmra.mrb[0].mxu0 %v7244
  %v8714 = vpop.f32.mrb[0].mxu0
  %v8715 = vadd.f32 %v8530, %v8714
  %v8716 = vpop.f32.mrb[0].mxu0
  %v8717 = vpop.f32.mrb[0].mxu0
  %v8718 = vadd.f32 %v8533, %v8717
  %v8719 = vpop.f32.mrb[0].mxu0
  %8720 = vmatprep.mubr.bf16.mxu0 0
  %8721 = vmatmul.mubr.bf16.gmra.mrb[0].mxu0 %v7247
  %v8722 = vpop.f32.mrb[0].mxu0
  %v8723 = vadd.f32 %v8538, %v8722
  %v8724 = vpop.f32.mrb[0].mxu0
  %v8725 = vpop.f32.mrb[0].mxu0
  %v8726 = vadd.f32 %v8541, %v8725
  %v8727 = vpop.f32.mrb[0].mxu0
  %8728 = vdwg.mxu0
  %vm8729 = vcmask 400384
  %v8730 = vsel %vm8729, %v8579, 0.0
  %8731 = vadd.xlane.f32.xlu0 %v8730
  %v8732 = vpop.xlane.xlu0 %8731
  %v8733 = vsel %vm8729, %v8582, 0.0
  %8734 = vadd.xlane.f32.xlu0 %v8733
  %v8735 = vpop.xlane.xlu0 %8734
  %v8736 = vsel %vm8729, %v8587, 0.0
  %8737 = vadd.xlane.f32.xlu0 %v8736
  %v8738 = vpop.xlane.xlu0 %8737
  %v8739 = vsel %vm8729, %v8590, 0.0
  %8740 = vadd.xlane.f32.xlu0 %v8739
  %v8741 = vpop.xlane.xlu0 %8740
  %v8742 = vsel %vm8729, %v8595, 0.0
  %8743 = vadd.xlane.f32.xlu0 %v8742
  %v8744 = vpop.xlane.xlu0 %8743
  %v8745 = vsel %vm8729, %v8598, 0.0
  %8746 = vadd.xlane.f32.xlu0 %v8745
  %v8747 = vpop.xlane.xlu0 %8746
  %v8748 = vsel %vm8729, %v8603, 0.0
  %8749 = vadd.xlane.f32.xlu0 %v8748
  %v8750 = vpop.xlane.xlu0 %8749
  %v8751 = vsel %vm8729, %v8606, 0.0
  %8752 = vadd.xlane.f32.xlu0 %v8751
  %v8753 = vpop.xlane.xlu0 %8752
  %v8754 = vsel %vm8729, %v8611, 0.0
  %8755 = vadd.xlane.f32.xlu0 %v8754
  %v8756 = vpop.xlane.xlu0 %8755
  %v8757 = vsel %vm8729, %v8614, 0.0
  %8758 = vadd.xlane.f32.xlu0 %v8757
  %v8759 = vpop.xlane.xlu0 %8758
  %v8760 = vsel %vm8729, %v8619, 0.0
  %8761 = vadd.xlane.f32.xlu0 %v8760
  %v8762 = vpop.xlane.xlu0 %8761
  %v8763 = vsel %vm8729, %v8622, 0.0
  %8764 = vadd.xlane.f32.xlu0 %v8763
  %v8765 = vpop.xlane.xlu0 %8764
  %v8766 = vsel %vm8729, %v8627, 0.0
  %8767 = vadd.xlane.f32.xlu0 %v8766
  %v8768 = vpop.xlane.xlu0 %8767
  %v8769 = vsel %vm8729, %v8630, 0.0
  %8770 = vadd.xlane.f32.xlu0 %v8769
  %v8771 = vpop.xlane.xlu0 %8770
  %v8772 = vsel %vm8729, %v8635, 0.0
  %8773 = vadd.xlane.f32.xlu0 %v8772
  %v8774 = vpop.xlane.xlu0 %8773
  %v8775 = vsel %vm8729, %v8638, 0.0
  %8776 = vadd.xlane.f32.xlu0 %v8775
  %v8777 = vpop.xlane.xlu0 %8776
  %v8778 = vsel %vm8729, %v8643, 0.0
  %8779 = vadd.xlane.f32.xlu0 %v8778
  %v8780 = vpop.xlane.xlu0 %8779
  %v8781 = vsel %vm8729, %v8646, 0.0
  %8782 = vadd.xlane.f32.xlu0 %v8781
  %v8783 = vpop.xlane.xlu0 %8782
  %v8784 = vsel %vm8729, %v8651, 0.0
  %8785 = vadd.xlane.f32.xlu0 %v8784
  %v8786 = vpop.xlane.xlu0 %8785
  %v8787 = vsel %vm8729, %v8654, 0.0
  %8788 = vadd.xlane.f32.xlu0 %v8787
  %v8789 = vpop.xlane.xlu0 %8788
  %v8790 = vsel %vm8729, %v8659, 0.0
  %8791 = vadd.xlane.f32.xlu0 %v8790
  %v8792 = vpop.xlane.xlu0 %8791
  %v8793 = vsel %vm8729, %v8662, 0.0
  %8794 = vadd.xlane.f32.xlu0 %v8793
  %v8795 = vpop.xlane.xlu0 %8794
  %v8796 = vsel %vm8729, %v8667, 0.0
  %8797 = vadd.xlane.f32.xlu0 %v8796
  %v8798 = vpop.xlane.xlu0 %8797
  %v8799 = vsel %vm8729, %v8670, 0.0
  %8800 = vadd.xlane.f32.xlu0 %v8799
  %v8801 = vpop.xlane.xlu0 %8800
  %v8802 = vsel %vm8729, %v8675, 0.0
  %8803 = vadd.xlane.f32.xlu0 %v8802
  %v8804 = vpop.xlane.xlu0 %8803
  %v8805 = vsel %vm8729, %v8678, 0.0
  %8806 = vadd.xlane.f32.xlu0 %v8805
  %v8807 = vpop.xlane.xlu0 %8806
  %v8808 = vsel %vm8729, %v8683, 0.0
  %8809 = vadd.xlane.f32.xlu0 %v8808
  %v8810 = vpop.xlane.xlu0 %8809
  %v8811 = vsel %vm8729, %v8686, 0.0
  %8812 = vadd.xlane.f32.xlu0 %v8811
  %v8813 = vpop.xlane.xlu0 %8812
  %v8814 = vsel %vm8729, %v8691, 0.0
  %8815 = vadd.xlane.f32.xlu0 %v8814
  %v8816 = vpop.xlane.xlu0 %8815
  %v8817 = vsel %vm8729, %v8694, 0.0
  %8818 = vadd.xlane.f32.xlu0 %v8817
  %v8819 = vpop.xlane.xlu0 %8818
  %v8820 = vsel %vm8729, %v8699, 0.0
  %8821 = vadd.xlane.f32.xlu0 %v8820
  %v8822 = vpop.xlane.xlu0 %8821
  %v8823 = vsel %vm8729, %v8702, 0.0
  %8824 = vadd.xlane.f32.xlu0 %v8823
  %v8825 = vpop.xlane.xlu0 %8824
  %v8826 = vsel %vm8729, %v8707, 0.0
  %8827 = vadd.xlane.f32.xlu0 %v8826
  %v8828 = vpop.xlane.xlu0 %8827
  %v8829 = vsel %vm8729, %v8710, 0.0
  %8830 = vadd.xlane.f32.xlu0 %v8829
  %v8831 = vpop.xlane.xlu0 %8830
  %v8832 = vsel %vm8729, %v8715, 0.0
  %8833 = vadd.xlane.f32.xlu0 %v8832
  %v8834 = vpop.xlane.xlu0 %8833
  %v8835 = vsel %vm8729, %v8718, 0.0
  %8836 = vadd.xlane.f32.xlu0 %v8835
  %v8837 = vpop.xlane.xlu0 %8836
  %v8838 = vsel %vm8729, %v8723, 0.0
  %8839 = vadd.xlane.f32.xlu0 %v8838
  %v8840 = vpop.xlane.xlu0 %8839
  %v8841 = vsel %vm8729, %v8726, 0.0
  %8842 = vadd.xlane.f32.xlu0 %v8841
  %v8843 = vpop.xlane.xlu0 %8842
  %v8844 = vrcp.pop 49.0
  %v8845 = vmul.f32 %v8732, %v8844
  %v8846 = vmul.f32 %v8735, %v8844
  %v8847 = vmul.f32 %v8738, %v8844
  %v8848 = vmul.f32 %v8741, %v8844
  %v8849 = vmul.f32 %v8744, %v8844
  %v8850 = vmul.f32 %v8747, %v8844
  %v8851 = vmul.f32 %v8750, %v8844
  %v8852 = vmul.f32 %v8753, %v8844
  %v8853 = vmul.f32 %v8756, %v8844
  %v8854 = vmul.f32 %v8759, %v8844
  %v8855 = vmul.f32 %v8762, %v8844
  %v8856 = vmul.f32 %v8765, %v8844
  %v8857 = vmul.f32 %v8768, %v8844
  %v8858 = vmul.f32 %v8771, %v8844
  %v8859 = vmul.f32 %v8774, %v8844
  %v8860 = vmul.f32 %v8777, %v8844
  %v8861 = vmul.f32 %v8780, %v8844
  %v8862 = vmul.f32 %v8783, %v8844
  %v8863 = vmul.f32 %v8786, %v8844
  %v8864 = vmul.f32 %v8789, %v8844
  %v8865 = vmul.f32 %v8792, %v8844
  %v8866 = vmul.f32 %v8795, %v8844
  %v8867 = vmul.f32 %v8798, %v8844
  %v8868 = vmul.f32 %v8801, %v8844
  %v8869 = vmul.f32 %v8804, %v8844
  %v8870 = vmul.f32 %v8807, %v8844
  %v8871 = vmul.f32 %v8810, %v8844
  %v8872 = vmul.f32 %v8813, %v8844
  %v8873 = vmul.f32 %v8816, %v8844
  %v8874 = vmul.f32 %v8819, %v8844
  %v8875 = vmul.f32 %v8822, %v8844
  %v8876 = vmul.f32 %v8825, %v8844
  %v8877 = vmul.f32 %v8828, %v8844
  %v8878 = vmul.f32 %v8831, %v8844
  %v8879 = vmul.f32 %v8834, %v8844
  %v8880 = vmul.f32 %v8837, %v8844
  %v8881 = vmul.f32 %v8840, %v8844
  %v8882 = vmul.f32 %v8843, %v8844
  %v8883 = vsub.f32 %v8579, %v8845
  %v8884 = vsub.f32 %v8582, %v8846
  %v8885 = vsub.f32 %v8587, %v8847
  %v8886 = vsub.f32 %v8590, %v8848
  %v8887 = vsub.f32 %v8595, %v8849
  %v8888 = vsub.f32 %v8598, %v8850
  %v8889 = vsub.f32 %v8603, %v8851
  %v8890 = vsub.f32 %v8606, %v8852
  %v8891 = vsub.f32 %v8611, %v8853
  %v8892 = vsub.f32 %v8614, %v8854
  %v8893 = vsub.f32 %v8619, %v8855
  %v8894 = vsub.f32 %v8622, %v8856
  %v8895 = vsub.f32 %v8627, %v8857
  %v8896 = vsub.f32 %v8630, %v8858
  %v8897 = vsub.f32 %v8635, %v8859
  %v8898 = vsub.f32 %v8638, %v8860
  %v8899 = vsub.f32 %v8643, %v8861
  %v8900 = vsub.f32 %v8646, %v8862
  %v8901 = vsub.f32 %v8651, %v8863
  %v8902 = vsub.f32 %v8654, %v8864
  %v8903 = vsub.f32 %v8659, %v8865
  %v8904 = vsub.f32 %v8662, %v8866
  %v8905 = vsub.f32 %v8667, %v8867
  %v8906 = vsub.f32 %v8670, %v8868
  %v8907 = vsub.f32 %v8675, %v8869
  %v8908 = vsub.f32 %v8678, %v8870
  %v8909 = vsub.f32 %v8683, %v8871
  %v8910 = vsub.f32 %v8686, %v8872
  %v8911 = vsub.f32 %v8691, %v8873
  %v8912 = vsub.f32 %v8694, %v8874
  %v8913 = vsub.f32 %v8699, %v8875
  %v8914 = vsub.f32 %v8702, %v8876
  %v8915 = vsub.f32 %v8707, %v8877
  %v8916 = vsub.f32 %v8710, %v8878
  %v8917 = vsub.f32 %v8715, %v8879
  %v8918 = vsub.f32 %v8718, %v8880
  %v8919 = vsub.f32 %v8723, %v8881
  %v8920 = vsub.f32 %v8726, %v8882
  %v8921 = vmul.f32 %v8883, %v8883
  %v8922 = vmul.f32 %v8884, %v8884
  %v8923 = vmul.f32 %v8885, %v8885
  %v8924 = vmul.f32 %v8886, %v8886
  %v8925 = vmul.f32 %v8887, %v8887
  %v8926 = vmul.f32 %v8888, %v8888
  %v8927 = vmul.f32 %v8889, %v8889
  %v8928 = vmul.f32 %v8890, %v8890
  %v8929 = vmul.f32 %v8891, %v8891
  %v8930 = vmul.f32 %v8892, %v8892
  %v8931 = vmul.f32 %v8893, %v8893
  %v8932 = vmul.f32 %v8894, %v8894
  %v8933 = vmul.f32 %v8895, %v8895
  %v8934 = vmul.f32 %v8896, %v8896
  %v8935 = vmul.f32 %v8897, %v8897
  %v8936 = vmul.f32 %v8898, %v8898
  %v8937 = vmul.f32 %v8899, %v8899
  %v8938 = vmul.f32 %v8900, %v8900
  %v8939 = vmul.f32 %v8901, %v8901
  %v8940 = vmul.f32 %v8902, %v8902
  %v8941 = vmul.f32 %v8903, %v8903
  %v8942 = vmul.f32 %v8904, %v8904
  %v8943 = vmul.f32 %v8905, %v8905
  %v8944 = vmul.f32 %v8906, %v8906
  %v8945 = vmul.f32 %v8907, %v8907
  %v8946 = vmul.f32 %v8908, %v8908
  %v8947 = vmul.f32 %v8909, %v8909
  %v8948 = vmul.f32 %v8910, %v8910
  %v8949 = vmul.f32 %v8911, %v8911
  %v8950 = vmul.f32 %v8912, %v8912
  %v8951 = vmul.f32 %v8913, %v8913
  %v8952 = vmul.f32 %v8914, %v8914
  %v8953 = vmul.f32 %v8915, %v8915
  %v8954 = vmul.f32 %v8916, %v8916
  %v8955 = vmul.f32 %v8917, %v8917
  %v8956 = vmul.f32 %v8918, %v8918
  %v8957 = vmul.f32 %v8919, %v8919
  %v8958 = vmul.f32 %v8920, %v8920
  %v8959 = vsel %vm8729, %v8921, 0.0
  %8960 = vadd.xlane.f32.xlu0 %v8959
  %v8961 = vpop.xlane.xlu0 %8960
  %v8962 = vsel %vm8729, %v8922, 0.0
  %8963 = vadd.xlane.f32.xlu0 %v8962
  %v8964 = vpop.xlane.xlu0 %8963
  %v8965 = vsel %vm8729, %v8923, 0.0
  %8966 = vadd.xlane.f32.xlu0 %v8965
  %v8967 = vpop.xlane.xlu0 %8966
  %v8968 = vsel %vm8729, %v8924, 0.0
  %8969 = vadd.xlane.f32.xlu0 %v8968
  %v8970 = vpop.xlane.xlu0 %8969
  %v8971 = vsel %vm8729, %v8925, 0.0
  %8972 = vadd.xlane.f32.xlu0 %v8971
  %v8973 = vpop.xlane.xlu0 %8972
  %v8974 = vsel %vm8729, %v8926, 0.0
  %8975 = vadd.xlane.f32.xlu0 %v8974
  %v8976 = vpop.xlane.xlu0 %8975
  %v8977 = vsel %vm8729, %v8927, 0.0
  %8978 = vadd.xlane.f32.xlu0 %v8977
  %v8979 = vpop.xlane.xlu0 %8978
  %v8980 = vsel %vm8729, %v8928, 0.0
  %8981 = vadd.xlane.f32.xlu0 %v8980
  %v8982 = vpop.xlane.xlu0 %8981
  %v8983 = vsel %vm8729, %v8929, 0.0
  %8984 = vadd.xlane.f32.xlu0 %v8983
  %v8985 = vpop.xlane.xlu0 %8984
  %v8986 = vsel %vm8729, %v8930, 0.0
  %8987 = vadd.xlane.f32.xlu0 %v8986
  %v8988 = vpop.xlane.xlu0 %8987
  %v8989 = vsel %vm8729, %v8931, 0.0
  %8990 = vadd.xlane.f32.xlu0 %v8989
  %v8991 = vpop.xlane.xlu0 %8990
  %v8992 = vsel %vm8729, %v8932, 0.0
  %8993 = vadd.xlane.f32.xlu0 %v8992
  %v8994 = vpop.xlane.xlu0 %8993
  %v8995 = vsel %vm8729, %v8933, 0.0
  %8996 = vadd.xlane.f32.xlu0 %v8995
  %v8997 = vpop.xlane.xlu0 %8996
  %v8998 = vsel %vm8729, %v8934, 0.0
  %8999 = vadd.xlane.f32.xlu0 %v8998
  %v9000 = vpop.xlane.xlu0 %8999
  %v9001 = vsel %vm8729, %v8935, 0.0
  %9002 = vadd.xlane.f32.xlu0 %v9001
  %v9003 = vpop.xlane.xlu0 %9002
  %v9004 = vsel %vm8729, %v8936, 0.0
  %9005 = vadd.xlane.f32.xlu0 %v9004
  %v9006 = vpop.xlane.xlu0 %9005
  %v9007 = vsel %vm8729, %v8937, 0.0
  %9008 = vadd.xlane.f32.xlu0 %v9007
  %v9009 = vpop.xlane.xlu0 %9008
  %v9010 = vsel %vm8729, %v8938, 0.0
  %9011 = vadd.xlane.f32.xlu0 %v9010
  %v9012 = vpop.xlane.xlu0 %9011
  %v9013 = vsel %vm8729, %v8939, 0.0
  %9014 = vadd.xlane.f32.xlu0 %v9013
  %v9015 = vpop.xlane.xlu0 %9014
  %v9016 = vsel %vm8729, %v8940, 0.0
  %9017 = vadd.xlane.f32.xlu0 %v9016
  %v9018 = vpop.xlane.xlu0 %9017
  %v9019 = vsel %vm8729, %v8941, 0.0
  %9020 = vadd.xlane.f32.xlu0 %v9019
  %v9021 = vpop.xlane.xlu0 %9020
  %v9022 = vsel %vm8729, %v8942, 0.0
  %9023 = vadd.xlane.f32.xlu0 %v9022
  %v9024 = vpop.xlane.xlu0 %9023
  %v9025 = vsel %vm8729, %v8943, 0.0
  %9026 = vadd.xlane.f32.xlu0 %v9025
  %v9027 = vpop.xlane.xlu0 %9026
  %v9028 = vsel %vm8729, %v8944, 0.0
  %9029 = vadd.xlane.f32.xlu0 %v9028
  %v9030 = vpop.xlane.xlu0 %9029
  %v9031 = vsel %vm8729, %v8945, 0.0
  %9032 = vadd.xlane.f32.xlu0 %v9031
  %v9033 = vpop.xlane.xlu0 %9032
  %v9034 = vsel %vm8729, %v8946, 0.0
  %9035 = vadd.xlane.f32.xlu0 %v9034
  %v9036 = vpop.xlane.xlu0 %9035
  %v9037 = vsel %vm8729, %v8947, 0.0
  %9038 = vadd.xlane.f32.xlu0 %v9037
  %v9039 = vpop.xlane.xlu0 %9038
  %v9040 = vsel %vm8729, %v8948, 0.0
  %9041 = vadd.xlane.f32.xlu0 %v9040
  %v9042 = vpop.xlane.xlu0 %9041
  %v9043 = vsel %vm8729, %v8949, 0.0
  %9044 = vadd.xlane.f32.xlu0 %v9043
  %v9045 = vpop.xlane.xlu0 %9044
  %v9046 = vsel %vm8729, %v8950, 0.0
  %9047 = vadd.xlane.f32.xlu0 %v9046
  %v9048 = vpop.xlane.xlu0 %9047
  %v9049 = vsel %vm8729, %v8951, 0.0
  %9050 = vadd.xlane.f32.xlu0 %v9049
  %v9051 = vpop.xlane.xlu0 %9050
  %v9052 = vsel %vm8729, %v8952, 0.0
  %9053 = vadd.xlane.f32.xlu0 %v9052
  %v9054 = vpop.xlane.xlu0 %9053
  %v9055 = vsel %vm8729, %v8953, 0.0
  %9056 = vadd.xlane.f32.xlu0 %v9055
  %v9057 = vpop.xlane.xlu0 %9056
  %v9058 = vsel %vm8729, %v8954, 0.0
  %9059 = vadd.xlane.f32.xlu0 %v9058
  %v9060 = vpop.xlane.xlu0 %9059
  %v9061 = vsel %vm8729, %v8955, 0.0
  %9062 = vadd.xlane.f32.xlu0 %v9061
  %v9063 = vpop.xlane.xlu0 %9062
  %v9064 = vsel %vm8729, %v8956, 0.0
  %9065 = vadd.xlane.f32.xlu0 %v9064
  %v9066 = vpop.xlane.xlu0 %9065
  %v9067 = vsel %vm8729, %v8957, 0.0
  %9068 = vadd.xlane.f32.xlu0 %v9067
  %v9069 = vpop.xlane.xlu0 %9068
  %v9070 = vsel %vm8729, %v8958, 0.0
  %9071 = vadd.xlane.f32.xlu0 %v9070
  %v9072 = vpop.xlane.xlu0 %9071
  %v9073 = vmul.f32 %v8961, %v8844
  %v9074 = vmul.f32 %v8964, %v8844
  %v9075 = vmul.f32 %v8967, %v8844
  %v9076 = vmul.f32 %v8970, %v8844
  %v9077 = vmul.f32 %v8973, %v8844
  %v9078 = vmul.f32 %v8976, %v8844
  %v9079 = vmul.f32 %v8979, %v8844
  %v9080 = vmul.f32 %v8982, %v8844
  %v9081 = vmul.f32 %v8985, %v8844
  %v9082 = vmul.f32 %v8988, %v8844
  %v9083 = vmul.f32 %v8991, %v8844
  %v9084 = vmul.f32 %v8994, %v8844
  %v9085 = vmul.f32 %v8997, %v8844
  %v9086 = vmul.f32 %v9000, %v8844
  %v9087 = vmul.f32 %v9003, %v8844
  %v9088 = vmul.f32 %v9006, %v8844
  %v9089 = vmul.f32 %v9009, %v8844
  %v9090 = vmul.f32 %v9012, %v8844
  %v9091 = vmul.f32 %v9015, %v8844
  %v9092 = vmul.f32 %v9018, %v8844
  %v9093 = vmul.f32 %v9021, %v8844
  %v9094 = vmul.f32 %v9024, %v8844
  %v9095 = vmul.f32 %v9027, %v8844
  %v9096 = vmul.f32 %v9030, %v8844
  %v9097 = vmul.f32 %v9033, %v8844
  %v9098 = vmul.f32 %v9036, %v8844
  %v9099 = vmul.f32 %v9039, %v8844
  %v9100 = vmul.f32 %v9042, %v8844
  %v9101 = vmul.f32 %v9045, %v8844
  %v9102 = vmul.f32 %v9048, %v8844
  %v9103 = vmul.f32 %v9051, %v8844
  %v9104 = vmul.f32 %v9054, %v8844
  %v9105 = vmul.f32 %v9057, %v8844
  %v9106 = vmul.f32 %v9060, %v8844
  %v9107 = vmul.f32 %v9063, %v8844
  %v9108 = vmul.f32 %v9066, %v8844
  %v9109 = vmul.f32 %v9069, %v8844
  %v9110 = vmul.f32 %v9072, %v8844
  %v9111 = vld [vmem:[%s5] sm:$0xff]
  %v9112 = vld [vmem:[%s5 + $0x8] sm:$0xff]
  %v9113 = vld [vmem:[%s5 + $0x10] sm:$0xff]
  %v9114 = vld [vmem:[%s5 + $0x18] sm:$0xff]
  %v9115 = vld [vmem:[%s5 + $0x20] sm:$0xff]
  %v9116 = vld [vmem:[%s5 + $0x28] sm:$0xff]
  %v9117 = vld [vmem:[%s5 + $0x30] sm:$0xff]
  %v9118 = vld [vmem:[%s5 + $0x38] sm:$0xff]
  %v9119 = vld [vmem:[%s5 + $0x40] sm:$0xff]
  %v9120 = vld [vmem:[%s5 + $0x48] sm:$0xff]
  %v9121 = vld [vmem:[%s5 + $0x50] sm:$0xff]
  %v9122 = vld [vmem:[%s5 + $0x58] sm:$0xff]
  %v9123 = vld [vmem:[%s5 + $0x60] sm:$0xff]
  %v9124 = vld [vmem:[%s5 + $0x68] sm:$0xff]
  %v9125 = vld [vmem:[%s5 + $0x70] sm:$0xff]
  %v9126 = vld [vmem:[%s5 + $0x78] sm:$0xff]
  %v9127 = vld [vmem:[%s5 + $0x80] sm:$0xff]
  %v9128 = vld [vmem:[%s5 + $0x88] sm:$0xff]
  %v9129 = vld [vmem:[%s5 + $0x90] sm:$0xff]
  %v9130 = vld [vmem:[%s5 + $0x98] sm:$0xff]
  %v9131 = vld [vmem:[%s5 + $0xa0] sm:$0xff]
  %v9132 = vld [vmem:[%s5 + $0xa8] sm:$0xff]
  %v9133 = vld [vmem:[%s5 + $0xb0] sm:$0xff]
  %v9134 = vld [vmem:[%s5 + $0xb8] sm:$0xff]
  %v9135 = vld [vmem:[%s5 + $0xc0] sm:$0xff]
  %v9136 = vld [vmem:[%s5 + $0xc8] sm:$0xff]
  %v9137 = vld [vmem:[%s5 + $0xd0] sm:$0xff]
  %v9138 = vld [vmem:[%s5 + $0xd8] sm:$0xff]
  %v9139 = vld [vmem:[%s5 + $0xe0] sm:$0xff]
  %v9140 = vld [vmem:[%s5 + $0xe8] sm:$0xff]
  %v9141 = vld [vmem:[%s5 + $0xf0] sm:$0xff]
  %v9142 = vld [vmem:[%s5 + $0xf8] sm:$0xff]
  %v9143 = vld [vmem:[%s5 + $0x100] sm:$0xff]
  %v9144 = vld [vmem:[%s5 + $0x108] sm:$0xff]
  %v9145 = vld [vmem:[%s5 + $0x110] sm:$0xff]
  %v9146 = vld [vmem:[%s5 + $0x118] sm:$0xff]
  %v9147 = vld [vmem:[%s5 + $0x120] sm:$0xff]
  %v9148 = vld [vmem:[%s5 + $0x128] sm:$0xff]
  %v9149 = vadd.f32 %v9073, 0.001
  %v9150 = vadd.f32 %v9074, 0.001
  %v9151 = vadd.f32 %v9075, 0.001
  %v9152 = vadd.f32 %v9076, 0.001
  %v9153 = vadd.f32 %v9077, 0.001
  %v9154 = vadd.f32 %v9078, 0.001
  %v9155 = vadd.f32 %v9079, 0.001
  %v9156 = vadd.f32 %v9080, 0.001
  %v9157 = vadd.f32 %v9081, 0.001
  %v9158 = vadd.f32 %v9082, 0.001
  %v9159 = vadd.f32 %v9083, 0.001
  %v9160 = vadd.f32 %v9084, 0.001
  %v9161 = vadd.f32 %v9085, 0.001
  %v9162 = vadd.f32 %v9086, 0.001
  %v9163 = vadd.f32 %v9087, 0.001
  %v9164 = vadd.f32 %v9088, 0.001
  %v9165 = vadd.f32 %v9089, 0.001
  %v9166 = vadd.f32 %v9090, 0.001
  %v9167 = vadd.f32 %v9091, 0.001
  %v9168 = vadd.f32 %v9092, 0.001
  %v9169 = vadd.f32 %v9093, 0.001
  %v9170 = vadd.f32 %v9094, 0.001
  %v9171 = vadd.f32 %v9095, 0.001
  %v9172 = vadd.f32 %v9096, 0.001
  %v9173 = vadd.f32 %v9097, 0.001
  %v9174 = vadd.f32 %v9098, 0.001
  %v9175 = vadd.f32 %v9099, 0.001
  %v9176 = vadd.f32 %v9100, 0.001
  %v9177 = vadd.f32 %v9101, 0.001
  %v9178 = vadd.f32 %v9102, 0.001
  %v9179 = vadd.f32 %v9103, 0.001
  %v9180 = vadd.f32 %v9104, 0.001
  %v9181 = vadd.f32 %v9105, 0.001
  %v9182 = vadd.f32 %v9106, 0.001
  %v9183 = vadd.f32 %v9107, 0.001
  %v9184 = vadd.f32 %v9108, 0.001
  %v9185 = vadd.f32 %v9109, 0.001
  %v9186 = vadd.f32 %v9110, 0.001
  %v9187 = vrsqrt.pop %v9149
  %v9188 = vrsqrt.pop %v9150
  %v9189 = vrsqrt.pop %v9151
  %v9190 = vrsqrt.pop %v9152
  %v9191 = vrsqrt.pop %v9153
  %v9192 = vrsqrt.pop %v9154
  %v9193 = vrsqrt.pop %v9155
  %v9194 = vrsqrt.pop %v9156
  %v9195 = vrsqrt.pop %v9157
  %v9196 = vrsqrt.pop %v9158
  %v9197 = vrsqrt.pop %v9159
  %v9198 = vrsqrt.pop %v9160
  %v9199 = vrsqrt.pop %v9161
  %v9200 = vrsqrt.pop %v9162
  %v9201 = vrsqrt.pop %v9163
  %v9202 = vrsqrt.pop %v9164
  %v9203 = vrsqrt.pop %v9165
  %v9204 = vrsqrt.pop %v9166
  %v9205 = vrsqrt.pop %v9167
  %v9206 = vrsqrt.pop %v9168
  %v9207 = vrsqrt.pop %v9169
  %v9208 = vrsqrt.pop %v9170
  %v9209 = vrsqrt.pop %v9171
  %v9210 = vrsqrt.pop %v9172
  %v9211 = vrsqrt.pop %v9173
  %v9212 = vrsqrt.pop %v9174
  %v9213 = vrsqrt.pop %v9175
  %v9214 = vrsqrt.pop %v9176
  %v9215 = vrsqrt.pop %v9177
  %v9216 = vrsqrt.pop %v9178
  %v9217 = vrsqrt.pop %v9179
  %v9218 = vrsqrt.pop %v9180
  %v9219 = vrsqrt.pop %v9181
  %v9220 = vrsqrt.pop %v9182
  %v9221 = vrsqrt.pop %v9183
  %v9222 = vrsqrt.pop %v9184
  %v9223 = vrsqrt.pop %v9185
  %v9224 = vrsqrt.pop %v9186
  %v9225 = vmul.f32 %v9111, %v9187
  %v9226 = vmul.f32 %v9112, %v9188
  %v9227 = vmul.f32 %v9113, %v9189
  %v9228 = vmul.f32 %v9114, %v9190
  %v9229 = vmul.f32 %v9115, %v9191
  %v9230 = vmul.f32 %v9116, %v9192
  %v9231 = vmul.f32 %v9117, %v9193
  %v9232 = vmul.f32 %v9118, %v9194
  %v9233 = vmul.f32 %v9119, %v9195
  %v9234 = vmul.f32 %v9120, %v9196
  %v9235 = vmul.f32 %v9121, %v9197
  %v9236 = vmul.f32 %v9122, %v9198
  %v9237 = vmul.f32 %v9123, %v9199
  %v9238 = vmul.f32 %v9124, %v9200
  %v9239 = vmul.f32 %v9125, %v9201
  %v9240 = vmul.f32 %v9126, %v9202
  %v9241 = vmul.f32 %v9127, %v9203
  %v9242 = vmul.f32 %v9128, %v9204
  %v9243 = vmul.f32 %v9129, %v9205
  %v9244 = vmul.f32 %v9130, %v9206
  %v9245 = vmul.f32 %v9131, %v9207
  %v9246 = vmul.f32 %v9132, %v9208
  %v9247 = vmul.f32 %v9133, %v9209
  %v9248 = vmul.f32 %v9134, %v9210
  %v9249 = vmul.f32 %v9135, %v9211
  %v9250 = vmul.f32 %v9136, %v9212
  %v9251 = vmul.f32 %v9137, %v9213
  %v9252 = vmul.f32 %v9138, %v9214
  %v9253 = vmul.f32 %v9139, %v9215
  %v9254 = vmul.f32 %v9140, %v9216
  %v9255 = vmul.f32 %v9141, %v9217
  %v9256 = vmul.f32 %v9142, %v9218
  %v9257 = vmul.f32 %v9143, %v9219
  %v9258 = vmul.f32 %v9144, %v9220
  %v9259 = vmul.f32 %v9145, %v9221
  %v9260 = vmul.f32 %v9146, %v9222
  %v9261 = vmul.f32 %v9147, %v9223
  %v9262 = vmul.f32 %v9148, %v9224
  %v9263 = vld [vmem:[%s6] sm:$0xff]
  %v9264 = vld [vmem:[%s6 + $0x8] sm:$0xff]
  %v9265 = vld [vmem:[%s6 + $0x10] sm:$0xff]
  %v9266 = vld [vmem:[%s6 + $0x18] sm:$0xff]
  %v9267 = vld [vmem:[%s6 + $0x20] sm:$0xff]
  %v9268 = vld [vmem:[%s6 + $0x28] sm:$0xff]
  %v9269 = vld [vmem:[%s6 + $0x30] sm:$0xff]
  %v9270 = vld [vmem:[%s6 + $0x38] sm:$0xff]
  %v9271 = vld [vmem:[%s6 + $0x40] sm:$0xff]
  %v9272 = vld [vmem:[%s6 + $0x48] sm:$0xff]
  %v9273 = vld [vmem:[%s6 + $0x50] sm:$0xff]
  %v9274 = vld [vmem:[%s6 + $0x58] sm:$0xff]
  %v9275 = vld [vmem:[%s6 + $0x60] sm:$0xff]
  %v9276 = vld [vmem:[%s6 + $0x68] sm:$0xff]
  %v9277 = vld [vmem:[%s6 + $0x70] sm:$0xff]
  %v9278 = vld [vmem:[%s6 + $0x78] sm:$0xff]
  %v9279 = vld [vmem:[%s6 + $0x80] sm:$0xff]
  %v9280 = vld [vmem:[%s6 + $0x88] sm:$0xff]
  %v9281 = vld [vmem:[%s6 + $0x90] sm:$0xff]
  %v9282 = vld [vmem:[%s6 + $0x98] sm:$0xff]
  %v9283 = vld [vmem:[%s6 + $0xa0] sm:$0xff]
  %v9284 = vld [vmem:[%s6 + $0xa8] sm:$0xff]
  %v9285 = vld [vmem:[%s6 + $0xb0] sm:$0xff]
  %v9286 = vld [vmem:[%s6 + $0xb8] sm:$0xff]
  %v9287 = vld [vmem:[%s6 + $0xc0] sm:$0xff]
  %v9288 = vld [vmem:[%s6 + $0xc8] sm:$0xff]
  %v9289 = vld [vmem:[%s6 + $0xd0] sm:$0xff]
  %v9290 = vld [vmem:[%s6 + $0xd8] sm:$0xff]
  %v9291 = vld [vmem:[%s6 + $0xe0] sm:$0xff]
  %v9292 = vld [vmem:[%s6 + $0xe8] sm:$0xff]
  %v9293 = vld [vmem:[%s6 + $0xf0] sm:$0xff]
  %v9294 = vld [vmem:[%s6 + $0xf8] sm:$0xff]
  %v9295 = vld [vmem:[%s6 + $0x100] sm:$0xff]
  %v9296 = vld [vmem:[%s6 + $0x108] sm:$0xff]
  %v9297 = vld [vmem:[%s6 + $0x110] sm:$0xff]
  %v9298 = vld [vmem:[%s6 + $0x118] sm:$0xff]
  %v9299 = vld [vmem:[%s6 + $0x120] sm:$0xff]
  %v9300 = vld [vmem:[%s6 + $0x128] sm:$0xff]
  %v9301 = vmul.f32 %v8845, %v9225
  %v9302 = vmul.f32 %v8846, %v9226
  %v9303 = vmul.f32 %v8847, %v9227
  %v9304 = vmul.f32 %v8848, %v9228
  %v9305 = vmul.f32 %v8849, %v9229
  %v9306 = vmul.f32 %v8850, %v9230
  %v9307 = vmul.f32 %v8851, %v9231
  %v9308 = vmul.f32 %v8852, %v9232
  %v9309 = vmul.f32 %v8853, %v9233
  %v9310 = vmul.f32 %v8854, %v9234
  %v9311 = vmul.f32 %v8855, %v9235
  %v9312 = vmul.f32 %v8856, %v9236
  %v9313 = vmul.f32 %v8857, %v9237
  %v9314 = vmul.f32 %v8858, %v9238
  %v9315 = vmul.f32 %v8859, %v9239
  %v9316 = vmul.f32 %v8860, %v9240
  %v9317 = vmul.f32 %v8861, %v9241
  %v9318 = vmul.f32 %v8862, %v9242
  %v9319 = vmul.f32 %v8863, %v9243
  %v9320 = vmul.f32 %v8864, %v9244
  %v9321 = vmul.f32 %v8865, %v9245
  %v9322 = vmul.f32 %v8866, %v9246
  %v9323 = vmul.f32 %v8867, %v9247
  %v9324 = vmul.f32 %v8868, %v9248
  %v9325 = vmul.f32 %v8869, %v9249
  %v9326 = vmul.f32 %v8870, %v9250
  %v9327 = vmul.f32 %v8871, %v9251
  %v9328 = vmul.f32 %v8872, %v9252
  %v9329 = vmul.f32 %v8873, %v9253
  %v9330 = vmul.f32 %v8874, %v9254
  %v9331 = vmul.f32 %v8875, %v9255
  %v9332 = vmul.f32 %v8876, %v9256
  %v9333 = vmul.f32 %v8877, %v9257
  %v9334 = vmul.f32 %v8878, %v9258
  %v9335 = vmul.f32 %v8879, %v9259
  %v9336 = vmul.f32 %v8880, %v9260
  %v9337 = vmul.f32 %v8881, %v9261
  %v9338 = vmul.f32 %v8882, %v9262
  %v9339 = vsub.f32 %v9263, %v9301
  %v9340 = vsub.f32 %v9264, %v9302
  %v9341 = vsub.f32 %v9265, %v9303
  %v9342 = vsub.f32 %v9266, %v9304
  %v9343 = vsub.f32 %v9267, %v9305
  %v9344 = vsub.f32 %v9268, %v9306
  %v9345 = vsub.f32 %v9269, %v9307
  %v9346 = vsub.f32 %v9270, %v9308
  %v9347 = vsub.f32 %v9271, %v9309
  %v9348 = vsub.f32 %v9272, %v9310
  %v9349 = vsub.f32 %v9273, %v9311
  %v9350 = vsub.f32 %v9274, %v9312
  %v9351 = vsub.f32 %v9275, %v9313
  %v9352 = vsub.f32 %v9276, %v9314
  %v9353 = vsub.f32 %v9277, %v9315
  %v9354 = vsub.f32 %v9278, %v9316
  %v9355 = vsub.f32 %v9279, %v9317
  %v9356 = vsub.f32 %v9280, %v9318
  %v9357 = vsub.f32 %v9281, %v9319
  %v9358 = vsub.f32 %v9282, %v9320
  %v9359 = vsub.f32 %v9283, %v9321
  %v9360 = vsub.f32 %v9284, %v9322
  %v9361 = vsub.f32 %v9285, %v9323
  %v9362 = vsub.f32 %v9286, %v9324
  %v9363 = vsub.f32 %v9287, %v9325
  %v9364 = vsub.f32 %v9288, %v9326
  %v9365 = vsub.f32 %v9289, %v9327
  %v9366 = vsub.f32 %v9290, %v9328
  %v9367 = vsub.f32 %v9291, %v9329
  %v9368 = vsub.f32 %v9292, %v9330
  %v9369 = vsub.f32 %v9293, %v9331
  %v9370 = vsub.f32 %v9294, %v9332
  %v9371 = vsub.f32 %v9295, %v9333
  %v9372 = vsub.f32 %v9296, %v9334
  %v9373 = vsub.f32 %v9297, %v9335
  %v9374 = vsub.f32 %v9298, %v9336
  %v9375 = vsub.f32 %v9299, %v9337
  %v9376 = vsub.f32 %v9300, %v9338
  %9378 = vset.pattern.permute.xlu0 0
  %9379 = vperm.xlu0 %9378, %v9225
  %v9380 = vpop.permute.xlu0 %9379
  %9383 = vset.pattern.permute.xlu0 0
  %9384 = vperm.xlu0 %9383, %v9226
  %v9385 = vpop.permute.xlu0 %9384
  %9388 = vset.pattern.permute.xlu0 0
  %9389 = vperm.xlu0 %9388, %v9227
  %v9390 = vpop.permute.xlu0 %9389
  %9393 = vset.pattern.permute.xlu0 0
  %9394 = vperm.xlu0 %9393, %v9228
  %v9395 = vpop.permute.xlu0 %9394
  %9398 = vset.pattern.permute.xlu0 0
  %9399 = vperm.xlu0 %9398, %v9229
  %v9400 = vpop.permute.xlu0 %9399
  %9403 = vset.pattern.permute.xlu0 0
  %9404 = vperm.xlu0 %9403, %v9230
  %v9405 = vpop.permute.xlu0 %9404
  %9408 = vset.pattern.permute.xlu0 0
  %9409 = vperm.xlu0 %9408, %v9231
  %v9410 = vpop.permute.xlu0 %9409
  %9413 = vset.pattern.permute.xlu0 0
  %9414 = vperm.xlu0 %9413, %v9232
  %v9415 = vpop.permute.xlu0 %9414
  %9418 = vset.pattern.permute.xlu0 0
  %9419 = vperm.xlu0 %9418, %v9233
  %v9420 = vpop.permute.xlu0 %9419
  %9423 = vset.pattern.permute.xlu0 0
  %9424 = vperm.xlu0 %9423, %v9234
  %v9425 = vpop.permute.xlu0 %9424
  %9428 = vset.pattern.permute.xlu0 0
  %9429 = vperm.xlu0 %9428, %v9235
  %v9430 = vpop.permute.xlu0 %9429
  %9433 = vset.pattern.permute.xlu0 0
  %9434 = vperm.xlu0 %9433, %v9236
  %v9435 = vpop.permute.xlu0 %9434
  %9438 = vset.pattern.permute.xlu0 0
  %9439 = vperm.xlu0 %9438, %v9237
  %v9440 = vpop.permute.xlu0 %9439
  %9443 = vset.pattern.permute.xlu0 0
  %9444 = vperm.xlu0 %9443, %v9238
  %v9445 = vpop.permute.xlu0 %9444
  %9448 = vset.pattern.permute.xlu0 0
  %9449 = vperm.xlu0 %9448, %v9239
  %v9450 = vpop.permute.xlu0 %9449
  %9453 = vset.pattern.permute.xlu0 0
  %9454 = vperm.xlu0 %9453, %v9240
  %v9455 = vpop.permute.xlu0 %9454
  %9458 = vset.pattern.permute.xlu0 0
  %9459 = vperm.xlu0 %9458, %v9241
  %v9460 = vpop.permute.xlu0 %9459
  %9463 = vset.pattern.permute.xlu0 0
  %9464 = vperm.xlu0 %9463, %v9242
  %v9465 = vpop.permute.xlu0 %9464
  %9468 = vset.pattern.permute.xlu0 0
  %9469 = vperm.xlu0 %9468, %v9243
  %v9470 = vpop.permute.xlu0 %9469
  %9473 = vset.pattern.permute.xlu0 0
  %9474 = vperm.xlu0 %9473, %v9244
  %v9475 = vpop.permute.xlu0 %9474
  %9478 = vset.pattern.permute.xlu0 0
  %9479 = vperm.xlu0 %9478, %v9245
  %v9480 = vpop.permute.xlu0 %9479
  %9483 = vset.pattern.permute.xlu0 0
  %9484 = vperm.xlu0 %9483, %v9246
  %v9485 = vpop.permute.xlu0 %9484
  %9488 = vset.pattern.permute.xlu0 0
  %9489 = vperm.xlu0 %9488, %v9247
  %v9490 = vpop.permute.xlu0 %9489
  %9493 = vset.pattern.permute.xlu0 0
  %9494 = vperm.xlu0 %9493, %v9248
  %v9495 = vpop.permute.xlu0 %9494
  %9498 = vset.pattern.permute.xlu0 0
  %9499 = vperm.xlu0 %9498, %v9249
  %v9500 = vpop.permute.xlu0 %9499
  %9503 = vset.pattern.permute.xlu0 0
  %9504 = vperm.xlu0 %9503, %v9250
  %v9505 = vpop.permute.xlu0 %9504
  %9508 = vset.pattern.permute.xlu0 0
  %9509 = vperm.xlu0 %9508, %v9251
  %v9510 = vpop.permute.xlu0 %9509
  %9513 = vset.pattern.permute.xlu0 0
  %9514 = vperm.xlu0 %9513, %v9252
  %v9515 = vpop.permute.xlu0 %9514
  %9518 = vset.pattern.permute.xlu0 0
  %9519 = vperm.xlu0 %9518, %v9253
  %v9520 = vpop.permute.xlu0 %9519
  %9523 = vset.pattern.permute.xlu0 0
  %9524 = vperm.xlu0 %9523, %v9254
  %v9525 = vpop.permute.xlu0 %9524
  %9528 = vset.pattern.permute.xlu0 0
  %9529 = vperm.xlu0 %9528, %v9255
  %v9530 = vpop.permute.xlu0 %9529
  %9533 = vset.pattern.permute.xlu0 0
  %9534 = vperm.xlu0 %9533, %v9256
  %v9535 = vpop.permute.xlu0 %9534
  %9538 = vset.pattern.permute.xlu0 0
  %9539 = vperm.xlu0 %9538, %v9257
  %v9540 = vpop.permute.xlu0 %9539
  %9543 = vset.pattern.permute.xlu0 0
  %9544 = vperm.xlu0 %9543, %v9258
  %v9545 = vpop.permute.xlu0 %9544
  %9548 = vset.pattern.permute.xlu0 0
  %9549 = vperm.xlu0 %9548, %v9259
  %v9550 = vpop.permute.xlu0 %9549
  %9553 = vset.pattern.permute.xlu0 0
  %9554 = vperm.xlu0 %9553, %v9260
  %v9555 = vpop.permute.xlu0 %9554
  %9558 = vset.pattern.permute.xlu0 0
  %9559 = vperm.xlu0 %9558, %v9261
  %v9560 = vpop.permute.xlu0 %9559
  %9563 = vset.pattern.permute.xlu0 0
  %9564 = vperm.xlu0 %9563, %v9262
  %v9565 = vpop.permute.xlu0 %9564
  %v9567 = vmul.f32 %v8579, %v9380
  %v9568 = vmul.f32 %v8582, %v9385
  %v9569 = vmul.f32 %v8587, %v9390
  %v9570 = vmul.f32 %v8590, %v9395
  %v9571 = vmul.f32 %v8595, %v9400
  %v9572 = vmul.f32 %v8598, %v9405
  %v9573 = vmul.f32 %v8603, %v9410
  %v9574 = vmul.f32 %v8606, %v9415
  %v9575 = vmul.f32 %v8611, %v9420
  %v9576 = vmul.f32 %v8614, %v9425
  %v9577 = vmul.f32 %v8619, %v9430
  %v9578 = vmul.f32 %v8622, %v9435
  %v9579 = vmul.f32 %v8627, %v9440
  %v9580 = vmul.f32 %v8630, %v9445
  %v9581 = vmul.f32 %v8635, %v9450
  %v9582 = vmul.f32 %v8638, %v9455
  %v9583 = vmul.f32 %v8643, %v9460
  %v9584 = vmul.f32 %v8646, %v9465
  %v9585 = vmul.f32 %v8651, %v9470
  %v9586 = vmul.f32 %v8654, %v9475
  %v9587 = vmul.f32 %v8659, %v9480
  %v9588 = vmul.f32 %v8662, %v9485
  %v9589 = vmul.f32 %v8667, %v9490
  %v9590 = vmul.f32 %v8670, %v9495
  %v9591 = vmul.f32 %v8675, %v9500
  %v9592 = vmul.f32 %v8678, %v9505
  %v9593 = vmul.f32 %v8683, %v9510
  %v9594 = vmul.f32 %v8686, %v9515
  %v9595 = vmul.f32 %v8691, %v9520
  %v9596 = vmul.f32 %v8694, %v9525
  %v9597 = vmul.f32 %v8699, %v9530
  %v9598 = vmul.f32 %v8702, %v9535
  %v9599 = vmul.f32 %v8707, %v9540
  %v9600 = vmul.f32 %v8710, %v9545
  %v9601 = vmul.f32 %v8715, %v9550
  %v9602 = vmul.f32 %v8718, %v9555
  %v9603 = vmul.f32 %v8723, %v9560
  %v9604 = vmul.f32 %v8726, %v9565
  %9606 = vset.pattern.permute.xlu0 0
  %9607 = vperm.xlu0 %9606, %v9339
  %v9608 = vpop.permute.xlu0 %9607
  %9611 = vset.pattern.permute.xlu0 0
  %9612 = vperm.xlu0 %9611, %v9340
  %v9613 = vpop.permute.xlu0 %9612
  %9616 = vset.pattern.permute.xlu0 0
  %9617 = vperm.xlu0 %9616, %v9341
  %v9618 = vpop.permute.xlu0 %9617
  %9621 = vset.pattern.permute.xlu0 0
  %9622 = vperm.xlu0 %9621, %v9342
  %v9623 = vpop.permute.xlu0 %9622
  %9626 = vset.pattern.permute.xlu0 0
  %9627 = vperm.xlu0 %9626, %v9343
  %v9628 = vpop.permute.xlu0 %9627
  %9631 = vset.pattern.permute.xlu0 0
  %9632 = vperm.xlu0 %9631, %v9344
  %v9633 = vpop.permute.xlu0 %9632
  %9636 = vset.pattern.permute.xlu0 0
  %9637 = vperm.xlu0 %9636, %v9345
  %v9638 = vpop.permute.xlu0 %9637
  %9641 = vset.pattern.permute.xlu0 0
  %9642 = vperm.xlu0 %9641, %v9346
  %v9643 = vpop.permute.xlu0 %9642
  %9646 = vset.pattern.permute.xlu0 0
  %9647 = vperm.xlu0 %9646, %v9347
  %v9648 = vpop.permute.xlu0 %9647
  %9651 = vset.pattern.permute.xlu0 0
  %9652 = vperm.xlu0 %9651, %v9348
  %v9653 = vpop.permute.xlu0 %9652
  %9656 = vset.pattern.permute.xlu0 0
  %9657 = vperm.xlu0 %9656, %v9349
  %v9658 = vpop.permute.xlu0 %9657
  %9661 = vset.pattern.permute.xlu0 0
  %9662 = vperm.xlu0 %9661, %v9350
  %v9663 = vpop.permute.xlu0 %9662
  %9666 = vset.pattern.permute.xlu0 0
  %9667 = vperm.xlu0 %9666, %v9351
  %v9668 = vpop.permute.xlu0 %9667
  %9671 = vset.pattern.permute.xlu0 0
  %9672 = vperm.xlu0 %9671, %v9352
  %v9673 = vpop.permute.xlu0 %9672
  %9676 = vset.pattern.permute.xlu0 0
  %9677 = vperm.xlu0 %9676, %v9353
  %v9678 = vpop.permute.xlu0 %9677
  %9681 = vset.pattern.permute.xlu0 0
  %9682 = vperm.xlu0 %9681, %v9354
  %v9683 = vpop.permute.xlu0 %9682
  %9686 = vset.pattern.permute.xlu0 0
  %9687 = vperm.xlu0 %9686, %v9355
  %v9688 = vpop.permute.xlu0 %9687
  %9691 = vset.pattern.permute.xlu0 0
  %9692 = vperm.xlu0 %9691, %v9356
  %v9693 = vpop.permute.xlu0 %9692
  %9696 = vset.pattern.permute.xlu0 0
  %9697 = vperm.xlu0 %9696, %v9357
  %v9698 = vpop.permute.xlu0 %9697
  %9701 = vset.pattern.permute.xlu0 0
  %9702 = vperm.xlu0 %9701, %v9358
  %v9703 = vpop.permute.xlu0 %9702
  %9706 = vset.pattern.permute.xlu0 0
  %9707 = vperm.xlu0 %9706, %v9359
  %v9708 = vpop.permute.xlu0 %9707
  %9711 = vset.pattern.permute.xlu0 0
  %9712 = vperm.xlu0 %9711, %v9360
  %v9713 = vpop.permute.xlu0 %9712
  %9716 = vset.pattern.permute.xlu0 0
  %9717 = vperm.xlu0 %9716, %v9361
  %v9718 = vpop.permute.xlu0 %9717
  %9721 = vset.pattern.permute.xlu0 0
  %9722 = vperm.xlu0 %9721, %v9362
  %v9723 = vpop.permute.xlu0 %9722
  %9726 = vset.pattern.permute.xlu0 0
  %9727 = vperm.xlu0 %9726, %v9363
  %v9728 = vpop.permute.xlu0 %9727
  %9731 = vset.pattern.permute.xlu0 0
  %9732 = vperm.xlu0 %9731, %v9364
  %v9733 = vpop.permute.xlu0 %9732
  %9736 = vset.pattern.permute.xlu0 0
  %9737 = vperm.xlu0 %9736, %v9365
  %v9738 = vpop.permute.xlu0 %9737
  %9741 = vset.pattern.permute.xlu0 0
  %9742 = vperm.xlu0 %9741, %v9366
  %v9743 = vpop.permute.xlu0 %9742
  %9746 = vset.pattern.permute.xlu0 0
  %9747 = vperm.xlu0 %9746, %v9367
  %v9748 = vpop.permute.xlu0 %9747
  %9751 = vset.pattern.permute.xlu0 0
  %9752 = vperm.xlu0 %9751, %v9368
  %v9753 = vpop.permute.xlu0 %9752
  %9756 = vset.pattern.permute.xlu0 0
  %9757 = vperm.xlu0 %9756, %v9369
  %v9758 = vpop.permute.xlu0 %9757
  %9761 = vset.pattern.permute.xlu0 0
  %9762 = vperm.xlu0 %9761, %v9370
  %v9763 = vpop.permute.xlu0 %9762
  %9766 = vset.pattern.permute.xlu0 0
  %9767 = vperm.xlu0 %9766, %v9371
  %v9768 = vpop.permute.xlu0 %9767
  %9771 = vset.pattern.permute.xlu0 0
  %9772 = vperm.xlu0 %9771, %v9372
  %v9773 = vpop.permute.xlu0 %9772
  %9776 = vset.pattern.permute.xlu0 0
  %9777 = vperm.xlu0 %9776, %v9373
  %v9778 = vpop.permute.xlu0 %9777
  %9781 = vset.pattern.permute.xlu0 0
  %9782 = vperm.xlu0 %9781, %v9374
  %v9783 = vpop.permute.xlu0 %9782
  %9786 = vset.pattern.permute.xlu0 0
  %9787 = vperm.xlu0 %9786, %v9375
  %v9788 = vpop.permute.xlu0 %9787
  %9791 = vset.pattern.permute.xlu0 0
  %9792 = vperm.xlu0 %9791, %v9376
  %v9793 = vpop.permute.xlu0 %9792
  %v9795 = vadd.f32 %v9567, %v9608
  %v9796 = vadd.f32 %v9568, %v9613
  %v9797 = vadd.f32 %v9569, %v9618
  %v9798 = vadd.f32 %v9570, %v9623
  %v9799 = vadd.f32 %v9571, %v9628
  %v9800 = vadd.f32 %v9572, %v9633
  %v9801 = vadd.f32 %v9573, %v9638
  %v9802 = vadd.f32 %v9574, %v9643
  %v9803 = vadd.f32 %v9575, %v9648
  %v9804 = vadd.f32 %v9576, %v9653
  %v9805 = vadd.f32 %v9577, %v9658
  %v9806 = vadd.f32 %v9578, %v9663
  %v9807 = vadd.f32 %v9579, %v9668
  %v9808 = vadd.f32 %v9580, %v9673
  %v9809 = vadd.f32 %v9581, %v9678
  %v9810 = vadd.f32 %v9582, %v9683
  %v9811 = vadd.f32 %v9583, %v9688
  %v9812 = vadd.f32 %v9584, %v9693
  %v9813 = vadd.f32 %v9585, %v9698
  %v9814 = vadd.f32 %v9586, %v9703
  %v9815 = vadd.f32 %v9587, %v9708
  %v9816 = vadd.f32 %v9588, %v9713
  %v9817 = vadd.f32 %v9589, %v9718
  %v9818 = vadd.f32 %v9590, %v9723
  %v9819 = vadd.f32 %v9591, %v9728
  %v9820 = vadd.f32 %v9592, %v9733
  %v9821 = vadd.f32 %v9593, %v9738
  %v9822 = vadd.f32 %v9594, %v9743
  %v9823 = vadd.f32 %v9595, %v9748
  %v9824 = vadd.f32 %v9596, %v9753
  %v9825 = vadd.f32 %v9597, %v9758
  %v9826 = vadd.f32 %v9598, %v9763
  %v9827 = vadd.f32 %v9599, %v9768
  %v9828 = vadd.f32 %v9600, %v9773
  %v9829 = vadd.f32 %v9601, %v9778
  %v9830 = vadd.f32 %v9602, %v9783
  %v9831 = vadd.f32 %v9603, %v9788
  %v9832 = vadd.f32 %v9604, %v9793
  %9833 = vst.msk [vmem:[%s7] sm:$0xff] %vm8729, %v9795
  %9834 = vst.msk [vmem:[%s7 + $0x8] sm:$0xff] %vm8729, %v9796
  %9835 = vst.msk [vmem:[%s7 + $0x10] sm:$0xff] %vm8729, %v9797
  %9836 = vst.msk [vmem:[%s7 + $0x18] sm:$0xff] %vm8729, %v9798
  %9837 = vst.msk [vmem:[%s7 + $0x20] sm:$0xff] %vm8729, %v9799
  %9838 = vst.msk [vmem:[%s7 + $0x28] sm:$0xff] %vm8729, %v9800
  %9839 = vst.msk [vmem:[%s7 + $0x30] sm:$0xff] %vm8729, %v9801
  %9840 = vst.msk [vmem:[%s7 + $0x38] sm:$0xff] %vm8729, %v9802
  %9841 = vst.msk [vmem:[%s7 + $0x40] sm:$0xff] %vm8729, %v9803
  %9842 = vst.msk [vmem:[%s7 + $0x48] sm:$0xff] %vm8729, %v9804
  %9843 = vst.msk [vmem:[%s7 + $0x50] sm:$0xff] %vm8729, %v9805
  %9844 = vst.msk [vmem:[%s7 + $0x58] sm:$0xff] %vm8729, %v9806
  %9845 = vst.msk [vmem:[%s7 + $0x60] sm:$0xff] %vm8729, %v9807
  %9846 = vst.msk [vmem:[%s7 + $0x68] sm:$0xff] %vm8729, %v9808
  %9847 = vst.msk [vmem:[%s7 + $0x70] sm:$0xff] %vm8729, %v9809
  %9848 = vst.msk [vmem:[%s7 + $0x78] sm:$0xff] %vm8729, %v9810
  %9849 = vst.msk [vmem:[%s7 + $0x80] sm:$0xff] %vm8729, %v9811
  %9850 = vst.msk [vmem:[%s7 + $0x88] sm:$0xff] %vm8729, %v9812
  %9851 = vst.msk [vmem:[%s7 + $0x90] sm:$0xff] %vm8729, %v9813
  %9852 = vst.msk [vmem:[%s7 + $0x98] sm:$0xff] %vm8729, %v9814
  %9853 = vst.msk [vmem:[%s7 + $0xa0] sm:$0xff] %vm8729, %v9815
  %9854 = vst.msk [vmem:[%s7 + $0xa8] sm:$0xff] %vm8729, %v9816
  %9855 = vst.msk [vmem:[%s7 + $0xb0] sm:$0xff] %vm8729, %v9817
  %9856 = vst.msk [vmem:[%s7 + $0xb8] sm:$0xff] %vm8729, %v9818
  %9857 = vst.msk [vmem:[%s7 + $0xc0] sm:$0xff] %vm8729, %v9819
  %9858 = vst.msk [vmem:[%s7 + $0xc8] sm:$0xff] %vm8729, %v9820
  %9859 = vst.msk [vmem:[%s7 + $0xd0] sm:$0xff] %vm8729, %v9821
  %9860 = vst.msk [vmem:[%s7 + $0xd8] sm:$0xff] %vm8729, %v9822
  %9861 = vst.msk [vmem:[%s7 + $0xe0] sm:$0xff] %vm8729, %v9823
  %9862 = vst.msk [vmem:[%s7 + $0xe8] sm:$0xff] %vm8729, %v9824
  %9863 = vst.msk [vmem:[%s7 + $0xf0] sm:$0xff] %vm8729, %v9825
  %9864 = vst.msk [vmem:[%s7 + $0xf8] sm:$0xff] %vm8729, %v9826
  %9865 = vst.msk [vmem:[%s7 + $0x100] sm:$0xff] %vm8729, %v9827
  %9866 = vst.msk [vmem:[%s7 + $0x108] sm:$0xff] %vm8729, %v9828
  %9867 = vst.msk [vmem:[%s7 + $0x110] sm:$0xff] %vm8729, %v9829
  %9868 = vst.msk [vmem:[%s7 + $0x118] sm:$0xff] %vm8729, %v9830
  %9869 = vst.msk [vmem:[%s7 + $0x120] sm:$0xff] %vm8729, %v9831
  %9870 = vst.msk [vmem:[%s7 + $0x128] sm:$0xff] %vm8729, %v9832
  // Predicated region
  $region30: #{tpu_custom_call.1} parent=0 // pred_check
    _
  $region31: #{tpu_custom_call.1} parent=0 // pred_check_branch
    %9872 = sbr.rel (0) target = $region33
  $region32: #{tpu_custom_call.1} parent=0 // pred_region
    _
  $region33: #{tpu_custom_call.1} parent=0 // pred_fallthru
    _
  // Predicated region
  $region34: #{tpu_custom_call.1} parent=0 // pred_check
    _
  $region35: #{tpu_custom_call.1} parent=0 // pred_check_branch
    %9874 = sbr.rel (0) target = $region37
  $region36: #{tpu_custom_call.1} parent=0 // pred_region
    _
  $region37: #{tpu_custom_call.1} parent=0 // pred_fallthru
    _

</llo_original>
